<compile_context>
chip_gen: v7x
topology: tpu7x:2x2x1
jax: 0.10.0
libtpu: 0.0.40
codegen_flags: <defaults>
</compile_context>

<pallas_src>
import numpy as np
import jax
import jax.numpy as jnp
from jax import lax
from jax.experimental import pallas as pl
from jax.experimental.pallas import tpu as pltpu

# ---- small, deterministic config (scaled-down resnet18-like) ----
B = 2            # batch
CIN = 4          # input channels
H = W = 16       # spatial
FEAT = 32        # fc_input_features (stand-in for resnet18's 512, scaled down)
E = 128          # embedding size  ('resnet18' -> E = 128)
N_CLASSES = 4
N_CENTERS = 2

HW = H * W
HP, WP = H + 2, W + 2
TAPS = 9
NROWS = B * HP * WP            # 648: every position of the padded grid treated as a conv center
GUARD = WP + 1                 # 19: max |row offset| of a 3x3 tap on the flattened padded grid
XROWS = NROWS + 2 * GUARD      # 686: guard rows keep every tap slice statically in-bounds

NHEAD = 16                     # packed head lanes: [logits 0:4 | logits copy 4:8 | dom 8:10 | 0]
OUT_LANES = 128                # lane-dense output slab

# ---- packed bf16 weight-slab row layout (lane width = 2E = 256) ----
ROW_WEMB = 0                        # rows [0,32):  [w_emb | w_dem]               (FEAT, 2E)
ROW_BEMB = ROW_WEMB + FEAT          # row 32:       [b_emb | b_dem]               (1, 2E)
ROW_HEAD = ROW_BEMB + 1             # rows [33,49): transposed head weight block  (NHEAD, 2E)
ROW_BHEAD = ROW_HEAD + NHEAD        # row 49:       head bias in lanes [0, NHEAD)
ROW_WCONV = ROW_BHEAD + 1           # rows [50,86): conv weight (tap-major) in lanes [0, FEAT)
ROW_BCONV = ROW_WCONV + TAPS * CIN  # row 86:       conv bias in lanes [0, FEAT)
W_ROWS = ROW_BCONV + 1              # 87

_VMEM = pl.BlockSpec(memory_space=pltpu.MemorySpace.VMEM)

_FLOPS = (2 * NROWS * (TAPS * CIN) * FEAT     # conv (9 shifted matmuls)
          + 2 * B * NROWS * FEAT              # global average pool matmul
          + 2 * B * FEAT * (2 * E)            # embedding + domain_embedding
          + 2 * B * (2 * E) * NHEAD)          # embedding_fc + domain_classifier
_BYTES = (XROWS * CIN + B * NROWS + W_ROWS * 2 * E) * 2 + B * OUT_LANES * 4


# ------------------------- fused kernel -------------------------

def _fused_kernel(x_ref, pool_ref, w_ref, out_ref):
    """3x3 conv (in-kernel im2col via 9 row-shifted matmuls) + bias + ReLU + GAP
    + both heads + softmax, one lane-dense store.

    x_ref   : (XROWS, CIN)    bf16  flattened zero-padded NHWC image (GUARD rows top/bottom)
    pool_ref: (B, NROWS)      bf16  GAP matrix: 1/HW at interior-center rows of each image
    w_ref   : (W_ROWS, 2E)    bf16  packed weight/bias slab (see ROW_* layout)
    out_ref : (B, OUT_LANES)  f32   [logits(4) | softmax(4) | dom(2) | zeros]
    """
    # --- conv: tap (dy,dx) of center row r reads input row r + (dy-1)*WP + (dx-1) ---
    acc = jnp.zeros((NROWS, FEAT), jnp.float32)
    for t in range(TAPS):
        dy, dx = divmod(t, 3)
        off = GUARD + (dy - 1) * WP + (dx - 1)                             # static, >= 0
        xs = x_ref[off:off + NROWS, :]                                     # (NROWS, CIN) bf16
        wt = w_ref[ROW_WCONV + t * CIN:ROW_WCONV + (t + 1) * CIN, 0:FEAT]  # (CIN, FEAT) bf16
        acc = acc + jnp.dot(xs, wt, preferred_element_type=jnp.float32)    # bf16 MXU, f32 acc
    b_conv = w_ref[ROW_BCONV:ROW_BCONV + 1, 0:FEAT].astype(jnp.float32)
    acc = jnp.maximum(acc + b_conv, 0.0)                                   # f32 VPU (v5e-safe)

    # --- global average pool: one (B, NROWS) x (NROWS, FEAT) matmul (zeros out border rows) ---
    feat = jnp.dot(pool_ref[...], acc.astype(jnp.bfloat16),
                   preferred_element_type=jnp.float32)                     # (B, FEAT) f32

    # --- embedding + domain_embedding fused (ReverseLayerF is identity in forward) ---
    w_embs = w_ref[ROW_WEMB:ROW_WEMB + FEAT, :]                            # (FEAT, 2E) bf16
    b_embs = w_ref[ROW_BEMB:ROW_BEMB + 1, :].astype(jnp.float32)
    embs = jnp.dot(feat.astype(jnp.bfloat16), w_embs,
                   preferred_element_type=jnp.float32) + b_embs            # (B, 2E) f32
    # Dropout(p=0.2) -> identity (deterministic / eval semantics)

    # --- embedding_fc + domain_classifier: one NT matmul against (NHEAD, 2E) head rows ---
    w_head_t = w_ref[ROW_HEAD:ROW_HEAD + NHEAD, :]                         # (NHEAD, 2E) bf16
    b_head = w_ref[ROW_BHEAD:ROW_BHEAD + 1, 0:NHEAD].astype(jnp.float32)   # (1, NHEAD)
    comb = lax.dot_general(embs.astype(jnp.bfloat16), w_head_t,
                           dimension_numbers=(((1,), (1,)), ((), ())),
                           preferred_element_type=jnp.float32) + b_head    # (B, NHEAD) f32
    # comb lanes: 0:4 logits, 4:8 logits copy (softmax slots), 8:10 domain logits, rest 0

    # --- softmax blended in-place into lanes 4:8 (no tiny-lane slice/concat chain) ---
    lane = lax.broadcasted_iota(jnp.int32, (B, NHEAD), 1)
    in_sm = jnp.logical_and(lane >= N_CLASSES, lane < 2 * N_CLASSES)
    m = jnp.max(jnp.where(in_sm, comb, -jnp.inf), axis=-1, keepdims=True)
    e = jnp.where(in_sm, jnp.exp(comb - m), 0.0)
    prob = e * pl.reciprocal(jnp.sum(e, axis=-1, keepdims=True), approx=True)  # EUP recip
    out16 = jnp.where(in_sm, prob, comb)                                   # [logits|prob|dom|0]

    # --- single lane-dense (B, 128) store ---
    out_ref[...] = jnp.concatenate(
        [out16, jnp.zeros((B, OUT_LANES - NHEAD), jnp.float32)], axis=1)


# ------------------------- one-time packing (NOT per forward) -------------------------

def _pool_matrix():
    """(B, NROWS) matrix with 1/HW at interior-center rows of each image, else 0."""
    m = np.zeros((B, NROWS), np.float32)
    for b in range(B):
        for h in range(H):
            r0 = b * HP * WP + (h + 1) * WP + 1
            m[b, r0:r0 + W] = 1.0 / HW          # 1/256 is exact in bf16
    return jnp.asarray(m, dtype=jnp.bfloat16)


def pack_params(p):
    """Pack ALL weights/biases into one bf16 (W_ROWS, 2E) slab + constant pooling matrix.
    Call once (e.g. per optimizer step), not per forward."""
    S = np.zeros((W_ROWS, 2 * E), np.float32)
    # [w_emb | w_dem], [b_emb | b_dem]
    S[ROW_WEMB:ROW_WEMB + FEAT, 0:E] = np.asarray(p['w_emb'])
    S[ROW_WEMB:ROW_WEMB + FEAT, E:2 * E] = np.asarray(p['w_dem'])
    S[ROW_BEMB, 0:E] = np.asarray(p['b_emb'])[0]
    S[ROW_BEMB, E:2 * E] = np.asarray(p['b_dem'])[0]
    # transposed "block-diagonal" head: rows 0:4 -> w_cls cols (lanes 0:E),
    # rows 4:8 -> w_cls cols again (in-place-softmax lanes), rows 8:10 -> w_dcl cols (lanes E:2E)
    w_cls = np.asarray(p['w_cls'])                  # (E, 4)
    w_dcl = np.asarray(p['w_dcl'])                  # (E, 2)
    S[ROW_HEAD:ROW_HEAD + N_CLASSES, 0:E] = w_cls.T
    S[ROW_HEAD + N_CLASSES:ROW_HEAD + 2 * N_CLASSES, 0:E] = w_cls.T
    S[ROW_HEAD + 2 * N_CLASSES:ROW_HEAD + 2 * N_CLASSES + N_CENTERS, E:2 * E] = w_dcl.T
    b_cls = np.asarray(p['b_cls'])[0]
    b_dcl = np.asarray(p['b_dcl'])[0]
    S[ROW_BHEAD, 0:N_CLASSES] = b_cls
    S[ROW_BHEAD, N_CLASSES:2 * N_CLASSES] = b_cls
    S[ROW_BHEAD, 2 * N_CLASSES:2 * N_CLASSES + N_CENTERS] = b_dcl
    # conv weight (tap-major, CIN-minor) + conv bias
    S[ROW_WCONV:ROW_WCONV + TAPS * CIN, 0:FEAT] = np.asarray(p['w_conv']).reshape(TAPS * CIN, FEAT)
    S[ROW_BCONV, 0:FEAT] = np.asarray(p['b_conv'])[0]
    return jnp.asarray(S, jnp.bfloat16), _pool_matrix()


# ------------------------- wrapper / glue -------------------------

def _prep_x(x_nchw):
    """NCHW -> zero-padded NHWC, flattened to (XROWS, CIN) bf16 with GUARD rows."""
    x = jnp.transpose(x_nchw, (0, 2, 3, 1)).astype(jnp.float32)   # (B, H, W, CIN)
    xp = jnp.pad(x, ((0, 0), (1, 1), (1, 1), (0, 0)))             # (B, HP, WP, CIN)
    flat = xp.reshape(B * HP * WP, CIN)                           # (NROWS, CIN)
    flat = jnp.pad(flat, ((GUARD, GUARD), (0, 0)))                # (XROWS, CIN)
    return flat.astype(jnp.bfloat16)


@jax.jit
def _forward_impl(x_nchw, w_slab, pool):
    x_flat = _prep_x(x_nchw)
    slab = pl.pallas_call(
        _fused_kernel,
        out_shape=jax.ShapeDtypeStruct((B, OUT_LANES), jnp.float32),
        in_specs=[_VMEM, _VMEM, _VMEM],
        out_specs=_VMEM,
        cost_estimate=pl.CostEstimate(flops=_FLOPS,
                                      transcendentals=2 * B * NHEAD,
                                      bytes_accessed=_BYTES),
    )(x_flat, pool, w_slab)
    logits = slab[:, 0:N_CLASSES]
    prob = slab[:, N_CLASSES:2 * N_CLASSES]
    dom = slab[:, 2 * N_CLASSES:2 * N_CLASSES + N_CENTERS]
    return logits, prob, dom


def cnn_model_forward(x_nchw, packed_params, mode='train', alpha=1.0):
    # alpha only scales ReverseLayerF's *backward* pass; forward is identity.
    w_slab, pool = packed_params
    logits, output_fcn, output_domain = _forward_impl(x_nchw, w_slab, pool)
    if mode == 'train':
        return logits, output_fcn, output_domain
    return logits, output_fcn


# ------------------------- params & reference -------------------------

def init_params(key):
    ks = jax.random.split(key, 10)
    s = 0.05
    return {
        'w_conv': jax.random.normal(ks[0], (TAPS, CIN, FEAT), jnp.float32) * s,
        'b_conv': jax.random.normal(ks[1], (1, FEAT), jnp.float32) * s,
        'w_emb':  jax.random.normal(ks[2], (FEAT, E), jnp.float32) * s,
        'b_emb':  jax.random.normal(ks[3], (1, E), jnp.float32) * s,
        'w_cls':  jax.random.normal(ks[4], (E, N_CLASSES), jnp.float32) * s,
        'b_cls':  jax.random.normal(ks[5], (1, N_CLASSES), jnp.float32) * s,
        'w_dem':  jax.random.normal(ks[6], (FEAT, E), jnp.float32) * s,
        'b_dem':  jax.random.normal(ks[7], (1, E), jnp.float32) * s,
        'w_dcl':  jax.random.normal(ks[8], (E, N_CENTERS), jnp.float32) * s,
        'b_dcl':  jax.random.normal(ks[9], (1, N_CENTERS), jnp.float32) * s,
    }


def _ref_forward(x_nchw, p):
    x = jnp.transpose(x_nchw, (0, 2, 3, 1)).astype(jnp.float32)
    xp = jnp.pad(x, ((0, 0), (1, 1), (1, 1), (0, 0)))
    acc = jnp.zeros((B, H, W, FEAT), jnp.float32)
    for dy in range(3):
        for dx in range(3):
            acc = acc + jnp.einsum('bhwc,co->bhwo',
                                   xp[:, dy:dy + H, dx:dx + W, :],
                                   p['w_conv'][dy * 3 + dx])
    acc = jnp.maximum(acc + p['b_conv'][0], 0.0)
    feat = acc.mean(axis=(1, 2))
    emb = feat @ p['w_emb'] + p['b_emb']
    logits = emb @ p['w_cls'] + p['b_cls']
    prob = jax.nn.softmax(logits, axis=-1)
    demb = feat @ p['w_dem'] + p['b_dem']
    dom = demb @ p['w_dcl'] + p['b_dcl']
    return logits, prob, dom


# ------------------------- main -------------------------

if __name__ == "__main__":
    key = jax.random.PRNGKey(0)
    k_x, k_p = jax.random.split(key)
    x = jax.random.normal(k_x, (B, CIN, H, W), jnp.float32)   # NCHW like PyTorch
    params = init_params(k_p)
    packed = pack_params(params)                              # once, outside the per-step path

    logits, output_fcn, output_domain = cnn_model_forward(x, packed, mode='train', alpha=1.0)
    jax.block_until_ready((logits, output_fcn, output_domain))

    ref_logits, ref_prob, ref_dom = _ref_forward(x, params)
    # bf16 weight/input storage (kernel) vs f32 reference -> allow ~1e-3-scale differences
    assert jnp.allclose(logits, ref_logits, rtol=1e-2, atol=5e-3)
    assert jnp.allclose(output_fcn, ref_prob, rtol=1e-2, atol=5e-3)
    assert jnp.allclose(output_domain, ref_dom, rtol=1e-2, atol=5e-3)
    assert logits.shape == (B, N_CLASSES)
    assert output_fcn.shape == (B, N_CLASSES)
    assert output_domain.shape == (B, N_CENTERS)

    print("KERNEL_OK")
</pallas_src>

<mosaic_0001>
module attributes {stable_mosaic.version = 11 : i64} {
  func.func @_fused_kernel(%arg0: memref<686x4xbf16, #tpu.memory_space<vmem>>, %arg1: memref<2x648xbf16, #tpu.memory_space<vmem>>, %arg2: memref<87x256xbf16, #tpu.memory_space<vmem>>, %arg3: memref<2x128xf32, #tpu.memory_space<vmem>>) attributes {dimension_semantics = [], scalar_prefetch = 0 : i64, scratch_operands = 0 : i64, tpu.core_type = #tpu.core_type<tc>} {
    %cst = arith.constant 0.000000e+00 : f32
    %0 = vector.broadcast %cst : f32 to vector<648x32xf32>
    %c0 = arith.constant 0 : index
    %c0_0 = arith.constant 0 : index
    %1 = vector.load %arg0[%c0, %c0_0] : memref<686x4xbf16, #tpu.memory_space<vmem>>, vector<648x4xbf16>
    %c50 = arith.constant 50 : index
    %c0_1 = arith.constant 0 : index
    %2 = vector.load %arg2[%c50, %c0_1] : memref<87x256xbf16, #tpu.memory_space<vmem>>, vector<4x32xbf16>
    %cst_2 = arith.constant dense<0.000000e+00> : vector<648x32xf32>
    %3 = tpu.matmul %1, %2, %cst_2 {dimension_numbers = #tpu.dot_dimension_numbers<[1], [0], [0], [1], [0, 0, 1, 1], [], []>} : vector<648x4xbf16>, vector<4x32xbf16>, vector<648x32xf32> -> vector<648x32xf32>
    %4 = arith.addf %0, %3 : vector<648x32xf32>
    %c1 = arith.constant 1 : index
    %c0_3 = arith.constant 0 : index
    %5 = vector.load %arg0[%c1, %c0_3] : memref<686x4xbf16, #tpu.memory_space<vmem>>, vector<648x4xbf16>
    %c54 = arith.constant 54 : index
    %c0_4 = arith.constant 0 : index
    %6 = vector.load %arg2[%c54, %c0_4] : memref<87x256xbf16, #tpu.memory_space<vmem>>, vector<4x32xbf16>
    %cst_5 = arith.constant dense<0.000000e+00> : vector<648x32xf32>
    %7 = tpu.matmul %5, %6, %cst_5 {dimension_numbers = #tpu.dot_dimension_numbers<[1], [0], [0], [1], [0, 0, 1, 1], [], []>} : vector<648x4xbf16>, vector<4x32xbf16>, vector<648x32xf32> -> vector<648x32xf32>
    %8 = arith.addf %4, %7 : vector<648x32xf32>
    %c2 = arith.constant 2 : index
    %c0_6 = arith.constant 0 : index
    %9 = vector.load %arg0[%c2, %c0_6] : memref<686x4xbf16, #tpu.memory_space<vmem>>, vector<648x4xbf16>
    %c58 = arith.constant 58 : index
    %c0_7 = arith.constant 0 : index
    %10 = vector.load %arg2[%c58, %c0_7] : memref<87x256xbf16, #tpu.memory_space<vmem>>, vector<4x32xbf16>
    %cst_8 = arith.constant dense<0.000000e+00> : vector<648x32xf32>
    %11 = tpu.matmul %9, %10, %cst_8 {dimension_numbers = #tpu.dot_dimension_numbers<[1], [0], [0], [1], [0, 0, 1, 1], [], []>} : vector<648x4xbf16>, vector<4x32xbf16>, vector<648x32xf32> -> vector<648x32xf32>
    %12 = arith.addf %8, %11 : vector<648x32xf32>
    %c18 = arith.constant 18 : index
    %c0_9 = arith.constant 0 : index
    %13 = vector.load %arg0[%c18, %c0_9] : memref<686x4xbf16, #tpu.memory_space<vmem>>, vector<648x4xbf16>
    %c62 = arith.constant 62 : index
    %c0_10 = arith.constant 0 : index
    %14 = vector.load %arg2[%c62, %c0_10] : memref<87x256xbf16, #tpu.memory_space<vmem>>, vector<4x32xbf16>
    %cst_11 = arith.constant dense<0.000000e+00> : vector<648x32xf32>
    %15 = tpu.matmul %13, %14, %cst_11 {dimension_numbers = #tpu.dot_dimension_numbers<[1], [0], [0], [1], [0, 0, 1, 1], [], []>} : vector<648x4xbf16>, vector<4x32xbf16>, vector<648x32xf32> -> vector<648x32xf32>
    %16 = arith.addf %12, %15 : vector<648x32xf32>
    %c19 = arith.constant 19 : index
    %c0_12 = arith.constant 0 : index
    %17 = vector.load %arg0[%c19, %c0_12] : memref<686x4xbf16, #tpu.memory_space<vmem>>, vector<648x4xbf16>
    %c66 = arith.constant 66 : index
    %c0_13 = arith.constant 0 : index
    %18 = vector.load %arg2[%c66, %c0_13] : memref<87x256xbf16, #tpu.memory_space<vmem>>, vector<4x32xbf16>
    %cst_14 = arith.constant dense<0.000000e+00> : vector<648x32xf32>
    %19 = tpu.matmul %17, %18, %cst_14 {dimension_numbers = #tpu.dot_dimension_numbers<[1], [0], [0], [1], [0, 0, 1, 1], [], []>} : vector<648x4xbf16>, vector<4x32xbf16>, vector<648x32xf32> -> vector<648x32xf32>
    %20 = arith.addf %16, %19 : vector<648x32xf32>
    %c20 = arith.constant 20 : index
    %c0_15 = arith.constant 0 : index
    %21 = vector.load %arg0[%c20, %c0_15] : memref<686x4xbf16, #tpu.memory_space<vmem>>, vector<648x4xbf16>
    %c70 = arith.constant 70 : index
    %c0_16 = arith.constant 0 : index
    %22 = vector.load %arg2[%c70, %c0_16] : memref<87x256xbf16, #tpu.memory_space<vmem>>, vector<4x32xbf16>
    %cst_17 = arith.constant dense<0.000000e+00> : vector<648x32xf32>
    %23 = tpu.matmul %21, %22, %cst_17 {dimension_numbers = #tpu.dot_dimension_numbers<[1], [0], [0], [1], [0, 0, 1, 1], [], []>} : vector<648x4xbf16>, vector<4x32xbf16>, vector<648x32xf32> -> vector<648x32xf32>
    %24 = arith.addf %20, %23 : vector<648x32xf32>
    %c36 = arith.constant 36 : index
    %c0_18 = arith.constant 0 : index
    %25 = vector.load %arg0[%c36, %c0_18] : memref<686x4xbf16, #tpu.memory_space<vmem>>, vector<648x4xbf16>
    %c74 = arith.constant 74 : index
    %c0_19 = arith.constant 0 : index
    %26 = vector.load %arg2[%c74, %c0_19] : memref<87x256xbf16, #tpu.memory_space<vmem>>, vector<4x32xbf16>
    %cst_20 = arith.constant dense<0.000000e+00> : vector<648x32xf32>
    %27 = tpu.matmul %25, %26, %cst_20 {dimension_numbers = #tpu.dot_dimension_numbers<[1], [0], [0], [1], [0, 0, 1, 1], [], []>} : vector<648x4xbf16>, vector<4x32xbf16>, vector<648x32xf32> -> vector<648x32xf32>
    %28 = arith.addf %24, %27 : vector<648x32xf32>
    %c37 = arith.constant 37 : index
    %c0_21 = arith.constant 0 : index
    %29 = vector.load %arg0[%c37, %c0_21] : memref<686x4xbf16, #tpu.memory_space<vmem>>, vector<648x4xbf16>
    %c78 = arith.constant 78 : index
    %c0_22 = arith.constant 0 : index
    %30 = vector.load %arg2[%c78, %c0_22] : memref<87x256xbf16, #tpu.memory_space<vmem>>, vector<4x32xbf16>
    %cst_23 = arith.constant dense<0.000000e+00> : vector<648x32xf32>
    %31 = tpu.matmul %29, %30, %cst_23 {dimension_numbers = #tpu.dot_dimension_numbers<[1], [0], [0], [1], [0, 0, 1, 1], [], []>} : vector<648x4xbf16>, vector<4x32xbf16>, vector<648x32xf32> -> vector<648x32xf32>
    %32 = arith.addf %28, %31 : vector<648x32xf32>
    %c38 = arith.constant 38 : index
    %c0_24 = arith.constant 0 : index
    %33 = vector.load %arg0[%c38, %c0_24] : memref<686x4xbf16, #tpu.memory_space<vmem>>, vector<648x4xbf16>
    %c82 = arith.constant 82 : index
    %c0_25 = arith.constant 0 : index
    %34 = vector.load %arg2[%c82, %c0_25] : memref<87x256xbf16, #tpu.memory_space<vmem>>, vector<4x32xbf16>
    %cst_26 = arith.constant dense<0.000000e+00> : vector<648x32xf32>
    %35 = tpu.matmul %33, %34, %cst_26 {dimension_numbers = #tpu.dot_dimension_numbers<[1], [0], [0], [1], [0, 0, 1, 1], [], []>} : vector<648x4xbf16>, vector<4x32xbf16>, vector<648x32xf32> -> vector<648x32xf32>
    %36 = arith.addf %32, %35 : vector<648x32xf32>
    %c86 = arith.constant 86 : index
    %c0_27 = arith.constant 0 : index
    %37 = vector.load %arg2[%c86, %c0_27] : memref<87x256xbf16, #tpu.memory_space<vmem>>, vector<1x32xbf16>
    %38 = arith.extf %37 : vector<1x32xbf16> to vector<1x32xf32>
    %39 = vector.broadcast %38 : vector<1x32xf32> to vector<648x32xf32>
    %40 = arith.addf %36, %39 : vector<648x32xf32>
    %cst_28 = arith.constant 0.000000e+00 : f32
    %41 = vector.broadcast %cst_28 : f32 to vector<648x32xf32>
    %42 = arith.maximumf %40, %41 : vector<648x32xf32>
    %c0_29 = arith.constant 0 : index
    %c0_30 = arith.constant 0 : index
    %43 = vector.load %arg1[%c0_29, %c0_30] : memref<2x648xbf16, #tpu.memory_space<vmem>>, vector<2x648xbf16>
    %44 = arith.truncf %42 : vector<648x32xf32> to vector<648x32xbf16>
    %cst_31 = arith.constant dense<0.000000e+00> : vector<2x32xf32>
    %45 = tpu.matmul %43, %44, %cst_31 {dimension_numbers = #tpu.dot_dimension_numbers<[1], [0], [0], [1], [0, 0, 1, 1], [], []>} : vector<2x648xbf16>, vector<648x32xbf16>, vector<2x32xf32> -> vector<2x32xf32>
    %c0_32 = arith.constant 0 : index
    %c0_33 = arith.constant 0 : index
    %46 = vector.load %arg2[%c0_32, %c0_33] : memref<87x256xbf16, #tpu.memory_space<vmem>>, vector<32x256xbf16>
    %c32 = arith.constant 32 : index
    %c0_34 = arith.constant 0 : index
    %47 = vector.load %arg2[%c32, %c0_34] : memref<87x256xbf16, #tpu.memory_space<vmem>>, vector<1x256xbf16>
    %48 = arith.extf %47 : vector<1x256xbf16> to vector<1x256xf32>
    %49 = arith.truncf %45 : vector<2x32xf32> to vector<2x32xbf16>
    %cst_35 = arith.constant dense<0.000000e+00> : vector<2x256xf32>
    %50 = tpu.matmul %49, %46, %cst_35 {dimension_numbers = #tpu.dot_dimension_numbers<[1], [0], [0], [1], [0, 0, 1, 1], [], []>} : vector<2x32xbf16>, vector<32x256xbf16>, vector<2x256xf32> -> vector<2x256xf32>
    %51 = vector.broadcast %48 : vector<1x256xf32> to vector<2x256xf32>
    %52 = arith.addf %50, %51 : vector<2x256xf32>
    %c33 = arith.constant 33 : index
    %c0_36 = arith.constant 0 : index
    %53 = vector.load %arg2[%c33, %c0_36] : memref<87x256xbf16, #tpu.memory_space<vmem>>, vector<16x256xbf16>
    %c49 = arith.constant 49 : index
    %c0_37 = arith.constant 0 : index
    %54 = vector.load %arg2[%c49, %c0_37] : memref<87x256xbf16, #tpu.memory_space<vmem>>, vector<1x16xbf16>
    %55 = arith.extf %54 : vector<1x16xbf16> to vector<1x16xf32>
    %56 = arith.truncf %52 : vector<2x256xf32> to vector<2x256xbf16>
    %cst_38 = arith.constant dense<0.000000e+00> : vector<2x16xf32>
    %57 = tpu.matmul %56, %53, %cst_38 {dimension_numbers = #tpu.dot_dimension_numbers<[1], [1], [0], [0], [0, 0, 1, 0], [], []>} : vector<2x256xbf16>, vector<16x256xbf16>, vector<2x16xf32> -> vector<2x16xf32>
    %58 = vector.broadcast %55 : vector<1x16xf32> to vector<2x16xf32>
    %59 = arith.addf %57, %58 : vector<2x16xf32>
    %60 = tpu.iota {dimensions = array<i32: 1>} : vector<2x16xi32>
    %c4_i32 = arith.constant 4 : i32
    %61 = vector.broadcast %c4_i32 : i32 to vector<2x16xi32>
    %62 = arith.cmpi sge, %60, %61 : vector<2x16xi32>
    %c8_i32 = arith.constant 8 : i32
    %63 = vector.broadcast %c8_i32 : i32 to vector<2x16xi32>
    %64 = arith.cmpi slt, %60, %63 : vector<2x16xi32>
    %65 = arith.andi %62, %64 : vector<2x16xi1>
    %cst_39 = arith.constant 0xFF800000 : f32
    %66 = vector.broadcast %cst_39 : f32 to vector<2x16xf32>
    %67 = arith.select %65, %59, %66 : vector<2x16xi1>, vector<2x16xf32>
    %cst_40 = arith.constant dense<0xFF800000> : vector<2xf32>
    %68 = vector.multi_reduction <maximumf>, %67, %cst_40 [1] : vector<2x16xf32> to vector<2xf32>
    %69 = vector.shape_cast %68 : vector<2xf32> to vector<2x1xf32>
    %70 = vector.broadcast %69 : vector<2x1xf32> to vector<2x16xf32>
    %71 = arith.subf %59, %70 : vector<2x16xf32>
    %72 = math.exp %71 : vector<2x16xf32>
    %cst_41 = arith.constant 0.000000e+00 : f32
    %73 = vector.broadcast %cst_41 : f32 to vector<2x16xf32>
    %74 = arith.select %65, %72, %73 : vector<2x16xi1>, vector<2x16xf32>
    %cst_42 = arith.constant dense<0.000000e+00> : vector<2xf32>
    %75 = vector.multi_reduction <add>, %74, %cst_42 [1] : vector<2x16xf32> to vector<2xf32>
    %76 = vector.shape_cast %75 : vector<2xf32> to vector<2x1xf32>
    %77 = tpu.reciprocal %76 {approx = true} : vector<2x1xf32> -> vector<2x1xf32>
    %78 = vector.broadcast %77 : vector<2x1xf32> to vector<2x16xf32>
    %79 = arith.mulf %74, %78 : vector<2x16xf32>
    %80 = arith.select %65, %79, %59 : vector<2x16xi1>, vector<2x16xf32>
    %cst_43 = arith.constant 0.000000e+00 : f32
    %81 = vector.broadcast %cst_43 : f32 to vector<2x112xf32>
    %82 = tpu.concatenate %80, %81 in 1 : vector<2x16xf32>, vector<2x112xf32> -> vector<2x128xf32>
    %c0_44 = arith.constant 0 : index
    %c0_45 = arith.constant 0 : index
    %83 = vector.load %arg3[%c0_44, %c0_45] : memref<2x128xf32, #tpu.memory_space<vmem>>, vector<2x128xf32>
    tpu.vector_store %arg3[%c0_44, %c0_45], %82 {strides = array<i32>} : memref<2x128xf32, #tpu.memory_space<vmem>>, vector<2x128xf32>,
    return
  }
}

</mosaic_0001>

<llo_original>
// kernel: _forward_impl.1
$region0: #{_forward_impl.1}
  #allocation0 [shape = 'u32[]', space=smem, size = 0x4, offset = 0x4, fixed_abs, tag = 'smem constant byte address 0x4 - core index']
  #allocation1 [shape = 'u32[144,128]{1,0:T(1,128)}', space=vmem, size = 0x12000, scoped, tag = 'internal scratch']
  %s0 = inlined_call_operand.vmem [shape: bf16[686,4], index: 0, kind: input, shape index: {}]
  %s1 = inlined_call_operand.vmem [shape: bf16[2,648], index: 1, kind: input, shape index: {}]
  %s2 = inlined_call_operand.vmem [shape: bf16[87,256], index: 2, kind: input, shape index: {}]
  %s3 = inlined_call_operand.vmem [shape: f32[2,128], index: 3, kind: output, shape index: {}]
  %s4 = sld [smem:[#allocation0]]
  $region22: #{_forward_impl.1} parent=0
    _
  %s6 = ssub.s32 1, %s4
  %s7 = scalar_select 0, %s6, %s4
  // Predicated region
  $region2: #{_forward_impl.1} parent=0 // pred_check
    _
  $region3: #{_forward_impl.1} parent=0 // pred_check_branch
    %9 = sbr.rel (0) target = $region5
  $region4: #{_forward_impl.1} parent=0 // pred_region
    _
  $region5: #{_forward_impl.1} parent=0 // pred_fallthru
    _
  // Predicated region
  $region6: #{_forward_impl.1} parent=0 // pred_check
    _
  $region7: #{_forward_impl.1} parent=0 // pred_check_branch
    %11 = sbr.rel (0) target = $region9
  $region8: #{_forward_impl.1} parent=0 // pred_region
    _
  $region9: #{_forward_impl.1} parent=0 // pred_fallthru
    _
  // Predicated region
  $region10: #{_forward_impl.1} parent=0 // pred_check
    _
  $region11: #{_forward_impl.1} parent=0 // pred_check_branch
    %13 = sbr.rel (0) target = $region13
  $region12: #{_forward_impl.1} parent=0 // pred_region
    _
  $region13: #{_forward_impl.1} parent=0 // pred_fallthru
    _
  %v15 = vld [vmem:[%s0] sm:$0xf]
  %v16 = vld [vmem:[%s0 + $0x4] sm:$0xf]
  %v17 = vld [vmem:[%s0 + $0x8] sm:$0xf]
  %v18 = vld [vmem:[%s0 + $0xc] sm:$0xf]
  %v19 = vld [vmem:[%s0 + $0x10] sm:$0xf]
  %v20 = vld [vmem:[%s0 + $0x14] sm:$0xf]
  %v21 = vld [vmem:[%s0 + $0x18] sm:$0xf]
  %v22 = vld [vmem:[%s0 + $0x1c] sm:$0xf]
  %v23 = vld [vmem:[%s0 + $0x20] sm:$0xf]
  %v24 = vld [vmem:[%s0 + $0x24] sm:$0xf]
  %v25 = vld [vmem:[%s0 + $0x28] sm:$0xf]
  %v26 = vld [vmem:[%s0 + $0x2c] sm:$0xf]
  %v27 = vld [vmem:[%s0 + $0x30] sm:$0xf]
  %v28 = vld [vmem:[%s0 + $0x34] sm:$0xf]
  %v29 = vld [vmem:[%s0 + $0x38] sm:$0xf]
  %v30 = vld [vmem:[%s0 + $0x3c] sm:$0xf]
  %v31 = vld [vmem:[%s0 + $0x40] sm:$0xf]
  %v32 = vld [vmem:[%s0 + $0x44] sm:$0xf]
  %v33 = vld [vmem:[%s0 + $0x48] sm:$0xf]
  %v34 = vld [vmem:[%s0 + $0x4c] sm:$0xf]
  %v35 = vld [vmem:[%s0 + $0x50] sm:$0xf]
  %v36 = vld [vmem:[%s0 + $0x54] sm:$0xf]
  %v37 = vld [vmem:[%s0 + $0x58] sm:$0xf]
  %v38 = vld [vmem:[%s0 + $0x5c] sm:$0xf]
  %v39 = vld [vmem:[%s0 + $0x60] sm:$0xf]
  %v40 = vld [vmem:[%s0 + $0x64] sm:$0xf]
  %v41 = vld [vmem:[%s0 + $0x68] sm:$0xf]
  %v42 = vld [vmem:[%s0 + $0x6c] sm:$0xf]
  %v43 = vld [vmem:[%s0 + $0x70] sm:$0xf]
  %v44 = vld [vmem:[%s0 + $0x74] sm:$0xf]
  %v45 = vld [vmem:[%s0 + $0x78] sm:$0xf]
  %v46 = vld [vmem:[%s0 + $0x7c] sm:$0xf]
  %v47 = vld [vmem:[%s0 + $0x80] sm:$0xf]
  %v48 = vld [vmem:[%s0 + $0x84] sm:$0xf]
  %v49 = vld [vmem:[%s0 + $0x88] sm:$0xf]
  %v50 = vld [vmem:[%s0 + $0x8c] sm:$0xf]
  %v51 = vld [vmem:[%s0 + $0x90] sm:$0xf]
  %v52 = vld [vmem:[%s0 + $0x94] sm:$0xf]
  %v53 = vld [vmem:[%s0 + $0x98] sm:$0xf]
  %v54 = vld [vmem:[%s0 + $0x9c] sm:$0xf]
  %v55 = vld [vmem:[%s0 + $0xa0] sm:$0xf]
  %v56 = vld [vmem:[%s0 + $0xa4] sm:$0xf]
  %v57 = vld [vmem:[%s0 + $0xa8] sm:$0xf]
  %v58 = vld [vmem:[%s0 + $0xac] sm:$0xf]
  %v59 = vld [vmem:[%s0 + $0xb0] sm:$0xf]
  %v60 = vld [vmem:[%s0 + $0xb4] sm:$0xf]
  %v61 = vld [vmem:[%s0 + $0xb8] sm:$0xf]
  %v62 = vld [vmem:[%s0 + $0xbc] sm:$0xf]
  %v63 = vld [vmem:[%s0 + $0xc0] sm:$0xf]
  %v64 = vld [vmem:[%s0 + $0xc4] sm:$0xf]
  %v65 = vld [vmem:[%s0 + $0xc8] sm:$0xf]
  %v66 = vld [vmem:[%s0 + $0xcc] sm:$0xf]
  %v67 = vld [vmem:[%s0 + $0xd0] sm:$0xf]
  %v68 = vld [vmem:[%s0 + $0xd4] sm:$0xf]
  %v69 = vld [vmem:[%s0 + $0xd8] sm:$0xf]
  %v70 = vld [vmem:[%s0 + $0xdc] sm:$0xf]
  %v71 = vld [vmem:[%s0 + $0xe0] sm:$0xf]
  %v72 = vld [vmem:[%s0 + $0xe4] sm:$0xf]
  %v73 = vld [vmem:[%s0 + $0xe8] sm:$0xf]
  %v74 = vld [vmem:[%s0 + $0xec] sm:$0xf]
  %v75 = vld [vmem:[%s0 + $0xf0] sm:$0xf]
  %v76 = vld [vmem:[%s0 + $0xf4] sm:$0xf]
  %v77 = vld [vmem:[%s0 + $0xf8] sm:$0xf]
  %v78 = vld [vmem:[%s0 + $0xfc] sm:$0xf]
  %v79 = vld [vmem:[%s0 + $0x100] sm:$0xf]
  %v80 = vld [vmem:[%s0 + $0x104] sm:$0xf]
  %v81 = vld [vmem:[%s0 + $0x108] sm:$0xf]
  %v82 = vld [vmem:[%s0 + $0x10c] sm:$0xf]
  %v83 = vld [vmem:[%s0 + $0x110] sm:$0xf]
  %v84 = vld [vmem:[%s0 + $0x114] sm:$0xf]
  %v85 = vld [vmem:[%s0 + $0x118] sm:$0xf]
  %v86 = vld [vmem:[%s0 + $0x11c] sm:$0xf]
  %v87 = vld [vmem:[%s0 + $0x120] sm:$0xf]
  %v88 = vld [vmem:[%s0 + $0x124] sm:$0xf]
  %v89 = vld [vmem:[%s0 + $0x128] sm:$0xf]
  %v90 = vld [vmem:[%s0 + $0x12c] sm:$0xf]
  %v91 = vld [vmem:[%s0 + $0x130] sm:$0xf]
  %v92 = vld [vmem:[%s0 + $0x134] sm:$0xf]
  %v93 = vld [vmem:[%s0 + $0x138] sm:$0xf]
  %v94 = vld [vmem:[%s0 + $0x13c] sm:$0xf]
  %v95 = vld [vmem:[%s0 + $0x140] sm:$0xf]
  %v96 = vld [vmem:[%s2 + $0x30] sm:$0x6]
  %v97 = vld [vmem:[%s0 + $0x144] sm:$0x1]
  %v98 = vld [vmem:[%s2 + $0x30] sm:$0x8]
  %v99 = vld [vmem:[%s2 + $0x38] sm:$0x1]
  %v182 = vunpack.c.l.b16 %v15
  %v183 = vunpack.c.l.b16 %v16
  %v184 = vunpack.c.l.b16 %v17
  %v185 = vunpack.c.l.b16 %v18
  %v186 = vunpack.c.l.b16 %v19
  %v187 = vunpack.c.l.b16 %v20
  %v188 = vunpack.c.l.b16 %v21
  %v189 = vunpack.c.l.b16 %v22
  %v190 = vunpack.c.l.b16 %v23
  %v191 = vunpack.c.l.b16 %v24
  %v192 = vunpack.c.l.b16 %v25
  %v193 = vunpack.c.l.b16 %v26
  %v194 = vunpack.c.l.b16 %v27
  %v195 = vunpack.c.l.b16 %v28
  %v196 = vunpack.c.l.b16 %v29
  %v197 = vunpack.c.l.b16 %v30
  %v198 = vunpack.c.l.b16 %v31
  %v199 = vunpack.c.l.b16 %v32
  %v200 = vunpack.c.l.b16 %v33
  %v201 = vunpack.c.l.b16 %v34
  %v202 = vunpack.c.l.b16 %v35
  %v203 = vunpack.c.l.b16 %v36
  %v204 = vunpack.c.l.b16 %v37
  %v205 = vunpack.c.l.b16 %v38
  %v206 = vunpack.c.l.b16 %v39
  %v207 = vunpack.c.l.b16 %v40
  %v208 = vunpack.c.l.b16 %v41
  %v209 = vunpack.c.l.b16 %v42
  %v210 = vunpack.c.l.b16 %v43
  %v211 = vunpack.c.l.b16 %v44
  %v212 = vunpack.c.l.b16 %v45
  %v213 = vunpack.c.l.b16 %v46
  %v214 = vunpack.c.l.b16 %v47
  %v215 = vunpack.c.l.b16 %v48
  %v216 = vunpack.c.l.b16 %v49
  %v217 = vunpack.c.l.b16 %v50
  %v218 = vunpack.c.l.b16 %v51
  %v219 = vunpack.c.l.b16 %v52
  %v220 = vunpack.c.l.b16 %v53
  %v221 = vunpack.c.l.b16 %v54
  %v222 = vunpack.c.l.b16 %v55
  %v223 = vunpack.c.l.b16 %v56
  %v224 = vunpack.c.l.b16 %v57
  %v225 = vunpack.c.l.b16 %v58
  %v226 = vunpack.c.l.b16 %v59
  %v227 = vunpack.c.l.b16 %v60
  %v228 = vunpack.c.l.b16 %v61
  %v229 = vunpack.c.l.b16 %v62
  %v230 = vunpack.c.l.b16 %v63
  %v231 = vunpack.c.l.b16 %v64
  %v232 = vunpack.c.l.b16 %v65
  %v233 = vunpack.c.l.b16 %v66
  %v234 = vunpack.c.l.b16 %v67
  %v235 = vunpack.c.l.b16 %v68
  %v236 = vunpack.c.l.b16 %v69
  %v237 = vunpack.c.l.b16 %v70
  %v238 = vunpack.c.l.b16 %v71
  %v239 = vunpack.c.l.b16 %v72
  %v240 = vunpack.c.l.b16 %v73
  %v241 = vunpack.c.l.b16 %v74
  %v242 = vunpack.c.l.b16 %v75
  %v243 = vunpack.c.l.b16 %v76
  %v244 = vunpack.c.l.b16 %v77
  %v245 = vunpack.c.l.b16 %v78
  %v246 = vunpack.c.l.b16 %v79
  %v247 = vunpack.c.l.b16 %v80
  %v248 = vunpack.c.l.b16 %v81
  %v249 = vunpack.c.l.b16 %v82
  %v250 = vunpack.c.l.b16 %v83
  %v251 = vunpack.c.l.b16 %v84
  %v252 = vunpack.c.l.b16 %v85
  %v253 = vunpack.c.l.b16 %v86
  %v254 = vunpack.c.l.b16 %v87
  %v255 = vunpack.c.l.b16 %v88
  %v256 = vunpack.c.l.b16 %v89
  %v257 = vunpack.c.l.b16 %v90
  %v258 = vunpack.c.l.b16 %v91
  %v259 = vunpack.c.l.b16 %v92
  %v260 = vunpack.c.l.b16 %v93
  %v261 = vunpack.c.l.b16 %v94
  %v262 = vunpack.c.l.b16 %v95
  %v263 = vunpack.c.l.b16 %v97
  %v264 = vpack.c.b16 %v183, %v182
  %v265 = vpack.c.b16 %v185, %v184
  %v266 = vpack.c.b16 %v187, %v186
  %v267 = vpack.c.b16 %v189, %v188
  %v268 = vpack.c.b16 %v191, %v190
  %v269 = vpack.c.b16 %v193, %v192
  %v270 = vpack.c.b16 %v195, %v194
  %v271 = vpack.c.b16 %v197, %v196
  %v272 = vpack.c.b16 %v199, %v198
  %v273 = vpack.c.b16 %v201, %v200
  %v274 = vpack.c.b16 %v203, %v202
  %v275 = vpack.c.b16 %v205, %v204
  %v276 = vpack.c.b16 %v207, %v206
  %v277 = vpack.c.b16 %v209, %v208
  %v278 = vpack.c.b16 %v211, %v210
  %v279 = vpack.c.b16 %v213, %v212
  %v280 = vpack.c.b16 %v215, %v214
  %v281 = vpack.c.b16 %v217, %v216
  %v282 = vpack.c.b16 %v219, %v218
  %v283 = vpack.c.b16 %v221, %v220
  %v284 = vpack.c.b16 %v223, %v222
  %v285 = vpack.c.b16 %v225, %v224
  %v286 = vpack.c.b16 %v227, %v226
  %v287 = vpack.c.b16 %v229, %v228
  %v288 = vpack.c.b16 %v231, %v230
  %v289 = vpack.c.b16 %v233, %v232
  %v290 = vpack.c.b16 %v235, %v234
  %v291 = vpack.c.b16 %v237, %v236
  %v292 = vpack.c.b16 %v239, %v238
  %v293 = vpack.c.b16 %v241, %v240
  %v294 = vpack.c.b16 %v243, %v242
  %v295 = vpack.c.b16 %v245, %v244
  %v296 = vpack.c.b16 %v247, %v246
  %v297 = vpack.c.b16 %v249, %v248
  %v298 = vpack.c.b16 %v251, %v250
  %v299 = vpack.c.b16 %v253, %v252
  %v300 = vpack.c.b16 %v255, %v254
  %v301 = vpack.c.b16 %v257, %v256
  %v302 = vpack.c.b16 %v259, %v258
  %v303 = vpack.c.b16 %v261, %v260
  %v304 = vpack.c.b16 %v263, %v262
  %vm305 = vsmask.f32 7424
  %v307 = vshrl.u32 %v264, 16
  %v309 = vshll.u32 %v264, 16
  %v311 = vrot.slane %v309, 1
  %v312 = vor.u32 %v307, %v311
  %v314 = vshll.u32 %v265, 16
  %v316 = vrot.slane %v314, 1
  %v317 = vsel %vm305, %v312, %v316
  %v318 = vshrl.u32 %v265, 16
  %v320 = vor.u32 %v318, %v316
  %v322 = vshll.u32 %v266, 16
  %v324 = vrot.slane %v322, 1
  %v325 = vsel %vm305, %v320, %v324
  %v326 = vshrl.u32 %v266, 16
  %v328 = vor.u32 %v326, %v324
  %v330 = vshll.u32 %v267, 16
  %v332 = vrot.slane %v330, 1
  %v333 = vsel %vm305, %v328, %v332
  %v334 = vshrl.u32 %v267, 16
  %v336 = vor.u32 %v334, %v332
  %v338 = vshll.u32 %v268, 16
  %v340 = vrot.slane %v338, 1
  %v341 = vsel %vm305, %v336, %v340
  %v342 = vshrl.u32 %v268, 16
  %v344 = vor.u32 %v342, %v340
  %v346 = vshll.u32 %v269, 16
  %v348 = vrot.slane %v346, 1
  %v349 = vsel %vm305, %v344, %v348
  %v350 = vshrl.u32 %v269, 16
  %v352 = vor.u32 %v350, %v348
  %v354 = vshll.u32 %v270, 16
  %v356 = vrot.slane %v354, 1
  %v357 = vsel %vm305, %v352, %v356
  %v358 = vshrl.u32 %v270, 16
  %v360 = vor.u32 %v358, %v356
  %v362 = vshll.u32 %v271, 16
  %v364 = vrot.slane %v362, 1
  %v365 = vsel %vm305, %v360, %v364
  %v366 = vshrl.u32 %v271, 16
  %v368 = vor.u32 %v366, %v364
  %v370 = vshll.u32 %v272, 16
  %v372 = vrot.slane %v370, 1
  %v373 = vsel %vm305, %v368, %v372
  %v374 = vshrl.u32 %v272, 16
  %v376 = vor.u32 %v374, %v372
  %v378 = vshll.u32 %v273, 16
  %v380 = vrot.slane %v378, 1
  %v381 = vsel %vm305, %v376, %v380
  %v382 = vshrl.u32 %v273, 16
  %v384 = vor.u32 %v382, %v380
  %v386 = vshll.u32 %v274, 16
  %v388 = vrot.slane %v386, 1
  %v389 = vsel %vm305, %v384, %v388
  %v390 = vshrl.u32 %v274, 16
  %v392 = vor.u32 %v390, %v388
  %v394 = vshll.u32 %v275, 16
  %v396 = vrot.slane %v394, 1
  %v397 = vsel %vm305, %v392, %v396
  %v398 = vshrl.u32 %v275, 16
  %v400 = vor.u32 %v398, %v396
  %v402 = vshll.u32 %v276, 16
  %v404 = vrot.slane %v402, 1
  %v405 = vsel %vm305, %v400, %v404
  %v406 = vshrl.u32 %v276, 16
  %v408 = vor.u32 %v406, %v404
  %v410 = vshll.u32 %v277, 16
  %v412 = vrot.slane %v410, 1
  %v413 = vsel %vm305, %v408, %v412
  %v414 = vshrl.u32 %v277, 16
  %v416 = vor.u32 %v414, %v412
  %v418 = vshll.u32 %v278, 16
  %v420 = vrot.slane %v418, 1
  %v421 = vsel %vm305, %v416, %v420
  %v422 = vshrl.u32 %v278, 16
  %v424 = vor.u32 %v422, %v420
  %v426 = vshll.u32 %v279, 16
  %v428 = vrot.slane %v426, 1
  %v429 = vsel %vm305, %v424, %v428
  %v430 = vshrl.u32 %v279, 16
  %v432 = vor.u32 %v430, %v428
  %v434 = vshll.u32 %v280, 16
  %v436 = vrot.slane %v434, 1
  %v437 = vsel %vm305, %v432, %v436
  %v438 = vshrl.u32 %v280, 16
  %v440 = vor.u32 %v438, %v436
  %v442 = vshll.u32 %v281, 16
  %v444 = vrot.slane %v442, 1
  %v445 = vsel %vm305, %v440, %v444
  %v446 = vshrl.u32 %v281, 16
  %v448 = vor.u32 %v446, %v444
  %v450 = vshll.u32 %v282, 16
  %v452 = vrot.slane %v450, 1
  %v453 = vsel %vm305, %v448, %v452
  %v454 = vshrl.u32 %v282, 16
  %v456 = vor.u32 %v454, %v452
  %v458 = vshll.u32 %v283, 16
  %v460 = vrot.slane %v458, 1
  %v461 = vsel %vm305, %v456, %v460
  %v462 = vshrl.u32 %v283, 16
  %v464 = vor.u32 %v462, %v460
  %v466 = vshll.u32 %v284, 16
  %v468 = vrot.slane %v466, 1
  %v469 = vsel %vm305, %v464, %v468
  %v470 = vshrl.u32 %v284, 16
  %v472 = vor.u32 %v470, %v468
  %v474 = vshll.u32 %v285, 16
  %v476 = vrot.slane %v474, 1
  %v477 = vsel %vm305, %v472, %v476
  %v478 = vshrl.u32 %v285, 16
  %v480 = vor.u32 %v478, %v476
  %v482 = vshll.u32 %v286, 16
  %v484 = vrot.slane %v482, 1
  %v485 = vsel %vm305, %v480, %v484
  %v486 = vshrl.u32 %v286, 16
  %v488 = vor.u32 %v486, %v484
  %v490 = vshll.u32 %v287, 16
  %v492 = vrot.slane %v490, 1
  %v493 = vsel %vm305, %v488, %v492
  %v494 = vshrl.u32 %v287, 16
  %v496 = vor.u32 %v494, %v492
  %v498 = vshll.u32 %v288, 16
  %v500 = vrot.slane %v498, 1
  %v501 = vsel %vm305, %v496, %v500
  %v502 = vshrl.u32 %v288, 16
  %v504 = vor.u32 %v502, %v500
  %v506 = vshll.u32 %v289, 16
  %v508 = vrot.slane %v506, 1
  %v509 = vsel %vm305, %v504, %v508
  %v510 = vshrl.u32 %v289, 16
  %v512 = vor.u32 %v510, %v508
  %v514 = vshll.u32 %v290, 16
  %v516 = vrot.slane %v514, 1
  %v517 = vsel %vm305, %v512, %v516
  %v518 = vshrl.u32 %v290, 16
  %v520 = vor.u32 %v518, %v516
  %v522 = vshll.u32 %v291, 16
  %v524 = vrot.slane %v522, 1
  %v525 = vsel %vm305, %v520, %v524
  %v526 = vshrl.u32 %v291, 16
  %v528 = vor.u32 %v526, %v524
  %v530 = vshll.u32 %v292, 16
  %v532 = vrot.slane %v530, 1
  %v533 = vsel %vm305, %v528, %v532
  %v534 = vshrl.u32 %v292, 16
  %v536 = vor.u32 %v534, %v532
  %v538 = vshll.u32 %v293, 16
  %v540 = vrot.slane %v538, 1
  %v541 = vsel %vm305, %v536, %v540
  %v542 = vshrl.u32 %v293, 16
  %v544 = vor.u32 %v542, %v540
  %v546 = vshll.u32 %v294, 16
  %v548 = vrot.slane %v546, 1
  %v549 = vsel %vm305, %v544, %v548
  %v550 = vshrl.u32 %v294, 16
  %v552 = vor.u32 %v550, %v548
  %v554 = vshll.u32 %v295, 16
  %v556 = vrot.slane %v554, 1
  %v557 = vsel %vm305, %v552, %v556
  %v558 = vshrl.u32 %v295, 16
  %v560 = vor.u32 %v558, %v556
  %v562 = vshll.u32 %v296, 16
  %v564 = vrot.slane %v562, 1
  %v565 = vsel %vm305, %v560, %v564
  %v566 = vshrl.u32 %v296, 16
  %v568 = vor.u32 %v566, %v564
  %v570 = vshll.u32 %v297, 16
  %v572 = vrot.slane %v570, 1
  %v573 = vsel %vm305, %v568, %v572
  %v574 = vshrl.u32 %v297, 16
  %v576 = vor.u32 %v574, %v572
  %v578 = vshll.u32 %v298, 16
  %v580 = vrot.slane %v578, 1
  %v581 = vsel %vm305, %v576, %v580
  %v582 = vshrl.u32 %v298, 16
  %v584 = vor.u32 %v582, %v580
  %v586 = vshll.u32 %v299, 16
  %v588 = vrot.slane %v586, 1
  %v589 = vsel %vm305, %v584, %v588
  %v590 = vshrl.u32 %v299, 16
  %v592 = vor.u32 %v590, %v588
  %v594 = vshll.u32 %v300, 16
  %v596 = vrot.slane %v594, 1
  %v597 = vsel %vm305, %v592, %v596
  %v598 = vshrl.u32 %v300, 16
  %v600 = vor.u32 %v598, %v596
  %v602 = vshll.u32 %v301, 16
  %v604 = vrot.slane %v602, 1
  %v605 = vsel %vm305, %v600, %v604
  %v606 = vshrl.u32 %v301, 16
  %v608 = vor.u32 %v606, %v604
  %v610 = vshll.u32 %v302, 16
  %v612 = vrot.slane %v610, 1
  %v613 = vsel %vm305, %v608, %v612
  %v614 = vshrl.u32 %v302, 16
  %v616 = vor.u32 %v614, %v612
  %v618 = vshll.u32 %v303, 16
  %v620 = vrot.slane %v618, 1
  %v621 = vsel %vm305, %v616, %v620
  %v622 = vshrl.u32 %v303, 16
  %v624 = vor.u32 %v622, %v620
  %v626 = vshll.u32 %v304, 16
  %v628 = vrot.slane %v626, 1
  %v629 = vsel %vm305, %v624, %v628
  %v630 = vshrl.u32 %v304, 16
  %v632 = vor.u32 %v630, %v628
  %v635 = vunpack.c.l.b16 %v98
  %v636 = vunpack.c.l.b16 %v99
  %v637 = vpack.c.b16 %v636, %v635
  %v638 = vrot.slane %v637, 3
  %vm639 = vcmask 31744
  %v641 = vsel %vm639, %v317, 0
  %v644 = vsel %vm639, %v325, 0
  %v647 = vsel %vm639, %v333, 0
  %v650 = vsel %vm639, %v341, 0
  %v653 = vsel %vm639, %v349, 0
  %v656 = vsel %vm639, %v357, 0
  %v659 = vsel %vm639, %v365, 0
  %v662 = vsel %vm639, %v373, 0
  %v665 = vsel %vm639, %v381, 0
  %v668 = vsel %vm639, %v389, 0
  %v671 = vsel %vm639, %v397, 0
  %v674 = vsel %vm639, %v405, 0
  %v677 = vsel %vm639, %v413, 0
  %v680 = vsel %vm639, %v421, 0
  %v683 = vsel %vm639, %v429, 0
  %v686 = vsel %vm639, %v437, 0
  %v689 = vsel %vm639, %v445, 0
  %v692 = vsel %vm639, %v453, 0
  %v695 = vsel %vm639, %v461, 0
  %v698 = vsel %vm639, %v469, 0
  %v701 = vsel %vm639, %v477, 0
  %v704 = vsel %vm639, %v485, 0
  %v707 = vsel %vm639, %v493, 0
  %v710 = vsel %vm639, %v501, 0
  %v713 = vsel %vm639, %v509, 0
  %v716 = vsel %vm639, %v517, 0
  %v719 = vsel %vm639, %v525, 0
  %v722 = vsel %vm639, %v533, 0
  %v725 = vsel %vm639, %v541, 0
  %v728 = vsel %vm639, %v549, 0
  %v731 = vsel %vm639, %v557, 0
  %v734 = vsel %vm639, %v565, 0
  %v737 = vsel %vm639, %v573, 0
  %v740 = vsel %vm639, %v581, 0
  %v743 = vsel %vm639, %v589, 0
  %v746 = vsel %vm639, %v597, 0
  %v749 = vsel %vm639, %v605, 0
  %v752 = vsel %vm639, %v613, 0
  %v755 = vsel %vm639, %v621, 0
  %v758 = vsel %vm639, %v629, 0
  %v761 = vsel %vm639, %v632, 0
  %vm763 = vcmask 1041408
  %v765 = vsel %vm763, %v638, 0
  %767 = vmatprep.subr.bf16.mxu0 0
  %768 = vmatpush1.bf16.msra.mxu0 %v765
  %769 = vmatprep.subr.bf16.mxu0 0
  %770 = vmatpush1.bf16.msra.mxu0 0
  %771 = vmatprep.subr.bf16.mxu0 0
  %772 = vmatpush1.bf16.msra.mxu0 0
  %773 = vmatprep.subr.bf16.mxu0 0
  %774 = vmatpush1.bf16.msra.mxu0 0
  %775 = vmatprep.subr.bf16.mxu0 0
  %776 = vmatpush1.bf16.msra.mxu0 0
  %777 = vmatprep.subr.bf16.mxu0 0
  %778 = vmatpush1.bf16.msra.mxu0 0
  %779 = vmatprep.subr.bf16.mxu0 0
  %780 = vmatpush1.bf16.msra.mxu0 0
  %781 = vmatprep.subr.bf16.mxu0 0
  %782 = vmatpush1.bf16.msra.mxu0 0
  %783 = vmatprep.subr.bf16.mxu0 0
  %784 = vmatpush1.bf16.msra.mxu0 0
  %785 = vmatprep.subr.bf16.mxu0 0
  %786 = vmatpush1.bf16.msra.mxu0 0
  %787 = vmatprep.subr.bf16.mxu0 0
  %788 = vmatpush1.bf16.msra.mxu0 0
  %789 = vmatprep.subr.bf16.mxu0 0
  %790 = vmatpush1.bf16.msra.mxu0 0
  %791 = vmatprep.subr.bf16.mxu0 0
  %792 = vmatpush1.bf16.msra.mxu0 0
  %793 = vmatprep.subr.bf16.mxu0 0
  %794 = vmatpush1.bf16.msra.mxu0 0
  %795 = vmatprep.subr.bf16.mxu0 0
  %796 = vmatpush1.bf16.msra.mxu0 0
  %797 = vmatprep.subr.bf16.mxu0 0
  %798 = vmatpush1.bf16.msra.mxu0 0
  %799 = vmatprep.mubr.bf16.mxu0 0
  %800 = vmatmul.mubr.bf16.gmra.mrb[0].mxu0 %v641
  %v801 = vpop.f32.mrb[0].mxu0
  %v802 = vadd.f32 0.0, %v801
  %v803 = vpop.f32.mrb[0].mxu0
  %v804 = vpop.f32.mrb[0].mxu0
  %v805 = vadd.f32 0.0, %v804
  %v806 = vpop.f32.mrb[0].mxu0
  %807 = vmatprep.mubr.bf16.mxu0 0
  %808 = vmatmul.mubr.bf16.gmra.mrb[0].mxu0 %v644
  %v809 = vpop.f32.mrb[0].mxu0
  %v810 = vadd.f32 0.0, %v809
  %v811 = vpop.f32.mrb[0].mxu0
  %v812 = vpop.f32.mrb[0].mxu0
  %v813 = vadd.f32 0.0, %v812
  %v814 = vpop.f32.mrb[0].mxu0
  %815 = vmatprep.mubr.bf16.mxu0 0
  %816 = vmatmul.mubr.bf16.gmra.mrb[0].mxu0 %v647
  %v817 = vpop.f32.mrb[0].mxu0
  %v818 = vadd.f32 0.0, %v817
  %v819 = vpop.f32.mrb[0].mxu0
  %v820 = vpop.f32.mrb[0].mxu0
  %v821 = vadd.f32 0.0, %v820
  %v822 = vpop.f32.mrb[0].mxu0
  %823 = vmatprep.mubr.bf16.mxu0 0
  %824 = vmatmul.mubr.bf16.gmra.mrb[0].mxu0 %v650
  %v825 = vpop.f32.mrb[0].mxu0
  %v826 = vadd.f32 0.0, %v825
  %v827 = vpop.f32.mrb[0].mxu0
  %v828 = vpop.f32.mrb[0].mxu0
  %v829 = vadd.f32 0.0, %v828
  %v830 = vpop.f32.mrb[0].mxu0
  %831 = vmatprep.mubr.bf16.mxu0 0
  %832 = vmatmul.mubr.bf16.gmra.mrb[0].mxu0 %v653
  %v833 = vpop.f32.mrb[0].mxu0
  %v834 = vadd.f32 0.0, %v833
  %v835 = vpop.f32.mrb[0].mxu0
  %v836 = vpop.f32.mrb[0].mxu0
  %v837 = vadd.f32 0.0, %v836
  %v838 = vpop.f32.mrb[0].mxu0
  %839 = vmatprep.mubr.bf16.mxu0 0
  %840 = vmatmul.mubr.bf16.gmra.mrb[0].mxu0 %v656
  %v841 = vpop.f32.mrb[0].mxu0
  %v842 = vadd.f32 0.0, %v841
  %v843 = vpop.f32.mrb[0].mxu0
  %v844 = vpop.f32.mrb[0].mxu0
  %v845 = vadd.f32 0.0, %v844
  %v846 = vpop.f32.mrb[0].mxu0
  %847 = vmatprep.mubr.bf16.mxu0 0
  %848 = vmatmul.mubr.bf16.gmra.mrb[0].mxu0 %v659
  %v849 = vpop.f32.mrb[0].mxu0
  %v850 = vadd.f32 0.0, %v849
  %v851 = vpop.f32.mrb[0].mxu0
  %v852 = vpop.f32.mrb[0].mxu0
  %v853 = vadd.f32 0.0, %v852
  %v854 = vpop.f32.mrb[0].mxu0
  %855 = vmatprep.mubr.bf16.mxu0 0
  %856 = vmatmul.mubr.bf16.gmra.mrb[0].mxu0 %v662
  %v857 = vpop.f32.mrb[0].mxu0
  %v858 = vadd.f32 0.0, %v857
  %v859 = vpop.f32.mrb[0].mxu0
  %v860 = vpop.f32.mrb[0].mxu0
  %v861 = vadd.f32 0.0, %v860
  %v862 = vpop.f32.mrb[0].mxu0
  %863 = vmatprep.mubr.bf16.mxu0 0
  %864 = vmatmul.mubr.bf16.gmra.mrb[0].mxu0 %v665
  %v865 = vpop.f32.mrb[0].mxu0
  %v866 = vadd.f32 0.0, %v865
  %v867 = vpop.f32.mrb[0].mxu0
  %v868 = vpop.f32.mrb[0].mxu0
  %v869 = vadd.f32 0.0, %v868
  %v870 = vpop.f32.mrb[0].mxu0
  %871 = vmatprep.mubr.bf16.mxu0 0
  %872 = vmatmul.mubr.bf16.gmra.mrb[0].mxu0 %v668
  %v873 = vpop.f32.mrb[0].mxu0
  %v874 = vadd.f32 0.0, %v873
  %v875 = vpop.f32.mrb[0].mxu0
  %v876 = vpop.f32.mrb[0].mxu0
  %v877 = vadd.f32 0.0, %v876
  %v878 = vpop.f32.mrb[0].mxu0
  %879 = vmatprep.mubr.bf16.mxu0 0
  %880 = vmatmul.mubr.bf16.gmra.mrb[0].mxu0 %v671
  %v881 = vpop.f32.mrb[0].mxu0
  %v882 = vadd.f32 0.0, %v881
  %v883 = vpop.f32.mrb[0].mxu0
  %v884 = vpop.f32.mrb[0].mxu0
  %v885 = vadd.f32 0.0, %v884
  %v886 = vpop.f32.mrb[0].mxu0
  %887 = vmatprep.mubr.bf16.mxu0 0
  %888 = vmatmul.mubr.bf16.gmra.mrb[0].mxu0 %v674
  %v889 = vpop.f32.mrb[0].mxu0
  %v890 = vadd.f32 0.0, %v889
  %v891 = vpop.f32.mrb[0].mxu0
  %v892 = vpop.f32.mrb[0].mxu0
  %v893 = vadd.f32 0.0, %v892
  %v894 = vpop.f32.mrb[0].mxu0
  %895 = vmatprep.mubr.bf16.mxu0 0
  %896 = vmatmul.mubr.bf16.gmra.mrb[0].mxu0 %v677
  %v897 = vpop.f32.mrb[0].mxu0
  %v898 = vadd.f32 0.0, %v897
  %v899 = vpop.f32.mrb[0].mxu0
  %v900 = vpop.f32.mrb[0].mxu0
  %v901 = vadd.f32 0.0, %v900
  %v902 = vpop.f32.mrb[0].mxu0
  %903 = vmatprep.mubr.bf16.mxu0 0
  %904 = vmatmul.mubr.bf16.gmra.mrb[0].mxu0 %v680
  %v905 = vpop.f32.mrb[0].mxu0
  %v906 = vadd.f32 0.0, %v905
  %v907 = vpop.f32.mrb[0].mxu0
  %v908 = vpop.f32.mrb[0].mxu0
  %v909 = vadd.f32 0.0, %v908
  %v910 = vpop.f32.mrb[0].mxu0
  %911 = vmatprep.mubr.bf16.mxu0 0
  %912 = vmatmul.mubr.bf16.gmra.mrb[0].mxu0 %v683
  %v913 = vpop.f32.mrb[0].mxu0
  %v914 = vadd.f32 0.0, %v913
  %v915 = vpop.f32.mrb[0].mxu0
  %v916 = vpop.f32.mrb[0].mxu0
  %v917 = vadd.f32 0.0, %v916
  %v918 = vpop.f32.mrb[0].mxu0
  %919 = vmatprep.mubr.bf16.mxu0 0
  %920 = vmatmul.mubr.bf16.gmra.mrb[0].mxu0 %v686
  %v921 = vpop.f32.mrb[0].mxu0
  %v922 = vadd.f32 0.0, %v921
  %v923 = vpop.f32.mrb[0].mxu0
  %v924 = vpop.f32.mrb[0].mxu0
  %v925 = vadd.f32 0.0, %v924
  %v926 = vpop.f32.mrb[0].mxu0
  %927 = vmatprep.mubr.bf16.mxu0 0
  %928 = vmatmul.mubr.bf16.gmra.mrb[0].mxu0 %v689
  %v929 = vpop.f32.mrb[0].mxu0
  %v930 = vadd.f32 0.0, %v929
  %v931 = vpop.f32.mrb[0].mxu0
  %v932 = vpop.f32.mrb[0].mxu0
  %v933 = vadd.f32 0.0, %v932
  %v934 = vpop.f32.mrb[0].mxu0
  %935 = vmatprep.mubr.bf16.mxu0 0
  %936 = vmatmul.mubr.bf16.gmra.mrb[0].mxu0 %v692
  %v937 = vpop.f32.mrb[0].mxu0
  %v938 = vadd.f32 0.0, %v937
  %v939 = vpop.f32.mrb[0].mxu0
  %v940 = vpop.f32.mrb[0].mxu0
  %v941 = vadd.f32 0.0, %v940
  %v942 = vpop.f32.mrb[0].mxu0
  %943 = vmatprep.mubr.bf16.mxu0 0
  %944 = vmatmul.mubr.bf16.gmra.mrb[0].mxu0 %v695
  %v945 = vpop.f32.mrb[0].mxu0
  %v946 = vadd.f32 0.0, %v945
  %v947 = vpop.f32.mrb[0].mxu0
  %v948 = vpop.f32.mrb[0].mxu0
  %v949 = vadd.f32 0.0, %v948
  %v950 = vpop.f32.mrb[0].mxu0
  %951 = vmatprep.mubr.bf16.mxu0 0
  %952 = vmatmul.mubr.bf16.gmra.mrb[0].mxu0 %v698
  %v953 = vpop.f32.mrb[0].mxu0
  %v954 = vadd.f32 0.0, %v953
  %v955 = vpop.f32.mrb[0].mxu0
  %v956 = vpop.f32.mrb[0].mxu0
  %v957 = vadd.f32 0.0, %v956
  %v958 = vpop.f32.mrb[0].mxu0
  %959 = vmatprep.mubr.bf16.mxu0 0
  %960 = vmatmul.mubr.bf16.gmra.mrb[0].mxu0 %v701
  %v961 = vpop.f32.mrb[0].mxu0
  %v962 = vadd.f32 0.0, %v961
  %v963 = vpop.f32.mrb[0].mxu0
  %v964 = vpop.f32.mrb[0].mxu0
  %v965 = vadd.f32 0.0, %v964
  %v966 = vpop.f32.mrb[0].mxu0
  %967 = vmatprep.mubr.bf16.mxu0 0
  %968 = vmatmul.mubr.bf16.gmra.mrb[0].mxu0 %v704
  %v969 = vpop.f32.mrb[0].mxu0
  %v970 = vadd.f32 0.0, %v969
  %v971 = vpop.f32.mrb[0].mxu0
  %v972 = vpop.f32.mrb[0].mxu0
  %v973 = vadd.f32 0.0, %v972
  %v974 = vpop.f32.mrb[0].mxu0
  %975 = vmatprep.mubr.bf16.mxu0 0
  %976 = vmatmul.mubr.bf16.gmra.mrb[0].mxu0 %v707
  %v977 = vpop.f32.mrb[0].mxu0
  %v978 = vadd.f32 0.0, %v977
  %v979 = vpop.f32.mrb[0].mxu0
  %v980 = vpop.f32.mrb[0].mxu0
  %v981 = vadd.f32 0.0, %v980
  %v982 = vpop.f32.mrb[0].mxu0
  %983 = vmatprep.mubr.bf16.mxu0 0
  %984 = vmatmul.mubr.bf16.gmra.mrb[0].mxu0 %v710
  %v985 = vpop.f32.mrb[0].mxu0
  %v986 = vadd.f32 0.0, %v985
  %v987 = vpop.f32.mrb[0].mxu0
  %v988 = vpop.f32.mrb[0].mxu0
  %v989 = vadd.f32 0.0, %v988
  %v990 = vpop.f32.mrb[0].mxu0
  %991 = vmatprep.mubr.bf16.mxu0 0
  %992 = vmatmul.mubr.bf16.gmra.mrb[0].mxu0 %v713
  %v993 = vpop.f32.mrb[0].mxu0
  %v994 = vadd.f32 0.0, %v993
  %v995 = vpop.f32.mrb[0].mxu0
  %v996 = vpop.f32.mrb[0].mxu0
  %v997 = vadd.f32 0.0, %v996
  %v998 = vpop.f32.mrb[0].mxu0
  %999 = vmatprep.mubr.bf16.mxu0 0
  %1000 = vmatmul.mubr.bf16.gmra.mrb[0].mxu0 %v716
  %v1001 = vpop.f32.mrb[0].mxu0
  %v1002 = vadd.f32 0.0, %v1001
  %v1003 = vpop.f32.mrb[0].mxu0
  %v1004 = vpop.f32.mrb[0].mxu0
  %v1005 = vadd.f32 0.0, %v1004
  %v1006 = vpop.f32.mrb[0].mxu0
  %1007 = vmatprep.mubr.bf16.mxu0 0
  %1008 = vmatmul.mubr.bf16.gmra.mrb[0].mxu0 %v719
  %v1009 = vpop.f32.mrb[0].mxu0
  %v1010 = vadd.f32 0.0, %v1009
  %v1011 = vpop.f32.mrb[0].mxu0
  %v1012 = vpop.f32.mrb[0].mxu0
  %v1013 = vadd.f32 0.0, %v1012
  %v1014 = vpop.f32.mrb[0].mxu0
  %1015 = vmatprep.mubr.bf16.mxu0 0
  %1016 = vmatmul.mubr.bf16.gmra.mrb[0].mxu0 %v722
  %v1017 = vpop.f32.mrb[0].mxu0
  %v1018 = vadd.f32 0.0, %v1017
  %v1019 = vpop.f32.mrb[0].mxu0
  %v1020 = vpop.f32.mrb[0].mxu0
  %v1021 = vadd.f32 0.0, %v1020
  %v1022 = vpop.f32.mrb[0].mxu0
  %1023 = vmatprep.mubr.bf16.mxu0 0
  %1024 = vmatmul.mubr.bf16.gmra.mrb[0].mxu0 %v725
  %v1025 = vpop.f32.mrb[0].mxu0
  %v1026 = vadd.f32 0.0, %v1025
  %v1027 = vpop.f32.mrb[0].mxu0
  %v1028 = vpop.f32.mrb[0].mxu0
  %v1029 = vadd.f32 0.0, %v1028
  %v1030 = vpop.f32.mrb[0].mxu0
  %1031 = vmatprep.mubr.bf16.mxu0 0
  %1032 = vmatmul.mubr.bf16.gmra.mrb[0].mxu0 %v728
  %v1033 = vpop.f32.mrb[0].mxu0
  %v1034 = vadd.f32 0.0, %v1033
  %v1035 = vpop.f32.mrb[0].mxu0
  %v1036 = vpop.f32.mrb[0].mxu0
  %v1037 = vadd.f32 0.0, %v1036
  %v1038 = vpop.f32.mrb[0].mxu0
  %1039 = vmatprep.mubr.bf16.mxu0 0
  %1040 = vmatmul.mubr.bf16.gmra.mrb[0].mxu0 %v731
  %v1041 = vpop.f32.mrb[0].mxu0
  %v1042 = vadd.f32 0.0, %v1041
  %v1043 = vpop.f32.mrb[0].mxu0
  %v1044 = vpop.f32.mrb[0].mxu0
  %v1045 = vadd.f32 0.0, %v1044
  %v1046 = vpop.f32.mrb[0].mxu0
  %1047 = vmatprep.mubr.bf16.mxu0 0
  %1048 = vmatmul.mubr.bf16.gmra.mrb[0].mxu0 %v734
  %v1049 = vpop.f32.mrb[0].mxu0
  %v1050 = vadd.f32 0.0, %v1049
  %v1051 = vpop.f32.mrb[0].mxu0
  %v1052 = vpop.f32.mrb[0].mxu0
  %v1053 = vadd.f32 0.0, %v1052
  %v1054 = vpop.f32.mrb[0].mxu0
  %1055 = vmatprep.mubr.bf16.mxu0 0
  %1056 = vmatmul.mubr.bf16.gmra.mrb[0].mxu0 %v737
  %v1057 = vpop.f32.mrb[0].mxu0
  %v1058 = vadd.f32 0.0, %v1057
  %v1059 = vpop.f32.mrb[0].mxu0
  %v1060 = vpop.f32.mrb[0].mxu0
  %v1061 = vadd.f32 0.0, %v1060
  %v1062 = vpop.f32.mrb[0].mxu0
  %1063 = vmatprep.mubr.bf16.mxu0 0
  %1064 = vmatmul.mubr.bf16.gmra.mrb[0].mxu0 %v740
  %v1065 = vpop.f32.mrb[0].mxu0
  %v1066 = vadd.f32 0.0, %v1065
  %v1067 = vpop.f32.mrb[0].mxu0
  %v1068 = vpop.f32.mrb[0].mxu0
  %v1069 = vadd.f32 0.0, %v1068
  %v1070 = vpop.f32.mrb[0].mxu0
  %1071 = vmatprep.mubr.bf16.mxu0 0
  %1072 = vmatmul.mubr.bf16.gmra.mrb[0].mxu0 %v743
  %v1073 = vpop.f32.mrb[0].mxu0
  %v1074 = vadd.f32 0.0, %v1073
  %v1075 = vpop.f32.mrb[0].mxu0
  %v1076 = vpop.f32.mrb[0].mxu0
  %v1077 = vadd.f32 0.0, %v1076
  %v1078 = vpop.f32.mrb[0].mxu0
  %1079 = vmatprep.mubr.bf16.mxu0 0
  %1080 = vmatmul.mubr.bf16.gmra.mrb[0].mxu0 %v746
  %v1081 = vpop.f32.mrb[0].mxu0
  %v1082 = vadd.f32 0.0, %v1081
  %v1083 = vpop.f32.mrb[0].mxu0
  %v1084 = vpop.f32.mrb[0].mxu0
  %v1085 = vadd.f32 0.0, %v1084
  %v1086 = vpop.f32.mrb[0].mxu0
  %1087 = vmatprep.mubr.bf16.mxu0 0
  %1088 = vmatmul.mubr.bf16.gmra.mrb[0].mxu0 %v749
  %v1089 = vpop.f32.mrb[0].mxu0
  %v1090 = vadd.f32 0.0, %v1089
  %v1091 = vpop.f32.mrb[0].mxu0
  %v1092 = vpop.f32.mrb[0].mxu0
  %v1093 = vadd.f32 0.0, %v1092
  %v1094 = vpop.f32.mrb[0].mxu0
  %1095 = vmatprep.mubr.bf16.mxu0 0
  %1096 = vmatmul.mubr.bf16.gmra.mrb[0].mxu0 %v752
  %v1097 = vpop.f32.mrb[0].mxu0
  %v1098 = vadd.f32 0.0, %v1097
  %v1099 = vpop.f32.mrb[0].mxu0
  %v1100 = vpop.f32.mrb[0].mxu0
  %v1101 = vadd.f32 0.0, %v1100
  %v1102 = vpop.f32.mrb[0].mxu0
  %1103 = vmatprep.mubr.bf16.mxu0 0
  %1104 = vmatmul.mubr.bf16.gmra.mrb[0].mxu0 %v755
  %v1105 = vpop.f32.mrb[0].mxu0
  %v1106 = vadd.f32 0.0, %v1105
  %v1107 = vpop.f32.mrb[0].mxu0
  %v1108 = vpop.f32.mrb[0].mxu0
  %v1109 = vadd.f32 0.0, %v1108
  %v1110 = vpop.f32.mrb[0].mxu0
  %1111 = vmatprep.mubr.bf16.mxu0 0
  %1112 = vmatmul.mubr.bf16.gmra.mrb[0].mxu0 %v758
  %v1113 = vpop.f32.mrb[0].mxu0
  %v1114 = vadd.f32 0.0, %v1113
  %v1115 = vpop.f32.mrb[0].mxu0
  %v1116 = vpop.f32.mrb[0].mxu0
  %v1117 = vadd.f32 0.0, %v1116
  %v1118 = vpop.f32.mrb[0].mxu0
  %1119 = vmatprep.mubr.bf16.mxu0 0
  %1120 = vmatmul.mubr.bf16.gmra.mrb[0].mxu0 %v761
  %v1121 = vpop.f32.mrb[0].mxu0
  %v1122 = vadd.f32 0.0, %v1121
  %v1123 = vpop.f32.mrb[0].mxu0
  %v1124 = vpop.f32.mrb[0].mxu0
  %v1125 = vpop.f32.mrb[0].mxu0
  %1126 = vdwg.mxu0
  %v1127 = vpack.c.b16 %v262, %v262
  %v1129 = vunpack.c.l.b16 %v96
  %v1130 = vpack.c.b16 %v1129, %v1129
  %v1131 = vrot.slane %v1130, 1
  %v1132 = vsel %vm639, %v264, 0
  %v1134 = vsel %vm639, %v265, 0
  %v1136 = vsel %vm639, %v266, 0
  %v1138 = vsel %vm639, %v267, 0
  %v1140 = vsel %vm639, %v268, 0
  %v1142 = vsel %vm639, %v269, 0
  %v1144 = vsel %vm639, %v270, 0
  %v1146 = vsel %vm639, %v271, 0
  %v1148 = vsel %vm639, %v272, 0
  %v1150 = vsel %vm639, %v273, 0
  %v1152 = vsel %vm639, %v274, 0
  %v1154 = vsel %vm639, %v275, 0
  %v1156 = vsel %vm639, %v276, 0
  %v1158 = vsel %vm639, %v277, 0
  %v1160 = vsel %vm639, %v278, 0
  %v1162 = vsel %vm639, %v279, 0
  %v1164 = vsel %vm639, %v280, 0
  %v1166 = vsel %vm639, %v281, 0
  %v1168 = vsel %vm639, %v282, 0
  %v1170 = vsel %vm639, %v283, 0
  %v1172 = vsel %vm639, %v284, 0
  %v1174 = vsel %vm639, %v285, 0
  %v1176 = vsel %vm639, %v286, 0
  %v1178 = vsel %vm639, %v287, 0
  %v1180 = vsel %vm639, %v288, 0
  %v1182 = vsel %vm639, %v289, 0
  %v1184 = vsel %vm639, %v290, 0
  %v1186 = vsel %vm639, %v291, 0
  %v1188 = vsel %vm639, %v292, 0
  %v1190 = vsel %vm639, %v293, 0
  %v1192 = vsel %vm639, %v294, 0
  %v1194 = vsel %vm639, %v295, 0
  %v1196 = vsel %vm639, %v296, 0
  %v1198 = vsel %vm639, %v297, 0
  %v1200 = vsel %vm639, %v298, 0
  %v1202 = vsel %vm639, %v299, 0
  %v1204 = vsel %vm639, %v300, 0
  %v1206 = vsel %vm639, %v301, 0
  %v1208 = vsel %vm639, %v302, 0
  %v1210 = vsel %vm639, %v303, 0
  %v1213 = vsel %vm639, %v1127, 0
  %v1216 = vsel %vm763, %v1131, 0
  %1218 = vmatprep.subr.bf16.mxu0 0
  %1219 = vmatpush1.bf16.msra.mxu0 %v1216
  %1220 = vmatprep.subr.bf16.mxu0 0
  %1221 = vmatpush1.bf16.msra.mxu0 0
  %1222 = vmatprep.subr.bf16.mxu0 0
  %1223 = vmatpush1.bf16.msra.mxu0 0
  %1224 = vmatprep.subr.bf16.mxu0 0
  %1225 = vmatpush1.bf16.msra.mxu0 0
  %1226 = vmatprep.subr.bf16.mxu0 0
  %1227 = vmatpush1.bf16.msra.mxu0 0
  %1228 = vmatprep.subr.bf16.mxu0 0
  %1229 = vmatpush1.bf16.msra.mxu0 0
  %1230 = vmatprep.subr.bf16.mxu0 0
  %1231 = vmatpush1.bf16.msra.mxu0 0
  %1232 = vmatprep.subr.bf16.mxu0 0
  %1233 = vmatpush1.bf16.msra.mxu0 0
  %1234 = vmatprep.subr.bf16.mxu0 0
  %1235 = vmatpush1.bf16.msra.mxu0 0
  %1236 = vmatprep.subr.bf16.mxu0 0
  %1237 = vmatpush1.bf16.msra.mxu0 0
  %1238 = vmatprep.subr.bf16.mxu0 0
  %1239 = vmatpush1.bf16.msra.mxu0 0
  %1240 = vmatprep.subr.bf16.mxu0 0
  %1241 = vmatpush1.bf16.msra.mxu0 0
  %1242 = vmatprep.subr.bf16.mxu0 0
  %1243 = vmatpush1.bf16.msra.mxu0 0
  %1244 = vmatprep.subr.bf16.mxu0 0
  %1245 = vmatpush1.bf16.msra.mxu0 0
  %1246 = vmatprep.subr.bf16.mxu0 0
  %1247 = vmatpush1.bf16.msra.mxu0 0
  %1248 = vmatprep.subr.bf16.mxu0 0
  %1249 = vmatpush1.bf16.msra.mxu0 0
  %1250 = vmatprep.mubr.bf16.mxu0 0
  %1251 = vmatmul.mubr.bf16.gmra.mrb[0].mxu0 %v1132
  %v1252 = vpop.f32.mrb[0].mxu0
  %v1253 = vadd.f32 %v802, %v1252
  %v1254 = vpop.f32.mrb[0].mxu0
  %v1255 = vpop.f32.mrb[0].mxu0
  %v1256 = vadd.f32 %v805, %v1255
  %v1257 = vpop.f32.mrb[0].mxu0
  %1258 = vmatprep.mubr.bf16.mxu0 0
  %1259 = vmatmul.mubr.bf16.gmra.mrb[0].mxu0 %v1134
  %v1260 = vpop.f32.mrb[0].mxu0
  %v1261 = vadd.f32 %v810, %v1260
  %v1262 = vpop.f32.mrb[0].mxu0
  %v1263 = vpop.f32.mrb[0].mxu0
  %v1264 = vadd.f32 %v813, %v1263
  %v1265 = vpop.f32.mrb[0].mxu0
  %1266 = vmatprep.mubr.bf16.mxu0 0
  %1267 = vmatmul.mubr.bf16.gmra.mrb[0].mxu0 %v1136
  %v1268 = vpop.f32.mrb[0].mxu0
  %v1269 = vadd.f32 %v818, %v1268
  %v1270 = vpop.f32.mrb[0].mxu0
  %v1271 = vpop.f32.mrb[0].mxu0
  %v1272 = vadd.f32 %v821, %v1271
  %v1273 = vpop.f32.mrb[0].mxu0
  %1274 = vmatprep.mubr.bf16.mxu0 0
  %1275 = vmatmul.mubr.bf16.gmra.mrb[0].mxu0 %v1138
  %v1276 = vpop.f32.mrb[0].mxu0
  %v1277 = vadd.f32 %v826, %v1276
  %v1278 = vpop.f32.mrb[0].mxu0
  %v1279 = vpop.f32.mrb[0].mxu0
  %v1280 = vadd.f32 %v829, %v1279
  %v1281 = vpop.f32.mrb[0].mxu0
  %1282 = vmatprep.mubr.bf16.mxu0 0
  %1283 = vmatmul.mubr.bf16.gmra.mrb[0].mxu0 %v1140
  %v1284 = vpop.f32.mrb[0].mxu0
  %v1285 = vadd.f32 %v834, %v1284
  %v1286 = vpop.f32.mrb[0].mxu0
  %v1287 = vpop.f32.mrb[0].mxu0
  %v1288 = vadd.f32 %v837, %v1287
  %v1289 = vpop.f32.mrb[0].mxu0
  %1290 = vmatprep.mubr.bf16.mxu0 0
  %1291 = vmatmul.mubr.bf16.gmra.mrb[0].mxu0 %v1142
  %v1292 = vpop.f32.mrb[0].mxu0
  %v1293 = vadd.f32 %v842, %v1292
  %v1294 = vpop.f32.mrb[0].mxu0
  %v1295 = vpop.f32.mrb[0].mxu0
  %v1296 = vadd.f32 %v845, %v1295
  %v1297 = vpop.f32.mrb[0].mxu0
  %1298 = vmatprep.mubr.bf16.mxu0 0
  %1299 = vmatmul.mubr.bf16.gmra.mrb[0].mxu0 %v1144
  %v1300 = vpop.f32.mrb[0].mxu0
  %v1301 = vadd.f32 %v850, %v1300
  %v1302 = vpop.f32.mrb[0].mxu0
  %v1303 = vpop.f32.mrb[0].mxu0
  %v1304 = vadd.f32 %v853, %v1303
  %v1305 = vpop.f32.mrb[0].mxu0
  %1306 = vmatprep.mubr.bf16.mxu0 0
  %1307 = vmatmul.mubr.bf16.gmra.mrb[0].mxu0 %v1146
  %v1308 = vpop.f32.mrb[0].mxu0
  %v1309 = vadd.f32 %v858, %v1308
  %v1310 = vpop.f32.mrb[0].mxu0
  %v1311 = vpop.f32.mrb[0].mxu0
  %v1312 = vadd.f32 %v861, %v1311
  %v1313 = vpop.f32.mrb[0].mxu0
  %1314 = vmatprep.mubr.bf16.mxu0 0
  %1315 = vmatmul.mubr.bf16.gmra.mrb[0].mxu0 %v1148
  %v1316 = vpop.f32.mrb[0].mxu0
  %v1317 = vadd.f32 %v866, %v1316
  %v1318 = vpop.f32.mrb[0].mxu0
  %v1319 = vpop.f32.mrb[0].mxu0
  %v1320 = vadd.f32 %v869, %v1319
  %v1321 = vpop.f32.mrb[0].mxu0
  %1322 = vmatprep.mubr.bf16.mxu0 0
  %1323 = vmatmul.mubr.bf16.gmra.mrb[0].mxu0 %v1150
  %v1324 = vpop.f32.mrb[0].mxu0
  %v1325 = vadd.f32 %v874, %v1324
  %v1326 = vpop.f32.mrb[0].mxu0
  %v1327 = vpop.f32.mrb[0].mxu0
  %v1328 = vadd.f32 %v877, %v1327
  %v1329 = vpop.f32.mrb[0].mxu0
  %1330 = vmatprep.mubr.bf16.mxu0 0
  %1331 = vmatmul.mubr.bf16.gmra.mrb[0].mxu0 %v1152
  %v1332 = vpop.f32.mrb[0].mxu0
  %v1333 = vadd.f32 %v882, %v1332
  %v1334 = vpop.f32.mrb[0].mxu0
  %v1335 = vpop.f32.mrb[0].mxu0
  %v1336 = vadd.f32 %v885, %v1335
  %v1337 = vpop.f32.mrb[0].mxu0
  %1338 = vmatprep.mubr.bf16.mxu0 0
  %1339 = vmatmul.mubr.bf16.gmra.mrb[0].mxu0 %v1154
  %v1340 = vpop.f32.mrb[0].mxu0
  %v1341 = vadd.f32 %v890, %v1340
  %v1342 = vpop.f32.mrb[0].mxu0
  %v1343 = vpop.f32.mrb[0].mxu0
  %v1344 = vadd.f32 %v893, %v1343
  %v1345 = vpop.f32.mrb[0].mxu0
  %1346 = vmatprep.mubr.bf16.mxu0 0
  %1347 = vmatmul.mubr.bf16.gmra.mrb[0].mxu0 %v1156
  %v1348 = vpop.f32.mrb[0].mxu0
  %v1349 = vadd.f32 %v898, %v1348
  %v1350 = vpop.f32.mrb[0].mxu0
  %v1351 = vpop.f32.mrb[0].mxu0
  %v1352 = vadd.f32 %v901, %v1351
  %v1353 = vpop.f32.mrb[0].mxu0
  %1354 = vmatprep.mubr.bf16.mxu0 0
  %1355 = vmatmul.mubr.bf16.gmra.mrb[0].mxu0 %v1158
  %v1356 = vpop.f32.mrb[0].mxu0
  %v1357 = vadd.f32 %v906, %v1356
  %v1358 = vpop.f32.mrb[0].mxu0
  %v1359 = vpop.f32.mrb[0].mxu0
  %v1360 = vadd.f32 %v909, %v1359
  %v1361 = vpop.f32.mrb[0].mxu0
  %1362 = vmatprep.mubr.bf16.mxu0 0
  %1363 = vmatmul.mubr.bf16.gmra.mrb[0].mxu0 %v1160
  %v1364 = vpop.f32.mrb[0].mxu0
  %v1365 = vadd.f32 %v914, %v1364
  %v1366 = vpop.f32.mrb[0].mxu0
  %v1367 = vpop.f32.mrb[0].mxu0
  %v1368 = vadd.f32 %v917, %v1367
  %v1369 = vpop.f32.mrb[0].mxu0
  %1370 = vmatprep.mubr.bf16.mxu0 0
  %1371 = vmatmul.mubr.bf16.gmra.mrb[0].mxu0 %v1162
  %v1372 = vpop.f32.mrb[0].mxu0
  %v1373 = vadd.f32 %v922, %v1372
  %v1374 = vpop.f32.mrb[0].mxu0
  %v1375 = vpop.f32.mrb[0].mxu0
  %v1376 = vadd.f32 %v925, %v1375
  %v1377 = vpop.f32.mrb[0].mxu0
  %1378 = vmatprep.mubr.bf16.mxu0 0
  %1379 = vmatmul.mubr.bf16.gmra.mrb[0].mxu0 %v1164
  %v1380 = vpop.f32.mrb[0].mxu0
  %v1381 = vadd.f32 %v930, %v1380
  %v1382 = vpop.f32.mrb[0].mxu0
  %v1383 = vpop.f32.mrb[0].mxu0
  %v1384 = vadd.f32 %v933, %v1383
  %v1385 = vpop.f32.mrb[0].mxu0
  %1386 = vmatprep.mubr.bf16.mxu0 0
  %1387 = vmatmul.mubr.bf16.gmra.mrb[0].mxu0 %v1166
  %v1388 = vpop.f32.mrb[0].mxu0
  %v1389 = vadd.f32 %v938, %v1388
  %v1390 = vpop.f32.mrb[0].mxu0
  %v1391 = vpop.f32.mrb[0].mxu0
  %v1392 = vadd.f32 %v941, %v1391
  %v1393 = vpop.f32.mrb[0].mxu0
  %1394 = vmatprep.mubr.bf16.mxu0 0
  %1395 = vmatmul.mubr.bf16.gmra.mrb[0].mxu0 %v1168
  %v1396 = vpop.f32.mrb[0].mxu0
  %v1397 = vadd.f32 %v946, %v1396
  %v1398 = vpop.f32.mrb[0].mxu0
  %v1399 = vpop.f32.mrb[0].mxu0
  %v1400 = vadd.f32 %v949, %v1399
  %v1401 = vpop.f32.mrb[0].mxu0
  %1402 = vmatprep.mubr.bf16.mxu0 0
  %1403 = vmatmul.mubr.bf16.gmra.mrb[0].mxu0 %v1170
  %v1404 = vpop.f32.mrb[0].mxu0
  %v1405 = vadd.f32 %v954, %v1404
  %v1406 = vpop.f32.mrb[0].mxu0
  %v1407 = vpop.f32.mrb[0].mxu0
  %v1408 = vadd.f32 %v957, %v1407
  %v1409 = vpop.f32.mrb[0].mxu0
  %1410 = vmatprep.mubr.bf16.mxu0 0
  %1411 = vmatmul.mubr.bf16.gmra.mrb[0].mxu0 %v1172
  %v1412 = vpop.f32.mrb[0].mxu0
  %v1413 = vadd.f32 %v962, %v1412
  %v1414 = vpop.f32.mrb[0].mxu0
  %v1415 = vpop.f32.mrb[0].mxu0
  %v1416 = vadd.f32 %v965, %v1415
  %v1417 = vpop.f32.mrb[0].mxu0
  %1418 = vmatprep.mubr.bf16.mxu0 0
  %1419 = vmatmul.mubr.bf16.gmra.mrb[0].mxu0 %v1174
  %v1420 = vpop.f32.mrb[0].mxu0
  %v1421 = vadd.f32 %v970, %v1420
  %v1422 = vpop.f32.mrb[0].mxu0
  %v1423 = vpop.f32.mrb[0].mxu0
  %v1424 = vadd.f32 %v973, %v1423
  %v1425 = vpop.f32.mrb[0].mxu0
  %1426 = vmatprep.mubr.bf16.mxu0 0
  %1427 = vmatmul.mubr.bf16.gmra.mrb[0].mxu0 %v1176
  %v1428 = vpop.f32.mrb[0].mxu0
  %v1429 = vadd.f32 %v978, %v1428
  %v1430 = vpop.f32.mrb[0].mxu0
  %v1431 = vpop.f32.mrb[0].mxu0
  %v1432 = vadd.f32 %v981, %v1431
  %v1433 = vpop.f32.mrb[0].mxu0
  %1434 = vmatprep.mubr.bf16.mxu0 0
  %1435 = vmatmul.mubr.bf16.gmra.mrb[0].mxu0 %v1178
  %v1436 = vpop.f32.mrb[0].mxu0
  %v1437 = vadd.f32 %v986, %v1436
  %v1438 = vpop.f32.mrb[0].mxu0
  %v1439 = vpop.f32.mrb[0].mxu0
  %v1440 = vadd.f32 %v989, %v1439
  %v1441 = vpop.f32.mrb[0].mxu0
  %1442 = vmatprep.mubr.bf16.mxu0 0
  %1443 = vmatmul.mubr.bf16.gmra.mrb[0].mxu0 %v1180
  %v1444 = vpop.f32.mrb[0].mxu0
  %v1445 = vadd.f32 %v994, %v1444
  %v1446 = vpop.f32.mrb[0].mxu0
  %v1447 = vpop.f32.mrb[0].mxu0
  %v1448 = vadd.f32 %v997, %v1447
  %v1449 = vpop.f32.mrb[0].mxu0
  %1450 = vmatprep.mubr.bf16.mxu0 0
  %1451 = vmatmul.mubr.bf16.gmra.mrb[0].mxu0 %v1182
  %v1452 = vpop.f32.mrb[0].mxu0
  %v1453 = vadd.f32 %v1002, %v1452
  %v1454 = vpop.f32.mrb[0].mxu0
  %v1455 = vpop.f32.mrb[0].mxu0
  %v1456 = vadd.f32 %v1005, %v1455
  %v1457 = vpop.f32.mrb[0].mxu0
  %1458 = vmatprep.mubr.bf16.mxu0 0
  %1459 = vmatmul.mubr.bf16.gmra.mrb[0].mxu0 %v1184
  %v1460 = vpop.f32.mrb[0].mxu0
  %v1461 = vadd.f32 %v1010, %v1460
  %v1462 = vpop.f32.mrb[0].mxu0
  %v1463 = vpop.f32.mrb[0].mxu0
  %v1464 = vadd.f32 %v1013, %v1463
  %v1465 = vpop.f32.mrb[0].mxu0
  %1466 = vmatprep.mubr.bf16.mxu0 0
  %1467 = vmatmul.mubr.bf16.gmra.mrb[0].mxu0 %v1186
  %v1468 = vpop.f32.mrb[0].mxu0
  %v1469 = vadd.f32 %v1018, %v1468
  %v1470 = vpop.f32.mrb[0].mxu0
  %v1471 = vpop.f32.mrb[0].mxu0
  %v1472 = vadd.f32 %v1021, %v1471
  %v1473 = vpop.f32.mrb[0].mxu0
  %1474 = vmatprep.mubr.bf16.mxu0 0
  %1475 = vmatmul.mubr.bf16.gmra.mrb[0].mxu0 %v1188
  %v1476 = vpop.f32.mrb[0].mxu0
  %v1477 = vadd.f32 %v1026, %v1476
  %v1478 = vpop.f32.mrb[0].mxu0
  %v1479 = vpop.f32.mrb[0].mxu0
  %v1480 = vadd.f32 %v1029, %v1479
  %v1481 = vpop.f32.mrb[0].mxu0
  %1482 = vmatprep.mubr.bf16.mxu0 0
  %1483 = vmatmul.mubr.bf16.gmra.mrb[0].mxu0 %v1190
  %v1484 = vpop.f32.mrb[0].mxu0
  %v1485 = vadd.f32 %v1034, %v1484
  %v1486 = vpop.f32.mrb[0].mxu0
  %v1487 = vpop.f32.mrb[0].mxu0
  %v1488 = vadd.f32 %v1037, %v1487
  %v1489 = vpop.f32.mrb[0].mxu0
  %1490 = vmatprep.mubr.bf16.mxu0 0
  %1491 = vmatmul.mubr.bf16.gmra.mrb[0].mxu0 %v1192
  %v1492 = vpop.f32.mrb[0].mxu0
  %v1493 = vadd.f32 %v1042, %v1492
  %v1494 = vpop.f32.mrb[0].mxu0
  %v1495 = vpop.f32.mrb[0].mxu0
  %v1496 = vadd.f32 %v1045, %v1495
  %v1497 = vpop.f32.mrb[0].mxu0
  %1498 = vmatprep.mubr.bf16.mxu0 0
  %1499 = vmatmul.mubr.bf16.gmra.mrb[0].mxu0 %v1194
  %v1500 = vpop.f32.mrb[0].mxu0
  %v1501 = vadd.f32 %v1050, %v1500
  %v1502 = vpop.f32.mrb[0].mxu0
  %v1503 = vpop.f32.mrb[0].mxu0
  %v1504 = vadd.f32 %v1053, %v1503
  %v1505 = vpop.f32.mrb[0].mxu0
  %1506 = vmatprep.mubr.bf16.mxu0 0
  %1507 = vmatmul.mubr.bf16.gmra.mrb[0].mxu0 %v1196
  %v1508 = vpop.f32.mrb[0].mxu0
  %v1509 = vadd.f32 %v1058, %v1508
  %v1510 = vpop.f32.mrb[0].mxu0
  %v1511 = vpop.f32.mrb[0].mxu0
  %v1512 = vadd.f32 %v1061, %v1511
  %v1513 = vpop.f32.mrb[0].mxu0
  %1514 = vmatprep.mubr.bf16.mxu0 0
  %1515 = vmatmul.mubr.bf16.gmra.mrb[0].mxu0 %v1198
  %v1516 = vpop.f32.mrb[0].mxu0
  %v1517 = vadd.f32 %v1066, %v1516
  %v1518 = vpop.f32.mrb[0].mxu0
  %v1519 = vpop.f32.mrb[0].mxu0
  %v1520 = vadd.f32 %v1069, %v1519
  %v1521 = vpop.f32.mrb[0].mxu0
  %1522 = vmatprep.mubr.bf16.mxu0 0
  %1523 = vmatmul.mubr.bf16.gmra.mrb[0].mxu0 %v1200
  %v1524 = vpop.f32.mrb[0].mxu0
  %v1525 = vadd.f32 %v1074, %v1524
  %v1526 = vpop.f32.mrb[0].mxu0
  %v1527 = vpop.f32.mrb[0].mxu0
  %v1528 = vadd.f32 %v1077, %v1527
  %v1529 = vpop.f32.mrb[0].mxu0
  %1530 = vmatprep.mubr.bf16.mxu0 0
  %1531 = vmatmul.mubr.bf16.gmra.mrb[0].mxu0 %v1202
  %v1532 = vpop.f32.mrb[0].mxu0
  %v1533 = vadd.f32 %v1082, %v1532
  %v1534 = vpop.f32.mrb[0].mxu0
  %v1535 = vpop.f32.mrb[0].mxu0
  %v1536 = vadd.f32 %v1085, %v1535
  %v1537 = vpop.f32.mrb[0].mxu0
  %1538 = vmatprep.mubr.bf16.mxu0 0
  %1539 = vmatmul.mubr.bf16.gmra.mrb[0].mxu0 %v1204
  %v1540 = vpop.f32.mrb[0].mxu0
  %v1541 = vadd.f32 %v1090, %v1540
  %v1542 = vpop.f32.mrb[0].mxu0
  %v1543 = vpop.f32.mrb[0].mxu0
  %v1544 = vadd.f32 %v1093, %v1543
  %v1545 = vpop.f32.mrb[0].mxu0
  %1546 = vmatprep.mubr.bf16.mxu0 0
  %1547 = vmatmul.mubr.bf16.gmra.mrb[0].mxu0 %v1206
  %v1548 = vpop.f32.mrb[0].mxu0
  %v1549 = vadd.f32 %v1098, %v1548
  %v1550 = vpop.f32.mrb[0].mxu0
  %v1551 = vpop.f32.mrb[0].mxu0
  %v1552 = vadd.f32 %v1101, %v1551
  %v1553 = vpop.f32.mrb[0].mxu0
  %1554 = vmatprep.mubr.bf16.mxu0 0
  %1555 = vmatmul.mubr.bf16.gmra.mrb[0].mxu0 %v1208
  %v1556 = vpop.f32.mrb[0].mxu0
  %v1557 = vadd.f32 %v1106, %v1556
  %v1558 = vpop.f32.mrb[0].mxu0
  %v1559 = vpop.f32.mrb[0].mxu0
  %v1560 = vadd.f32 %v1109, %v1559
  %v1561 = vpop.f32.mrb[0].mxu0
  %1562 = vmatprep.mubr.bf16.mxu0 0
  %1563 = vmatmul.mubr.bf16.gmra.mrb[0].mxu0 %v1210
  %v1564 = vpop.f32.mrb[0].mxu0
  %v1565 = vadd.f32 %v1114, %v1564
  %v1566 = vpop.f32.mrb[0].mxu0
  %v1567 = vpop.f32.mrb[0].mxu0
  %v1568 = vadd.f32 %v1117, %v1567
  %v1569 = vpop.f32.mrb[0].mxu0
  %1570 = vmatprep.mubr.bf16.mxu0 0
  %1571 = vmatmul.mubr.bf16.gmra.mrb[0].mxu0 %v1213
  %v1572 = vpop.f32.mrb[0].mxu0
  %v1573 = vadd.f32 %v1122, %v1572
  %v1574 = vpop.f32.mrb[0].mxu0
  %v1575 = vpop.f32.mrb[0].mxu0
  %v1576 = vpop.f32.mrb[0].mxu0
  %1577 = vdwg.mxu0
  %v1578 = vld [vmem:[%s0] sm:$0xe]
  %v1579 = vld [vmem:[%s2 + $0x38] sm:$0x6]
  %v1581 = vunpack.c.l.b16 %v1578
  %v1582 = vpack.c.b16 %v183, %v1581
  %vm1583 = vcmask 1046528
  %v1584 = vrot.slane %v1582, 1
  %v1585 = vrot.slane %v265, 1
  %v1586 = vsel %vm1583, %v1584, %v1585
  %v1587 = vrot.slane %v266, 1
  %v1588 = vsel %vm1583, %v1585, %v1587
  %v1589 = vrot.slane %v267, 1
  %v1590 = vsel %vm1583, %v1587, %v1589
  %v1591 = vrot.slane %v268, 1
  %v1592 = vsel %vm1583, %v1589, %v1591
  %v1593 = vrot.slane %v269, 1
  %v1594 = vsel %vm1583, %v1591, %v1593
  %v1595 = vrot.slane %v270, 1
  %v1596 = vsel %vm1583, %v1593, %v1595
  %v1597 = vrot.slane %v271, 1
  %v1598 = vsel %vm1583, %v1595, %v1597
  %v1599 = vrot.slane %v272, 1
  %v1600 = vsel %vm1583, %v1597, %v1599
  %v1601 = vrot.slane %v273, 1
  %v1602 = vsel %vm1583, %v1599, %v1601
  %v1603 = vrot.slane %v274, 1
  %v1604 = vsel %vm1583, %v1601, %v1603
  %v1605 = vrot.slane %v275, 1
  %v1606 = vsel %vm1583, %v1603, %v1605
  %v1607 = vrot.slane %v276, 1
  %v1608 = vsel %vm1583, %v1605, %v1607
  %v1609 = vrot.slane %v277, 1
  %v1610 = vsel %vm1583, %v1607, %v1609
  %v1611 = vrot.slane %v278, 1
  %v1612 = vsel %vm1583, %v1609, %v1611
  %v1613 = vrot.slane %v279, 1
  %v1614 = vsel %vm1583, %v1611, %v1613
  %v1615 = vrot.slane %v280, 1
  %v1616 = vsel %vm1583, %v1613, %v1615
  %v1617 = vrot.slane %v281, 1
  %v1618 = vsel %vm1583, %v1615, %v1617
  %v1619 = vrot.slane %v282, 1
  %v1620 = vsel %vm1583, %v1617, %v1619
  %v1621 = vrot.slane %v283, 1
  %v1622 = vsel %vm1583, %v1619, %v1621
  %v1623 = vrot.slane %v284, 1
  %v1624 = vsel %vm1583, %v1621, %v1623
  %v1625 = vrot.slane %v285, 1
  %v1626 = vsel %vm1583, %v1623, %v1625
  %v1627 = vrot.slane %v286, 1
  %v1628 = vsel %vm1583, %v1625, %v1627
  %v1629 = vrot.slane %v287, 1
  %v1630 = vsel %vm1583, %v1627, %v1629
  %v1631 = vrot.slane %v288, 1
  %v1632 = vsel %vm1583, %v1629, %v1631
  %v1633 = vrot.slane %v289, 1
  %v1634 = vsel %vm1583, %v1631, %v1633
  %v1635 = vrot.slane %v290, 1
  %v1636 = vsel %vm1583, %v1633, %v1635
  %v1637 = vrot.slane %v291, 1
  %v1638 = vsel %vm1583, %v1635, %v1637
  %v1639 = vrot.slane %v292, 1
  %v1640 = vsel %vm1583, %v1637, %v1639
  %v1641 = vrot.slane %v293, 1
  %v1642 = vsel %vm1583, %v1639, %v1641
  %v1643 = vrot.slane %v294, 1
  %v1644 = vsel %vm1583, %v1641, %v1643
  %v1645 = vrot.slane %v295, 1
  %v1646 = vsel %vm1583, %v1643, %v1645
  %v1647 = vrot.slane %v296, 1
  %v1648 = vsel %vm1583, %v1645, %v1647
  %v1649 = vrot.slane %v297, 1
  %v1650 = vsel %vm1583, %v1647, %v1649
  %v1651 = vrot.slane %v298, 1
  %v1652 = vsel %vm1583, %v1649, %v1651
  %v1653 = vrot.slane %v299, 1
  %v1654 = vsel %vm1583, %v1651, %v1653
  %v1655 = vrot.slane %v300, 1
  %v1656 = vsel %vm1583, %v1653, %v1655
  %v1657 = vrot.slane %v301, 1
  %v1658 = vsel %vm1583, %v1655, %v1657
  %v1659 = vrot.slane %v302, 1
  %v1660 = vsel %vm1583, %v1657, %v1659
  %v1661 = vrot.slane %v303, 1
  %v1662 = vsel %vm1583, %v1659, %v1661
  %v1663 = vrot.slane %v304, 1
  %v1664 = vsel %vm1583, %v1661, %v1663
  %v1666 = vunpack.c.l.b16 %v1579
  %v1667 = vpack.c.b16 %v1666, %v1666
  %v1668 = vrot.slane %v1667, 1
  %v1670 = vsel %vm639, %v1586, 0
  %v1673 = vsel %vm639, %v1588, 0
  %v1676 = vsel %vm639, %v1590, 0
  %v1679 = vsel %vm639, %v1592, 0
  %v1682 = vsel %vm639, %v1594, 0
  %v1685 = vsel %vm639, %v1596, 0
  %v1688 = vsel %vm639, %v1598, 0
  %v1691 = vsel %vm639, %v1600, 0
  %v1694 = vsel %vm639, %v1602, 0
  %v1697 = vsel %vm639, %v1604, 0
  %v1700 = vsel %vm639, %v1606, 0
  %v1703 = vsel %vm639, %v1608, 0
  %v1706 = vsel %vm639, %v1610, 0
  %v1709 = vsel %vm639, %v1612, 0
  %v1712 = vsel %vm639, %v1614, 0
  %v1715 = vsel %vm639, %v1616, 0
  %v1718 = vsel %vm639, %v1618, 0
  %v1721 = vsel %vm639, %v1620, 0
  %v1724 = vsel %vm639, %v1622, 0
  %v1727 = vsel %vm639, %v1624, 0
  %v1730 = vsel %vm639, %v1626, 0
  %v1733 = vsel %vm639, %v1628, 0
  %v1736 = vsel %vm639, %v1630, 0
  %v1739 = vsel %vm639, %v1632, 0
  %v1742 = vsel %vm639, %v1634, 0
  %v1745 = vsel %vm639, %v1636, 0
  %v1748 = vsel %vm639, %v1638, 0
  %v1751 = vsel %vm639, %v1640, 0
  %v1754 = vsel %vm639, %v1642, 0
  %v1757 = vsel %vm639, %v1644, 0
  %v1760 = vsel %vm639, %v1646, 0
  %v1763 = vsel %vm639, %v1648, 0
  %v1766 = vsel %vm639, %v1650, 0
  %v1769 = vsel %vm639, %v1652, 0
  %v1772 = vsel %vm639, %v1654, 0
  %v1775 = vsel %vm639, %v1656, 0
  %v1778 = vsel %vm639, %v1658, 0
  %v1781 = vsel %vm639, %v1660, 0
  %v1784 = vsel %vm639, %v1662, 0
  %v1787 = vsel %vm639, %v1664, 0
  %v1790 = vsel %vm639, %v1663, 0
  %v1793 = vsel %vm763, %v1668, 0
  %1795 = vmatprep.subr.bf16.mxu0 0
  %1796 = vmatpush1.bf16.msra.mxu0 %v1793
  %1797 = vmatprep.subr.bf16.mxu0 0
  %1798 = vmatpush1.bf16.msra.mxu0 0
  %1799 = vmatprep.subr.bf16.mxu0 0
  %1800 = vmatpush1.bf16.msra.mxu0 0
  %1801 = vmatprep.subr.bf16.mxu0 0
  %1802 = vmatpush1.bf16.msra.mxu0 0
  %1803 = vmatprep.subr.bf16.mxu0 0
  %1804 = vmatpush1.bf16.msra.mxu0 0
  %1805 = vmatprep.subr.bf16.mxu0 0
  %1806 = vmatpush1.bf16.msra.mxu0 0
  %1807 = vmatprep.subr.bf16.mxu0 0
  %1808 = vmatpush1.bf16.msra.mxu0 0
  %1809 = vmatprep.subr.bf16.mxu0 0
  %1810 = vmatpush1.bf16.msra.mxu0 0
  %1811 = vmatprep.subr.bf16.mxu0 0
  %1812 = vmatpush1.bf16.msra.mxu0 0
  %1813 = vmatprep.subr.bf16.mxu0 0
  %1814 = vmatpush1.bf16.msra.mxu0 0
  %1815 = vmatprep.subr.bf16.mxu0 0
  %1816 = vmatpush1.bf16.msra.mxu0 0
  %1817 = vmatprep.subr.bf16.mxu0 0
  %1818 = vmatpush1.bf16.msra.mxu0 0
  %1819 = vmatprep.subr.bf16.mxu0 0
  %1820 = vmatpush1.bf16.msra.mxu0 0
  %1821 = vmatprep.subr.bf16.mxu0 0
  %1822 = vmatpush1.bf16.msra.mxu0 0
  %1823 = vmatprep.subr.bf16.mxu0 0
  %1824 = vmatpush1.bf16.msra.mxu0 0
  %1825 = vmatprep.subr.bf16.mxu0 0
  %1826 = vmatpush1.bf16.msra.mxu0 0
  %1827 = vmatprep.mubr.bf16.mxu0 0
  %1828 = vmatmul.mubr.bf16.gmra.mrb[0].mxu0 %v1670
  %v1829 = vpop.f32.mrb[0].mxu0
  %v1830 = vadd.f32 0.0, %v1829
  %v1831 = vpop.f32.mrb[0].mxu0
  %v1832 = vpop.f32.mrb[0].mxu0
  %v1833 = vadd.f32 0.0, %v1832
  %v1834 = vpop.f32.mrb[0].mxu0
  %1835 = vmatprep.mubr.bf16.mxu0 0
  %1836 = vmatmul.mubr.bf16.gmra.mrb[0].mxu0 %v1673
  %v1837 = vpop.f32.mrb[0].mxu0
  %v1838 = vadd.f32 0.0, %v1837
  %v1839 = vpop.f32.mrb[0].mxu0
  %v1840 = vpop.f32.mrb[0].mxu0
  %v1841 = vadd.f32 0.0, %v1840
  %v1842 = vpop.f32.mrb[0].mxu0
  %1843 = vmatprep.mubr.bf16.mxu0 0
  %1844 = vmatmul.mubr.bf16.gmra.mrb[0].mxu0 %v1676
  %v1845 = vpop.f32.mrb[0].mxu0
  %v1846 = vadd.f32 0.0, %v1845
  %v1847 = vpop.f32.mrb[0].mxu0
  %v1848 = vpop.f32.mrb[0].mxu0
  %v1849 = vadd.f32 0.0, %v1848
  %v1850 = vpop.f32.mrb[0].mxu0
  %1851 = vmatprep.mubr.bf16.mxu0 0
  %1852 = vmatmul.mubr.bf16.gmra.mrb[0].mxu0 %v1679
  %v1853 = vpop.f32.mrb[0].mxu0
  %v1854 = vadd.f32 0.0, %v1853
  %v1855 = vpop.f32.mrb[0].mxu0
  %v1856 = vpop.f32.mrb[0].mxu0
  %v1857 = vadd.f32 0.0, %v1856
  %v1858 = vpop.f32.mrb[0].mxu0
  %1859 = vmatprep.mubr.bf16.mxu0 0
  %1860 = vmatmul.mubr.bf16.gmra.mrb[0].mxu0 %v1682
  %v1861 = vpop.f32.mrb[0].mxu0
  %v1862 = vadd.f32 0.0, %v1861
  %v1863 = vpop.f32.mrb[0].mxu0
  %v1864 = vpop.f32.mrb[0].mxu0
  %v1865 = vadd.f32 0.0, %v1864
  %v1866 = vpop.f32.mrb[0].mxu0
  %1867 = vmatprep.mubr.bf16.mxu0 0
  %1868 = vmatmul.mubr.bf16.gmra.mrb[0].mxu0 %v1685
  %v1869 = vpop.f32.mrb[0].mxu0
  %v1870 = vadd.f32 0.0, %v1869
  %v1871 = vpop.f32.mrb[0].mxu0
  %v1872 = vpop.f32.mrb[0].mxu0
  %v1873 = vadd.f32 0.0, %v1872
  %v1874 = vpop.f32.mrb[0].mxu0
  %1875 = vmatprep.mubr.bf16.mxu0 0
  %1876 = vmatmul.mubr.bf16.gmra.mrb[0].mxu0 %v1688
  %v1877 = vpop.f32.mrb[0].mxu0
  %v1878 = vadd.f32 0.0, %v1877
  %v1879 = vpop.f32.mrb[0].mxu0
  %v1880 = vpop.f32.mrb[0].mxu0
  %v1881 = vadd.f32 0.0, %v1880
  %v1882 = vpop.f32.mrb[0].mxu0
  %1883 = vmatprep.mubr.bf16.mxu0 0
  %1884 = vmatmul.mubr.bf16.gmra.mrb[0].mxu0 %v1691
  %v1885 = vpop.f32.mrb[0].mxu0
  %v1886 = vadd.f32 0.0, %v1885
  %v1887 = vpop.f32.mrb[0].mxu0
  %v1888 = vpop.f32.mrb[0].mxu0
  %v1889 = vadd.f32 0.0, %v1888
  %v1890 = vpop.f32.mrb[0].mxu0
  %1891 = vmatprep.mubr.bf16.mxu0 0
  %1892 = vmatmul.mubr.bf16.gmra.mrb[0].mxu0 %v1694
  %v1893 = vpop.f32.mrb[0].mxu0
  %v1894 = vadd.f32 0.0, %v1893
  %v1895 = vpop.f32.mrb[0].mxu0
  %v1896 = vpop.f32.mrb[0].mxu0
  %v1897 = vadd.f32 0.0, %v1896
  %v1898 = vpop.f32.mrb[0].mxu0
  %1899 = vmatprep.mubr.bf16.mxu0 0
  %1900 = vmatmul.mubr.bf16.gmra.mrb[0].mxu0 %v1697
  %v1901 = vpop.f32.mrb[0].mxu0
  %v1902 = vadd.f32 0.0, %v1901
  %v1903 = vpop.f32.mrb[0].mxu0
  %v1904 = vpop.f32.mrb[0].mxu0
  %v1905 = vadd.f32 0.0, %v1904
  %v1906 = vpop.f32.mrb[0].mxu0
  %1907 = vmatprep.mubr.bf16.mxu0 0
  %1908 = vmatmul.mubr.bf16.gmra.mrb[0].mxu0 %v1700
  %v1909 = vpop.f32.mrb[0].mxu0
  %v1910 = vadd.f32 0.0, %v1909
  %v1911 = vpop.f32.mrb[0].mxu0
  %v1912 = vpop.f32.mrb[0].mxu0
  %v1913 = vadd.f32 0.0, %v1912
  %v1914 = vpop.f32.mrb[0].mxu0
  %1915 = vmatprep.mubr.bf16.mxu0 0
  %1916 = vmatmul.mubr.bf16.gmra.mrb[0].mxu0 %v1703
  %v1917 = vpop.f32.mrb[0].mxu0
  %v1918 = vadd.f32 0.0, %v1917
  %v1919 = vpop.f32.mrb[0].mxu0
  %v1920 = vpop.f32.mrb[0].mxu0
  %v1921 = vadd.f32 0.0, %v1920
  %v1922 = vpop.f32.mrb[0].mxu0
  %1923 = vmatprep.mubr.bf16.mxu0 0
  %1924 = vmatmul.mubr.bf16.gmra.mrb[0].mxu0 %v1706
  %v1925 = vpop.f32.mrb[0].mxu0
  %v1926 = vadd.f32 0.0, %v1925
  %v1927 = vpop.f32.mrb[0].mxu0
  %v1928 = vpop.f32.mrb[0].mxu0
  %v1929 = vadd.f32 0.0, %v1928
  %v1930 = vpop.f32.mrb[0].mxu0
  %1931 = vmatprep.mubr.bf16.mxu0 0
  %1932 = vmatmul.mubr.bf16.gmra.mrb[0].mxu0 %v1709
  %v1933 = vpop.f32.mrb[0].mxu0
  %v1934 = vadd.f32 0.0, %v1933
  %v1935 = vpop.f32.mrb[0].mxu0
  %v1936 = vpop.f32.mrb[0].mxu0
  %v1937 = vadd.f32 0.0, %v1936
  %v1938 = vpop.f32.mrb[0].mxu0
  %1939 = vmatprep.mubr.bf16.mxu0 0
  %1940 = vmatmul.mubr.bf16.gmra.mrb[0].mxu0 %v1712
  %v1941 = vpop.f32.mrb[0].mxu0
  %v1942 = vadd.f32 0.0, %v1941
  %v1943 = vpop.f32.mrb[0].mxu0
  %v1944 = vpop.f32.mrb[0].mxu0
  %v1945 = vadd.f32 0.0, %v1944
  %v1946 = vpop.f32.mrb[0].mxu0
  %1947 = vmatprep.mubr.bf16.mxu0 0
  %1948 = vmatmul.mubr.bf16.gmra.mrb[0].mxu0 %v1715
  %v1949 = vpop.f32.mrb[0].mxu0
  %v1950 = vadd.f32 0.0, %v1949
  %v1951 = vpop.f32.mrb[0].mxu0
  %v1952 = vpop.f32.mrb[0].mxu0
  %v1953 = vadd.f32 0.0, %v1952
  %v1954 = vpop.f32.mrb[0].mxu0
  %1955 = vmatprep.mubr.bf16.mxu0 0
  %1956 = vmatmul.mubr.bf16.gmra.mrb[0].mxu0 %v1718
  %v1957 = vpop.f32.mrb[0].mxu0
  %v1958 = vadd.f32 0.0, %v1957
  %v1959 = vpop.f32.mrb[0].mxu0
  %v1960 = vpop.f32.mrb[0].mxu0
  %v1961 = vadd.f32 0.0, %v1960
  %v1962 = vpop.f32.mrb[0].mxu0
  %1963 = vmatprep.mubr.bf16.mxu0 0
  %1964 = vmatmul.mubr.bf16.gmra.mrb[0].mxu0 %v1721
  %v1965 = vpop.f32.mrb[0].mxu0
  %v1966 = vadd.f32 0.0, %v1965
  %v1967 = vpop.f32.mrb[0].mxu0
  %v1968 = vpop.f32.mrb[0].mxu0
  %v1969 = vadd.f32 0.0, %v1968
  %v1970 = vpop.f32.mrb[0].mxu0
  %1971 = vmatprep.mubr.bf16.mxu0 0
  %1972 = vmatmul.mubr.bf16.gmra.mrb[0].mxu0 %v1724
  %v1973 = vpop.f32.mrb[0].mxu0
  %v1974 = vadd.f32 0.0, %v1973
  %v1975 = vpop.f32.mrb[0].mxu0
  %v1976 = vpop.f32.mrb[0].mxu0
  %v1977 = vadd.f32 0.0, %v1976
  %v1978 = vpop.f32.mrb[0].mxu0
  %1979 = vmatprep.mubr.bf16.mxu0 0
  %1980 = vmatmul.mubr.bf16.gmra.mrb[0].mxu0 %v1727
  %v1981 = vpop.f32.mrb[0].mxu0
  %v1982 = vadd.f32 0.0, %v1981
  %v1983 = vpop.f32.mrb[0].mxu0
  %v1984 = vpop.f32.mrb[0].mxu0
  %v1985 = vadd.f32 0.0, %v1984
  %v1986 = vpop.f32.mrb[0].mxu0
  %1987 = vmatprep.mubr.bf16.mxu0 0
  %1988 = vmatmul.mubr.bf16.gmra.mrb[0].mxu0 %v1730
  %v1989 = vpop.f32.mrb[0].mxu0
  %v1990 = vadd.f32 0.0, %v1989
  %v1991 = vpop.f32.mrb[0].mxu0
  %v1992 = vpop.f32.mrb[0].mxu0
  %v1993 = vadd.f32 0.0, %v1992
  %v1994 = vpop.f32.mrb[0].mxu0
  %1995 = vmatprep.mubr.bf16.mxu0 0
  %1996 = vmatmul.mubr.bf16.gmra.mrb[0].mxu0 %v1733
  %v1997 = vpop.f32.mrb[0].mxu0
  %v1998 = vadd.f32 0.0, %v1997
  %v1999 = vpop.f32.mrb[0].mxu0
  %v2000 = vpop.f32.mrb[0].mxu0
  %v2001 = vadd.f32 0.0, %v2000
  %v2002 = vpop.f32.mrb[0].mxu0
  %2003 = vmatprep.mubr.bf16.mxu0 0
  %2004 = vmatmul.mubr.bf16.gmra.mrb[0].mxu0 %v1736
  %v2005 = vpop.f32.mrb[0].mxu0
  %v2006 = vadd.f32 0.0, %v2005
  %v2007 = vpop.f32.mrb[0].mxu0
  %v2008 = vpop.f32.mrb[0].mxu0
  %v2009 = vadd.f32 0.0, %v2008
  %v2010 = vpop.f32.mrb[0].mxu0
  %2011 = vmatprep.mubr.bf16.mxu0 0
  %2012 = vmatmul.mubr.bf16.gmra.mrb[0].mxu0 %v1739
  %v2013 = vpop.f32.mrb[0].mxu0
  %v2014 = vadd.f32 0.0, %v2013
  %v2015 = vpop.f32.mrb[0].mxu0
  %v2016 = vpop.f32.mrb[0].mxu0
  %v2017 = vadd.f32 0.0, %v2016
  %v2018 = vpop.f32.mrb[0].mxu0
  %2019 = vmatprep.mubr.bf16.mxu0 0
  %2020 = vmatmul.mubr.bf16.gmra.mrb[0].mxu0 %v1742
  %v2021 = vpop.f32.mrb[0].mxu0
  %v2022 = vadd.f32 0.0, %v2021
  %v2023 = vpop.f32.mrb[0].mxu0
  %v2024 = vpop.f32.mrb[0].mxu0
  %v2025 = vadd.f32 0.0, %v2024
  %v2026 = vpop.f32.mrb[0].mxu0
  %2027 = vmatprep.mubr.bf16.mxu0 0
  %2028 = vmatmul.mubr.bf16.gmra.mrb[0].mxu0 %v1745
  %v2029 = vpop.f32.mrb[0].mxu0
  %v2030 = vadd.f32 0.0, %v2029
  %v2031 = vpop.f32.mrb[0].mxu0
  %v2032 = vpop.f32.mrb[0].mxu0
  %v2033 = vadd.f32 0.0, %v2032
  %v2034 = vpop.f32.mrb[0].mxu0
  %2035 = vmatprep.mubr.bf16.mxu0 0
  %2036 = vmatmul.mubr.bf16.gmra.mrb[0].mxu0 %v1748
  %v2037 = vpop.f32.mrb[0].mxu0
  %v2038 = vadd.f32 0.0, %v2037
  %v2039 = vpop.f32.mrb[0].mxu0
  %v2040 = vpop.f32.mrb[0].mxu0
  %v2041 = vadd.f32 0.0, %v2040
  %v2042 = vpop.f32.mrb[0].mxu0
  %2043 = vmatprep.mubr.bf16.mxu0 0
  %2044 = vmatmul.mubr.bf16.gmra.mrb[0].mxu0 %v1751
  %v2045 = vpop.f32.mrb[0].mxu0
  %v2046 = vadd.f32 0.0, %v2045
  %v2047 = vpop.f32.mrb[0].mxu0
  %v2048 = vpop.f32.mrb[0].mxu0
  %v2049 = vadd.f32 0.0, %v2048
  %v2050 = vpop.f32.mrb[0].mxu0
  %2051 = vmatprep.mubr.bf16.mxu0 0
  %2052 = vmatmul.mubr.bf16.gmra.mrb[0].mxu0 %v1754
  %v2053 = vpop.f32.mrb[0].mxu0
  %v2054 = vadd.f32 0.0, %v2053
  %v2055 = vpop.f32.mrb[0].mxu0
  %v2056 = vpop.f32.mrb[0].mxu0
  %v2057 = vadd.f32 0.0, %v2056
  %v2058 = vpop.f32.mrb[0].mxu0
  %2059 = vmatprep.mubr.bf16.mxu0 0
  %2060 = vmatmul.mubr.bf16.gmra.mrb[0].mxu0 %v1757
  %v2061 = vpop.f32.mrb[0].mxu0
  %v2062 = vadd.f32 0.0, %v2061
  %v2063 = vpop.f32.mrb[0].mxu0
  %v2064 = vpop.f32.mrb[0].mxu0
  %v2065 = vadd.f32 0.0, %v2064
  %v2066 = vpop.f32.mrb[0].mxu0
  %2067 = vmatprep.mubr.bf16.mxu0 0
  %2068 = vmatmul.mubr.bf16.gmra.mrb[0].mxu0 %v1760
  %v2069 = vpop.f32.mrb[0].mxu0
  %v2070 = vadd.f32 0.0, %v2069
  %v2071 = vpop.f32.mrb[0].mxu0
  %v2072 = vpop.f32.mrb[0].mxu0
  %v2073 = vadd.f32 0.0, %v2072
  %v2074 = vpop.f32.mrb[0].mxu0
  %2075 = vmatprep.mubr.bf16.mxu0 0
  %2076 = vmatmul.mubr.bf16.gmra.mrb[0].mxu0 %v1763
  %v2077 = vpop.f32.mrb[0].mxu0
  %v2078 = vadd.f32 0.0, %v2077
  %v2079 = vpop.f32.mrb[0].mxu0
  %v2080 = vpop.f32.mrb[0].mxu0
  %v2081 = vadd.f32 0.0, %v2080
  %v2082 = vpop.f32.mrb[0].mxu0
  %2083 = vmatprep.mubr.bf16.mxu0 0
  %2084 = vmatmul.mubr.bf16.gmra.mrb[0].mxu0 %v1766
  %v2085 = vpop.f32.mrb[0].mxu0
  %v2086 = vadd.f32 0.0, %v2085
  %v2087 = vpop.f32.mrb[0].mxu0
  %v2088 = vpop.f32.mrb[0].mxu0
  %v2089 = vadd.f32 0.0, %v2088
  %v2090 = vpop.f32.mrb[0].mxu0
  %2091 = vmatprep.mubr.bf16.mxu0 0
  %2092 = vmatmul.mubr.bf16.gmra.mrb[0].mxu0 %v1769
  %v2093 = vpop.f32.mrb[0].mxu0
  %v2094 = vadd.f32 0.0, %v2093
  %v2095 = vpop.f32.mrb[0].mxu0
  %v2096 = vpop.f32.mrb[0].mxu0
  %v2097 = vadd.f32 0.0, %v2096
  %v2098 = vpop.f32.mrb[0].mxu0
  %2099 = vmatprep.mubr.bf16.mxu0 0
  %2100 = vmatmul.mubr.bf16.gmra.mrb[0].mxu0 %v1772
  %v2101 = vpop.f32.mrb[0].mxu0
  %v2102 = vadd.f32 0.0, %v2101
  %v2103 = vpop.f32.mrb[0].mxu0
  %v2104 = vpop.f32.mrb[0].mxu0
  %v2105 = vadd.f32 0.0, %v2104
  %v2106 = vpop.f32.mrb[0].mxu0
  %2107 = vmatprep.mubr.bf16.mxu0 0
  %2108 = vmatmul.mubr.bf16.gmra.mrb[0].mxu0 %v1775
  %v2109 = vpop.f32.mrb[0].mxu0
  %v2110 = vadd.f32 0.0, %v2109
  %v2111 = vpop.f32.mrb[0].mxu0
  %v2112 = vpop.f32.mrb[0].mxu0
  %v2113 = vadd.f32 0.0, %v2112
  %v2114 = vpop.f32.mrb[0].mxu0
  %2115 = vmatprep.mubr.bf16.mxu0 0
  %2116 = vmatmul.mubr.bf16.gmra.mrb[0].mxu0 %v1778
  %v2117 = vpop.f32.mrb[0].mxu0
  %v2118 = vadd.f32 0.0, %v2117
  %v2119 = vpop.f32.mrb[0].mxu0
  %v2120 = vpop.f32.mrb[0].mxu0
  %v2121 = vadd.f32 0.0, %v2120
  %v2122 = vpop.f32.mrb[0].mxu0
  %2123 = vmatprep.mubr.bf16.mxu0 0
  %2124 = vmatmul.mubr.bf16.gmra.mrb[0].mxu0 %v1781
  %v2125 = vpop.f32.mrb[0].mxu0
  %v2126 = vadd.f32 0.0, %v2125
  %v2127 = vpop.f32.mrb[0].mxu0
  %v2128 = vpop.f32.mrb[0].mxu0
  %v2129 = vadd.f32 0.0, %v2128
  %v2130 = vpop.f32.mrb[0].mxu0
  %2131 = vmatprep.mubr.bf16.mxu0 0
  %2132 = vmatmul.mubr.bf16.gmra.mrb[0].mxu0 %v1784
  %v2133 = vpop.f32.mrb[0].mxu0
  %v2134 = vadd.f32 0.0, %v2133
  %v2135 = vpop.f32.mrb[0].mxu0
  %v2136 = vpop.f32.mrb[0].mxu0
  %v2137 = vadd.f32 0.0, %v2136
  %v2138 = vpop.f32.mrb[0].mxu0
  %2139 = vmatprep.mubr.bf16.mxu0 0
  %2140 = vmatmul.mubr.bf16.gmra.mrb[0].mxu0 %v1787
  %v2141 = vpop.f32.mrb[0].mxu0
  %v2142 = vadd.f32 0.0, %v2141
  %v2143 = vpop.f32.mrb[0].mxu0
  %v2144 = vpop.f32.mrb[0].mxu0
  %v2145 = vadd.f32 0.0, %v2144
  %v2146 = vpop.f32.mrb[0].mxu0
  %2147 = vmatprep.mubr.bf16.mxu0 0
  %2148 = vmatmul.mubr.bf16.gmra.mrb[0].mxu0 %v1790
  %v2149 = vpop.f32.mrb[0].mxu0
  %v2150 = vadd.f32 0.0, %v2149
  %v2151 = vpop.f32.mrb[0].mxu0
  %v2152 = vpop.f32.mrb[0].mxu0
  %v2153 = vpop.f32.mrb[0].mxu0
  %2154 = vdwg.mxu0
  %v2155 = vadd.f32 %v1253, %v1830
  %v2156 = vadd.f32 %v1256, %v1833
  %v2157 = vadd.f32 %v1261, %v1838
  %v2158 = vadd.f32 %v1264, %v1841
  %v2159 = vadd.f32 %v1269, %v1846
  %v2160 = vadd.f32 %v1272, %v1849
  %v2161 = vadd.f32 %v1277, %v1854
  %v2162 = vadd.f32 %v1280, %v1857
  %v2163 = vadd.f32 %v1285, %v1862
  %v2164 = vadd.f32 %v1288, %v1865
  %v2165 = vadd.f32 %v1293, %v1870
  %v2166 = vadd.f32 %v1296, %v1873
  %v2167 = vadd.f32 %v1301, %v1878
  %v2168 = vadd.f32 %v1304, %v1881
  %v2169 = vadd.f32 %v1309, %v1886
  %v2170 = vadd.f32 %v1312, %v1889
  %v2171 = vadd.f32 %v1317, %v1894
  %v2172 = vadd.f32 %v1320, %v1897
  %v2173 = vadd.f32 %v1325, %v1902
  %v2174 = vadd.f32 %v1328, %v1905
  %v2175 = vadd.f32 %v1333, %v1910
  %v2176 = vadd.f32 %v1336, %v1913
  %v2177 = vadd.f32 %v1341, %v1918
  %v2178 = vadd.f32 %v1344, %v1921
  %v2179 = vadd.f32 %v1349, %v1926
  %v2180 = vadd.f32 %v1352, %v1929
  %v2181 = vadd.f32 %v1357, %v1934
  %v2182 = vadd.f32 %v1360, %v1937
  %v2183 = vadd.f32 %v1365, %v1942
  %v2184 = vadd.f32 %v1368, %v1945
  %v2185 = vadd.f32 %v1373, %v1950
  %v2186 = vadd.f32 %v1376, %v1953
  %v2187 = vadd.f32 %v1381, %v1958
  %v2188 = vadd.f32 %v1384, %v1961
  %v2189 = vadd.f32 %v1389, %v1966
  %v2190 = vadd.f32 %v1392, %v1969
  %v2191 = vadd.f32 %v1397, %v1974
  %v2192 = vadd.f32 %v1400, %v1977
  %v2193 = vadd.f32 %v1405, %v1982
  %v2194 = vadd.f32 %v1408, %v1985
  %v2195 = vadd.f32 %v1413, %v1990
  %v2196 = vadd.f32 %v1416, %v1993
  %v2197 = vadd.f32 %v1421, %v1998
  %v2198 = vadd.f32 %v1424, %v2001
  %v2199 = vadd.f32 %v1429, %v2006
  %v2200 = vadd.f32 %v1432, %v2009
  %v2201 = vadd.f32 %v1437, %v2014
  %v2202 = vadd.f32 %v1440, %v2017
  %v2203 = vadd.f32 %v1445, %v2022
  %v2204 = vadd.f32 %v1448, %v2025
  %v2205 = vadd.f32 %v1453, %v2030
  %v2206 = vadd.f32 %v1456, %v2033
  %v2207 = vadd.f32 %v1461, %v2038
  %v2208 = vadd.f32 %v1464, %v2041
  %v2209 = vadd.f32 %v1469, %v2046
  %v2210 = vadd.f32 %v1472, %v2049
  %v2211 = vadd.f32 %v1477, %v2054
  %v2212 = vadd.f32 %v1480, %v2057
  %v2213 = vadd.f32 %v1485, %v2062
  %v2214 = vadd.f32 %v1488, %v2065
  %v2215 = vadd.f32 %v1493, %v2070
  %v2216 = vadd.f32 %v1496, %v2073
  %v2217 = vadd.f32 %v1501, %v2078
  %v2218 = vadd.f32 %v1504, %v2081
  %v2219 = vadd.f32 %v1509, %v2086
  %v2220 = vadd.f32 %v1512, %v2089
  %v2221 = vadd.f32 %v1517, %v2094
  %v2222 = vadd.f32 %v1520, %v2097
  %v2223 = vadd.f32 %v1525, %v2102
  %v2224 = vadd.f32 %v1528, %v2105
  %v2225 = vadd.f32 %v1533, %v2110
  %v2226 = vadd.f32 %v1536, %v2113
  %v2227 = vadd.f32 %v1541, %v2118
  %v2228 = vadd.f32 %v1544, %v2121
  %v2229 = vadd.f32 %v1549, %v2126
  %v2230 = vadd.f32 %v1552, %v2129
  %v2231 = vadd.f32 %v1557, %v2134
  %v2232 = vadd.f32 %v1560, %v2137
  %v2233 = vadd.f32 %v1565, %v2142
  %v2234 = vadd.f32 %v1568, %v2145
  %v2235 = vadd.f32 %v1573, %v2150
  %v2236 = vld [vmem:[%s0 + $0x8] sm:$0xe]
  %v2237 = vld [vmem:[%s0 + $0xc] sm:$0xf]
  %v2238 = vld [vmem:[%s0 + $0x10] sm:$0xf]
  %v2239 = vld [vmem:[%s0 + $0x14] sm:$0xf]
  %v2240 = vld [vmem:[%s0 + $0x18] sm:$0xf]
  %v2241 = vld [vmem:[%s0 + $0x1c] sm:$0xf]
  %v2242 = vld [vmem:[%s0 + $0x20] sm:$0xf]
  %v2243 = vld [vmem:[%s0 + $0x24] sm:$0xf]
  %v2244 = vld [vmem:[%s0 + $0x28] sm:$0xf]
  %v2245 = vld [vmem:[%s0 + $0x2c] sm:$0xf]
  %v2246 = vld [vmem:[%s0 + $0x30] sm:$0xf]
  %v2247 = vld [vmem:[%s0 + $0x34] sm:$0xf]
  %v2248 = vld [vmem:[%s0 + $0x38] sm:$0xf]
  %v2249 = vld [vmem:[%s0 + $0x3c] sm:$0xf]
  %v2250 = vld [vmem:[%s0 + $0x40] sm:$0xf]
  %v2251 = vld [vmem:[%s0 + $0x44] sm:$0xf]
  %v2252 = vld [vmem:[%s0 + $0x48] sm:$0xf]
  %v2253 = vld [vmem:[%s0 + $0x4c] sm:$0xf]
  %v2254 = vld [vmem:[%s0 + $0x50] sm:$0xf]
  %v2255 = vld [vmem:[%s0 + $0x54] sm:$0xf]
  %v2256 = vld [vmem:[%s0 + $0x58] sm:$0xf]
  %v2257 = vld [vmem:[%s0 + $0x5c] sm:$0xf]
  %v2258 = vld [vmem:[%s0 + $0x60] sm:$0xf]
  %v2259 = vld [vmem:[%s0 + $0x64] sm:$0xf]
  %v2260 = vld [vmem:[%s0 + $0x68] sm:$0xf]
  %v2261 = vld [vmem:[%s0 + $0x6c] sm:$0xf]
  %v2262 = vld [vmem:[%s0 + $0x70] sm:$0xf]
  %v2263 = vld [vmem:[%s0 + $0x74] sm:$0xf]
  %v2264 = vld [vmem:[%s0 + $0x78] sm:$0xf]
  %v2265 = vld [vmem:[%s0 + $0x7c] sm:$0xf]
  %v2266 = vld [vmem:[%s0 + $0x80] sm:$0xf]
  %v2267 = vld [vmem:[%s0 + $0x84] sm:$0xf]
  %v2268 = vld [vmem:[%s0 + $0x88] sm:$0xf]
  %v2269 = vld [vmem:[%s0 + $0x8c] sm:$0xf]
  %v2270 = vld [vmem:[%s0 + $0x90] sm:$0xf]
  %v2271 = vld [vmem:[%s0 + $0x94] sm:$0xf]
  %v2272 = vld [vmem:[%s0 + $0x98] sm:$0xf]
  %v2273 = vld [vmem:[%s0 + $0x9c] sm:$0xf]
  %v2274 = vld [vmem:[%s0 + $0xa0] sm:$0xf]
  %v2275 = vld [vmem:[%s0 + $0xa4] sm:$0xf]
  %v2276 = vld [vmem:[%s0 + $0xa8] sm:$0xf]
  %v2277 = vld [vmem:[%s0 + $0xac] sm:$0xf]
  %v2278 = vld [vmem:[%s0 + $0xb0] sm:$0xf]
  %v2279 = vld [vmem:[%s0 + $0xb4] sm:$0xf]
  %v2280 = vld [vmem:[%s0 + $0xb8] sm:$0xf]
  %v2281 = vld [vmem:[%s0 + $0xbc] sm:$0xf]
  %v2282 = vld [vmem:[%s0 + $0xc0] sm:$0xf]
  %v2283 = vld [vmem:[%s0 + $0xc4] sm:$0xf]
  %v2284 = vld [vmem:[%s0 + $0xc8] sm:$0xf]
  %v2285 = vld [vmem:[%s0 + $0xcc] sm:$0xf]
  %v2286 = vld [vmem:[%s0 + $0xd0] sm:$0xf]
  %v2287 = vld [vmem:[%s0 + $0xd4] sm:$0xf]
  %v2288 = vld [vmem:[%s0 + $0xd8] sm:$0xf]
  %v2289 = vld [vmem:[%s0 + $0xdc] sm:$0xf]
  %v2290 = vld [vmem:[%s0 + $0xe0] sm:$0xf]
  %v2291 = vld [vmem:[%s0 + $0xe4] sm:$0xf]
  %v2292 = vld [vmem:[%s0 + $0xe8] sm:$0xf]
  %v2293 = vld [vmem:[%s0 + $0xec] sm:$0xf]
  %v2294 = vld [vmem:[%s0 + $0xf0] sm:$0xf]
  %v2295 = vld [vmem:[%s0 + $0xf4] sm:$0xf]
  %v2296 = vld [vmem:[%s0 + $0xf8] sm:$0xf]
  %v2297 = vld [vmem:[%s0 + $0xfc] sm:$0xf]
  %v2298 = vld [vmem:[%s0 + $0x100] sm:$0xf]
  %v2299 = vld [vmem:[%s0 + $0x104] sm:$0xf]
  %v2300 = vld [vmem:[%s0 + $0x108] sm:$0xf]
  %v2301 = vld [vmem:[%s0 + $0x10c] sm:$0xf]
  %v2302 = vld [vmem:[%s0 + $0x110] sm:$0xf]
  %v2303 = vld [vmem:[%s0 + $0x114] sm:$0xf]
  %v2304 = vld [vmem:[%s0 + $0x118] sm:$0xf]
  %v2305 = vld [vmem:[%s0 + $0x11c] sm:$0xf]
  %v2306 = vld [vmem:[%s0 + $0x120] sm:$0xf]
  %v2307 = vld [vmem:[%s0 + $0x124] sm:$0xf]
  %v2308 = vld [vmem:[%s0 + $0x128] sm:$0xf]
  %v2309 = vld [vmem:[%s0 + $0x12c] sm:$0xf]
  %v2310 = vld [vmem:[%s0 + $0x130] sm:$0xf]
  %v2311 = vld [vmem:[%s0 + $0x134] sm:$0xf]
  %v2312 = vld [vmem:[%s0 + $0x138] sm:$0xf]
  %v2313 = vld [vmem:[%s0 + $0x13c] sm:$0xf]
  %v2314 = vld [vmem:[%s0 + $0x140] sm:$0xf]
  %v2315 = vld [vmem:[%s0 + $0x144] sm:$0xf]
  %v2316 = vld [vmem:[%s0 + $0x148] sm:$0xf]
  %v2317 = vld [vmem:[%s0 + $0x14c] sm:$0x1]
  %v2318 = vld [vmem:[%s2 + $0x38] sm:$0x8]
  %v2319 = vld [vmem:[%s2 + $0x40] sm:$0x1]
  %v2402 = vunpack.c.l.b16 %v2236
  %v2403 = vunpack.c.l.b16 %v2237
  %v2404 = vunpack.c.l.b16 %v2238
  %v2405 = vunpack.c.l.b16 %v2239
  %v2406 = vunpack.c.l.b16 %v2240
  %v2407 = vunpack.c.l.b16 %v2241
  %v2408 = vunpack.c.l.b16 %v2242
  %v2409 = vunpack.c.l.b16 %v2243
  %v2410 = vunpack.c.l.b16 %v2244
  %v2411 = vunpack.c.l.b16 %v2245
  %v2412 = vunpack.c.l.b16 %v2246
  %v2413 = vunpack.c.l.b16 %v2247
  %v2414 = vunpack.c.l.b16 %v2248
  %v2415 = vunpack.c.l.b16 %v2249
  %v2416 = vunpack.c.l.b16 %v2250
  %v2417 = vunpack.c.l.b16 %v2251
  %v2418 = vunpack.c.l.b16 %v2252
  %v2419 = vunpack.c.l.b16 %v2253
  %v2420 = vunpack.c.l.b16 %v2254
  %v2421 = vunpack.c.l.b16 %v2255
  %v2422 = vunpack.c.l.b16 %v2256
  %v2423 = vunpack.c.l.b16 %v2257
  %v2424 = vunpack.c.l.b16 %v2258
  %v2425 = vunpack.c.l.b16 %v2259
  %v2426 = vunpack.c.l.b16 %v2260
  %v2427 = vunpack.c.l.b16 %v2261
  %v2428 = vunpack.c.l.b16 %v2262
  %v2429 = vunpack.c.l.b16 %v2263
  %v2430 = vunpack.c.l.b16 %v2264
  %v2431 = vunpack.c.l.b16 %v2265
  %v2432 = vunpack.c.l.b16 %v2266
  %v2433 = vunpack.c.l.b16 %v2267
  %v2434 = vunpack.c.l.b16 %v2268
  %v2435 = vunpack.c.l.b16 %v2269
  %v2436 = vunpack.c.l.b16 %v2270
  %v2437 = vunpack.c.l.b16 %v2271
  %v2438 = vunpack.c.l.b16 %v2272
  %v2439 = vunpack.c.l.b16 %v2273
  %v2440 = vunpack.c.l.b16 %v2274
  %v2441 = vunpack.c.l.b16 %v2275
  %v2442 = vunpack.c.l.b16 %v2276
  %v2443 = vunpack.c.l.b16 %v2277
  %v2444 = vunpack.c.l.b16 %v2278
  %v2445 = vunpack.c.l.b16 %v2279
  %v2446 = vunpack.c.l.b16 %v2280
  %v2447 = vunpack.c.l.b16 %v2281
  %v2448 = vunpack.c.l.b16 %v2282
  %v2449 = vunpack.c.l.b16 %v2283
  %v2450 = vunpack.c.l.b16 %v2284
  %v2451 = vunpack.c.l.b16 %v2285
  %v2452 = vunpack.c.l.b16 %v2286
  %v2453 = vunpack.c.l.b16 %v2287
  %v2454 = vunpack.c.l.b16 %v2288
  %v2455 = vunpack.c.l.b16 %v2289
  %v2456 = vunpack.c.l.b16 %v2290
  %v2457 = vunpack.c.l.b16 %v2291
  %v2458 = vunpack.c.l.b16 %v2292
  %v2459 = vunpack.c.l.b16 %v2293
  %v2460 = vunpack.c.l.b16 %v2294
  %v2461 = vunpack.c.l.b16 %v2295
  %v2462 = vunpack.c.l.b16 %v2296
  %v2463 = vunpack.c.l.b16 %v2297
  %v2464 = vunpack.c.l.b16 %v2298
  %v2465 = vunpack.c.l.b16 %v2299
  %v2466 = vunpack.c.l.b16 %v2300
  %v2467 = vunpack.c.l.b16 %v2301
  %v2468 = vunpack.c.l.b16 %v2302
  %v2469 = vunpack.c.l.b16 %v2303
  %v2470 = vunpack.c.l.b16 %v2304
  %v2471 = vunpack.c.l.b16 %v2305
  %v2472 = vunpack.c.l.b16 %v2306
  %v2473 = vunpack.c.l.b16 %v2307
  %v2474 = vunpack.c.l.b16 %v2308
  %v2475 = vunpack.c.l.b16 %v2309
  %v2476 = vunpack.c.l.b16 %v2310
  %v2477 = vunpack.c.l.b16 %v2311
  %v2478 = vunpack.c.l.b16 %v2312
  %v2479 = vunpack.c.l.b16 %v2313
  %v2480 = vunpack.c.l.b16 %v2314
  %v2481 = vunpack.c.l.b16 %v2315
  %v2482 = vunpack.c.l.b16 %v2316
  %v2483 = vunpack.c.l.b16 %v2317
  %v2484 = vpack.c.b16 %v2403, %v2402
  %v2485 = vpack.c.b16 %v2405, %v2404
  %v2486 = vpack.c.b16 %v2407, %v2406
  %v2487 = vpack.c.b16 %v2409, %v2408
  %v2488 = vpack.c.b16 %v2411, %v2410
  %v2489 = vpack.c.b16 %v2413, %v2412
  %v2490 = vpack.c.b16 %v2415, %v2414
  %v2491 = vpack.c.b16 %v2417, %v2416
  %v2492 = vpack.c.b16 %v2419, %v2418
  %v2493 = vpack.c.b16 %v2421, %v2420
  %v2494 = vpack.c.b16 %v2423, %v2422
  %v2495 = vpack.c.b16 %v2425, %v2424
  %v2496 = vpack.c.b16 %v2427, %v2426
  %v2497 = vpack.c.b16 %v2429, %v2428
  %v2498 = vpack.c.b16 %v2431, %v2430
  %v2499 = vpack.c.b16 %v2433, %v2432
  %v2500 = vpack.c.b16 %v2435, %v2434
  %v2501 = vpack.c.b16 %v2437, %v2436
  %v2502 = vpack.c.b16 %v2439, %v2438
  %v2503 = vpack.c.b16 %v2441, %v2440
  %v2504 = vpack.c.b16 %v2443, %v2442
  %v2505 = vpack.c.b16 %v2445, %v2444
  %v2506 = vpack.c.b16 %v2447, %v2446
  %v2507 = vpack.c.b16 %v2449, %v2448
  %v2508 = vpack.c.b16 %v2451, %v2450
  %v2509 = vpack.c.b16 %v2453, %v2452
  %v2510 = vpack.c.b16 %v2455, %v2454
  %v2511 = vpack.c.b16 %v2457, %v2456
  %v2512 = vpack.c.b16 %v2459, %v2458
  %v2513 = vpack.c.b16 %v2461, %v2460
  %v2514 = vpack.c.b16 %v2463, %v2462
  %v2515 = vpack.c.b16 %v2465, %v2464
  %v2516 = vpack.c.b16 %v2467, %v2466
  %v2517 = vpack.c.b16 %v2469, %v2468
  %v2518 = vpack.c.b16 %v2471, %v2470
  %v2519 = vpack.c.b16 %v2473, %v2472
  %v2520 = vpack.c.b16 %v2475, %v2474
  %v2521 = vpack.c.b16 %v2477, %v2476
  %v2522 = vpack.c.b16 %v2479, %v2478
  %v2523 = vpack.c.b16 %v2481, %v2480
  %v2524 = vpack.c.b16 %v2483, %v2482
  %v2525 = vrot.slane %v2484, 1
  %v2526 = vrot.slane %v2485, 1
  %v2527 = vsel %vm1583, %v2525, %v2526
  %v2528 = vrot.slane %v2486, 1
  %v2529 = vsel %vm1583, %v2526, %v2528
  %v2530 = vrot.slane %v2487, 1
  %v2531 = vsel %vm1583, %v2528, %v2530
  %v2532 = vrot.slane %v2488, 1
  %v2533 = vsel %vm1583, %v2530, %v2532
  %v2534 = vrot.slane %v2489, 1
  %v2535 = vsel %vm1583, %v2532, %v2534
  %v2536 = vrot.slane %v2490, 1
  %v2537 = vsel %vm1583, %v2534, %v2536
  %v2538 = vrot.slane %v2491, 1
  %v2539 = vsel %vm1583, %v2536, %v2538
  %v2540 = vrot.slane %v2492, 1
  %v2541 = vsel %vm1583, %v2538, %v2540
  %v2542 = vrot.slane %v2493, 1
  %v2543 = vsel %vm1583, %v2540, %v2542
  %v2544 = vrot.slane %v2494, 1
  %v2545 = vsel %vm1583, %v2542, %v2544
  %v2546 = vrot.slane %v2495, 1
  %v2547 = vsel %vm1583, %v2544, %v2546
  %v2548 = vrot.slane %v2496, 1
  %v2549 = vsel %vm1583, %v2546, %v2548
  %v2550 = vrot.slane %v2497, 1
  %v2551 = vsel %vm1583, %v2548, %v2550
  %v2552 = vrot.slane %v2498, 1
  %v2553 = vsel %vm1583, %v2550, %v2552
  %v2554 = vrot.slane %v2499, 1
  %v2555 = vsel %vm1583, %v2552, %v2554
  %v2556 = vrot.slane %v2500, 1
  %v2557 = vsel %vm1583, %v2554, %v2556
  %v2558 = vrot.slane %v2501, 1
  %v2559 = vsel %vm1583, %v2556, %v2558
  %v2560 = vrot.slane %v2502, 1
  %v2561 = vsel %vm1583, %v2558, %v2560
  %v2562 = vrot.slane %v2503, 1
  %v2563 = vsel %vm1583, %v2560, %v2562
  %v2564 = vrot.slane %v2504, 1
  %v2565 = vsel %vm1583, %v2562, %v2564
  %v2566 = vrot.slane %v2505, 1
  %v2567 = vsel %vm1583, %v2564, %v2566
  %v2568 = vrot.slane %v2506, 1
  %v2569 = vsel %vm1583, %v2566, %v2568
  %v2570 = vrot.slane %v2507, 1
  %v2571 = vsel %vm1583, %v2568, %v2570
  %v2572 = vrot.slane %v2508, 1
  %v2573 = vsel %vm1583, %v2570, %v2572
  %v2574 = vrot.slane %v2509, 1
  %v2575 = vsel %vm1583, %v2572, %v2574
  %v2576 = vrot.slane %v2510, 1
  %v2577 = vsel %vm1583, %v2574, %v2576
  %v2578 = vrot.slane %v2511, 1
  %v2579 = vsel %vm1583, %v2576, %v2578
  %v2580 = vrot.slane %v2512, 1
  %v2581 = vsel %vm1583, %v2578, %v2580
  %v2582 = vrot.slane %v2513, 1
  %v2583 = vsel %vm1583, %v2580, %v2582
  %v2584 = vrot.slane %v2514, 1
  %v2585 = vsel %vm1583, %v2582, %v2584
  %v2586 = vrot.slane %v2515, 1
  %v2587 = vsel %vm1583, %v2584, %v2586
  %v2588 = vrot.slane %v2516, 1
  %v2589 = vsel %vm1583, %v2586, %v2588
  %v2590 = vrot.slane %v2517, 1
  %v2591 = vsel %vm1583, %v2588, %v2590
  %v2592 = vrot.slane %v2518, 1
  %v2593 = vsel %vm1583, %v2590, %v2592
  %v2594 = vrot.slane %v2519, 1
  %v2595 = vsel %vm1583, %v2592, %v2594
  %v2596 = vrot.slane %v2520, 1
  %v2597 = vsel %vm1583, %v2594, %v2596
  %v2598 = vrot.slane %v2521, 1
  %v2599 = vsel %vm1583, %v2596, %v2598
  %v2600 = vrot.slane %v2522, 1
  %v2601 = vsel %vm1583, %v2598, %v2600
  %v2602 = vrot.slane %v2523, 1
  %v2603 = vsel %vm1583, %v2600, %v2602
  %v2604 = vrot.slane %v2524, 1
  %v2605 = vsel %vm1583, %v2602, %v2604
  %v2608 = vunpack.c.l.b16 %v2318
  %v2609 = vunpack.c.l.b16 %v2319
  %v2610 = vpack.c.b16 %v2609, %v2608
  %v2611 = vrot.slane %v2610, 3
  %v2613 = vsel %vm639, %v2527, 0
  %v2616 = vsel %vm639, %v2529, 0
  %v2619 = vsel %vm639, %v2531, 0
  %v2622 = vsel %vm639, %v2533, 0
  %v2625 = vsel %vm639, %v2535, 0
  %v2628 = vsel %vm639, %v2537, 0
  %v2631 = vsel %vm639, %v2539, 0
  %v2634 = vsel %vm639, %v2541, 0
  %v2637 = vsel %vm639, %v2543, 0
  %v2640 = vsel %vm639, %v2545, 0
  %v2643 = vsel %vm639, %v2547, 0
  %v2646 = vsel %vm639, %v2549, 0
  %v2649 = vsel %vm639, %v2551, 0
  %v2652 = vsel %vm639, %v2553, 0
  %v2655 = vsel %vm639, %v2555, 0
  %v2658 = vsel %vm639, %v2557, 0
  %v2661 = vsel %vm639, %v2559, 0
  %v2664 = vsel %vm639, %v2561, 0
  %v2667 = vsel %vm639, %v2563, 0
  %v2670 = vsel %vm639, %v2565, 0
  %v2673 = vsel %vm639, %v2567, 0
  %v2676 = vsel %vm639, %v2569, 0
  %v2679 = vsel %vm639, %v2571, 0
  %v2682 = vsel %vm639, %v2573, 0
  %v2685 = vsel %vm639, %v2575, 0
  %v2688 = vsel %vm639, %v2577, 0
  %v2691 = vsel %vm639, %v2579, 0
  %v2694 = vsel %vm639, %v2581, 0
  %v2697 = vsel %vm639, %v2583, 0
  %v2700 = vsel %vm639, %v2585, 0
  %v2703 = vsel %vm639, %v2587, 0
  %v2706 = vsel %vm639, %v2589, 0
  %v2709 = vsel %vm639, %v2591, 0
  %v2712 = vsel %vm639, %v2593, 0
  %v2715 = vsel %vm639, %v2595, 0
  %v2718 = vsel %vm639, %v2597, 0
  %v2721 = vsel %vm639, %v2599, 0
  %v2724 = vsel %vm639, %v2601, 0
  %v2727 = vsel %vm639, %v2603, 0
  %v2730 = vsel %vm639, %v2605, 0
  %v2733 = vsel %vm639, %v2604, 0
  %v2736 = vsel %vm763, %v2611, 0
  %2738 = vmatprep.subr.bf16.mxu0 0
  %2739 = vmatpush1.bf16.msra.mxu0 %v2736
  %2740 = vmatprep.subr.bf16.mxu0 0
  %2741 = vmatpush1.bf16.msra.mxu0 0
  %2742 = vmatprep.subr.bf16.mxu0 0
  %2743 = vmatpush1.bf16.msra.mxu0 0
  %2744 = vmatprep.subr.bf16.mxu0 0
  %2745 = vmatpush1.bf16.msra.mxu0 0
  %2746 = vmatprep.subr.bf16.mxu0 0
  %2747 = vmatpush1.bf16.msra.mxu0 0
  %2748 = vmatprep.subr.bf16.mxu0 0
  %2749 = vmatpush1.bf16.msra.mxu0 0
  %2750 = vmatprep.subr.bf16.mxu0 0
  %2751 = vmatpush1.bf16.msra.mxu0 0
  %2752 = vmatprep.subr.bf16.mxu0 0
  %2753 = vmatpush1.bf16.msra.mxu0 0
  %2754 = vmatprep.subr.bf16.mxu0 0
  %2755 = vmatpush1.bf16.msra.mxu0 0
  %2756 = vmatprep.subr.bf16.mxu0 0
  %2757 = vmatpush1.bf16.msra.mxu0 0
  %2758 = vmatprep.subr.bf16.mxu0 0
  %2759 = vmatpush1.bf16.msra.mxu0 0
  %2760 = vmatprep.subr.bf16.mxu0 0
  %2761 = vmatpush1.bf16.msra.mxu0 0
  %2762 = vmatprep.subr.bf16.mxu0 0
  %2763 = vmatpush1.bf16.msra.mxu0 0
  %2764 = vmatprep.subr.bf16.mxu0 0
  %2765 = vmatpush1.bf16.msra.mxu0 0
  %2766 = vmatprep.subr.bf16.mxu0 0
  %2767 = vmatpush1.bf16.msra.mxu0 0
  %2768 = vmatprep.subr.bf16.mxu0 0
  %2769 = vmatpush1.bf16.msra.mxu0 0
  %2770 = vmatprep.mubr.bf16.mxu0 0
  %2771 = vmatmul.mubr.bf16.gmra.mrb[0].mxu0 %v2613
  %v2772 = vpop.f32.mrb[0].mxu0
  %v2773 = vadd.f32 0.0, %v2772
  %v2774 = vpop.f32.mrb[0].mxu0
  %v2775 = vpop.f32.mrb[0].mxu0
  %v2776 = vadd.f32 0.0, %v2775
  %v2777 = vpop.f32.mrb[0].mxu0
  %2778 = vmatprep.mubr.bf16.mxu0 0
  %2779 = vmatmul.mubr.bf16.gmra.mrb[0].mxu0 %v2616
  %v2780 = vpop.f32.mrb[0].mxu0
  %v2781 = vadd.f32 0.0, %v2780
  %v2782 = vpop.f32.mrb[0].mxu0
  %v2783 = vpop.f32.mrb[0].mxu0
  %v2784 = vadd.f32 0.0, %v2783
  %v2785 = vpop.f32.mrb[0].mxu0
  %2786 = vmatprep.mubr.bf16.mxu0 0
  %2787 = vmatmul.mubr.bf16.gmra.mrb[0].mxu0 %v2619
  %v2788 = vpop.f32.mrb[0].mxu0
  %v2789 = vadd.f32 0.0, %v2788
  %v2790 = vpop.f32.mrb[0].mxu0
  %v2791 = vpop.f32.mrb[0].mxu0
  %v2792 = vadd.f32 0.0, %v2791
  %v2793 = vpop.f32.mrb[0].mxu0
  %2794 = vmatprep.mubr.bf16.mxu0 0
  %2795 = vmatmul.mubr.bf16.gmra.mrb[0].mxu0 %v2622
  %v2796 = vpop.f32.mrb[0].mxu0
  %v2797 = vadd.f32 0.0, %v2796
  %v2798 = vpop.f32.mrb[0].mxu0
  %v2799 = vpop.f32.mrb[0].mxu0
  %v2800 = vadd.f32 0.0, %v2799
  %v2801 = vpop.f32.mrb[0].mxu0
  %2802 = vmatprep.mubr.bf16.mxu0 0
  %2803 = vmatmul.mubr.bf16.gmra.mrb[0].mxu0 %v2625
  %v2804 = vpop.f32.mrb[0].mxu0
  %v2805 = vadd.f32 0.0, %v2804
  %v2806 = vpop.f32.mrb[0].mxu0
  %v2807 = vpop.f32.mrb[0].mxu0
  %v2808 = vadd.f32 0.0, %v2807
  %v2809 = vpop.f32.mrb[0].mxu0
  %2810 = vmatprep.mubr.bf16.mxu0 0
  %2811 = vmatmul.mubr.bf16.gmra.mrb[0].mxu0 %v2628
  %v2812 = vpop.f32.mrb[0].mxu0
  %v2813 = vadd.f32 0.0, %v2812
  %v2814 = vpop.f32.mrb[0].mxu0
  %v2815 = vpop.f32.mrb[0].mxu0
  %v2816 = vadd.f32 0.0, %v2815
  %v2817 = vpop.f32.mrb[0].mxu0
  %2818 = vmatprep.mubr.bf16.mxu0 0
  %2819 = vmatmul.mubr.bf16.gmra.mrb[0].mxu0 %v2631
  %v2820 = vpop.f32.mrb[0].mxu0
  %v2821 = vadd.f32 0.0, %v2820
  %v2822 = vpop.f32.mrb[0].mxu0
  %v2823 = vpop.f32.mrb[0].mxu0
  %v2824 = vadd.f32 0.0, %v2823
  %v2825 = vpop.f32.mrb[0].mxu0
  %2826 = vmatprep.mubr.bf16.mxu0 0
  %2827 = vmatmul.mubr.bf16.gmra.mrb[0].mxu0 %v2634
  %v2828 = vpop.f32.mrb[0].mxu0
  %v2829 = vadd.f32 0.0, %v2828
  %v2830 = vpop.f32.mrb[0].mxu0
  %v2831 = vpop.f32.mrb[0].mxu0
  %v2832 = vadd.f32 0.0, %v2831
  %v2833 = vpop.f32.mrb[0].mxu0
  %2834 = vmatprep.mubr.bf16.mxu0 0
  %2835 = vmatmul.mubr.bf16.gmra.mrb[0].mxu0 %v2637
  %v2836 = vpop.f32.mrb[0].mxu0
  %v2837 = vadd.f32 0.0, %v2836
  %v2838 = vpop.f32.mrb[0].mxu0
  %v2839 = vpop.f32.mrb[0].mxu0
  %v2840 = vadd.f32 0.0, %v2839
  %v2841 = vpop.f32.mrb[0].mxu0
  %2842 = vmatprep.mubr.bf16.mxu0 0
  %2843 = vmatmul.mubr.bf16.gmra.mrb[0].mxu0 %v2640
  %v2844 = vpop.f32.mrb[0].mxu0
  %v2845 = vadd.f32 0.0, %v2844
  %v2846 = vpop.f32.mrb[0].mxu0
  %v2847 = vpop.f32.mrb[0].mxu0
  %v2848 = vadd.f32 0.0, %v2847
  %v2849 = vpop.f32.mrb[0].mxu0
  %2850 = vmatprep.mubr.bf16.mxu0 0
  %2851 = vmatmul.mubr.bf16.gmra.mrb[0].mxu0 %v2643
  %v2852 = vpop.f32.mrb[0].mxu0
  %v2853 = vadd.f32 0.0, %v2852
  %v2854 = vpop.f32.mrb[0].mxu0
  %v2855 = vpop.f32.mrb[0].mxu0
  %v2856 = vadd.f32 0.0, %v2855
  %v2857 = vpop.f32.mrb[0].mxu0
  %2858 = vmatprep.mubr.bf16.mxu0 0
  %2859 = vmatmul.mubr.bf16.gmra.mrb[0].mxu0 %v2646
  %v2860 = vpop.f32.mrb[0].mxu0
  %v2861 = vadd.f32 0.0, %v2860
  %v2862 = vpop.f32.mrb[0].mxu0
  %v2863 = vpop.f32.mrb[0].mxu0
  %v2864 = vadd.f32 0.0, %v2863
  %v2865 = vpop.f32.mrb[0].mxu0
  %2866 = vmatprep.mubr.bf16.mxu0 0
  %2867 = vmatmul.mubr.bf16.gmra.mrb[0].mxu0 %v2649
  %v2868 = vpop.f32.mrb[0].mxu0
  %v2869 = vadd.f32 0.0, %v2868
  %v2870 = vpop.f32.mrb[0].mxu0
  %v2871 = vpop.f32.mrb[0].mxu0
  %v2872 = vadd.f32 0.0, %v2871
  %v2873 = vpop.f32.mrb[0].mxu0
  %2874 = vmatprep.mubr.bf16.mxu0 0
  %2875 = vmatmul.mubr.bf16.gmra.mrb[0].mxu0 %v2652
  %v2876 = vpop.f32.mrb[0].mxu0
  %v2877 = vadd.f32 0.0, %v2876
  %v2878 = vpop.f32.mrb[0].mxu0
  %v2879 = vpop.f32.mrb[0].mxu0
  %v2880 = vadd.f32 0.0, %v2879
  %v2881 = vpop.f32.mrb[0].mxu0
  %2882 = vmatprep.mubr.bf16.mxu0 0
  %2883 = vmatmul.mubr.bf16.gmra.mrb[0].mxu0 %v2655
  %v2884 = vpop.f32.mrb[0].mxu0
  %v2885 = vadd.f32 0.0, %v2884
  %v2886 = vpop.f32.mrb[0].mxu0
  %v2887 = vpop.f32.mrb[0].mxu0
  %v2888 = vadd.f32 0.0, %v2887
  %v2889 = vpop.f32.mrb[0].mxu0
  %2890 = vmatprep.mubr.bf16.mxu0 0
  %2891 = vmatmul.mubr.bf16.gmra.mrb[0].mxu0 %v2658
  %v2892 = vpop.f32.mrb[0].mxu0
  %v2893 = vadd.f32 0.0, %v2892
  %v2894 = vpop.f32.mrb[0].mxu0
  %v2895 = vpop.f32.mrb[0].mxu0
  %v2896 = vadd.f32 0.0, %v2895
  %v2897 = vpop.f32.mrb[0].mxu0
  %2898 = vmatprep.mubr.bf16.mxu0 0
  %2899 = vmatmul.mubr.bf16.gmra.mrb[0].mxu0 %v2661
  %v2900 = vpop.f32.mrb[0].mxu0
  %v2901 = vadd.f32 0.0, %v2900
  %v2902 = vpop.f32.mrb[0].mxu0
  %v2903 = vpop.f32.mrb[0].mxu0
  %v2904 = vadd.f32 0.0, %v2903
  %v2905 = vpop.f32.mrb[0].mxu0
  %2906 = vmatprep.mubr.bf16.mxu0 0
  %2907 = vmatmul.mubr.bf16.gmra.mrb[0].mxu0 %v2664
  %v2908 = vpop.f32.mrb[0].mxu0
  %v2909 = vadd.f32 0.0, %v2908
  %v2910 = vpop.f32.mrb[0].mxu0
  %v2911 = vpop.f32.mrb[0].mxu0
  %v2912 = vadd.f32 0.0, %v2911
  %v2913 = vpop.f32.mrb[0].mxu0
  %2914 = vmatprep.mubr.bf16.mxu0 0
  %2915 = vmatmul.mubr.bf16.gmra.mrb[0].mxu0 %v2667
  %v2916 = vpop.f32.mrb[0].mxu0
  %v2917 = vadd.f32 0.0, %v2916
  %v2918 = vpop.f32.mrb[0].mxu0
  %v2919 = vpop.f32.mrb[0].mxu0
  %v2920 = vadd.f32 0.0, %v2919
  %v2921 = vpop.f32.mrb[0].mxu0
  %2922 = vmatprep.mubr.bf16.mxu0 0
  %2923 = vmatmul.mubr.bf16.gmra.mrb[0].mxu0 %v2670
  %v2924 = vpop.f32.mrb[0].mxu0
  %v2925 = vadd.f32 0.0, %v2924
  %v2926 = vpop.f32.mrb[0].mxu0
  %v2927 = vpop.f32.mrb[0].mxu0
  %v2928 = vadd.f32 0.0, %v2927
  %v2929 = vpop.f32.mrb[0].mxu0
  %2930 = vmatprep.mubr.bf16.mxu0 0
  %2931 = vmatmul.mubr.bf16.gmra.mrb[0].mxu0 %v2673
  %v2932 = vpop.f32.mrb[0].mxu0
  %v2933 = vadd.f32 0.0, %v2932
  %v2934 = vpop.f32.mrb[0].mxu0
  %v2935 = vpop.f32.mrb[0].mxu0
  %v2936 = vadd.f32 0.0, %v2935
  %v2937 = vpop.f32.mrb[0].mxu0
  %2938 = vmatprep.mubr.bf16.mxu0 0
  %2939 = vmatmul.mubr.bf16.gmra.mrb[0].mxu0 %v2676
  %v2940 = vpop.f32.mrb[0].mxu0
  %v2941 = vadd.f32 0.0, %v2940
  %v2942 = vpop.f32.mrb[0].mxu0
  %v2943 = vpop.f32.mrb[0].mxu0
  %v2944 = vadd.f32 0.0, %v2943
  %v2945 = vpop.f32.mrb[0].mxu0
  %2946 = vmatprep.mubr.bf16.mxu0 0
  %2947 = vmatmul.mubr.bf16.gmra.mrb[0].mxu0 %v2679
  %v2948 = vpop.f32.mrb[0].mxu0
  %v2949 = vadd.f32 0.0, %v2948
  %v2950 = vpop.f32.mrb[0].mxu0
  %v2951 = vpop.f32.mrb[0].mxu0
  %v2952 = vadd.f32 0.0, %v2951
  %v2953 = vpop.f32.mrb[0].mxu0
  %2954 = vmatprep.mubr.bf16.mxu0 0
  %2955 = vmatmul.mubr.bf16.gmra.mrb[0].mxu0 %v2682
  %v2956 = vpop.f32.mrb[0].mxu0
  %v2957 = vadd.f32 0.0, %v2956
  %v2958 = vpop.f32.mrb[0].mxu0
  %v2959 = vpop.f32.mrb[0].mxu0
  %v2960 = vadd.f32 0.0, %v2959
  %v2961 = vpop.f32.mrb[0].mxu0
  %2962 = vmatprep.mubr.bf16.mxu0 0
  %2963 = vmatmul.mubr.bf16.gmra.mrb[0].mxu0 %v2685
  %v2964 = vpop.f32.mrb[0].mxu0
  %v2965 = vadd.f32 0.0, %v2964
  %v2966 = vpop.f32.mrb[0].mxu0
  %v2967 = vpop.f32.mrb[0].mxu0
  %v2968 = vadd.f32 0.0, %v2967
  %v2969 = vpop.f32.mrb[0].mxu0
  %2970 = vmatprep.mubr.bf16.mxu0 0
  %2971 = vmatmul.mubr.bf16.gmra.mrb[0].mxu0 %v2688
  %v2972 = vpop.f32.mrb[0].mxu0
  %v2973 = vadd.f32 0.0, %v2972
  %v2974 = vpop.f32.mrb[0].mxu0
  %v2975 = vpop.f32.mrb[0].mxu0
  %v2976 = vadd.f32 0.0, %v2975
  %v2977 = vpop.f32.mrb[0].mxu0
  %2978 = vmatprep.mubr.bf16.mxu0 0
  %2979 = vmatmul.mubr.bf16.gmra.mrb[0].mxu0 %v2691
  %v2980 = vpop.f32.mrb[0].mxu0
  %v2981 = vadd.f32 0.0, %v2980
  %v2982 = vpop.f32.mrb[0].mxu0
  %v2983 = vpop.f32.mrb[0].mxu0
  %v2984 = vadd.f32 0.0, %v2983
  %v2985 = vpop.f32.mrb[0].mxu0
  %2986 = vmatprep.mubr.bf16.mxu0 0
  %2987 = vmatmul.mubr.bf16.gmra.mrb[0].mxu0 %v2694
  %v2988 = vpop.f32.mrb[0].mxu0
  %v2989 = vadd.f32 0.0, %v2988
  %v2990 = vpop.f32.mrb[0].mxu0
  %v2991 = vpop.f32.mrb[0].mxu0
  %v2992 = vadd.f32 0.0, %v2991
  %v2993 = vpop.f32.mrb[0].mxu0
  %2994 = vmatprep.mubr.bf16.mxu0 0
  %2995 = vmatmul.mubr.bf16.gmra.mrb[0].mxu0 %v2697
  %v2996 = vpop.f32.mrb[0].mxu0
  %v2997 = vadd.f32 0.0, %v2996
  %v2998 = vpop.f32.mrb[0].mxu0
  %v2999 = vpop.f32.mrb[0].mxu0
  %v3000 = vadd.f32 0.0, %v2999
  %v3001 = vpop.f32.mrb[0].mxu0
  %3002 = vmatprep.mubr.bf16.mxu0 0
  %3003 = vmatmul.mubr.bf16.gmra.mrb[0].mxu0 %v2700
  %v3004 = vpop.f32.mrb[0].mxu0
  %v3005 = vadd.f32 0.0, %v3004
  %v3006 = vpop.f32.mrb[0].mxu0
  %v3007 = vpop.f32.mrb[0].mxu0
  %v3008 = vadd.f32 0.0, %v3007
  %v3009 = vpop.f32.mrb[0].mxu0
  %3010 = vmatprep.mubr.bf16.mxu0 0
  %3011 = vmatmul.mubr.bf16.gmra.mrb[0].mxu0 %v2703
  %v3012 = vpop.f32.mrb[0].mxu0
  %v3013 = vadd.f32 0.0, %v3012
  %v3014 = vpop.f32.mrb[0].mxu0
  %v3015 = vpop.f32.mrb[0].mxu0
  %v3016 = vadd.f32 0.0, %v3015
  %v3017 = vpop.f32.mrb[0].mxu0
  %3018 = vmatprep.mubr.bf16.mxu0 0
  %3019 = vmatmul.mubr.bf16.gmra.mrb[0].mxu0 %v2706
  %v3020 = vpop.f32.mrb[0].mxu0
  %v3021 = vadd.f32 0.0, %v3020
  %v3022 = vpop.f32.mrb[0].mxu0
  %v3023 = vpop.f32.mrb[0].mxu0
  %v3024 = vadd.f32 0.0, %v3023
  %v3025 = vpop.f32.mrb[0].mxu0
  %3026 = vmatprep.mubr.bf16.mxu0 0
  %3027 = vmatmul.mubr.bf16.gmra.mrb[0].mxu0 %v2709
  %v3028 = vpop.f32.mrb[0].mxu0
  %v3029 = vadd.f32 0.0, %v3028
  %v3030 = vpop.f32.mrb[0].mxu0
  %v3031 = vpop.f32.mrb[0].mxu0
  %v3032 = vadd.f32 0.0, %v3031
  %v3033 = vpop.f32.mrb[0].mxu0
  %3034 = vmatprep.mubr.bf16.mxu0 0
  %3035 = vmatmul.mubr.bf16.gmra.mrb[0].mxu0 %v2712
  %v3036 = vpop.f32.mrb[0].mxu0
  %v3037 = vadd.f32 0.0, %v3036
  %v3038 = vpop.f32.mrb[0].mxu0
  %v3039 = vpop.f32.mrb[0].mxu0
  %v3040 = vadd.f32 0.0, %v3039
  %v3041 = vpop.f32.mrb[0].mxu0
  %3042 = vmatprep.mubr.bf16.mxu0 0
  %3043 = vmatmul.mubr.bf16.gmra.mrb[0].mxu0 %v2715
  %v3044 = vpop.f32.mrb[0].mxu0
  %v3045 = vadd.f32 0.0, %v3044
  %v3046 = vpop.f32.mrb[0].mxu0
  %v3047 = vpop.f32.mrb[0].mxu0
  %v3048 = vadd.f32 0.0, %v3047
  %v3049 = vpop.f32.mrb[0].mxu0
  %3050 = vmatprep.mubr.bf16.mxu0 0
  %3051 = vmatmul.mubr.bf16.gmra.mrb[0].mxu0 %v2718
  %v3052 = vpop.f32.mrb[0].mxu0
  %v3053 = vadd.f32 0.0, %v3052
  %v3054 = vpop.f32.mrb[0].mxu0
  %v3055 = vpop.f32.mrb[0].mxu0
  %v3056 = vadd.f32 0.0, %v3055
  %v3057 = vpop.f32.mrb[0].mxu0
  %3058 = vmatprep.mubr.bf16.mxu0 0
  %3059 = vmatmul.mubr.bf16.gmra.mrb[0].mxu0 %v2721
  %v3060 = vpop.f32.mrb[0].mxu0
  %v3061 = vadd.f32 0.0, %v3060
  %v3062 = vpop.f32.mrb[0].mxu0
  %v3063 = vpop.f32.mrb[0].mxu0
  %v3064 = vadd.f32 0.0, %v3063
  %v3065 = vpop.f32.mrb[0].mxu0
  %3066 = vmatprep.mubr.bf16.mxu0 0
  %3067 = vmatmul.mubr.bf16.gmra.mrb[0].mxu0 %v2724
  %v3068 = vpop.f32.mrb[0].mxu0
  %v3069 = vadd.f32 0.0, %v3068
  %v3070 = vpop.f32.mrb[0].mxu0
  %v3071 = vpop.f32.mrb[0].mxu0
  %v3072 = vadd.f32 0.0, %v3071
  %v3073 = vpop.f32.mrb[0].mxu0
  %3074 = vmatprep.mubr.bf16.mxu0 0
  %3075 = vmatmul.mubr.bf16.gmra.mrb[0].mxu0 %v2727
  %v3076 = vpop.f32.mrb[0].mxu0
  %v3077 = vadd.f32 0.0, %v3076
  %v3078 = vpop.f32.mrb[0].mxu0
  %v3079 = vpop.f32.mrb[0].mxu0
  %v3080 = vadd.f32 0.0, %v3079
  %v3081 = vpop.f32.mrb[0].mxu0
  %3082 = vmatprep.mubr.bf16.mxu0 0
  %3083 = vmatmul.mubr.bf16.gmra.mrb[0].mxu0 %v2730
  %v3084 = vpop.f32.mrb[0].mxu0
  %v3085 = vadd.f32 0.0, %v3084
  %v3086 = vpop.f32.mrb[0].mxu0
  %v3087 = vpop.f32.mrb[0].mxu0
  %v3088 = vadd.f32 0.0, %v3087
  %v3089 = vpop.f32.mrb[0].mxu0
  %3090 = vmatprep.mubr.bf16.mxu0 0
  %3091 = vmatmul.mubr.bf16.gmra.mrb[0].mxu0 %v2733
  %v3092 = vpop.f32.mrb[0].mxu0
  %v3093 = vadd.f32 0.0, %v3092
  %v3094 = vpop.f32.mrb[0].mxu0
  %v3095 = vpop.f32.mrb[0].mxu0
  %v3096 = vpop.f32.mrb[0].mxu0
  %3097 = vdwg.mxu0
  %v3098 = vadd.f32 %v2155, %v2773
  %v3099 = vadd.f32 %v2156, %v2776
  %v3100 = vadd.f32 %v2157, %v2781
  %v3101 = vadd.f32 %v2158, %v2784
  %v3102 = vadd.f32 %v2159, %v2789
  %v3103 = vadd.f32 %v2160, %v2792
  %v3104 = vadd.f32 %v2161, %v2797
  %v3105 = vadd.f32 %v2162, %v2800
  %v3106 = vadd.f32 %v2163, %v2805
  %v3107 = vadd.f32 %v2164, %v2808
  %v3108 = vadd.f32 %v2165, %v2813
  %v3109 = vadd.f32 %v2166, %v2816
  %v3110 = vadd.f32 %v2167, %v2821
  %v3111 = vadd.f32 %v2168, %v2824
  %v3112 = vadd.f32 %v2169, %v2829
  %v3113 = vadd.f32 %v2170, %v2832
  %v3114 = vadd.f32 %v2171, %v2837
  %v3115 = vadd.f32 %v2172, %v2840
  %v3116 = vadd.f32 %v2173, %v2845
  %v3117 = vadd.f32 %v2174, %v2848
  %v3118 = vadd.f32 %v2175, %v2853
  %v3119 = vadd.f32 %v2176, %v2856
  %v3120 = vadd.f32 %v2177, %v2861
  %v3121 = vadd.f32 %v2178, %v2864
  %v3122 = vadd.f32 %v2179, %v2869
  %v3123 = vadd.f32 %v2180, %v2872
  %v3124 = vadd.f32 %v2181, %v2877
  %v3125 = vadd.f32 %v2182, %v2880
  %v3126 = vadd.f32 %v2183, %v2885
  %v3127 = vadd.f32 %v2184, %v2888
  %v3128 = vadd.f32 %v2185, %v2893
  %v3129 = vadd.f32 %v2186, %v2896
  %v3130 = vadd.f32 %v2187, %v2901
  %v3131 = vadd.f32 %v2188, %v2904
  %v3132 = vadd.f32 %v2189, %v2909
  %v3133 = vadd.f32 %v2190, %v2912
  %v3134 = vadd.f32 %v2191, %v2917
  %v3135 = vadd.f32 %v2192, %v2920
  %v3136 = vadd.f32 %v2193, %v2925
  %v3137 = vadd.f32 %v2194, %v2928
  %v3138 = vadd.f32 %v2195, %v2933
  %v3139 = vadd.f32 %v2196, %v2936
  %v3140 = vadd.f32 %v2197, %v2941
  %v3141 = vadd.f32 %v2198, %v2944
  %v3142 = vadd.f32 %v2199, %v2949
  %v3143 = vadd.f32 %v2200, %v2952
  %v3144 = vadd.f32 %v2201, %v2957
  %v3145 = vadd.f32 %v2202, %v2960
  %v3146 = vadd.f32 %v2203, %v2965
  %v3147 = vadd.f32 %v2204, %v2968
  %v3148 = vadd.f32 %v2205, %v2973
  %v3149 = vadd.f32 %v2206, %v2976
  %v3150 = vadd.f32 %v2207, %v2981
  %v3151 = vadd.f32 %v2208, %v2984
  %v3152 = vadd.f32 %v2209, %v2989
  %v3153 = vadd.f32 %v2210, %v2992
  %v3154 = vadd.f32 %v2211, %v2997
  %v3155 = vadd.f32 %v2212, %v3000
  %v3156 = vadd.f32 %v2213, %v3005
  %v3157 = vadd.f32 %v2214, %v3008
  %v3158 = vadd.f32 %v2215, %v3013
  %v3159 = vadd.f32 %v2216, %v3016
  %v3160 = vadd.f32 %v2217, %v3021
  %v3161 = vadd.f32 %v2218, %v3024
  %v3162 = vadd.f32 %v2219, %v3029
  %v3163 = vadd.f32 %v2220, %v3032
  %v3164 = vadd.f32 %v2221, %v3037
  %v3165 = vadd.f32 %v2222, %v3040
  %v3166 = vadd.f32 %v2223, %v3045
  %v3167 = vadd.f32 %v2224, %v3048
  %v3168 = vadd.f32 %v2225, %v3053
  %v3169 = vadd.f32 %v2226, %v3056
  %v3170 = vadd.f32 %v2227, %v3061
  %v3171 = vadd.f32 %v2228, %v3064
  %v3172 = vadd.f32 %v2229, %v3069
  %v3173 = vadd.f32 %v2230, %v3072
  %v3174 = vadd.f32 %v2231, %v3077
  %v3175 = vadd.f32 %v2232, %v3080
  %v3176 = vadd.f32 %v2233, %v3085
  %v3177 = vadd.f32 %v2234, %v3088
  %v3178 = vadd.f32 %v2235, %v3093
  %v3179 = vld [vmem:[%s0 + $0x14c] sm:$0x3]
  %v3180 = vld [vmem:[%s2 + $0x40] sm:$0x6]
  %v3182 = vunpack.c.l.b16 %v3179
  %v3183 = vpack.c.b16 %v3182, %v2482
  %vm3184 = vsmask.f32 6400
  %v3186 = vshrl.u32 %v2484, 16
  %v3188 = vrot.slane %v3186, 1
  %v3189 = vshll.u32 %v2484, 16
  %v3191 = vrot.slane %v3189, 2
  %v3192 = vor.u32 %v3188, %v3191
  %v3194 = vshrl.u32 %v2485, 16
  %v3196 = vrot.slane %v3194, 1
  %v3197 = vshll.u32 %v2485, 16
  %v3199 = vrot.slane %v3197, 2
  %v3200 = vor.u32 %v3196, %v3199
  %v3201 = vsel %vm3184, %v3192, %v3200
  %v3203 = vshrl.u32 %v2486, 16
  %v3205 = vrot.slane %v3203, 1
  %v3206 = vshll.u32 %v2486, 16
  %v3208 = vrot.slane %v3206, 2
  %v3209 = vor.u32 %v3205, %v3208
  %v3210 = vsel %vm3184, %v3200, %v3209
  %v3212 = vshrl.u32 %v2487, 16
  %v3214 = vrot.slane %v3212, 1
  %v3215 = vshll.u32 %v2487, 16
  %v3217 = vrot.slane %v3215, 2
  %v3218 = vor.u32 %v3214, %v3217
  %v3219 = vsel %vm3184, %v3209, %v3218
  %v3221 = vshrl.u32 %v2488, 16
  %v3223 = vrot.slane %v3221, 1
  %v3224 = vshll.u32 %v2488, 16
  %v3226 = vrot.slane %v3224, 2
  %v3227 = vor.u32 %v3223, %v3226
  %v3228 = vsel %vm3184, %v3218, %v3227
  %v3230 = vshrl.u32 %v2489, 16
  %v3232 = vrot.slane %v3230, 1
  %v3233 = vshll.u32 %v2489, 16
  %v3235 = vrot.slane %v3233, 2
  %v3236 = vor.u32 %v3232, %v3235
  %v3237 = vsel %vm3184, %v3227, %v3236
  %v3239 = vshrl.u32 %v2490, 16
  %v3241 = vrot.slane %v3239, 1
  %v3242 = vshll.u32 %v2490, 16
  %v3244 = vrot.slane %v3242, 2
  %v3245 = vor.u32 %v3241, %v3244
  %v3246 = vsel %vm3184, %v3236, %v3245
  %v3248 = vshrl.u32 %v2491, 16
  %v3250 = vrot.slane %v3248, 1
  %v3251 = vshll.u32 %v2491, 16
  %v3253 = vrot.slane %v3251, 2
  %v3254 = vor.u32 %v3250, %v3253
  %v3255 = vsel %vm3184, %v3245, %v3254
  %v3257 = vshrl.u32 %v2492, 16
  %v3259 = vrot.slane %v3257, 1
  %v3260 = vshll.u32 %v2492, 16
  %v3262 = vrot.slane %v3260, 2
  %v3263 = vor.u32 %v3259, %v3262
  %v3264 = vsel %vm3184, %v3254, %v3263
  %v3266 = vshrl.u32 %v2493, 16
  %v3268 = vrot.slane %v3266, 1
  %v3269 = vshll.u32 %v2493, 16
  %v3271 = vrot.slane %v3269, 2
  %v3272 = vor.u32 %v3268, %v3271
  %v3273 = vsel %vm3184, %v3263, %v3272
  %v3275 = vshrl.u32 %v2494, 16
  %v3277 = vrot.slane %v3275, 1
  %v3278 = vshll.u32 %v2494, 16
  %v3280 = vrot.slane %v3278, 2
  %v3281 = vor.u32 %v3277, %v3280
  %v3282 = vsel %vm3184, %v3272, %v3281
  %v3284 = vshrl.u32 %v2495, 16
  %v3286 = vrot.slane %v3284, 1
  %v3287 = vshll.u32 %v2495, 16
  %v3289 = vrot.slane %v3287, 2
  %v3290 = vor.u32 %v3286, %v3289
  %v3291 = vsel %vm3184, %v3281, %v3290
  %v3293 = vshrl.u32 %v2496, 16
  %v3295 = vrot.slane %v3293, 1
  %v3296 = vshll.u32 %v2496, 16
  %v3298 = vrot.slane %v3296, 2
  %v3299 = vor.u32 %v3295, %v3298
  %v3300 = vsel %vm3184, %v3290, %v3299
  %v3302 = vshrl.u32 %v2497, 16
  %v3304 = vrot.slane %v3302, 1
  %v3305 = vshll.u32 %v2497, 16
  %v3307 = vrot.slane %v3305, 2
  %v3308 = vor.u32 %v3304, %v3307
  %v3309 = vsel %vm3184, %v3299, %v3308
  %v3311 = vshrl.u32 %v2498, 16
  %v3313 = vrot.slane %v3311, 1
  %v3314 = vshll.u32 %v2498, 16
  %v3316 = vrot.slane %v3314, 2
  %v3317 = vor.u32 %v3313, %v3316
  %v3318 = vsel %vm3184, %v3308, %v3317
  %v3320 = vshrl.u32 %v2499, 16
  %v3322 = vrot.slane %v3320, 1
  %v3323 = vshll.u32 %v2499, 16
  %v3325 = vrot.slane %v3323, 2
  %v3326 = vor.u32 %v3322, %v3325
  %v3327 = vsel %vm3184, %v3317, %v3326
  %v3329 = vshrl.u32 %v2500, 16
  %v3331 = vrot.slane %v3329, 1
  %v3332 = vshll.u32 %v2500, 16
  %v3334 = vrot.slane %v3332, 2
  %v3335 = vor.u32 %v3331, %v3334
  %v3336 = vsel %vm3184, %v3326, %v3335
  %v3338 = vshrl.u32 %v2501, 16
  %v3340 = vrot.slane %v3338, 1
  %v3341 = vshll.u32 %v2501, 16
  %v3343 = vrot.slane %v3341, 2
  %v3344 = vor.u32 %v3340, %v3343
  %v3345 = vsel %vm3184, %v3335, %v3344
  %v3347 = vshrl.u32 %v2502, 16
  %v3349 = vrot.slane %v3347, 1
  %v3350 = vshll.u32 %v2502, 16
  %v3352 = vrot.slane %v3350, 2
  %v3353 = vor.u32 %v3349, %v3352
  %v3354 = vsel %vm3184, %v3344, %v3353
  %v3356 = vshrl.u32 %v2503, 16
  %v3358 = vrot.slane %v3356, 1
  %v3359 = vshll.u32 %v2503, 16
  %v3361 = vrot.slane %v3359, 2
  %v3362 = vor.u32 %v3358, %v3361
  %v3363 = vsel %vm3184, %v3353, %v3362
  %v3365 = vshrl.u32 %v2504, 16
  %v3367 = vrot.slane %v3365, 1
  %v3368 = vshll.u32 %v2504, 16
  %v3370 = vrot.slane %v3368, 2
  %v3371 = vor.u32 %v3367, %v3370
  %v3372 = vsel %vm3184, %v3362, %v3371
  %v3374 = vshrl.u32 %v2505, 16
  %v3376 = vrot.slane %v3374, 1
  %v3377 = vshll.u32 %v2505, 16
  %v3379 = vrot.slane %v3377, 2
  %v3380 = vor.u32 %v3376, %v3379
  %v3381 = vsel %vm3184, %v3371, %v3380
  %v3383 = vshrl.u32 %v2506, 16
  %v3385 = vrot.slane %v3383, 1
  %v3386 = vshll.u32 %v2506, 16
  %v3388 = vrot.slane %v3386, 2
  %v3389 = vor.u32 %v3385, %v3388
  %v3390 = vsel %vm3184, %v3380, %v3389
  %v3392 = vshrl.u32 %v2507, 16
  %v3394 = vrot.slane %v3392, 1
  %v3395 = vshll.u32 %v2507, 16
  %v3397 = vrot.slane %v3395, 2
  %v3398 = vor.u32 %v3394, %v3397
  %v3399 = vsel %vm3184, %v3389, %v3398
  %v3401 = vshrl.u32 %v2508, 16
  %v3403 = vrot.slane %v3401, 1
  %v3404 = vshll.u32 %v2508, 16
  %v3406 = vrot.slane %v3404, 2
  %v3407 = vor.u32 %v3403, %v3406
  %v3408 = vsel %vm3184, %v3398, %v3407
  %v3410 = vshrl.u32 %v2509, 16
  %v3412 = vrot.slane %v3410, 1
  %v3413 = vshll.u32 %v2509, 16
  %v3415 = vrot.slane %v3413, 2
  %v3416 = vor.u32 %v3412, %v3415
  %v3417 = vsel %vm3184, %v3407, %v3416
  %v3419 = vshrl.u32 %v2510, 16
  %v3421 = vrot.slane %v3419, 1
  %v3422 = vshll.u32 %v2510, 16
  %v3424 = vrot.slane %v3422, 2
  %v3425 = vor.u32 %v3421, %v3424
  %v3426 = vsel %vm3184, %v3416, %v3425
  %v3428 = vshrl.u32 %v2511, 16
  %v3430 = vrot.slane %v3428, 1
  %v3431 = vshll.u32 %v2511, 16
  %v3433 = vrot.slane %v3431, 2
  %v3434 = vor.u32 %v3430, %v3433
  %v3435 = vsel %vm3184, %v3425, %v3434
  %v3437 = vshrl.u32 %v2512, 16
  %v3439 = vrot.slane %v3437, 1
  %v3440 = vshll.u32 %v2512, 16
  %v3442 = vrot.slane %v3440, 2
  %v3443 = vor.u32 %v3439, %v3442
  %v3444 = vsel %vm3184, %v3434, %v3443
  %v3446 = vshrl.u32 %v2513, 16
  %v3448 = vrot.slane %v3446, 1
  %v3449 = vshll.u32 %v2513, 16
  %v3451 = vrot.slane %v3449, 2
  %v3452 = vor.u32 %v3448, %v3451
  %v3453 = vsel %vm3184, %v3443, %v3452
  %v3455 = vshrl.u32 %v2514, 16
  %v3457 = vrot.slane %v3455, 1
  %v3458 = vshll.u32 %v2514, 16
  %v3460 = vrot.slane %v3458, 2
  %v3461 = vor.u32 %v3457, %v3460
  %v3462 = vsel %vm3184, %v3452, %v3461
  %v3464 = vshrl.u32 %v2515, 16
  %v3466 = vrot.slane %v3464, 1
  %v3467 = vshll.u32 %v2515, 16
  %v3469 = vrot.slane %v3467, 2
  %v3470 = vor.u32 %v3466, %v3469
  %v3471 = vsel %vm3184, %v3461, %v3470
  %v3473 = vshrl.u32 %v2516, 16
  %v3475 = vrot.slane %v3473, 1
  %v3476 = vshll.u32 %v2516, 16
  %v3478 = vrot.slane %v3476, 2
  %v3479 = vor.u32 %v3475, %v3478
  %v3480 = vsel %vm3184, %v3470, %v3479
  %v3482 = vshrl.u32 %v2517, 16
  %v3484 = vrot.slane %v3482, 1
  %v3485 = vshll.u32 %v2517, 16
  %v3487 = vrot.slane %v3485, 2
  %v3488 = vor.u32 %v3484, %v3487
  %v3489 = vsel %vm3184, %v3479, %v3488
  %v3491 = vshrl.u32 %v2518, 16
  %v3493 = vrot.slane %v3491, 1
  %v3494 = vshll.u32 %v2518, 16
  %v3496 = vrot.slane %v3494, 2
  %v3497 = vor.u32 %v3493, %v3496
  %v3498 = vsel %vm3184, %v3488, %v3497
  %v3500 = vshrl.u32 %v2519, 16
  %v3502 = vrot.slane %v3500, 1
  %v3503 = vshll.u32 %v2519, 16
  %v3505 = vrot.slane %v3503, 2
  %v3506 = vor.u32 %v3502, %v3505
  %v3507 = vsel %vm3184, %v3497, %v3506
  %v3509 = vshrl.u32 %v2520, 16
  %v3511 = vrot.slane %v3509, 1
  %v3512 = vshll.u32 %v2520, 16
  %v3514 = vrot.slane %v3512, 2
  %v3515 = vor.u32 %v3511, %v3514
  %v3516 = vsel %vm3184, %v3506, %v3515
  %v3518 = vshrl.u32 %v2521, 16
  %v3520 = vrot.slane %v3518, 1
  %v3521 = vshll.u32 %v2521, 16
  %v3523 = vrot.slane %v3521, 2
  %v3524 = vor.u32 %v3520, %v3523
  %v3525 = vsel %vm3184, %v3515, %v3524
  %v3527 = vshrl.u32 %v2522, 16
  %v3529 = vrot.slane %v3527, 1
  %v3530 = vshll.u32 %v2522, 16
  %v3532 = vrot.slane %v3530, 2
  %v3533 = vor.u32 %v3529, %v3532
  %v3534 = vsel %vm3184, %v3524, %v3533
  %v3536 = vshrl.u32 %v2523, 16
  %v3538 = vrot.slane %v3536, 1
  %v3539 = vshll.u32 %v2523, 16
  %v3541 = vrot.slane %v3539, 2
  %v3542 = vor.u32 %v3538, %v3541
  %v3543 = vsel %vm3184, %v3533, %v3542
  %v3545 = vshrl.u32 %v3183, 16
  %v3547 = vrot.slane %v3545, 1
  %v3548 = vshll.u32 %v3183, 16
  %v3550 = vrot.slane %v3548, 2
  %v3551 = vor.u32 %v3547, %v3550
  %v3552 = vsel %vm3184, %v3542, %v3551
  %v3554 = vunpack.c.l.b16 %v3180
  %v3555 = vpack.c.b16 %v3554, %v3554
  %v3556 = vrot.slane %v3555, 1
  %v3558 = vsel %vm639, %v3201, 0
  %v3561 = vsel %vm639, %v3210, 0
  %v3564 = vsel %vm639, %v3219, 0
  %v3567 = vsel %vm639, %v3228, 0
  %v3570 = vsel %vm639, %v3237, 0
  %v3573 = vsel %vm639, %v3246, 0
  %v3576 = vsel %vm639, %v3255, 0
  %v3579 = vsel %vm639, %v3264, 0
  %v3582 = vsel %vm639, %v3273, 0
  %v3585 = vsel %vm639, %v3282, 0
  %v3588 = vsel %vm639, %v3291, 0
  %v3591 = vsel %vm639, %v3300, 0
  %v3594 = vsel %vm639, %v3309, 0
  %v3597 = vsel %vm639, %v3318, 0
  %v3600 = vsel %vm639, %v3327, 0
  %v3603 = vsel %vm639, %v3336, 0
  %v3606 = vsel %vm639, %v3345, 0
  %v3609 = vsel %vm639, %v3354, 0
  %v3612 = vsel %vm639, %v3363, 0
  %v3615 = vsel %vm639, %v3372, 0
  %v3618 = vsel %vm639, %v3381, 0
  %v3621 = vsel %vm639, %v3390, 0
  %v3624 = vsel %vm639, %v3399, 0
  %v3627 = vsel %vm639, %v3408, 0
  %v3630 = vsel %vm639, %v3417, 0
  %v3633 = vsel %vm639, %v3426, 0
  %v3636 = vsel %vm639, %v3435, 0
  %v3639 = vsel %vm639, %v3444, 0
  %v3642 = vsel %vm639, %v3453, 0
  %v3645 = vsel %vm639, %v3462, 0
  %v3648 = vsel %vm639, %v3471, 0
  %v3651 = vsel %vm639, %v3480, 0
  %v3654 = vsel %vm639, %v3489, 0
  %v3657 = vsel %vm639, %v3498, 0
  %v3660 = vsel %vm639, %v3507, 0
  %v3663 = vsel %vm639, %v3516, 0
  %v3666 = vsel %vm639, %v3525, 0
  %v3669 = vsel %vm639, %v3534, 0
  %v3672 = vsel %vm639, %v3543, 0
  %v3675 = vsel %vm639, %v3552, 0
  %v3678 = vsel %vm639, %v3551, 0
  %v3681 = vsel %vm763, %v3556, 0
  %3683 = vmatprep.subr.bf16.mxu0 0
  %3684 = vmatpush1.bf16.msra.mxu0 %v3681
  %3685 = vmatprep.subr.bf16.mxu0 0
  %3686 = vmatpush1.bf16.msra.mxu0 0
  %3687 = vmatprep.subr.bf16.mxu0 0
  %3688 = vmatpush1.bf16.msra.mxu0 0
  %3689 = vmatprep.subr.bf16.mxu0 0
  %3690 = vmatpush1.bf16.msra.mxu0 0
  %3691 = vmatprep.subr.bf16.mxu0 0
  %3692 = vmatpush1.bf16.msra.mxu0 0
  %3693 = vmatprep.subr.bf16.mxu0 0
  %3694 = vmatpush1.bf16.msra.mxu0 0
  %3695 = vmatprep.subr.bf16.mxu0 0
  %3696 = vmatpush1.bf16.msra.mxu0 0
  %3697 = vmatprep.subr.bf16.mxu0 0
  %3698 = vmatpush1.bf16.msra.mxu0 0
  %3699 = vmatprep.subr.bf16.mxu0 0
  %3700 = vmatpush1.bf16.msra.mxu0 0
  %3701 = vmatprep.subr.bf16.mxu0 0
  %3702 = vmatpush1.bf16.msra.mxu0 0
  %3703 = vmatprep.subr.bf16.mxu0 0
  %3704 = vmatpush1.bf16.msra.mxu0 0
  %3705 = vmatprep.subr.bf16.mxu0 0
  %3706 = vmatpush1.bf16.msra.mxu0 0
  %3707 = vmatprep.subr.bf16.mxu0 0
  %3708 = vmatpush1.bf16.msra.mxu0 0
  %3709 = vmatprep.subr.bf16.mxu0 0
  %3710 = vmatpush1.bf16.msra.mxu0 0
  %3711 = vmatprep.subr.bf16.mxu0 0
  %3712 = vmatpush1.bf16.msra.mxu0 0
  %3713 = vmatprep.subr.bf16.mxu0 0
  %3714 = vmatpush1.bf16.msra.mxu0 0
  %3715 = vmatprep.mubr.bf16.mxu0 0
  %3716 = vmatmul.mubr.bf16.gmra.mrb[0].mxu0 %v3558
  %v3717 = vpop.f32.mrb[0].mxu0
  %v3718 = vadd.f32 0.0, %v3717
  %v3719 = vpop.f32.mrb[0].mxu0
  %v3720 = vpop.f32.mrb[0].mxu0
  %v3721 = vadd.f32 0.0, %v3720
  %v3722 = vpop.f32.mrb[0].mxu0
  %3723 = vmatprep.mubr.bf16.mxu0 0
  %3724 = vmatmul.mubr.bf16.gmra.mrb[0].mxu0 %v3561
  %v3725 = vpop.f32.mrb[0].mxu0
  %v3726 = vadd.f32 0.0, %v3725
  %v3727 = vpop.f32.mrb[0].mxu0
  %v3728 = vpop.f32.mrb[0].mxu0
  %v3729 = vadd.f32 0.0, %v3728
  %v3730 = vpop.f32.mrb[0].mxu0
  %3731 = vmatprep.mubr.bf16.mxu0 0
  %3732 = vmatmul.mubr.bf16.gmra.mrb[0].mxu0 %v3564
  %v3733 = vpop.f32.mrb[0].mxu0
  %v3734 = vadd.f32 0.0, %v3733
  %v3735 = vpop.f32.mrb[0].mxu0
  %v3736 = vpop.f32.mrb[0].mxu0
  %v3737 = vadd.f32 0.0, %v3736
  %v3738 = vpop.f32.mrb[0].mxu0
  %3739 = vmatprep.mubr.bf16.mxu0 0
  %3740 = vmatmul.mubr.bf16.gmra.mrb[0].mxu0 %v3567
  %v3741 = vpop.f32.mrb[0].mxu0
  %v3742 = vadd.f32 0.0, %v3741
  %v3743 = vpop.f32.mrb[0].mxu0
  %v3744 = vpop.f32.mrb[0].mxu0
  %v3745 = vadd.f32 0.0, %v3744
  %v3746 = vpop.f32.mrb[0].mxu0
  %3747 = vmatprep.mubr.bf16.mxu0 0
  %3748 = vmatmul.mubr.bf16.gmra.mrb[0].mxu0 %v3570
  %v3749 = vpop.f32.mrb[0].mxu0
  %v3750 = vadd.f32 0.0, %v3749
  %v3751 = vpop.f32.mrb[0].mxu0
  %v3752 = vpop.f32.mrb[0].mxu0
  %v3753 = vadd.f32 0.0, %v3752
  %v3754 = vpop.f32.mrb[0].mxu0
  %3755 = vmatprep.mubr.bf16.mxu0 0
  %3756 = vmatmul.mubr.bf16.gmra.mrb[0].mxu0 %v3573
  %v3757 = vpop.f32.mrb[0].mxu0
  %v3758 = vadd.f32 0.0, %v3757
  %v3759 = vpop.f32.mrb[0].mxu0
  %v3760 = vpop.f32.mrb[0].mxu0
  %v3761 = vadd.f32 0.0, %v3760
  %v3762 = vpop.f32.mrb[0].mxu0
  %3763 = vmatprep.mubr.bf16.mxu0 0
  %3764 = vmatmul.mubr.bf16.gmra.mrb[0].mxu0 %v3576
  %v3765 = vpop.f32.mrb[0].mxu0
  %v3766 = vadd.f32 0.0, %v3765
  %v3767 = vpop.f32.mrb[0].mxu0
  %v3768 = vpop.f32.mrb[0].mxu0
  %v3769 = vadd.f32 0.0, %v3768
  %v3770 = vpop.f32.mrb[0].mxu0
  %3771 = vmatprep.mubr.bf16.mxu0 0
  %3772 = vmatmul.mubr.bf16.gmra.mrb[0].mxu0 %v3579
  %v3773 = vpop.f32.mrb[0].mxu0
  %v3774 = vadd.f32 0.0, %v3773
  %v3775 = vpop.f32.mrb[0].mxu0
  %v3776 = vpop.f32.mrb[0].mxu0
  %v3777 = vadd.f32 0.0, %v3776
  %v3778 = vpop.f32.mrb[0].mxu0
  %3779 = vmatprep.mubr.bf16.mxu0 0
  %3780 = vmatmul.mubr.bf16.gmra.mrb[0].mxu0 %v3582
  %v3781 = vpop.f32.mrb[0].mxu0
  %v3782 = vadd.f32 0.0, %v3781
  %v3783 = vpop.f32.mrb[0].mxu0
  %v3784 = vpop.f32.mrb[0].mxu0
  %v3785 = vadd.f32 0.0, %v3784
  %v3786 = vpop.f32.mrb[0].mxu0
  %3787 = vmatprep.mubr.bf16.mxu0 0
  %3788 = vmatmul.mubr.bf16.gmra.mrb[0].mxu0 %v3585
  %v3789 = vpop.f32.mrb[0].mxu0
  %v3790 = vadd.f32 0.0, %v3789
  %v3791 = vpop.f32.mrb[0].mxu0
  %v3792 = vpop.f32.mrb[0].mxu0
  %v3793 = vadd.f32 0.0, %v3792
  %v3794 = vpop.f32.mrb[0].mxu0
  %3795 = vmatprep.mubr.bf16.mxu0 0
  %3796 = vmatmul.mubr.bf16.gmra.mrb[0].mxu0 %v3588
  %v3797 = vpop.f32.mrb[0].mxu0
  %v3798 = vadd.f32 0.0, %v3797
  %v3799 = vpop.f32.mrb[0].mxu0
  %v3800 = vpop.f32.mrb[0].mxu0
  %v3801 = vadd.f32 0.0, %v3800
  %v3802 = vpop.f32.mrb[0].mxu0
  %3803 = vmatprep.mubr.bf16.mxu0 0
  %3804 = vmatmul.mubr.bf16.gmra.mrb[0].mxu0 %v3591
  %v3805 = vpop.f32.mrb[0].mxu0
  %v3806 = vadd.f32 0.0, %v3805
  %v3807 = vpop.f32.mrb[0].mxu0
  %v3808 = vpop.f32.mrb[0].mxu0
  %v3809 = vadd.f32 0.0, %v3808
  %v3810 = vpop.f32.mrb[0].mxu0
  %3811 = vmatprep.mubr.bf16.mxu0 0
  %3812 = vmatmul.mubr.bf16.gmra.mrb[0].mxu0 %v3594
  %v3813 = vpop.f32.mrb[0].mxu0
  %v3814 = vadd.f32 0.0, %v3813
  %v3815 = vpop.f32.mrb[0].mxu0
  %v3816 = vpop.f32.mrb[0].mxu0
  %v3817 = vadd.f32 0.0, %v3816
  %v3818 = vpop.f32.mrb[0].mxu0
  %3819 = vmatprep.mubr.bf16.mxu0 0
  %3820 = vmatmul.mubr.bf16.gmra.mrb[0].mxu0 %v3597
  %v3821 = vpop.f32.mrb[0].mxu0
  %v3822 = vadd.f32 0.0, %v3821
  %v3823 = vpop.f32.mrb[0].mxu0
  %v3824 = vpop.f32.mrb[0].mxu0
  %v3825 = vadd.f32 0.0, %v3824
  %v3826 = vpop.f32.mrb[0].mxu0
  %3827 = vmatprep.mubr.bf16.mxu0 0
  %3828 = vmatmul.mubr.bf16.gmra.mrb[0].mxu0 %v3600
  %v3829 = vpop.f32.mrb[0].mxu0
  %v3830 = vadd.f32 0.0, %v3829
  %v3831 = vpop.f32.mrb[0].mxu0
  %v3832 = vpop.f32.mrb[0].mxu0
  %v3833 = vadd.f32 0.0, %v3832
  %v3834 = vpop.f32.mrb[0].mxu0
  %3835 = vmatprep.mubr.bf16.mxu0 0
  %3836 = vmatmul.mubr.bf16.gmra.mrb[0].mxu0 %v3603
  %v3837 = vpop.f32.mrb[0].mxu0
  %v3838 = vadd.f32 0.0, %v3837
  %v3839 = vpop.f32.mrb[0].mxu0
  %v3840 = vpop.f32.mrb[0].mxu0
  %v3841 = vadd.f32 0.0, %v3840
  %v3842 = vpop.f32.mrb[0].mxu0
  %3843 = vmatprep.mubr.bf16.mxu0 0
  %3844 = vmatmul.mubr.bf16.gmra.mrb[0].mxu0 %v3606
  %v3845 = vpop.f32.mrb[0].mxu0
  %v3846 = vadd.f32 0.0, %v3845
  %v3847 = vpop.f32.mrb[0].mxu0
  %v3848 = vpop.f32.mrb[0].mxu0
  %v3849 = vadd.f32 0.0, %v3848
  %v3850 = vpop.f32.mrb[0].mxu0
  %3851 = vmatprep.mubr.bf16.mxu0 0
  %3852 = vmatmul.mubr.bf16.gmra.mrb[0].mxu0 %v3609
  %v3853 = vpop.f32.mrb[0].mxu0
  %v3854 = vadd.f32 0.0, %v3853
  %v3855 = vpop.f32.mrb[0].mxu0
  %v3856 = vpop.f32.mrb[0].mxu0
  %v3857 = vadd.f32 0.0, %v3856
  %v3858 = vpop.f32.mrb[0].mxu0
  %3859 = vmatprep.mubr.bf16.mxu0 0
  %3860 = vmatmul.mubr.bf16.gmra.mrb[0].mxu0 %v3612
  %v3861 = vpop.f32.mrb[0].mxu0
  %v3862 = vadd.f32 0.0, %v3861
  %v3863 = vpop.f32.mrb[0].mxu0
  %v3864 = vpop.f32.mrb[0].mxu0
  %v3865 = vadd.f32 0.0, %v3864
  %v3866 = vpop.f32.mrb[0].mxu0
  %3867 = vmatprep.mubr.bf16.mxu0 0
  %3868 = vmatmul.mubr.bf16.gmra.mrb[0].mxu0 %v3615
  %v3869 = vpop.f32.mrb[0].mxu0
  %v3870 = vadd.f32 0.0, %v3869
  %v3871 = vpop.f32.mrb[0].mxu0
  %v3872 = vpop.f32.mrb[0].mxu0
  %v3873 = vadd.f32 0.0, %v3872
  %v3874 = vpop.f32.mrb[0].mxu0
  %3875 = vmatprep.mubr.bf16.mxu0 0
  %3876 = vmatmul.mubr.bf16.gmra.mrb[0].mxu0 %v3618
  %v3877 = vpop.f32.mrb[0].mxu0
  %v3878 = vadd.f32 0.0, %v3877
  %v3879 = vpop.f32.mrb[0].mxu0
  %v3880 = vpop.f32.mrb[0].mxu0
  %v3881 = vadd.f32 0.0, %v3880
  %v3882 = vpop.f32.mrb[0].mxu0
  %3883 = vmatprep.mubr.bf16.mxu0 0
  %3884 = vmatmul.mubr.bf16.gmra.mrb[0].mxu0 %v3621
  %v3885 = vpop.f32.mrb[0].mxu0
  %v3886 = vadd.f32 0.0, %v3885
  %v3887 = vpop.f32.mrb[0].mxu0
  %v3888 = vpop.f32.mrb[0].mxu0
  %v3889 = vadd.f32 0.0, %v3888
  %v3890 = vpop.f32.mrb[0].mxu0
  %3891 = vmatprep.mubr.bf16.mxu0 0
  %3892 = vmatmul.mubr.bf16.gmra.mrb[0].mxu0 %v3624
  %v3893 = vpop.f32.mrb[0].mxu0
  %v3894 = vadd.f32 0.0, %v3893
  %v3895 = vpop.f32.mrb[0].mxu0
  %v3896 = vpop.f32.mrb[0].mxu0
  %v3897 = vadd.f32 0.0, %v3896
  %v3898 = vpop.f32.mrb[0].mxu0
  %3899 = vmatprep.mubr.bf16.mxu0 0
  %3900 = vmatmul.mubr.bf16.gmra.mrb[0].mxu0 %v3627
  %v3901 = vpop.f32.mrb[0].mxu0
  %v3902 = vadd.f32 0.0, %v3901
  %v3903 = vpop.f32.mrb[0].mxu0
  %v3904 = vpop.f32.mrb[0].mxu0
  %v3905 = vadd.f32 0.0, %v3904
  %v3906 = vpop.f32.mrb[0].mxu0
  %3907 = vmatprep.mubr.bf16.mxu0 0
  %3908 = vmatmul.mubr.bf16.gmra.mrb[0].mxu0 %v3630
  %v3909 = vpop.f32.mrb[0].mxu0
  %v3910 = vadd.f32 0.0, %v3909
  %v3911 = vpop.f32.mrb[0].mxu0
  %v3912 = vpop.f32.mrb[0].mxu0
  %v3913 = vadd.f32 0.0, %v3912
  %v3914 = vpop.f32.mrb[0].mxu0
  %3915 = vmatprep.mubr.bf16.mxu0 0
  %3916 = vmatmul.mubr.bf16.gmra.mrb[0].mxu0 %v3633
  %v3917 = vpop.f32.mrb[0].mxu0
  %v3918 = vadd.f32 0.0, %v3917
  %v3919 = vpop.f32.mrb[0].mxu0
  %v3920 = vpop.f32.mrb[0].mxu0
  %v3921 = vadd.f32 0.0, %v3920
  %v3922 = vpop.f32.mrb[0].mxu0
  %3923 = vmatprep.mubr.bf16.mxu0 0
  %3924 = vmatmul.mubr.bf16.gmra.mrb[0].mxu0 %v3636
  %v3925 = vpop.f32.mrb[0].mxu0
  %v3926 = vadd.f32 0.0, %v3925
  %v3927 = vpop.f32.mrb[0].mxu0
  %v3928 = vpop.f32.mrb[0].mxu0
  %v3929 = vadd.f32 0.0, %v3928
  %v3930 = vpop.f32.mrb[0].mxu0
  %3931 = vmatprep.mubr.bf16.mxu0 0
  %3932 = vmatmul.mubr.bf16.gmra.mrb[0].mxu0 %v3639
  %v3933 = vpop.f32.mrb[0].mxu0
  %v3934 = vadd.f32 0.0, %v3933
  %v3935 = vpop.f32.mrb[0].mxu0
  %v3936 = vpop.f32.mrb[0].mxu0
  %v3937 = vadd.f32 0.0, %v3936
  %v3938 = vpop.f32.mrb[0].mxu0
  %3939 = vmatprep.mubr.bf16.mxu0 0
  %3940 = vmatmul.mubr.bf16.gmra.mrb[0].mxu0 %v3642
  %v3941 = vpop.f32.mrb[0].mxu0
  %v3942 = vadd.f32 0.0, %v3941
  %v3943 = vpop.f32.mrb[0].mxu0
  %v3944 = vpop.f32.mrb[0].mxu0
  %v3945 = vadd.f32 0.0, %v3944
  %v3946 = vpop.f32.mrb[0].mxu0
  %3947 = vmatprep.mubr.bf16.mxu0 0
  %3948 = vmatmul.mubr.bf16.gmra.mrb[0].mxu0 %v3645
  %v3949 = vpop.f32.mrb[0].mxu0
  %v3950 = vadd.f32 0.0, %v3949
  %v3951 = vpop.f32.mrb[0].mxu0
  %v3952 = vpop.f32.mrb[0].mxu0
  %v3953 = vadd.f32 0.0, %v3952
  %v3954 = vpop.f32.mrb[0].mxu0
  %3955 = vmatprep.mubr.bf16.mxu0 0
  %3956 = vmatmul.mubr.bf16.gmra.mrb[0].mxu0 %v3648
  %v3957 = vpop.f32.mrb[0].mxu0
  %v3958 = vadd.f32 0.0, %v3957
  %v3959 = vpop.f32.mrb[0].mxu0
  %v3960 = vpop.f32.mrb[0].mxu0
  %v3961 = vadd.f32 0.0, %v3960
  %v3962 = vpop.f32.mrb[0].mxu0
  %3963 = vmatprep.mubr.bf16.mxu0 0
  %3964 = vmatmul.mubr.bf16.gmra.mrb[0].mxu0 %v3651
  %v3965 = vpop.f32.mrb[0].mxu0
  %v3966 = vadd.f32 0.0, %v3965
  %v3967 = vpop.f32.mrb[0].mxu0
  %v3968 = vpop.f32.mrb[0].mxu0
  %v3969 = vadd.f32 0.0, %v3968
  %v3970 = vpop.f32.mrb[0].mxu0
  %3971 = vmatprep.mubr.bf16.mxu0 0
  %3972 = vmatmul.mubr.bf16.gmra.mrb[0].mxu0 %v3654
  %v3973 = vpop.f32.mrb[0].mxu0
  %v3974 = vadd.f32 0.0, %v3973
  %v3975 = vpop.f32.mrb[0].mxu0
  %v3976 = vpop.f32.mrb[0].mxu0
  %v3977 = vadd.f32 0.0, %v3976
  %v3978 = vpop.f32.mrb[0].mxu0
  %3979 = vmatprep.mubr.bf16.mxu0 0
  %3980 = vmatmul.mubr.bf16.gmra.mrb[0].mxu0 %v3657
  %v3981 = vpop.f32.mrb[0].mxu0
  %v3982 = vadd.f32 0.0, %v3981
  %v3983 = vpop.f32.mrb[0].mxu0
  %v3984 = vpop.f32.mrb[0].mxu0
  %v3985 = vadd.f32 0.0, %v3984
  %v3986 = vpop.f32.mrb[0].mxu0
  %3987 = vmatprep.mubr.bf16.mxu0 0
  %3988 = vmatmul.mubr.bf16.gmra.mrb[0].mxu0 %v3660
  %v3989 = vpop.f32.mrb[0].mxu0
  %v3990 = vadd.f32 0.0, %v3989
  %v3991 = vpop.f32.mrb[0].mxu0
  %v3992 = vpop.f32.mrb[0].mxu0
  %v3993 = vadd.f32 0.0, %v3992
  %v3994 = vpop.f32.mrb[0].mxu0
  %3995 = vmatprep.mubr.bf16.mxu0 0
  %3996 = vmatmul.mubr.bf16.gmra.mrb[0].mxu0 %v3663
  %v3997 = vpop.f32.mrb[0].mxu0
  %v3998 = vadd.f32 0.0, %v3997
  %v3999 = vpop.f32.mrb[0].mxu0
  %v4000 = vpop.f32.mrb[0].mxu0
  %v4001 = vadd.f32 0.0, %v4000
  %v4002 = vpop.f32.mrb[0].mxu0
  %4003 = vmatprep.mubr.bf16.mxu0 0
  %4004 = vmatmul.mubr.bf16.gmra.mrb[0].mxu0 %v3666
  %v4005 = vpop.f32.mrb[0].mxu0
  %v4006 = vadd.f32 0.0, %v4005
  %v4007 = vpop.f32.mrb[0].mxu0
  %v4008 = vpop.f32.mrb[0].mxu0
  %v4009 = vadd.f32 0.0, %v4008
  %v4010 = vpop.f32.mrb[0].mxu0
  %4011 = vmatprep.mubr.bf16.mxu0 0
  %4012 = vmatmul.mubr.bf16.gmra.mrb[0].mxu0 %v3669
  %v4013 = vpop.f32.mrb[0].mxu0
  %v4014 = vadd.f32 0.0, %v4013
  %v4015 = vpop.f32.mrb[0].mxu0
  %v4016 = vpop.f32.mrb[0].mxu0
  %v4017 = vadd.f32 0.0, %v4016
  %v4018 = vpop.f32.mrb[0].mxu0
  %4019 = vmatprep.mubr.bf16.mxu0 0
  %4020 = vmatmul.mubr.bf16.gmra.mrb[0].mxu0 %v3672
  %v4021 = vpop.f32.mrb[0].mxu0
  %v4022 = vadd.f32 0.0, %v4021
  %v4023 = vpop.f32.mrb[0].mxu0
  %v4024 = vpop.f32.mrb[0].mxu0
  %v4025 = vadd.f32 0.0, %v4024
  %v4026 = vpop.f32.mrb[0].mxu0
  %4027 = vmatprep.mubr.bf16.mxu0 0
  %4028 = vmatmul.mubr.bf16.gmra.mrb[0].mxu0 %v3675
  %v4029 = vpop.f32.mrb[0].mxu0
  %v4030 = vadd.f32 0.0, %v4029
  %v4031 = vpop.f32.mrb[0].mxu0
  %v4032 = vpop.f32.mrb[0].mxu0
  %v4033 = vadd.f32 0.0, %v4032
  %v4034 = vpop.f32.mrb[0].mxu0
  %4035 = vmatprep.mubr.bf16.mxu0 0
  %4036 = vmatmul.mubr.bf16.gmra.mrb[0].mxu0 %v3678
  %v4037 = vpop.f32.mrb[0].mxu0
  %v4038 = vadd.f32 0.0, %v4037
  %v4039 = vpop.f32.mrb[0].mxu0
  %v4040 = vpop.f32.mrb[0].mxu0
  %v4041 = vpop.f32.mrb[0].mxu0
  %4042 = vdwg.mxu0
  %v4043 = vadd.f32 %v3098, %v3718
  %v4044 = vadd.f32 %v3099, %v3721
  %v4045 = vadd.f32 %v3100, %v3726
  %v4046 = vadd.f32 %v3101, %v3729
  %v4047 = vadd.f32 %v3102, %v3734
  %v4048 = vadd.f32 %v3103, %v3737
  %v4049 = vadd.f32 %v3104, %v3742
  %v4050 = vadd.f32 %v3105, %v3745
  %v4051 = vadd.f32 %v3106, %v3750
  %v4052 = vadd.f32 %v3107, %v3753
  %v4053 = vadd.f32 %v3108, %v3758
  %v4054 = vadd.f32 %v3109, %v3761
  %v4055 = vadd.f32 %v3110, %v3766
  %v4056 = vadd.f32 %v3111, %v3769
  %v4057 = vadd.f32 %v3112, %v3774
  %v4058 = vadd.f32 %v3113, %v3777
  %v4059 = vadd.f32 %v3114, %v3782
  %v4060 = vadd.f32 %v3115, %v3785
  %v4061 = vadd.f32 %v3116, %v3790
  %v4062 = vadd.f32 %v3117, %v3793
  %v4063 = vadd.f32 %v3118, %v3798
  %v4064 = vadd.f32 %v3119, %v3801
  %v4065 = vadd.f32 %v3120, %v3806
  %v4066 = vadd.f32 %v3121, %v3809
  %v4067 = vadd.f32 %v3122, %v3814
  %v4068 = vadd.f32 %v3123, %v3817
  %v4069 = vadd.f32 %v3124, %v3822
  %v4070 = vadd.f32 %v3125, %v3825
  %v4071 = vadd.f32 %v3126, %v3830
  %v4072 = vadd.f32 %v3127, %v3833
  %v4073 = vadd.f32 %v3128, %v3838
  %v4074 = vadd.f32 %v3129, %v3841
  %v4075 = vadd.f32 %v3130, %v3846
  %v4076 = vadd.f32 %v3131, %v3849
  %v4077 = vadd.f32 %v3132, %v3854
  %v4078 = vadd.f32 %v3133, %v3857
  %v4079 = vadd.f32 %v3134, %v3862
  %v4080 = vadd.f32 %v3135, %v3865
  %v4081 = vadd.f32 %v3136, %v3870
  %v4082 = vadd.f32 %v3137, %v3873
  %v4083 = vadd.f32 %v3138, %v3878
  %v4084 = vadd.f32 %v3139, %v3881
  %v4085 = vadd.f32 %v3140, %v3886
  %v4086 = vadd.f32 %v3141, %v3889
  %v4087 = vadd.f32 %v3142, %v3894
  %v4088 = vadd.f32 %v3143, %v3897
  %v4089 = vadd.f32 %v3144, %v3902
  %v4090 = vadd.f32 %v3145, %v3905
  %v4091 = vadd.f32 %v3146, %v3910
  %v4092 = vadd.f32 %v3147, %v3913
  %v4093 = vadd.f32 %v3148, %v3918
  %v4094 = vadd.f32 %v3149, %v3921
  %v4095 = vadd.f32 %v3150, %v3926
  %v4096 = vadd.f32 %v3151, %v3929
  %v4097 = vadd.f32 %v3152, %v3934
  %v4098 = vadd.f32 %v3153, %v3937
  %v4099 = vadd.f32 %v3154, %v3942
  %v4100 = vadd.f32 %v3155, %v3945
  %v4101 = vadd.f32 %v3156, %v3950
  %v4102 = vadd.f32 %v3157, %v3953
  %v4103 = vadd.f32 %v3158, %v3958
  %v4104 = vadd.f32 %v3159, %v3961
  %v4105 = vadd.f32 %v3160, %v3966
  %v4106 = vadd.f32 %v3161, %v3969
  %v4107 = vadd.f32 %v3162, %v3974
  %v4108 = vadd.f32 %v3163, %v3977
  %v4109 = vadd.f32 %v3164, %v3982
  %v4110 = vadd.f32 %v3165, %v3985
  %v4111 = vadd.f32 %v3166, %v3990
  %v4112 = vadd.f32 %v3167, %v3993
  %v4113 = vadd.f32 %v3168, %v3998
  %v4114 = vadd.f32 %v3169, %v4001
  %v4115 = vadd.f32 %v3170, %v4006
  %v4116 = vadd.f32 %v3171, %v4009
  %v4117 = vadd.f32 %v3172, %v4014
  %v4118 = vadd.f32 %v3173, %v4017
  %v4119 = vadd.f32 %v3174, %v4022
  %v4120 = vadd.f32 %v3175, %v4025
  %v4121 = vadd.f32 %v3176, %v4030
  %v4122 = vadd.f32 %v3177, %v4033
  %v4123 = vadd.f32 %v3178, %v4038
  %v4124 = vld [vmem:[%s0 + $0x8] sm:$0xc]
  %v4125 = vld [vmem:[%s2 + $0x40] sm:$0x8]
  %v4126 = vld [vmem:[%s2 + $0x48] sm:$0x1]
  %v4128 = vunpack.c.l.b16 %v4124
  %v4129 = vpack.c.b16 %v2403, %v4128
  %vm4130 = vcmask 1045504
  %v4131 = vrot.slane %v4129, 2
  %v4132 = vrot.slane %v2485, 2
  %v4133 = vsel %vm4130, %v4131, %v4132
  %v4134 = vrot.slane %v2486, 2
  %v4135 = vsel %vm4130, %v4132, %v4134
  %v4136 = vrot.slane %v2487, 2
  %v4137 = vsel %vm4130, %v4134, %v4136
  %v4138 = vrot.slane %v2488, 2
  %v4139 = vsel %vm4130, %v4136, %v4138
  %v4140 = vrot.slane %v2489, 2
  %v4141 = vsel %vm4130, %v4138, %v4140
  %v4142 = vrot.slane %v2490, 2
  %v4143 = vsel %vm4130, %v4140, %v4142
  %v4144 = vrot.slane %v2491, 2
  %v4145 = vsel %vm4130, %v4142, %v4144
  %v4146 = vrot.slane %v2492, 2
  %v4147 = vsel %vm4130, %v4144, %v4146
  %v4148 = vrot.slane %v2493, 2
  %v4149 = vsel %vm4130, %v4146, %v4148
  %v4150 = vrot.slane %v2494, 2
  %v4151 = vsel %vm4130, %v4148, %v4150
  %v4152 = vrot.slane %v2495, 2
  %v4153 = vsel %vm4130, %v4150, %v4152
  %v4154 = vrot.slane %v2496, 2
  %v4155 = vsel %vm4130, %v4152, %v4154
  %v4156 = vrot.slane %v2497, 2
  %v4157 = vsel %vm4130, %v4154, %v4156
  %v4158 = vrot.slane %v2498, 2
  %v4159 = vsel %vm4130, %v4156, %v4158
  %v4160 = vrot.slane %v2499, 2
  %v4161 = vsel %vm4130, %v4158, %v4160
  %v4162 = vrot.slane %v2500, 2
  %v4163 = vsel %vm4130, %v4160, %v4162
  %v4164 = vrot.slane %v2501, 2
  %v4165 = vsel %vm4130, %v4162, %v4164
  %v4166 = vrot.slane %v2502, 2
  %v4167 = vsel %vm4130, %v4164, %v4166
  %v4168 = vrot.slane %v2503, 2
  %v4169 = vsel %vm4130, %v4166, %v4168
  %v4170 = vrot.slane %v2504, 2
  %v4171 = vsel %vm4130, %v4168, %v4170
  %v4172 = vrot.slane %v2505, 2
  %v4173 = vsel %vm4130, %v4170, %v4172
  %v4174 = vrot.slane %v2506, 2
  %v4175 = vsel %vm4130, %v4172, %v4174
  %v4176 = vrot.slane %v2507, 2
  %v4177 = vsel %vm4130, %v4174, %v4176
  %v4178 = vrot.slane %v2508, 2
  %v4179 = vsel %vm4130, %v4176, %v4178
  %v4180 = vrot.slane %v2509, 2
  %v4181 = vsel %vm4130, %v4178, %v4180
  %v4182 = vrot.slane %v2510, 2
  %v4183 = vsel %vm4130, %v4180, %v4182
  %v4184 = vrot.slane %v2511, 2
  %v4185 = vsel %vm4130, %v4182, %v4184
  %v4186 = vrot.slane %v2512, 2
  %v4187 = vsel %vm4130, %v4184, %v4186
  %v4188 = vrot.slane %v2513, 2
  %v4189 = vsel %vm4130, %v4186, %v4188
  %v4190 = vrot.slane %v2514, 2
  %v4191 = vsel %vm4130, %v4188, %v4190
  %v4192 = vrot.slane %v2515, 2
  %v4193 = vsel %vm4130, %v4190, %v4192
  %v4194 = vrot.slane %v2516, 2
  %v4195 = vsel %vm4130, %v4192, %v4194
  %v4196 = vrot.slane %v2517, 2
  %v4197 = vsel %vm4130, %v4194, %v4196
  %v4198 = vrot.slane %v2518, 2
  %v4199 = vsel %vm4130, %v4196, %v4198
  %v4200 = vrot.slane %v2519, 2
  %v4201 = vsel %vm4130, %v4198, %v4200
  %v4202 = vrot.slane %v2520, 2
  %v4203 = vsel %vm4130, %v4200, %v4202
  %v4204 = vrot.slane %v2521, 2
  %v4205 = vsel %vm4130, %v4202, %v4204
  %v4206 = vrot.slane %v2522, 2
  %v4207 = vsel %vm4130, %v4204, %v4206
  %v4208 = vrot.slane %v2523, 2
  %v4209 = vsel %vm4130, %v4206, %v4208
  %v4210 = vrot.slane %v3183, 2
  %v4211 = vsel %vm4130, %v4208, %v4210
  %v4214 = vunpack.c.l.b16 %v4125
  %v4215 = vunpack.c.l.b16 %v4126
  %v4216 = vpack.c.b16 %v4215, %v4214
  %v4217 = vrot.slane %v4216, 3
  %v4219 = vsel %vm639, %v4133, 0
  %v4222 = vsel %vm639, %v4135, 0
  %v4225 = vsel %vm639, %v4137, 0
  %v4228 = vsel %vm639, %v4139, 0
  %v4231 = vsel %vm639, %v4141, 0
  %v4234 = vsel %vm639, %v4143, 0
  %v4237 = vsel %vm639, %v4145, 0
  %v4240 = vsel %vm639, %v4147, 0
  %v4243 = vsel %vm639, %v4149, 0
  %v4246 = vsel %vm639, %v4151, 0
  %v4249 = vsel %vm639, %v4153, 0
  %v4252 = vsel %vm639, %v4155, 0
  %v4255 = vsel %vm639, %v4157, 0
  %v4258 = vsel %vm639, %v4159, 0
  %v4261 = vsel %vm639, %v4161, 0
  %v4264 = vsel %vm639, %v4163, 0
  %v4267 = vsel %vm639, %v4165, 0
  %v4270 = vsel %vm639, %v4167, 0
  %v4273 = vsel %vm639, %v4169, 0
  %v4276 = vsel %vm639, %v4171, 0
  %v4279 = vsel %vm639, %v4173, 0
  %v4282 = vsel %vm639, %v4175, 0
  %v4285 = vsel %vm639, %v4177, 0
  %v4288 = vsel %vm639, %v4179, 0
  %v4291 = vsel %vm639, %v4181, 0
  %v4294 = vsel %vm639, %v4183, 0
  %v4297 = vsel %vm639, %v4185, 0
  %v4300 = vsel %vm639, %v4187, 0
  %v4303 = vsel %vm639, %v4189, 0
  %v4306 = vsel %vm639, %v4191, 0
  %v4309 = vsel %vm639, %v4193, 0
  %v4312 = vsel %vm639, %v4195, 0
  %v4315 = vsel %vm639, %v4197, 0
  %v4318 = vsel %vm639, %v4199, 0
  %v4321 = vsel %vm639, %v4201, 0
  %v4324 = vsel %vm639, %v4203, 0
  %v4327 = vsel %vm639, %v4205, 0
  %v4330 = vsel %vm639, %v4207, 0
  %v4333 = vsel %vm639, %v4209, 0
  %v4336 = vsel %vm639, %v4211, 0
  %v4339 = vsel %vm639, %v4210, 0
  %v4342 = vsel %vm763, %v4217, 0
  %4344 = vmatprep.subr.bf16.mxu0 0
  %4345 = vmatpush1.bf16.msra.mxu0 %v4342
  %4346 = vmatprep.subr.bf16.mxu0 0
  %4347 = vmatpush1.bf16.msra.mxu0 0
  %4348 = vmatprep.subr.bf16.mxu0 0
  %4349 = vmatpush1.bf16.msra.mxu0 0
  %4350 = vmatprep.subr.bf16.mxu0 0
  %4351 = vmatpush1.bf16.msra.mxu0 0
  %4352 = vmatprep.subr.bf16.mxu0 0
  %4353 = vmatpush1.bf16.msra.mxu0 0
  %4354 = vmatprep.subr.bf16.mxu0 0
  %4355 = vmatpush1.bf16.msra.mxu0 0
  %4356 = vmatprep.subr.bf16.mxu0 0
  %4357 = vmatpush1.bf16.msra.mxu0 0
  %4358 = vmatprep.subr.bf16.mxu0 0
  %4359 = vmatpush1.bf16.msra.mxu0 0
  %4360 = vmatprep.subr.bf16.mxu0 0
  %4361 = vmatpush1.bf16.msra.mxu0 0
  %4362 = vmatprep.subr.bf16.mxu0 0
  %4363 = vmatpush1.bf16.msra.mxu0 0
  %4364 = vmatprep.subr.bf16.mxu0 0
  %4365 = vmatpush1.bf16.msra.mxu0 0
  %4366 = vmatprep.subr.bf16.mxu0 0
  %4367 = vmatpush1.bf16.msra.mxu0 0
  %4368 = vmatprep.subr.bf16.mxu0 0
  %4369 = vmatpush1.bf16.msra.mxu0 0
  %4370 = vmatprep.subr.bf16.mxu0 0
  %4371 = vmatpush1.bf16.msra.mxu0 0
  %4372 = vmatprep.subr.bf16.mxu0 0
  %4373 = vmatpush1.bf16.msra.mxu0 0
  %4374 = vmatprep.subr.bf16.mxu0 0
  %4375 = vmatpush1.bf16.msra.mxu0 0
  %4376 = vmatprep.mubr.bf16.mxu0 0
  %4377 = vmatmul.mubr.bf16.gmra.mrb[0].mxu0 %v4219
  %v4378 = vpop.f32.mrb[0].mxu0
  %v4379 = vadd.f32 0.0, %v4378
  %v4380 = vpop.f32.mrb[0].mxu0
  %v4381 = vpop.f32.mrb[0].mxu0
  %v4382 = vadd.f32 0.0, %v4381
  %v4383 = vpop.f32.mrb[0].mxu0
  %4384 = vmatprep.mubr.bf16.mxu0 0
  %4385 = vmatmul.mubr.bf16.gmra.mrb[0].mxu0 %v4222
  %v4386 = vpop.f32.mrb[0].mxu0
  %v4387 = vadd.f32 0.0, %v4386
  %v4388 = vpop.f32.mrb[0].mxu0
  %v4389 = vpop.f32.mrb[0].mxu0
  %v4390 = vadd.f32 0.0, %v4389
  %v4391 = vpop.f32.mrb[0].mxu0
  %4392 = vmatprep.mubr.bf16.mxu0 0
  %4393 = vmatmul.mubr.bf16.gmra.mrb[0].mxu0 %v4225
  %v4394 = vpop.f32.mrb[0].mxu0
  %v4395 = vadd.f32 0.0, %v4394
  %v4396 = vpop.f32.mrb[0].mxu0
  %v4397 = vpop.f32.mrb[0].mxu0
  %v4398 = vadd.f32 0.0, %v4397
  %v4399 = vpop.f32.mrb[0].mxu0
  %4400 = vmatprep.mubr.bf16.mxu0 0
  %4401 = vmatmul.mubr.bf16.gmra.mrb[0].mxu0 %v4228
  %v4402 = vpop.f32.mrb[0].mxu0
  %v4403 = vadd.f32 0.0, %v4402
  %v4404 = vpop.f32.mrb[0].mxu0
  %v4405 = vpop.f32.mrb[0].mxu0
  %v4406 = vadd.f32 0.0, %v4405
  %v4407 = vpop.f32.mrb[0].mxu0
  %4408 = vmatprep.mubr.bf16.mxu0 0
  %4409 = vmatmul.mubr.bf16.gmra.mrb[0].mxu0 %v4231
  %v4410 = vpop.f32.mrb[0].mxu0
  %v4411 = vadd.f32 0.0, %v4410
  %v4412 = vpop.f32.mrb[0].mxu0
  %v4413 = vpop.f32.mrb[0].mxu0
  %v4414 = vadd.f32 0.0, %v4413
  %v4415 = vpop.f32.mrb[0].mxu0
  %4416 = vmatprep.mubr.bf16.mxu0 0
  %4417 = vmatmul.mubr.bf16.gmra.mrb[0].mxu0 %v4234
  %v4418 = vpop.f32.mrb[0].mxu0
  %v4419 = vadd.f32 0.0, %v4418
  %v4420 = vpop.f32.mrb[0].mxu0
  %v4421 = vpop.f32.mrb[0].mxu0
  %v4422 = vadd.f32 0.0, %v4421
  %v4423 = vpop.f32.mrb[0].mxu0
  %4424 = vmatprep.mubr.bf16.mxu0 0
  %4425 = vmatmul.mubr.bf16.gmra.mrb[0].mxu0 %v4237
  %v4426 = vpop.f32.mrb[0].mxu0
  %v4427 = vadd.f32 0.0, %v4426
  %v4428 = vpop.f32.mrb[0].mxu0
  %v4429 = vpop.f32.mrb[0].mxu0
  %v4430 = vadd.f32 0.0, %v4429
  %v4431 = vpop.f32.mrb[0].mxu0
  %4432 = vmatprep.mubr.bf16.mxu0 0
  %4433 = vmatmul.mubr.bf16.gmra.mrb[0].mxu0 %v4240
  %v4434 = vpop.f32.mrb[0].mxu0
  %v4435 = vadd.f32 0.0, %v4434
  %v4436 = vpop.f32.mrb[0].mxu0
  %v4437 = vpop.f32.mrb[0].mxu0
  %v4438 = vadd.f32 0.0, %v4437
  %v4439 = vpop.f32.mrb[0].mxu0
  %4440 = vmatprep.mubr.bf16.mxu0 0
  %4441 = vmatmul.mubr.bf16.gmra.mrb[0].mxu0 %v4243
  %v4442 = vpop.f32.mrb[0].mxu0
  %v4443 = vadd.f32 0.0, %v4442
  %v4444 = vpop.f32.mrb[0].mxu0
  %v4445 = vpop.f32.mrb[0].mxu0
  %v4446 = vadd.f32 0.0, %v4445
  %v4447 = vpop.f32.mrb[0].mxu0
  %4448 = vmatprep.mubr.bf16.mxu0 0
  %4449 = vmatmul.mubr.bf16.gmra.mrb[0].mxu0 %v4246
  %v4450 = vpop.f32.mrb[0].mxu0
  %v4451 = vadd.f32 0.0, %v4450
  %v4452 = vpop.f32.mrb[0].mxu0
  %v4453 = vpop.f32.mrb[0].mxu0
  %v4454 = vadd.f32 0.0, %v4453
  %v4455 = vpop.f32.mrb[0].mxu0
  %4456 = vmatprep.mubr.bf16.mxu0 0
  %4457 = vmatmul.mubr.bf16.gmra.mrb[0].mxu0 %v4249
  %v4458 = vpop.f32.mrb[0].mxu0
  %v4459 = vadd.f32 0.0, %v4458
  %v4460 = vpop.f32.mrb[0].mxu0
  %v4461 = vpop.f32.mrb[0].mxu0
  %v4462 = vadd.f32 0.0, %v4461
  %v4463 = vpop.f32.mrb[0].mxu0
  %4464 = vmatprep.mubr.bf16.mxu0 0
  %4465 = vmatmul.mubr.bf16.gmra.mrb[0].mxu0 %v4252
  %v4466 = vpop.f32.mrb[0].mxu0
  %v4467 = vadd.f32 0.0, %v4466
  %v4468 = vpop.f32.mrb[0].mxu0
  %v4469 = vpop.f32.mrb[0].mxu0
  %v4470 = vadd.f32 0.0, %v4469
  %v4471 = vpop.f32.mrb[0].mxu0
  %4472 = vmatprep.mubr.bf16.mxu0 0
  %4473 = vmatmul.mubr.bf16.gmra.mrb[0].mxu0 %v4255
  %v4474 = vpop.f32.mrb[0].mxu0
  %v4475 = vadd.f32 0.0, %v4474
  %v4476 = vpop.f32.mrb[0].mxu0
  %v4477 = vpop.f32.mrb[0].mxu0
  %v4478 = vadd.f32 0.0, %v4477
  %v4479 = vpop.f32.mrb[0].mxu0
  %4480 = vmatprep.mubr.bf16.mxu0 0
  %4481 = vmatmul.mubr.bf16.gmra.mrb[0].mxu0 %v4258
  %v4482 = vpop.f32.mrb[0].mxu0
  %v4483 = vadd.f32 0.0, %v4482
  %v4484 = vpop.f32.mrb[0].mxu0
  %v4485 = vpop.f32.mrb[0].mxu0
  %v4486 = vadd.f32 0.0, %v4485
  %v4487 = vpop.f32.mrb[0].mxu0
  %4488 = vmatprep.mubr.bf16.mxu0 0
  %4489 = vmatmul.mubr.bf16.gmra.mrb[0].mxu0 %v4261
  %v4490 = vpop.f32.mrb[0].mxu0
  %v4491 = vadd.f32 0.0, %v4490
  %v4492 = vpop.f32.mrb[0].mxu0
  %v4493 = vpop.f32.mrb[0].mxu0
  %v4494 = vadd.f32 0.0, %v4493
  %v4495 = vpop.f32.mrb[0].mxu0
  %4496 = vmatprep.mubr.bf16.mxu0 0
  %4497 = vmatmul.mubr.bf16.gmra.mrb[0].mxu0 %v4264
  %v4498 = vpop.f32.mrb[0].mxu0
  %v4499 = vadd.f32 0.0, %v4498
  %v4500 = vpop.f32.mrb[0].mxu0
  %v4501 = vpop.f32.mrb[0].mxu0
  %v4502 = vadd.f32 0.0, %v4501
  %v4503 = vpop.f32.mrb[0].mxu0
  %4504 = vmatprep.mubr.bf16.mxu0 0
  %4505 = vmatmul.mubr.bf16.gmra.mrb[0].mxu0 %v4267
  %v4506 = vpop.f32.mrb[0].mxu0
  %v4507 = vadd.f32 0.0, %v4506
  %v4508 = vpop.f32.mrb[0].mxu0
  %v4509 = vpop.f32.mrb[0].mxu0
  %v4510 = vadd.f32 0.0, %v4509
  %v4511 = vpop.f32.mrb[0].mxu0
  %4512 = vmatprep.mubr.bf16.mxu0 0
  %4513 = vmatmul.mubr.bf16.gmra.mrb[0].mxu0 %v4270
  %v4514 = vpop.f32.mrb[0].mxu0
  %v4515 = vadd.f32 0.0, %v4514
  %v4516 = vpop.f32.mrb[0].mxu0
  %v4517 = vpop.f32.mrb[0].mxu0
  %v4518 = vadd.f32 0.0, %v4517
  %v4519 = vpop.f32.mrb[0].mxu0
  %4520 = vmatprep.mubr.bf16.mxu0 0
  %4521 = vmatmul.mubr.bf16.gmra.mrb[0].mxu0 %v4273
  %v4522 = vpop.f32.mrb[0].mxu0
  %v4523 = vadd.f32 0.0, %v4522
  %v4524 = vpop.f32.mrb[0].mxu0
  %v4525 = vpop.f32.mrb[0].mxu0
  %v4526 = vadd.f32 0.0, %v4525
  %v4527 = vpop.f32.mrb[0].mxu0
  %4528 = vmatprep.mubr.bf16.mxu0 0
  %4529 = vmatmul.mubr.bf16.gmra.mrb[0].mxu0 %v4276
  %v4530 = vpop.f32.mrb[0].mxu0
  %v4531 = vadd.f32 0.0, %v4530
  %v4532 = vpop.f32.mrb[0].mxu0
  %v4533 = vpop.f32.mrb[0].mxu0
  %v4534 = vadd.f32 0.0, %v4533
  %v4535 = vpop.f32.mrb[0].mxu0
  %4536 = vmatprep.mubr.bf16.mxu0 0
  %4537 = vmatmul.mubr.bf16.gmra.mrb[0].mxu0 %v4279
  %v4538 = vpop.f32.mrb[0].mxu0
  %v4539 = vadd.f32 0.0, %v4538
  %v4540 = vpop.f32.mrb[0].mxu0
  %v4541 = vpop.f32.mrb[0].mxu0
  %v4542 = vadd.f32 0.0, %v4541
  %v4543 = vpop.f32.mrb[0].mxu0
  %4544 = vmatprep.mubr.bf16.mxu0 0
  %4545 = vmatmul.mubr.bf16.gmra.mrb[0].mxu0 %v4282
  %v4546 = vpop.f32.mrb[0].mxu0
  %v4547 = vadd.f32 0.0, %v4546
  %v4548 = vpop.f32.mrb[0].mxu0
  %v4549 = vpop.f32.mrb[0].mxu0
  %v4550 = vadd.f32 0.0, %v4549
  %v4551 = vpop.f32.mrb[0].mxu0
  %4552 = vmatprep.mubr.bf16.mxu0 0
  %4553 = vmatmul.mubr.bf16.gmra.mrb[0].mxu0 %v4285
  %v4554 = vpop.f32.mrb[0].mxu0
  %v4555 = vadd.f32 0.0, %v4554
  %v4556 = vpop.f32.mrb[0].mxu0
  %v4557 = vpop.f32.mrb[0].mxu0
  %v4558 = vadd.f32 0.0, %v4557
  %v4559 = vpop.f32.mrb[0].mxu0
  %4560 = vmatprep.mubr.bf16.mxu0 0
  %4561 = vmatmul.mubr.bf16.gmra.mrb[0].mxu0 %v4288
  %v4562 = vpop.f32.mrb[0].mxu0
  %v4563 = vadd.f32 0.0, %v4562
  %v4564 = vpop.f32.mrb[0].mxu0
  %v4565 = vpop.f32.mrb[0].mxu0
  %v4566 = vadd.f32 0.0, %v4565
  %v4567 = vpop.f32.mrb[0].mxu0
  %4568 = vmatprep.mubr.bf16.mxu0 0
  %4569 = vmatmul.mubr.bf16.gmra.mrb[0].mxu0 %v4291
  %v4570 = vpop.f32.mrb[0].mxu0
  %v4571 = vadd.f32 0.0, %v4570
  %v4572 = vpop.f32.mrb[0].mxu0
  %v4573 = vpop.f32.mrb[0].mxu0
  %v4574 = vadd.f32 0.0, %v4573
  %v4575 = vpop.f32.mrb[0].mxu0
  %4576 = vmatprep.mubr.bf16.mxu0 0
  %4577 = vmatmul.mubr.bf16.gmra.mrb[0].mxu0 %v4294
  %v4578 = vpop.f32.mrb[0].mxu0
  %v4579 = vadd.f32 0.0, %v4578
  %v4580 = vpop.f32.mrb[0].mxu0
  %v4581 = vpop.f32.mrb[0].mxu0
  %v4582 = vadd.f32 0.0, %v4581
  %v4583 = vpop.f32.mrb[0].mxu0
  %4584 = vmatprep.mubr.bf16.mxu0 0
  %4585 = vmatmul.mubr.bf16.gmra.mrb[0].mxu0 %v4297
  %v4586 = vpop.f32.mrb[0].mxu0
  %v4587 = vadd.f32 0.0, %v4586
  %v4588 = vpop.f32.mrb[0].mxu0
  %v4589 = vpop.f32.mrb[0].mxu0
  %v4590 = vadd.f32 0.0, %v4589
  %v4591 = vpop.f32.mrb[0].mxu0
  %4592 = vmatprep.mubr.bf16.mxu0 0
  %4593 = vmatmul.mubr.bf16.gmra.mrb[0].mxu0 %v4300
  %v4594 = vpop.f32.mrb[0].mxu0
  %v4595 = vadd.f32 0.0, %v4594
  %v4596 = vpop.f32.mrb[0].mxu0
  %v4597 = vpop.f32.mrb[0].mxu0
  %v4598 = vadd.f32 0.0, %v4597
  %v4599 = vpop.f32.mrb[0].mxu0
  %4600 = vmatprep.mubr.bf16.mxu0 0
  %4601 = vmatmul.mubr.bf16.gmra.mrb[0].mxu0 %v4303
  %v4602 = vpop.f32.mrb[0].mxu0
  %v4603 = vadd.f32 0.0, %v4602
  %v4604 = vpop.f32.mrb[0].mxu0
  %v4605 = vpop.f32.mrb[0].mxu0
  %v4606 = vadd.f32 0.0, %v4605
  %v4607 = vpop.f32.mrb[0].mxu0
  %4608 = vmatprep.mubr.bf16.mxu0 0
  %4609 = vmatmul.mubr.bf16.gmra.mrb[0].mxu0 %v4306
  %v4610 = vpop.f32.mrb[0].mxu0
  %v4611 = vadd.f32 0.0, %v4610
  %v4612 = vpop.f32.mrb[0].mxu0
  %v4613 = vpop.f32.mrb[0].mxu0
  %v4614 = vadd.f32 0.0, %v4613
  %v4615 = vpop.f32.mrb[0].mxu0
  %4616 = vmatprep.mubr.bf16.mxu0 0
  %4617 = vmatmul.mubr.bf16.gmra.mrb[0].mxu0 %v4309
  %v4618 = vpop.f32.mrb[0].mxu0
  %v4619 = vadd.f32 0.0, %v4618
  %v4620 = vpop.f32.mrb[0].mxu0
  %v4621 = vpop.f32.mrb[0].mxu0
  %v4622 = vadd.f32 0.0, %v4621
  %v4623 = vpop.f32.mrb[0].mxu0
  %4624 = vmatprep.mubr.bf16.mxu0 0
  %4625 = vmatmul.mubr.bf16.gmra.mrb[0].mxu0 %v4312
  %v4626 = vpop.f32.mrb[0].mxu0
  %v4627 = vadd.f32 0.0, %v4626
  %v4628 = vpop.f32.mrb[0].mxu0
  %v4629 = vpop.f32.mrb[0].mxu0
  %v4630 = vadd.f32 0.0, %v4629
  %v4631 = vpop.f32.mrb[0].mxu0
  %4632 = vmatprep.mubr.bf16.mxu0 0
  %4633 = vmatmul.mubr.bf16.gmra.mrb[0].mxu0 %v4315
  %v4634 = vpop.f32.mrb[0].mxu0
  %v4635 = vadd.f32 0.0, %v4634
  %v4636 = vpop.f32.mrb[0].mxu0
  %v4637 = vpop.f32.mrb[0].mxu0
  %v4638 = vadd.f32 0.0, %v4637
  %v4639 = vpop.f32.mrb[0].mxu0
  %4640 = vmatprep.mubr.bf16.mxu0 0
  %4641 = vmatmul.mubr.bf16.gmra.mrb[0].mxu0 %v4318
  %v4642 = vpop.f32.mrb[0].mxu0
  %v4643 = vadd.f32 0.0, %v4642
  %v4644 = vpop.f32.mrb[0].mxu0
  %v4645 = vpop.f32.mrb[0].mxu0
  %v4646 = vadd.f32 0.0, %v4645
  %v4647 = vpop.f32.mrb[0].mxu0
  %4648 = vmatprep.mubr.bf16.mxu0 0
  %4649 = vmatmul.mubr.bf16.gmra.mrb[0].mxu0 %v4321
  %v4650 = vpop.f32.mrb[0].mxu0
  %v4651 = vadd.f32 0.0, %v4650
  %v4652 = vpop.f32.mrb[0].mxu0
  %v4653 = vpop.f32.mrb[0].mxu0
  %v4654 = vadd.f32 0.0, %v4653
  %v4655 = vpop.f32.mrb[0].mxu0
  %4656 = vmatprep.mubr.bf16.mxu0 0
  %4657 = vmatmul.mubr.bf16.gmra.mrb[0].mxu0 %v4324
  %v4658 = vpop.f32.mrb[0].mxu0
  %v4659 = vadd.f32 0.0, %v4658
  %v4660 = vpop.f32.mrb[0].mxu0
  %v4661 = vpop.f32.mrb[0].mxu0
  %v4662 = vadd.f32 0.0, %v4661
  %v4663 = vpop.f32.mrb[0].mxu0
  %4664 = vmatprep.mubr.bf16.mxu0 0
  %4665 = vmatmul.mubr.bf16.gmra.mrb[0].mxu0 %v4327
  %v4666 = vpop.f32.mrb[0].mxu0
  %v4667 = vadd.f32 0.0, %v4666
  %v4668 = vpop.f32.mrb[0].mxu0
  %v4669 = vpop.f32.mrb[0].mxu0
  %v4670 = vadd.f32 0.0, %v4669
  %v4671 = vpop.f32.mrb[0].mxu0
  %4672 = vmatprep.mubr.bf16.mxu0 0
  %4673 = vmatmul.mubr.bf16.gmra.mrb[0].mxu0 %v4330
  %v4674 = vpop.f32.mrb[0].mxu0
  %v4675 = vadd.f32 0.0, %v4674
  %v4676 = vpop.f32.mrb[0].mxu0
  %v4677 = vpop.f32.mrb[0].mxu0
  %v4678 = vadd.f32 0.0, %v4677
  %v4679 = vpop.f32.mrb[0].mxu0
  %4680 = vmatprep.mubr.bf16.mxu0 0
  %4681 = vmatmul.mubr.bf16.gmra.mrb[0].mxu0 %v4333
  %v4682 = vpop.f32.mrb[0].mxu0
  %v4683 = vadd.f32 0.0, %v4682
  %v4684 = vpop.f32.mrb[0].mxu0
  %v4685 = vpop.f32.mrb[0].mxu0
  %v4686 = vadd.f32 0.0, %v4685
  %v4687 = vpop.f32.mrb[0].mxu0
  %4688 = vmatprep.mubr.bf16.mxu0 0
  %4689 = vmatmul.mubr.bf16.gmra.mrb[0].mxu0 %v4336
  %v4690 = vpop.f32.mrb[0].mxu0
  %v4691 = vadd.f32 0.0, %v4690
  %v4692 = vpop.f32.mrb[0].mxu0
  %v4693 = vpop.f32.mrb[0].mxu0
  %v4694 = vadd.f32 0.0, %v4693
  %v4695 = vpop.f32.mrb[0].mxu0
  %4696 = vmatprep.mubr.bf16.mxu0 0
  %4697 = vmatmul.mubr.bf16.gmra.mrb[0].mxu0 %v4339
  %v4698 = vpop.f32.mrb[0].mxu0
  %v4699 = vadd.f32 0.0, %v4698
  %v4700 = vpop.f32.mrb[0].mxu0
  %v4701 = vpop.f32.mrb[0].mxu0
  %v4702 = vpop.f32.mrb[0].mxu0
  %4703 = vdwg.mxu0
  %v4704 = vadd.f32 %v4043, %v4379
  %v4705 = vadd.f32 %v4044, %v4382
  %v4706 = vadd.f32 %v4045, %v4387
  %v4707 = vadd.f32 %v4046, %v4390
  %v4708 = vadd.f32 %v4047, %v4395
  %v4709 = vadd.f32 %v4048, %v4398
  %v4710 = vadd.f32 %v4049, %v4403
  %v4711 = vadd.f32 %v4050, %v4406
  %v4712 = vadd.f32 %v4051, %v4411
  %v4713 = vadd.f32 %v4052, %v4414
  %v4714 = vadd.f32 %v4053, %v4419
  %v4715 = vadd.f32 %v4054, %v4422
  %v4716 = vadd.f32 %v4055, %v4427
  %v4717 = vadd.f32 %v4056, %v4430
  %v4718 = vadd.f32 %v4057, %v4435
  %v4719 = vadd.f32 %v4058, %v4438
  %v4720 = vadd.f32 %v4059, %v4443
  %v4721 = vadd.f32 %v4060, %v4446
  %v4722 = vadd.f32 %v4061, %v4451
  %v4723 = vadd.f32 %v4062, %v4454
  %v4724 = vadd.f32 %v4063, %v4459
  %v4725 = vadd.f32 %v4064, %v4462
  %v4726 = vadd.f32 %v4065, %v4467
  %v4727 = vadd.f32 %v4066, %v4470
  %v4728 = vadd.f32 %v4067, %v4475
  %v4729 = vadd.f32 %v4068, %v4478
  %v4730 = vadd.f32 %v4069, %v4483
  %v4731 = vadd.f32 %v4070, %v4486
  %v4732 = vadd.f32 %v4071, %v4491
  %v4733 = vadd.f32 %v4072, %v4494
  %v4734 = vadd.f32 %v4073, %v4499
  %v4735 = vadd.f32 %v4074, %v4502
  %v4736 = vadd.f32 %v4075, %v4507
  %v4737 = vadd.f32 %v4076, %v4510
  %v4738 = vadd.f32 %v4077, %v4515
  %v4739 = vadd.f32 %v4078, %v4518
  %v4740 = vadd.f32 %v4079, %v4523
  %v4741 = vadd.f32 %v4080, %v4526
  %v4742 = vadd.f32 %v4081, %v4531
  %v4743 = vadd.f32 %v4082, %v4534
  %v4744 = vadd.f32 %v4083, %v4539
  %v4745 = vadd.f32 %v4084, %v4542
  %v4746 = vadd.f32 %v4085, %v4547
  %v4747 = vadd.f32 %v4086, %v4550
  %v4748 = vadd.f32 %v4087, %v4555
  %v4749 = vadd.f32 %v4088, %v4558
  %v4750 = vadd.f32 %v4089, %v4563
  %v4751 = vadd.f32 %v4090, %v4566
  %v4752 = vadd.f32 %v4091, %v4571
  %v4753 = vadd.f32 %v4092, %v4574
  %v4754 = vadd.f32 %v4093, %v4579
  %v4755 = vadd.f32 %v4094, %v4582
  %v4756 = vadd.f32 %v4095, %v4587
  %v4757 = vadd.f32 %v4096, %v4590
  %v4758 = vadd.f32 %v4097, %v4595
  %v4759 = vadd.f32 %v4098, %v4598
  %v4760 = vadd.f32 %v4099, %v4603
  %v4761 = vadd.f32 %v4100, %v4606
  %v4762 = vadd.f32 %v4101, %v4611
  %v4763 = vadd.f32 %v4102, %v4614
  %v4764 = vadd.f32 %v4103, %v4619
  %v4765 = vadd.f32 %v4104, %v4622
  %v4766 = vadd.f32 %v4105, %v4627
  %v4767 = vadd.f32 %v4106, %v4630
  %v4768 = vadd.f32 %v4107, %v4635
  %v4769 = vadd.f32 %v4108, %v4638
  %v4770 = vadd.f32 %v4109, %v4643
  %v4771 = vadd.f32 %v4110, %v4646
  %v4772 = vadd.f32 %v4111, %v4651
  %v4773 = vadd.f32 %v4112, %v4654
  %v4774 = vadd.f32 %v4113, %v4659
  %v4775 = vadd.f32 %v4114, %v4662
  %v4776 = vadd.f32 %v4115, %v4667
  %v4777 = vadd.f32 %v4116, %v4670
  %v4778 = vadd.f32 %v4117, %v4675
  %v4779 = vadd.f32 %v4118, %v4678
  %v4780 = vadd.f32 %v4119, %v4683
  %v4781 = vadd.f32 %v4120, %v4686
  %v4782 = vadd.f32 %v4121, %v4691
  %v4783 = vadd.f32 %v4122, %v4694
  %v4784 = vadd.f32 %v4123, %v4699
  %v4785 = vld [vmem:[%s0 + $0x10] sm:$0xc]
  %v4786 = vld [vmem:[%s0 + $0x14] sm:$0xf]
  %v4787 = vld [vmem:[%s0 + $0x18] sm:$0xf]
  %v4788 = vld [vmem:[%s0 + $0x1c] sm:$0xf]
  %v4789 = vld [vmem:[%s0 + $0x20] sm:$0xf]
  %v4790 = vld [vmem:[%s0 + $0x24] sm:$0xf]
  %v4791 = vld [vmem:[%s0 + $0x28] sm:$0xf]
  %v4792 = vld [vmem:[%s0 + $0x2c] sm:$0xf]
  %v4793 = vld [vmem:[%s0 + $0x30] sm:$0xf]
  %v4794 = vld [vmem:[%s0 + $0x34] sm:$0xf]
  %v4795 = vld [vmem:[%s0 + $0x38] sm:$0xf]
  %v4796 = vld [vmem:[%s0 + $0x3c] sm:$0xf]
  %v4797 = vld [vmem:[%s0 + $0x40] sm:$0xf]
  %v4798 = vld [vmem:[%s0 + $0x44] sm:$0xf]
  %v4799 = vld [vmem:[%s0 + $0x48] sm:$0xf]
  %v4800 = vld [vmem:[%s0 + $0x4c] sm:$0xf]
  %v4801 = vld [vmem:[%s0 + $0x50] sm:$0xf]
  %v4802 = vld [vmem:[%s0 + $0x54] sm:$0xf]
  %v4803 = vld [vmem:[%s0 + $0x58] sm:$0xf]
  %v4804 = vld [vmem:[%s0 + $0x5c] sm:$0xf]
  %v4805 = vld [vmem:[%s0 + $0x60] sm:$0xf]
  %v4806 = vld [vmem:[%s0 + $0x64] sm:$0xf]
  %v4807 = vld [vmem:[%s0 + $0x68] sm:$0xf]
  %v4808 = vld [vmem:[%s0 + $0x6c] sm:$0xf]
  %v4809 = vld [vmem:[%s0 + $0x70] sm:$0xf]
  %v4810 = vld [vmem:[%s0 + $0x74] sm:$0xf]
  %v4811 = vld [vmem:[%s0 + $0x78] sm:$0xf]
  %v4812 = vld [vmem:[%s0 + $0x7c] sm:$0xf]
  %v4813 = vld [vmem:[%s0 + $0x80] sm:$0xf]
  %v4814 = vld [vmem:[%s0 + $0x84] sm:$0xf]
  %v4815 = vld [vmem:[%s0 + $0x88] sm:$0xf]
  %v4816 = vld [vmem:[%s0 + $0x8c] sm:$0xf]
  %v4817 = vld [vmem:[%s0 + $0x90] sm:$0xf]
  %v4818 = vld [vmem:[%s0 + $0x94] sm:$0xf]
  %v4819 = vld [vmem:[%s0 + $0x98] sm:$0xf]
  %v4820 = vld [vmem:[%s0 + $0x9c] sm:$0xf]
  %v4821 = vld [vmem:[%s0 + $0xa0] sm:$0xf]
  %v4822 = vld [vmem:[%s0 + $0xa4] sm:$0xf]
  %v4823 = vld [vmem:[%s0 + $0xa8] sm:$0xf]
  %v4824 = vld [vmem:[%s0 + $0xac] sm:$0xf]
  %v4825 = vld [vmem:[%s0 + $0xb0] sm:$0xf]
  %v4826 = vld [vmem:[%s0 + $0xb4] sm:$0xf]
  %v4827 = vld [vmem:[%s0 + $0xb8] sm:$0xf]
  %v4828 = vld [vmem:[%s0 + $0xbc] sm:$0xf]
  %v4829 = vld [vmem:[%s0 + $0xc0] sm:$0xf]
  %v4830 = vld [vmem:[%s0 + $0xc4] sm:$0xf]
  %v4831 = vld [vmem:[%s0 + $0xc8] sm:$0xf]
  %v4832 = vld [vmem:[%s0 + $0xcc] sm:$0xf]
  %v4833 = vld [vmem:[%s0 + $0xd0] sm:$0xf]
  %v4834 = vld [vmem:[%s0 + $0xd4] sm:$0xf]
  %v4835 = vld [vmem:[%s0 + $0xd8] sm:$0xf]
  %v4836 = vld [vmem:[%s0 + $0xdc] sm:$0xf]
  %v4837 = vld [vmem:[%s0 + $0xe0] sm:$0xf]
  %v4838 = vld [vmem:[%s0 + $0xe4] sm:$0xf]
  %v4839 = vld [vmem:[%s0 + $0xe8] sm:$0xf]
  %v4840 = vld [vmem:[%s0 + $0xec] sm:$0xf]
  %v4841 = vld [vmem:[%s0 + $0xf0] sm:$0xf]
  %v4842 = vld [vmem:[%s0 + $0xf4] sm:$0xf]
  %v4843 = vld [vmem:[%s0 + $0xf8] sm:$0xf]
  %v4844 = vld [vmem:[%s0 + $0xfc] sm:$0xf]
  %v4845 = vld [vmem:[%s0 + $0x100] sm:$0xf]
  %v4846 = vld [vmem:[%s0 + $0x104] sm:$0xf]
  %v4847 = vld [vmem:[%s0 + $0x108] sm:$0xf]
  %v4848 = vld [vmem:[%s0 + $0x10c] sm:$0xf]
  %v4849 = vld [vmem:[%s0 + $0x110] sm:$0xf]
  %v4850 = vld [vmem:[%s0 + $0x114] sm:$0xf]
  %v4851 = vld [vmem:[%s0 + $0x118] sm:$0xf]
  %v4852 = vld [vmem:[%s0 + $0x11c] sm:$0xf]
  %v4853 = vld [vmem:[%s0 + $0x120] sm:$0xf]
  %v4854 = vld [vmem:[%s0 + $0x124] sm:$0xf]
  %v4855 = vld [vmem:[%s0 + $0x128] sm:$0xf]
  %v4856 = vld [vmem:[%s0 + $0x12c] sm:$0xf]
  %v4857 = vld [vmem:[%s0 + $0x130] sm:$0xf]
  %v4858 = vld [vmem:[%s0 + $0x134] sm:$0xf]
  %v4859 = vld [vmem:[%s0 + $0x138] sm:$0xf]
  %v4860 = vld [vmem:[%s0 + $0x13c] sm:$0xf]
  %v4861 = vld [vmem:[%s0 + $0x140] sm:$0xf]
  %v4862 = vld [vmem:[%s0 + $0x144] sm:$0xf]
  %v4863 = vld [vmem:[%s0 + $0x148] sm:$0xf]
  %v4864 = vld [vmem:[%s0 + $0x14c] sm:$0xf]
  %v4865 = vld [vmem:[%s0 + $0x150] sm:$0xf]
  %v4866 = vld [vmem:[%s0 + $0x154] sm:$0x3]
  %v4867 = vld [vmem:[%s2 + $0x48] sm:$0x6]
  %v4950 = vunpack.c.l.b16 %v4785
  %v4951 = vunpack.c.l.b16 %v4786
  %v4952 = vunpack.c.l.b16 %v4787
  %v4953 = vunpack.c.l.b16 %v4788
  %v4954 = vunpack.c.l.b16 %v4789
  %v4955 = vunpack.c.l.b16 %v4790
  %v4956 = vunpack.c.l.b16 %v4791
  %v4957 = vunpack.c.l.b16 %v4792
  %v4958 = vunpack.c.l.b16 %v4793
  %v4959 = vunpack.c.l.b16 %v4794
  %v4960 = vunpack.c.l.b16 %v4795
  %v4961 = vunpack.c.l.b16 %v4796
  %v4962 = vunpack.c.l.b16 %v4797
  %v4963 = vunpack.c.l.b16 %v4798
  %v4964 = vunpack.c.l.b16 %v4799
  %v4965 = vunpack.c.l.b16 %v4800
  %v4966 = vunpack.c.l.b16 %v4801
  %v4967 = vunpack.c.l.b16 %v4802
  %v4968 = vunpack.c.l.b16 %v4803
  %v4969 = vunpack.c.l.b16 %v4804
  %v4970 = vunpack.c.l.b16 %v4805
  %v4971 = vunpack.c.l.b16 %v4806
  %v4972 = vunpack.c.l.b16 %v4807
  %v4973 = vunpack.c.l.b16 %v4808
  %v4974 = vunpack.c.l.b16 %v4809
  %v4975 = vunpack.c.l.b16 %v4810
  %v4976 = vunpack.c.l.b16 %v4811
  %v4977 = vunpack.c.l.b16 %v4812
  %v4978 = vunpack.c.l.b16 %v4813
  %v4979 = vunpack.c.l.b16 %v4814
  %v4980 = vunpack.c.l.b16 %v4815
  %v4981 = vunpack.c.l.b16 %v4816
  %v4982 = vunpack.c.l.b16 %v4817
  %v4983 = vunpack.c.l.b16 %v4818
  %v4984 = vunpack.c.l.b16 %v4819
  %v4985 = vunpack.c.l.b16 %v4820
  %v4986 = vunpack.c.l.b16 %v4821
  %v4987 = vunpack.c.l.b16 %v4822
  %v4988 = vunpack.c.l.b16 %v4823
  %v4989 = vunpack.c.l.b16 %v4824
  %v4990 = vunpack.c.l.b16 %v4825
  %v4991 = vunpack.c.l.b16 %v4826
  %v4992 = vunpack.c.l.b16 %v4827
  %v4993 = vunpack.c.l.b16 %v4828
  %v4994 = vunpack.c.l.b16 %v4829
  %v4995 = vunpack.c.l.b16 %v4830
  %v4996 = vunpack.c.l.b16 %v4831
  %v4997 = vunpack.c.l.b16 %v4832
  %v4998 = vunpack.c.l.b16 %v4833
  %v4999 = vunpack.c.l.b16 %v4834
  %v5000 = vunpack.c.l.b16 %v4835
  %v5001 = vunpack.c.l.b16 %v4836
  %v5002 = vunpack.c.l.b16 %v4837
  %v5003 = vunpack.c.l.b16 %v4838
  %v5004 = vunpack.c.l.b16 %v4839
  %v5005 = vunpack.c.l.b16 %v4840
  %v5006 = vunpack.c.l.b16 %v4841
  %v5007 = vunpack.c.l.b16 %v4842
  %v5008 = vunpack.c.l.b16 %v4843
  %v5009 = vunpack.c.l.b16 %v4844
  %v5010 = vunpack.c.l.b16 %v4845
  %v5011 = vunpack.c.l.b16 %v4846
  %v5012 = vunpack.c.l.b16 %v4847
  %v5013 = vunpack.c.l.b16 %v4848
  %v5014 = vunpack.c.l.b16 %v4849
  %v5015 = vunpack.c.l.b16 %v4850
  %v5016 = vunpack.c.l.b16 %v4851
  %v5017 = vunpack.c.l.b16 %v4852
  %v5018 = vunpack.c.l.b16 %v4853
  %v5019 = vunpack.c.l.b16 %v4854
  %v5020 = vunpack.c.l.b16 %v4855
  %v5021 = vunpack.c.l.b16 %v4856
  %v5022 = vunpack.c.l.b16 %v4857
  %v5023 = vunpack.c.l.b16 %v4858
  %v5024 = vunpack.c.l.b16 %v4859
  %v5025 = vunpack.c.l.b16 %v4860
  %v5026 = vunpack.c.l.b16 %v4861
  %v5027 = vunpack.c.l.b16 %v4862
  %v5028 = vunpack.c.l.b16 %v4863
  %v5029 = vunpack.c.l.b16 %v4864
  %v5030 = vunpack.c.l.b16 %v4865
  %v5031 = vunpack.c.l.b16 %v4866
  %v5032 = vpack.c.b16 %v4951, %v4950
  %v5033 = vpack.c.b16 %v4953, %v4952
  %v5034 = vpack.c.b16 %v4955, %v4954
  %v5035 = vpack.c.b16 %v4957, %v4956
  %v5036 = vpack.c.b16 %v4959, %v4958
  %v5037 = vpack.c.b16 %v4961, %v4960
  %v5038 = vpack.c.b16 %v4963, %v4962
  %v5039 = vpack.c.b16 %v4965, %v4964
  %v5040 = vpack.c.b16 %v4967, %v4966
  %v5041 = vpack.c.b16 %v4969, %v4968
  %v5042 = vpack.c.b16 %v4971, %v4970
  %v5043 = vpack.c.b16 %v4973, %v4972
  %v5044 = vpack.c.b16 %v4975, %v4974
  %v5045 = vpack.c.b16 %v4977, %v4976
  %v5046 = vpack.c.b16 %v4979, %v4978
  %v5047 = vpack.c.b16 %v4981, %v4980
  %v5048 = vpack.c.b16 %v4983, %v4982
  %v5049 = vpack.c.b16 %v4985, %v4984
  %v5050 = vpack.c.b16 %v4987, %v4986
  %v5051 = vpack.c.b16 %v4989, %v4988
  %v5052 = vpack.c.b16 %v4991, %v4990
  %v5053 = vpack.c.b16 %v4993, %v4992
  %v5054 = vpack.c.b16 %v4995, %v4994
  %v5055 = vpack.c.b16 %v4997, %v4996
  %v5056 = vpack.c.b16 %v4999, %v4998
  %v5057 = vpack.c.b16 %v5001, %v5000
  %v5058 = vpack.c.b16 %v5003, %v5002
  %v5059 = vpack.c.b16 %v5005, %v5004
  %v5060 = vpack.c.b16 %v5007, %v5006
  %v5061 = vpack.c.b16 %v5009, %v5008
  %v5062 = vpack.c.b16 %v5011, %v5010
  %v5063 = vpack.c.b16 %v5013, %v5012
  %v5064 = vpack.c.b16 %v5015, %v5014
  %v5065 = vpack.c.b16 %v5017, %v5016
  %v5066 = vpack.c.b16 %v5019, %v5018
  %v5067 = vpack.c.b16 %v5021, %v5020
  %v5068 = vpack.c.b16 %v5023, %v5022
  %v5069 = vpack.c.b16 %v5025, %v5024
  %v5070 = vpack.c.b16 %v5027, %v5026
  %v5071 = vpack.c.b16 %v5029, %v5028
  %v5072 = vpack.c.b16 %v5031, %v5030
  %v5073 = vrot.slane %v5032, 2
  %v5074 = vrot.slane %v5033, 2
  %v5075 = vsel %vm4130, %v5073, %v5074
  %v5076 = vrot.slane %v5034, 2
  %v5077 = vsel %vm4130, %v5074, %v5076
  %v5078 = vrot.slane %v5035, 2
  %v5079 = vsel %vm4130, %v5076, %v5078
  %v5080 = vrot.slane %v5036, 2
  %v5081 = vsel %vm4130, %v5078, %v5080
  %v5082 = vrot.slane %v5037, 2
  %v5083 = vsel %vm4130, %v5080, %v5082
  %v5084 = vrot.slane %v5038, 2
  %v5085 = vsel %vm4130, %v5082, %v5084
  %v5086 = vrot.slane %v5039, 2
  %v5087 = vsel %vm4130, %v5084, %v5086
  %v5088 = vrot.slane %v5040, 2
  %v5089 = vsel %vm4130, %v5086, %v5088
  %v5090 = vrot.slane %v5041, 2
  %v5091 = vsel %vm4130, %v5088, %v5090
  %v5092 = vrot.slane %v5042, 2
  %v5093 = vsel %vm4130, %v5090, %v5092
  %v5094 = vrot.slane %v5043, 2
  %v5095 = vsel %vm4130, %v5092, %v5094
  %v5096 = vrot.slane %v5044, 2
  %v5097 = vsel %vm4130, %v5094, %v5096
  %v5098 = vrot.slane %v5045, 2
  %v5099 = vsel %vm4130, %v5096, %v5098
  %v5100 = vrot.slane %v5046, 2
  %v5101 = vsel %vm4130, %v5098, %v5100
  %v5102 = vrot.slane %v5047, 2
  %v5103 = vsel %vm4130, %v5100, %v5102
  %v5104 = vrot.slane %v5048, 2
  %v5105 = vsel %vm4130, %v5102, %v5104
  %v5106 = vrot.slane %v5049, 2
  %v5107 = vsel %vm4130, %v5104, %v5106
  %v5108 = vrot.slane %v5050, 2
  %v5109 = vsel %vm4130, %v5106, %v5108
  %v5110 = vrot.slane %v5051, 2
  %v5111 = vsel %vm4130, %v5108, %v5110
  %v5112 = vrot.slane %v5052, 2
  %v5113 = vsel %vm4130, %v5110, %v5112
  %v5114 = vrot.slane %v5053, 2
  %v5115 = vsel %vm4130, %v5112, %v5114
  %v5116 = vrot.slane %v5054, 2
  %v5117 = vsel %vm4130, %v5114, %v5116
  %v5118 = vrot.slane %v5055, 2
  %v5119 = vsel %vm4130, %v5116, %v5118
  %v5120 = vrot.slane %v5056, 2
  %v5121 = vsel %vm4130, %v5118, %v5120
  %v5122 = vrot.slane %v5057, 2
  %v5123 = vsel %vm4130, %v5120, %v5122
  %v5124 = vrot.slane %v5058, 2
  %v5125 = vsel %vm4130, %v5122, %v5124
  %v5126 = vrot.slane %v5059, 2
  %v5127 = vsel %vm4130, %v5124, %v5126
  %v5128 = vrot.slane %v5060, 2
  %v5129 = vsel %vm4130, %v5126, %v5128
  %v5130 = vrot.slane %v5061, 2
  %v5131 = vsel %vm4130, %v5128, %v5130
  %v5132 = vrot.slane %v5062, 2
  %v5133 = vsel %vm4130, %v5130, %v5132
  %v5134 = vrot.slane %v5063, 2
  %v5135 = vsel %vm4130, %v5132, %v5134
  %v5136 = vrot.slane %v5064, 2
  %v5137 = vsel %vm4130, %v5134, %v5136
  %v5138 = vrot.slane %v5065, 2
  %v5139 = vsel %vm4130, %v5136, %v5138
  %v5140 = vrot.slane %v5066, 2
  %v5141 = vsel %vm4130, %v5138, %v5140
  %v5142 = vrot.slane %v5067, 2
  %v5143 = vsel %vm4130, %v5140, %v5142
  %v5144 = vrot.slane %v5068, 2
  %v5145 = vsel %vm4130, %v5142, %v5144
  %v5146 = vrot.slane %v5069, 2
  %v5147 = vsel %vm4130, %v5144, %v5146
  %v5148 = vrot.slane %v5070, 2
  %v5149 = vsel %vm4130, %v5146, %v5148
  %v5150 = vrot.slane %v5071, 2
  %v5151 = vsel %vm4130, %v5148, %v5150
  %v5152 = vrot.slane %v5072, 2
  %v5153 = vsel %vm4130, %v5150, %v5152
  %v5155 = vunpack.c.l.b16 %v4867
  %v5156 = vpack.c.b16 %v5155, %v5155
  %v5157 = vrot.slane %v5156, 1
  %v5159 = vsel %vm639, %v5075, 0
  %v5162 = vsel %vm639, %v5077, 0
  %v5165 = vsel %vm639, %v5079, 0
  %v5168 = vsel %vm639, %v5081, 0
  %v5171 = vsel %vm639, %v5083, 0
  %v5174 = vsel %vm639, %v5085, 0
  %v5177 = vsel %vm639, %v5087, 0
  %v5180 = vsel %vm639, %v5089, 0
  %v5183 = vsel %vm639, %v5091, 0
  %v5186 = vsel %vm639, %v5093, 0
  %v5189 = vsel %vm639, %v5095, 0
  %v5192 = vsel %vm639, %v5097, 0
  %v5195 = vsel %vm639, %v5099, 0
  %v5198 = vsel %vm639, %v5101, 0
  %v5201 = vsel %vm639, %v5103, 0
  %v5204 = vsel %vm639, %v5105, 0
  %v5207 = vsel %vm639, %v5107, 0
  %v5210 = vsel %vm639, %v5109, 0
  %v5213 = vsel %vm639, %v5111, 0
  %v5216 = vsel %vm639, %v5113, 0
  %v5219 = vsel %vm639, %v5115, 0
  %v5222 = vsel %vm639, %v5117, 0
  %v5225 = vsel %vm639, %v5119, 0
  %v5228 = vsel %vm639, %v5121, 0
  %v5231 = vsel %vm639, %v5123, 0
  %v5234 = vsel %vm639, %v5125, 0
  %v5237 = vsel %vm639, %v5127, 0
  %v5240 = vsel %vm639, %v5129, 0
  %v5243 = vsel %vm639, %v5131, 0
  %v5246 = vsel %vm639, %v5133, 0
  %v5249 = vsel %vm639, %v5135, 0
  %v5252 = vsel %vm639, %v5137, 0
  %v5255 = vsel %vm639, %v5139, 0
  %v5258 = vsel %vm639, %v5141, 0
  %v5261 = vsel %vm639, %v5143, 0
  %v5264 = vsel %vm639, %v5145, 0
  %v5267 = vsel %vm639, %v5147, 0
  %v5270 = vsel %vm639, %v5149, 0
  %v5273 = vsel %vm639, %v5151, 0
  %v5276 = vsel %vm639, %v5153, 0
  %v5279 = vsel %vm639, %v5152, 0
  %v5282 = vsel %vm763, %v5157, 0
  %5284 = vmatprep.subr.bf16.mxu0 0
  %5285 = vmatpush1.bf16.msra.mxu0 %v5282
  %5286 = vmatprep.subr.bf16.mxu0 0
  %5287 = vmatpush1.bf16.msra.mxu0 0
  %5288 = vmatprep.subr.bf16.mxu0 0
  %5289 = vmatpush1.bf16.msra.mxu0 0
  %5290 = vmatprep.subr.bf16.mxu0 0
  %5291 = vmatpush1.bf16.msra.mxu0 0
  %5292 = vmatprep.subr.bf16.mxu0 0
  %5293 = vmatpush1.bf16.msra.mxu0 0
  %5294 = vmatprep.subr.bf16.mxu0 0
  %5295 = vmatpush1.bf16.msra.mxu0 0
  %5296 = vmatprep.subr.bf16.mxu0 0
  %5297 = vmatpush1.bf16.msra.mxu0 0
  %5298 = vmatprep.subr.bf16.mxu0 0
  %5299 = vmatpush1.bf16.msra.mxu0 0
  %5300 = vmatprep.subr.bf16.mxu0 0
  %5301 = vmatpush1.bf16.msra.mxu0 0
  %5302 = vmatprep.subr.bf16.mxu0 0
  %5303 = vmatpush1.bf16.msra.mxu0 0
  %5304 = vmatprep.subr.bf16.mxu0 0
  %5305 = vmatpush1.bf16.msra.mxu0 0
  %5306 = vmatprep.subr.bf16.mxu0 0
  %5307 = vmatpush1.bf16.msra.mxu0 0
  %5308 = vmatprep.subr.bf16.mxu0 0
  %5309 = vmatpush1.bf16.msra.mxu0 0
  %5310 = vmatprep.subr.bf16.mxu0 0
  %5311 = vmatpush1.bf16.msra.mxu0 0
  %5312 = vmatprep.subr.bf16.mxu0 0
  %5313 = vmatpush1.bf16.msra.mxu0 0
  %5314 = vmatprep.subr.bf16.mxu0 0
  %5315 = vmatpush1.bf16.msra.mxu0 0
  %5316 = vmatprep.mubr.bf16.mxu0 0
  %5317 = vmatmul.mubr.bf16.gmra.mrb[0].mxu0 %v5159
  %v5318 = vpop.f32.mrb[0].mxu0
  %v5319 = vadd.f32 0.0, %v5318
  %v5320 = vpop.f32.mrb[0].mxu0
  %v5321 = vpop.f32.mrb[0].mxu0
  %v5322 = vadd.f32 0.0, %v5321
  %v5323 = vpop.f32.mrb[0].mxu0
  %5324 = vmatprep.mubr.bf16.mxu0 0
  %5325 = vmatmul.mubr.bf16.gmra.mrb[0].mxu0 %v5162
  %v5326 = vpop.f32.mrb[0].mxu0
  %v5327 = vadd.f32 0.0, %v5326
  %v5328 = vpop.f32.mrb[0].mxu0
  %v5329 = vpop.f32.mrb[0].mxu0
  %v5330 = vadd.f32 0.0, %v5329
  %v5331 = vpop.f32.mrb[0].mxu0
  %5332 = vmatprep.mubr.bf16.mxu0 0
  %5333 = vmatmul.mubr.bf16.gmra.mrb[0].mxu0 %v5165
  %v5334 = vpop.f32.mrb[0].mxu0
  %v5335 = vadd.f32 0.0, %v5334
  %v5336 = vpop.f32.mrb[0].mxu0
  %v5337 = vpop.f32.mrb[0].mxu0
  %v5338 = vadd.f32 0.0, %v5337
  %v5339 = vpop.f32.mrb[0].mxu0
  %5340 = vmatprep.mubr.bf16.mxu0 0
  %5341 = vmatmul.mubr.bf16.gmra.mrb[0].mxu0 %v5168
  %v5342 = vpop.f32.mrb[0].mxu0
  %v5343 = vadd.f32 0.0, %v5342
  %v5344 = vpop.f32.mrb[0].mxu0
  %v5345 = vpop.f32.mrb[0].mxu0
  %v5346 = vadd.f32 0.0, %v5345
  %v5347 = vpop.f32.mrb[0].mxu0
  %5348 = vmatprep.mubr.bf16.mxu0 0
  %5349 = vmatmul.mubr.bf16.gmra.mrb[0].mxu0 %v5171
  %v5350 = vpop.f32.mrb[0].mxu0
  %v5351 = vadd.f32 0.0, %v5350
  %v5352 = vpop.f32.mrb[0].mxu0
  %v5353 = vpop.f32.mrb[0].mxu0
  %v5354 = vadd.f32 0.0, %v5353
  %v5355 = vpop.f32.mrb[0].mxu0
  %5356 = vmatprep.mubr.bf16.mxu0 0
  %5357 = vmatmul.mubr.bf16.gmra.mrb[0].mxu0 %v5174
  %v5358 = vpop.f32.mrb[0].mxu0
  %v5359 = vadd.f32 0.0, %v5358
  %v5360 = vpop.f32.mrb[0].mxu0
  %v5361 = vpop.f32.mrb[0].mxu0
  %v5362 = vadd.f32 0.0, %v5361
  %v5363 = vpop.f32.mrb[0].mxu0
  %5364 = vmatprep.mubr.bf16.mxu0 0
  %5365 = vmatmul.mubr.bf16.gmra.mrb[0].mxu0 %v5177
  %v5366 = vpop.f32.mrb[0].mxu0
  %v5367 = vadd.f32 0.0, %v5366
  %v5368 = vpop.f32.mrb[0].mxu0
  %v5369 = vpop.f32.mrb[0].mxu0
  %v5370 = vadd.f32 0.0, %v5369
  %v5371 = vpop.f32.mrb[0].mxu0
  %5372 = vmatprep.mubr.bf16.mxu0 0
  %5373 = vmatmul.mubr.bf16.gmra.mrb[0].mxu0 %v5180
  %v5374 = vpop.f32.mrb[0].mxu0
  %v5375 = vadd.f32 0.0, %v5374
  %v5376 = vpop.f32.mrb[0].mxu0
  %v5377 = vpop.f32.mrb[0].mxu0
  %v5378 = vadd.f32 0.0, %v5377
  %v5379 = vpop.f32.mrb[0].mxu0
  %5380 = vmatprep.mubr.bf16.mxu0 0
  %5381 = vmatmul.mubr.bf16.gmra.mrb[0].mxu0 %v5183
  %v5382 = vpop.f32.mrb[0].mxu0
  %v5383 = vadd.f32 0.0, %v5382
  %v5384 = vpop.f32.mrb[0].mxu0
  %v5385 = vpop.f32.mrb[0].mxu0
  %v5386 = vadd.f32 0.0, %v5385
  %v5387 = vpop.f32.mrb[0].mxu0
  %5388 = vmatprep.mubr.bf16.mxu0 0
  %5389 = vmatmul.mubr.bf16.gmra.mrb[0].mxu0 %v5186
  %v5390 = vpop.f32.mrb[0].mxu0
  %v5391 = vadd.f32 0.0, %v5390
  %v5392 = vpop.f32.mrb[0].mxu0
  %v5393 = vpop.f32.mrb[0].mxu0
  %v5394 = vadd.f32 0.0, %v5393
  %v5395 = vpop.f32.mrb[0].mxu0
  %5396 = vmatprep.mubr.bf16.mxu0 0
  %5397 = vmatmul.mubr.bf16.gmra.mrb[0].mxu0 %v5189
  %v5398 = vpop.f32.mrb[0].mxu0
  %v5399 = vadd.f32 0.0, %v5398
  %v5400 = vpop.f32.mrb[0].mxu0
  %v5401 = vpop.f32.mrb[0].mxu0
  %v5402 = vadd.f32 0.0, %v5401
  %v5403 = vpop.f32.mrb[0].mxu0
  %5404 = vmatprep.mubr.bf16.mxu0 0
  %5405 = vmatmul.mubr.bf16.gmra.mrb[0].mxu0 %v5192
  %v5406 = vpop.f32.mrb[0].mxu0
  %v5407 = vadd.f32 0.0, %v5406
  %v5408 = vpop.f32.mrb[0].mxu0
  %v5409 = vpop.f32.mrb[0].mxu0
  %v5410 = vadd.f32 0.0, %v5409
  %v5411 = vpop.f32.mrb[0].mxu0
  %5412 = vmatprep.mubr.bf16.mxu0 0
  %5413 = vmatmul.mubr.bf16.gmra.mrb[0].mxu0 %v5195
  %v5414 = vpop.f32.mrb[0].mxu0
  %v5415 = vadd.f32 0.0, %v5414
  %v5416 = vpop.f32.mrb[0].mxu0
  %v5417 = vpop.f32.mrb[0].mxu0
  %v5418 = vadd.f32 0.0, %v5417
  %v5419 = vpop.f32.mrb[0].mxu0
  %5420 = vmatprep.mubr.bf16.mxu0 0
  %5421 = vmatmul.mubr.bf16.gmra.mrb[0].mxu0 %v5198
  %v5422 = vpop.f32.mrb[0].mxu0
  %v5423 = vadd.f32 0.0, %v5422
  %v5424 = vpop.f32.mrb[0].mxu0
  %v5425 = vpop.f32.mrb[0].mxu0
  %v5426 = vadd.f32 0.0, %v5425
  %v5427 = vpop.f32.mrb[0].mxu0
  %5428 = vmatprep.mubr.bf16.mxu0 0
  %5429 = vmatmul.mubr.bf16.gmra.mrb[0].mxu0 %v5201
  %v5430 = vpop.f32.mrb[0].mxu0
  %v5431 = vadd.f32 0.0, %v5430
  %v5432 = vpop.f32.mrb[0].mxu0
  %v5433 = vpop.f32.mrb[0].mxu0
  %v5434 = vadd.f32 0.0, %v5433
  %v5435 = vpop.f32.mrb[0].mxu0
  %5436 = vmatprep.mubr.bf16.mxu0 0
  %5437 = vmatmul.mubr.bf16.gmra.mrb[0].mxu0 %v5204
  %v5438 = vpop.f32.mrb[0].mxu0
  %v5439 = vadd.f32 0.0, %v5438
  %v5440 = vpop.f32.mrb[0].mxu0
  %v5441 = vpop.f32.mrb[0].mxu0
  %v5442 = vadd.f32 0.0, %v5441
  %v5443 = vpop.f32.mrb[0].mxu0
  %5444 = vmatprep.mubr.bf16.mxu0 0
  %5445 = vmatmul.mubr.bf16.gmra.mrb[0].mxu0 %v5207
  %v5446 = vpop.f32.mrb[0].mxu0
  %v5447 = vadd.f32 0.0, %v5446
  %v5448 = vpop.f32.mrb[0].mxu0
  %v5449 = vpop.f32.mrb[0].mxu0
  %v5450 = vadd.f32 0.0, %v5449
  %v5451 = vpop.f32.mrb[0].mxu0
  %5452 = vmatprep.mubr.bf16.mxu0 0
  %5453 = vmatmul.mubr.bf16.gmra.mrb[0].mxu0 %v5210
  %v5454 = vpop.f32.mrb[0].mxu0
  %v5455 = vadd.f32 0.0, %v5454
  %v5456 = vpop.f32.mrb[0].mxu0
  %v5457 = vpop.f32.mrb[0].mxu0
  %v5458 = vadd.f32 0.0, %v5457
  %v5459 = vpop.f32.mrb[0].mxu0
  %5460 = vmatprep.mubr.bf16.mxu0 0
  %5461 = vmatmul.mubr.bf16.gmra.mrb[0].mxu0 %v5213
  %v5462 = vpop.f32.mrb[0].mxu0
  %v5463 = vadd.f32 0.0, %v5462
  %v5464 = vpop.f32.mrb[0].mxu0
  %v5465 = vpop.f32.mrb[0].mxu0
  %v5466 = vadd.f32 0.0, %v5465
  %v5467 = vpop.f32.mrb[0].mxu0
  %5468 = vmatprep.mubr.bf16.mxu0 0
  %5469 = vmatmul.mubr.bf16.gmra.mrb[0].mxu0 %v5216
  %v5470 = vpop.f32.mrb[0].mxu0
  %v5471 = vadd.f32 0.0, %v5470
  %v5472 = vpop.f32.mrb[0].mxu0
  %v5473 = vpop.f32.mrb[0].mxu0
  %v5474 = vadd.f32 0.0, %v5473
  %v5475 = vpop.f32.mrb[0].mxu0
  %5476 = vmatprep.mubr.bf16.mxu0 0
  %5477 = vmatmul.mubr.bf16.gmra.mrb[0].mxu0 %v5219
  %v5478 = vpop.f32.mrb[0].mxu0
  %v5479 = vadd.f32 0.0, %v5478
  %v5480 = vpop.f32.mrb[0].mxu0
  %v5481 = vpop.f32.mrb[0].mxu0
  %v5482 = vadd.f32 0.0, %v5481
  %v5483 = vpop.f32.mrb[0].mxu0
  %5484 = vmatprep.mubr.bf16.mxu0 0
  %5485 = vmatmul.mubr.bf16.gmra.mrb[0].mxu0 %v5222
  %v5486 = vpop.f32.mrb[0].mxu0
  %v5487 = vadd.f32 0.0, %v5486
  %v5488 = vpop.f32.mrb[0].mxu0
  %v5489 = vpop.f32.mrb[0].mxu0
  %v5490 = vadd.f32 0.0, %v5489
  %v5491 = vpop.f32.mrb[0].mxu0
  %5492 = vmatprep.mubr.bf16.mxu0 0
  %5493 = vmatmul.mubr.bf16.gmra.mrb[0].mxu0 %v5225
  %v5494 = vpop.f32.mrb[0].mxu0
  %v5495 = vadd.f32 0.0, %v5494
  %v5496 = vpop.f32.mrb[0].mxu0
  %v5497 = vpop.f32.mrb[0].mxu0
  %v5498 = vadd.f32 0.0, %v5497
  %v5499 = vpop.f32.mrb[0].mxu0
  %5500 = vmatprep.mubr.bf16.mxu0 0
  %5501 = vmatmul.mubr.bf16.gmra.mrb[0].mxu0 %v5228
  %v5502 = vpop.f32.mrb[0].mxu0
  %v5503 = vadd.f32 0.0, %v5502
  %v5504 = vpop.f32.mrb[0].mxu0
  %v5505 = vpop.f32.mrb[0].mxu0
  %v5506 = vadd.f32 0.0, %v5505
  %v5507 = vpop.f32.mrb[0].mxu0
  %5508 = vmatprep.mubr.bf16.mxu0 0
  %5509 = vmatmul.mubr.bf16.gmra.mrb[0].mxu0 %v5231
  %v5510 = vpop.f32.mrb[0].mxu0
  %v5511 = vadd.f32 0.0, %v5510
  %v5512 = vpop.f32.mrb[0].mxu0
  %v5513 = vpop.f32.mrb[0].mxu0
  %v5514 = vadd.f32 0.0, %v5513
  %v5515 = vpop.f32.mrb[0].mxu0
  %5516 = vmatprep.mubr.bf16.mxu0 0
  %5517 = vmatmul.mubr.bf16.gmra.mrb[0].mxu0 %v5234
  %v5518 = vpop.f32.mrb[0].mxu0
  %v5519 = vadd.f32 0.0, %v5518
  %v5520 = vpop.f32.mrb[0].mxu0
  %v5521 = vpop.f32.mrb[0].mxu0
  %v5522 = vadd.f32 0.0, %v5521
  %v5523 = vpop.f32.mrb[0].mxu0
  %5524 = vmatprep.mubr.bf16.mxu0 0
  %5525 = vmatmul.mubr.bf16.gmra.mrb[0].mxu0 %v5237
  %v5526 = vpop.f32.mrb[0].mxu0
  %v5527 = vadd.f32 0.0, %v5526
  %v5528 = vpop.f32.mrb[0].mxu0
  %v5529 = vpop.f32.mrb[0].mxu0
  %v5530 = vadd.f32 0.0, %v5529
  %v5531 = vpop.f32.mrb[0].mxu0
  %5532 = vmatprep.mubr.bf16.mxu0 0
  %5533 = vmatmul.mubr.bf16.gmra.mrb[0].mxu0 %v5240
  %v5534 = vpop.f32.mrb[0].mxu0
  %v5535 = vadd.f32 0.0, %v5534
  %v5536 = vpop.f32.mrb[0].mxu0
  %v5537 = vpop.f32.mrb[0].mxu0
  %v5538 = vadd.f32 0.0, %v5537
  %v5539 = vpop.f32.mrb[0].mxu0
  %5540 = vmatprep.mubr.bf16.mxu0 0
  %5541 = vmatmul.mubr.bf16.gmra.mrb[0].mxu0 %v5243
  %v5542 = vpop.f32.mrb[0].mxu0
  %v5543 = vadd.f32 0.0, %v5542
  %v5544 = vpop.f32.mrb[0].mxu0
  %v5545 = vpop.f32.mrb[0].mxu0
  %v5546 = vadd.f32 0.0, %v5545
  %v5547 = vpop.f32.mrb[0].mxu0
  %5548 = vmatprep.mubr.bf16.mxu0 0
  %5549 = vmatmul.mubr.bf16.gmra.mrb[0].mxu0 %v5246
  %v5550 = vpop.f32.mrb[0].mxu0
  %v5551 = vadd.f32 0.0, %v5550
  %v5552 = vpop.f32.mrb[0].mxu0
  %v5553 = vpop.f32.mrb[0].mxu0
  %v5554 = vadd.f32 0.0, %v5553
  %v5555 = vpop.f32.mrb[0].mxu0
  %5556 = vmatprep.mubr.bf16.mxu0 0
  %5557 = vmatmul.mubr.bf16.gmra.mrb[0].mxu0 %v5249
  %v5558 = vpop.f32.mrb[0].mxu0
  %v5559 = vadd.f32 0.0, %v5558
  %v5560 = vpop.f32.mrb[0].mxu0
  %v5561 = vpop.f32.mrb[0].mxu0
  %v5562 = vadd.f32 0.0, %v5561
  %v5563 = vpop.f32.mrb[0].mxu0
  %5564 = vmatprep.mubr.bf16.mxu0 0
  %5565 = vmatmul.mubr.bf16.gmra.mrb[0].mxu0 %v5252
  %v5566 = vpop.f32.mrb[0].mxu0
  %v5567 = vadd.f32 0.0, %v5566
  %v5568 = vpop.f32.mrb[0].mxu0
  %v5569 = vpop.f32.mrb[0].mxu0
  %v5570 = vadd.f32 0.0, %v5569
  %v5571 = vpop.f32.mrb[0].mxu0
  %5572 = vmatprep.mubr.bf16.mxu0 0
  %5573 = vmatmul.mubr.bf16.gmra.mrb[0].mxu0 %v5255
  %v5574 = vpop.f32.mrb[0].mxu0
  %v5575 = vadd.f32 0.0, %v5574
  %v5576 = vpop.f32.mrb[0].mxu0
  %v5577 = vpop.f32.mrb[0].mxu0
  %v5578 = vadd.f32 0.0, %v5577
  %v5579 = vpop.f32.mrb[0].mxu0
  %5580 = vmatprep.mubr.bf16.mxu0 0
  %5581 = vmatmul.mubr.bf16.gmra.mrb[0].mxu0 %v5258
  %v5582 = vpop.f32.mrb[0].mxu0
  %v5583 = vadd.f32 0.0, %v5582
  %v5584 = vpop.f32.mrb[0].mxu0
  %v5585 = vpop.f32.mrb[0].mxu0
  %v5586 = vadd.f32 0.0, %v5585
  %v5587 = vpop.f32.mrb[0].mxu0
  %5588 = vmatprep.mubr.bf16.mxu0 0
  %5589 = vmatmul.mubr.bf16.gmra.mrb[0].mxu0 %v5261
  %v5590 = vpop.f32.mrb[0].mxu0
  %v5591 = vadd.f32 0.0, %v5590
  %v5592 = vpop.f32.mrb[0].mxu0
  %v5593 = vpop.f32.mrb[0].mxu0
  %v5594 = vadd.f32 0.0, %v5593
  %v5595 = vpop.f32.mrb[0].mxu0
  %5596 = vmatprep.mubr.bf16.mxu0 0
  %5597 = vmatmul.mubr.bf16.gmra.mrb[0].mxu0 %v5264
  %v5598 = vpop.f32.mrb[0].mxu0
  %v5599 = vadd.f32 0.0, %v5598
  %v5600 = vpop.f32.mrb[0].mxu0
  %v5601 = vpop.f32.mrb[0].mxu0
  %v5602 = vadd.f32 0.0, %v5601
  %v5603 = vpop.f32.mrb[0].mxu0
  %5604 = vmatprep.mubr.bf16.mxu0 0
  %5605 = vmatmul.mubr.bf16.gmra.mrb[0].mxu0 %v5267
  %v5606 = vpop.f32.mrb[0].mxu0
  %v5607 = vadd.f32 0.0, %v5606
  %v5608 = vpop.f32.mrb[0].mxu0
  %v5609 = vpop.f32.mrb[0].mxu0
  %v5610 = vadd.f32 0.0, %v5609
  %v5611 = vpop.f32.mrb[0].mxu0
  %5612 = vmatprep.mubr.bf16.mxu0 0
  %5613 = vmatmul.mubr.bf16.gmra.mrb[0].mxu0 %v5270
  %v5614 = vpop.f32.mrb[0].mxu0
  %v5615 = vadd.f32 0.0, %v5614
  %v5616 = vpop.f32.mrb[0].mxu0
  %v5617 = vpop.f32.mrb[0].mxu0
  %v5618 = vadd.f32 0.0, %v5617
  %v5619 = vpop.f32.mrb[0].mxu0
  %5620 = vmatprep.mubr.bf16.mxu0 0
  %5621 = vmatmul.mubr.bf16.gmra.mrb[0].mxu0 %v5273
  %v5622 = vpop.f32.mrb[0].mxu0
  %v5623 = vadd.f32 0.0, %v5622
  %v5624 = vpop.f32.mrb[0].mxu0
  %v5625 = vpop.f32.mrb[0].mxu0
  %v5626 = vadd.f32 0.0, %v5625
  %v5627 = vpop.f32.mrb[0].mxu0
  %5628 = vmatprep.mubr.bf16.mxu0 0
  %5629 = vmatmul.mubr.bf16.gmra.mrb[0].mxu0 %v5276
  %v5630 = vpop.f32.mrb[0].mxu0
  %v5631 = vadd.f32 0.0, %v5630
  %v5632 = vpop.f32.mrb[0].mxu0
  %v5633 = vpop.f32.mrb[0].mxu0
  %v5634 = vadd.f32 0.0, %v5633
  %v5635 = vpop.f32.mrb[0].mxu0
  %5636 = vmatprep.mubr.bf16.mxu0 0
  %5637 = vmatmul.mubr.bf16.gmra.mrb[0].mxu0 %v5279
  %v5638 = vpop.f32.mrb[0].mxu0
  %v5639 = vadd.f32 0.0, %v5638
  %v5640 = vpop.f32.mrb[0].mxu0
  %v5641 = vpop.f32.mrb[0].mxu0
  %v5642 = vpop.f32.mrb[0].mxu0
  %5643 = vdwg.mxu0
  %v5644 = vadd.f32 %v4704, %v5319
  %v5645 = vadd.f32 %v4705, %v5322
  %v5646 = vadd.f32 %v4706, %v5327
  %v5647 = vadd.f32 %v4707, %v5330
  %v5648 = vadd.f32 %v4708, %v5335
  %v5649 = vadd.f32 %v4709, %v5338
  %v5650 = vadd.f32 %v4710, %v5343
  %v5651 = vadd.f32 %v4711, %v5346
  %v5652 = vadd.f32 %v4712, %v5351
  %v5653 = vadd.f32 %v4713, %v5354
  %v5654 = vadd.f32 %v4714, %v5359
  %v5655 = vadd.f32 %v4715, %v5362
  %v5656 = vadd.f32 %v4716, %v5367
  %v5657 = vadd.f32 %v4717, %v5370
  %v5658 = vadd.f32 %v4718, %v5375
  %v5659 = vadd.f32 %v4719, %v5378
  %v5660 = vadd.f32 %v4720, %v5383
  %v5661 = vadd.f32 %v4721, %v5386
  %v5662 = vadd.f32 %v4722, %v5391
  %v5663 = vadd.f32 %v4723, %v5394
  %v5664 = vadd.f32 %v4724, %v5399
  %v5665 = vadd.f32 %v4725, %v5402
  %v5666 = vadd.f32 %v4726, %v5407
  %v5667 = vadd.f32 %v4727, %v5410
  %v5668 = vadd.f32 %v4728, %v5415
  %v5669 = vadd.f32 %v4729, %v5418
  %v5670 = vadd.f32 %v4730, %v5423
  %v5671 = vadd.f32 %v4731, %v5426
  %v5672 = vadd.f32 %v4732, %v5431
  %v5673 = vadd.f32 %v4733, %v5434
  %v5674 = vadd.f32 %v4734, %v5439
  %v5675 = vadd.f32 %v4735, %v5442
  %v5676 = vadd.f32 %v4736, %v5447
  %v5677 = vadd.f32 %v4737, %v5450
  %v5678 = vadd.f32 %v4738, %v5455
  %v5679 = vadd.f32 %v4739, %v5458
  %v5680 = vadd.f32 %v4740, %v5463
  %v5681 = vadd.f32 %v4741, %v5466
  %v5682 = vadd.f32 %v4742, %v5471
  %v5683 = vadd.f32 %v4743, %v5474
  %v5684 = vadd.f32 %v4744, %v5479
  %v5685 = vadd.f32 %v4745, %v5482
  %v5686 = vadd.f32 %v4746, %v5487
  %v5687 = vadd.f32 %v4747, %v5490
  %v5688 = vadd.f32 %v4748, %v5495
  %v5689 = vadd.f32 %v4749, %v5498
  %v5690 = vadd.f32 %v4750, %v5503
  %v5691 = vadd.f32 %v4751, %v5506
  %v5692 = vadd.f32 %v4752, %v5511
  %v5693 = vadd.f32 %v4753, %v5514
  %v5694 = vadd.f32 %v4754, %v5519
  %v5695 = vadd.f32 %v4755, %v5522
  %v5696 = vadd.f32 %v4756, %v5527
  %v5697 = vadd.f32 %v4757, %v5530
  %v5698 = vadd.f32 %v4758, %v5535
  %v5699 = vadd.f32 %v4759, %v5538
  %v5700 = vadd.f32 %v4760, %v5543
  %v5701 = vadd.f32 %v4761, %v5546
  %v5702 = vadd.f32 %v4762, %v5551
  %v5703 = vadd.f32 %v4763, %v5554
  %v5704 = vadd.f32 %v4764, %v5559
  %v5705 = vadd.f32 %v4765, %v5562
  %v5706 = vadd.f32 %v4766, %v5567
  %v5707 = vadd.f32 %v4767, %v5570
  %v5708 = vadd.f32 %v4768, %v5575
  %v5709 = vadd.f32 %v4769, %v5578
  %v5710 = vadd.f32 %v4770, %v5583
  %v5711 = vadd.f32 %v4771, %v5586
  %v5712 = vadd.f32 %v4772, %v5591
  %v5713 = vadd.f32 %v4773, %v5594
  %v5714 = vadd.f32 %v4774, %v5599
  %v5715 = vadd.f32 %v4775, %v5602
  %v5716 = vadd.f32 %v4776, %v5607
  %v5717 = vadd.f32 %v4777, %v5610
  %v5718 = vadd.f32 %v4778, %v5615
  %v5719 = vadd.f32 %v4779, %v5618
  %v5720 = vadd.f32 %v4780, %v5623
  %v5721 = vadd.f32 %v4781, %v5626
  %v5722 = vadd.f32 %v4782, %v5631
  %v5723 = vadd.f32 %v4783, %v5634
  %v5724 = vadd.f32 %v4784, %v5639
  %v5725 = vld [vmem:[%s0 + $0x154] sm:$0x7]
  %v5726 = vld [vmem:[%s2 + $0x48] sm:$0x8]
  %v5727 = vld [vmem:[%s2 + $0x50] sm:$0x1]
  %v5729 = vunpack.c.l.b16 %v5725
  %v5730 = vpack.c.b16 %v5729, %v5030
  %vm5731 = vsmask.f32 5376
  %v5733 = vshrl.u32 %v5032, 16
  %v5735 = vrot.slane %v5733, 2
  %v5736 = vshll.u32 %v5032, 16
  %v5738 = vrot.slane %v5736, 3
  %v5739 = vor.u32 %v5735, %v5738
  %v5741 = vshrl.u32 %v5033, 16
  %v5743 = vrot.slane %v5741, 2
  %v5744 = vshll.u32 %v5033, 16
  %v5746 = vrot.slane %v5744, 3
  %v5747 = vor.u32 %v5743, %v5746
  %v5748 = vsel %vm5731, %v5739, %v5747
  %v5750 = vshrl.u32 %v5034, 16
  %v5752 = vrot.slane %v5750, 2
  %v5753 = vshll.u32 %v5034, 16
  %v5755 = vrot.slane %v5753, 3
  %v5756 = vor.u32 %v5752, %v5755
  %v5757 = vsel %vm5731, %v5747, %v5756
  %v5759 = vshrl.u32 %v5035, 16
  %v5761 = vrot.slane %v5759, 2
  %v5762 = vshll.u32 %v5035, 16
  %v5764 = vrot.slane %v5762, 3
  %v5765 = vor.u32 %v5761, %v5764
  %v5766 = vsel %vm5731, %v5756, %v5765
  %v5768 = vshrl.u32 %v5036, 16
  %v5770 = vrot.slane %v5768, 2
  %v5771 = vshll.u32 %v5036, 16
  %v5773 = vrot.slane %v5771, 3
  %v5774 = vor.u32 %v5770, %v5773
  %v5775 = vsel %vm5731, %v5765, %v5774
  %v5777 = vshrl.u32 %v5037, 16
  %v5779 = vrot.slane %v5777, 2
  %v5780 = vshll.u32 %v5037, 16
  %v5782 = vrot.slane %v5780, 3
  %v5783 = vor.u32 %v5779, %v5782
  %v5784 = vsel %vm5731, %v5774, %v5783
  %v5786 = vshrl.u32 %v5038, 16
  %v5788 = vrot.slane %v5786, 2
  %v5789 = vshll.u32 %v5038, 16
  %v5791 = vrot.slane %v5789, 3
  %v5792 = vor.u32 %v5788, %v5791
  %v5793 = vsel %vm5731, %v5783, %v5792
  %v5795 = vshrl.u32 %v5039, 16
  %v5797 = vrot.slane %v5795, 2
  %v5798 = vshll.u32 %v5039, 16
  %v5800 = vrot.slane %v5798, 3
  %v5801 = vor.u32 %v5797, %v5800
  %v5802 = vsel %vm5731, %v5792, %v5801
  %v5804 = vshrl.u32 %v5040, 16
  %v5806 = vrot.slane %v5804, 2
  %v5807 = vshll.u32 %v5040, 16
  %v5809 = vrot.slane %v5807, 3
  %v5810 = vor.u32 %v5806, %v5809
  %v5811 = vsel %vm5731, %v5801, %v5810
  %v5813 = vshrl.u32 %v5041, 16
  %v5815 = vrot.slane %v5813, 2
  %v5816 = vshll.u32 %v5041, 16
  %v5818 = vrot.slane %v5816, 3
  %v5819 = vor.u32 %v5815, %v5818
  %v5820 = vsel %vm5731, %v5810, %v5819
  %v5822 = vshrl.u32 %v5042, 16
  %v5824 = vrot.slane %v5822, 2
  %v5825 = vshll.u32 %v5042, 16
  %v5827 = vrot.slane %v5825, 3
  %v5828 = vor.u32 %v5824, %v5827
  %v5829 = vsel %vm5731, %v5819, %v5828
  %v5831 = vshrl.u32 %v5043, 16
  %v5833 = vrot.slane %v5831, 2
  %v5834 = vshll.u32 %v5043, 16
  %v5836 = vrot.slane %v5834, 3
  %v5837 = vor.u32 %v5833, %v5836
  %v5838 = vsel %vm5731, %v5828, %v5837
  %v5840 = vshrl.u32 %v5044, 16
  %v5842 = vrot.slane %v5840, 2
  %v5843 = vshll.u32 %v5044, 16
  %v5845 = vrot.slane %v5843, 3
  %v5846 = vor.u32 %v5842, %v5845
  %v5847 = vsel %vm5731, %v5837, %v5846
  %v5849 = vshrl.u32 %v5045, 16
  %v5851 = vrot.slane %v5849, 2
  %v5852 = vshll.u32 %v5045, 16
  %v5854 = vrot.slane %v5852, 3
  %v5855 = vor.u32 %v5851, %v5854
  %v5856 = vsel %vm5731, %v5846, %v5855
  %v5858 = vshrl.u32 %v5046, 16
  %v5860 = vrot.slane %v5858, 2
  %v5861 = vshll.u32 %v5046, 16
  %v5863 = vrot.slane %v5861, 3
  %v5864 = vor.u32 %v5860, %v5863
  %v5865 = vsel %vm5731, %v5855, %v5864
  %v5867 = vshrl.u32 %v5047, 16
  %v5869 = vrot.slane %v5867, 2
  %v5870 = vshll.u32 %v5047, 16
  %v5872 = vrot.slane %v5870, 3
  %v5873 = vor.u32 %v5869, %v5872
  %v5874 = vsel %vm5731, %v5864, %v5873
  %v5876 = vshrl.u32 %v5048, 16
  %v5878 = vrot.slane %v5876, 2
  %v5879 = vshll.u32 %v5048, 16
  %v5881 = vrot.slane %v5879, 3
  %v5882 = vor.u32 %v5878, %v5881
  %v5883 = vsel %vm5731, %v5873, %v5882
  %v5885 = vshrl.u32 %v5049, 16
  %v5887 = vrot.slane %v5885, 2
  %v5888 = vshll.u32 %v5049, 16
  %v5890 = vrot.slane %v5888, 3
  %v5891 = vor.u32 %v5887, %v5890
  %v5892 = vsel %vm5731, %v5882, %v5891
  %v5894 = vshrl.u32 %v5050, 16
  %v5896 = vrot.slane %v5894, 2
  %v5897 = vshll.u32 %v5050, 16
  %v5899 = vrot.slane %v5897, 3
  %v5900 = vor.u32 %v5896, %v5899
  %v5901 = vsel %vm5731, %v5891, %v5900
  %v5903 = vshrl.u32 %v5051, 16
  %v5905 = vrot.slane %v5903, 2
  %v5906 = vshll.u32 %v5051, 16
  %v5908 = vrot.slane %v5906, 3
  %v5909 = vor.u32 %v5905, %v5908
  %v5910 = vsel %vm5731, %v5900, %v5909
  %v5912 = vshrl.u32 %v5052, 16
  %v5914 = vrot.slane %v5912, 2
  %v5915 = vshll.u32 %v5052, 16
  %v5917 = vrot.slane %v5915, 3
  %v5918 = vor.u32 %v5914, %v5917
  %v5919 = vsel %vm5731, %v5909, %v5918
  %v5921 = vshrl.u32 %v5053, 16
  %v5923 = vrot.slane %v5921, 2
  %v5924 = vshll.u32 %v5053, 16
  %v5926 = vrot.slane %v5924, 3
  %v5927 = vor.u32 %v5923, %v5926
  %v5928 = vsel %vm5731, %v5918, %v5927
  %v5930 = vshrl.u32 %v5054, 16
  %v5932 = vrot.slane %v5930, 2
  %v5933 = vshll.u32 %v5054, 16
  %v5935 = vrot.slane %v5933, 3
  %v5936 = vor.u32 %v5932, %v5935
  %v5937 = vsel %vm5731, %v5927, %v5936
  %v5939 = vshrl.u32 %v5055, 16
  %v5941 = vrot.slane %v5939, 2
  %v5942 = vshll.u32 %v5055, 16
  %v5944 = vrot.slane %v5942, 3
  %v5945 = vor.u32 %v5941, %v5944
  %v5946 = vsel %vm5731, %v5936, %v5945
  %v5948 = vshrl.u32 %v5056, 16
  %v5950 = vrot.slane %v5948, 2
  %v5951 = vshll.u32 %v5056, 16
  %v5953 = vrot.slane %v5951, 3
  %v5954 = vor.u32 %v5950, %v5953
  %v5955 = vsel %vm5731, %v5945, %v5954
  %v5957 = vshrl.u32 %v5057, 16
  %v5959 = vrot.slane %v5957, 2
  %v5960 = vshll.u32 %v5057, 16
  %v5962 = vrot.slane %v5960, 3
  %v5963 = vor.u32 %v5959, %v5962
  %v5964 = vsel %vm5731, %v5954, %v5963
  %v5966 = vshrl.u32 %v5058, 16
  %v5968 = vrot.slane %v5966, 2
  %v5969 = vshll.u32 %v5058, 16
  %v5971 = vrot.slane %v5969, 3
  %v5972 = vor.u32 %v5968, %v5971
  %v5973 = vsel %vm5731, %v5963, %v5972
  %v5975 = vshrl.u32 %v5059, 16
  %v5977 = vrot.slane %v5975, 2
  %v5978 = vshll.u32 %v5059, 16
  %v5980 = vrot.slane %v5978, 3
  %v5981 = vor.u32 %v5977, %v5980
  %v5982 = vsel %vm5731, %v5972, %v5981
  %v5984 = vshrl.u32 %v5060, 16
  %v5986 = vrot.slane %v5984, 2
  %v5987 = vshll.u32 %v5060, 16
  %v5989 = vrot.slane %v5987, 3
  %v5990 = vor.u32 %v5986, %v5989
  %v5991 = vsel %vm5731, %v5981, %v5990
  %v5993 = vshrl.u32 %v5061, 16
  %v5995 = vrot.slane %v5993, 2
  %v5996 = vshll.u32 %v5061, 16
  %v5998 = vrot.slane %v5996, 3
  %v5999 = vor.u32 %v5995, %v5998
  %v6000 = vsel %vm5731, %v5990, %v5999
  %v6002 = vshrl.u32 %v5062, 16
  %v6004 = vrot.slane %v6002, 2
  %v6005 = vshll.u32 %v5062, 16
  %v6007 = vrot.slane %v6005, 3
  %v6008 = vor.u32 %v6004, %v6007
  %v6009 = vsel %vm5731, %v5999, %v6008
  %v6011 = vshrl.u32 %v5063, 16
  %v6013 = vrot.slane %v6011, 2
  %v6014 = vshll.u32 %v5063, 16
  %v6016 = vrot.slane %v6014, 3
  %v6017 = vor.u32 %v6013, %v6016
  %v6018 = vsel %vm5731, %v6008, %v6017
  %v6020 = vshrl.u32 %v5064, 16
  %v6022 = vrot.slane %v6020, 2
  %v6023 = vshll.u32 %v5064, 16
  %v6025 = vrot.slane %v6023, 3
  %v6026 = vor.u32 %v6022, %v6025
  %v6027 = vsel %vm5731, %v6017, %v6026
  %v6029 = vshrl.u32 %v5065, 16
  %v6031 = vrot.slane %v6029, 2
  %v6032 = vshll.u32 %v5065, 16
  %v6034 = vrot.slane %v6032, 3
  %v6035 = vor.u32 %v6031, %v6034
  %v6036 = vsel %vm5731, %v6026, %v6035
  %v6038 = vshrl.u32 %v5066, 16
  %v6040 = vrot.slane %v6038, 2
  %v6041 = vshll.u32 %v5066, 16
  %v6043 = vrot.slane %v6041, 3
  %v6044 = vor.u32 %v6040, %v6043
  %v6045 = vsel %vm5731, %v6035, %v6044
  %v6047 = vshrl.u32 %v5067, 16
  %v6049 = vrot.slane %v6047, 2
  %v6050 = vshll.u32 %v5067, 16
  %v6052 = vrot.slane %v6050, 3
  %v6053 = vor.u32 %v6049, %v6052
  %v6054 = vsel %vm5731, %v6044, %v6053
  %v6056 = vshrl.u32 %v5068, 16
  %v6058 = vrot.slane %v6056, 2
  %v6059 = vshll.u32 %v5068, 16
  %v6061 = vrot.slane %v6059, 3
  %v6062 = vor.u32 %v6058, %v6061
  %v6063 = vsel %vm5731, %v6053, %v6062
  %v6065 = vshrl.u32 %v5069, 16
  %v6067 = vrot.slane %v6065, 2
  %v6068 = vshll.u32 %v5069, 16
  %v6070 = vrot.slane %v6068, 3
  %v6071 = vor.u32 %v6067, %v6070
  %v6072 = vsel %vm5731, %v6062, %v6071
  %v6074 = vshrl.u32 %v5070, 16
  %v6076 = vrot.slane %v6074, 2
  %v6077 = vshll.u32 %v5070, 16
  %v6079 = vrot.slane %v6077, 3
  %v6080 = vor.u32 %v6076, %v6079
  %v6081 = vsel %vm5731, %v6071, %v6080
  %v6083 = vshrl.u32 %v5071, 16
  %v6085 = vrot.slane %v6083, 2
  %v6086 = vshll.u32 %v5071, 16
  %v6088 = vrot.slane %v6086, 3
  %v6089 = vor.u32 %v6085, %v6088
  %v6090 = vsel %vm5731, %v6080, %v6089
  %v6092 = vshrl.u32 %v5730, 16
  %v6094 = vrot.slane %v6092, 2
  %v6095 = vshll.u32 %v5730, 16
  %v6097 = vrot.slane %v6095, 3
  %v6098 = vor.u32 %v6094, %v6097
  %v6099 = vsel %vm5731, %v6089, %v6098
  %v6102 = vunpack.c.l.b16 %v5726
  %v6103 = vunpack.c.l.b16 %v5727
  %v6104 = vpack.c.b16 %v6103, %v6102
  %v6105 = vrot.slane %v6104, 3
  %v6107 = vsel %vm639, %v5748, 0
  %v6110 = vsel %vm639, %v5757, 0
  %v6113 = vsel %vm639, %v5766, 0
  %v6116 = vsel %vm639, %v5775, 0
  %v6119 = vsel %vm639, %v5784, 0
  %v6122 = vsel %vm639, %v5793, 0
  %v6125 = vsel %vm639, %v5802, 0
  %v6128 = vsel %vm639, %v5811, 0
  %v6131 = vsel %vm639, %v5820, 0
  %v6134 = vsel %vm639, %v5829, 0
  %v6137 = vsel %vm639, %v5838, 0
  %v6140 = vsel %vm639, %v5847, 0
  %v6143 = vsel %vm639, %v5856, 0
  %v6146 = vsel %vm639, %v5865, 0
  %v6149 = vsel %vm639, %v5874, 0
  %v6152 = vsel %vm639, %v5883, 0
  %v6155 = vsel %vm639, %v5892, 0
  %v6158 = vsel %vm639, %v5901, 0
  %v6161 = vsel %vm639, %v5910, 0
  %v6164 = vsel %vm639, %v5919, 0
  %v6167 = vsel %vm639, %v5928, 0
  %v6170 = vsel %vm639, %v5937, 0
  %v6173 = vsel %vm639, %v5946, 0
  %v6176 = vsel %vm639, %v5955, 0
  %v6179 = vsel %vm639, %v5964, 0
  %v6182 = vsel %vm639, %v5973, 0
  %v6185 = vsel %vm639, %v5982, 0
  %v6188 = vsel %vm639, %v5991, 0
  %v6191 = vsel %vm639, %v6000, 0
  %v6194 = vsel %vm639, %v6009, 0
  %v6197 = vsel %vm639, %v6018, 0
  %v6200 = vsel %vm639, %v6027, 0
  %v6203 = vsel %vm639, %v6036, 0
  %v6206 = vsel %vm639, %v6045, 0
  %v6209 = vsel %vm639, %v6054, 0
  %v6212 = vsel %vm639, %v6063, 0
  %v6215 = vsel %vm639, %v6072, 0
  %v6218 = vsel %vm639, %v6081, 0
  %v6221 = vsel %vm639, %v6090, 0
  %v6224 = vsel %vm639, %v6099, 0
  %v6227 = vsel %vm639, %v6098, 0
  %v6230 = vsel %vm763, %v6105, 0
  %6232 = vmatprep.subr.bf16.mxu0 0
  %6233 = vmatpush1.bf16.msra.mxu0 %v6230
  %6234 = vmatprep.subr.bf16.mxu0 0
  %6235 = vmatpush1.bf16.msra.mxu0 0
  %6236 = vmatprep.subr.bf16.mxu0 0
  %6237 = vmatpush1.bf16.msra.mxu0 0
  %6238 = vmatprep.subr.bf16.mxu0 0
  %6239 = vmatpush1.bf16.msra.mxu0 0
  %6240 = vmatprep.subr.bf16.mxu0 0
  %6241 = vmatpush1.bf16.msra.mxu0 0
  %6242 = vmatprep.subr.bf16.mxu0 0
  %6243 = vmatpush1.bf16.msra.mxu0 0
  %6244 = vmatprep.subr.bf16.mxu0 0
  %6245 = vmatpush1.bf16.msra.mxu0 0
  %6246 = vmatprep.subr.bf16.mxu0 0
  %6247 = vmatpush1.bf16.msra.mxu0 0
  %6248 = vmatprep.subr.bf16.mxu0 0
  %6249 = vmatpush1.bf16.msra.mxu0 0
  %6250 = vmatprep.subr.bf16.mxu0 0
  %6251 = vmatpush1.bf16.msra.mxu0 0
  %6252 = vmatprep.subr.bf16.mxu0 0
  %6253 = vmatpush1.bf16.msra.mxu0 0
  %6254 = vmatprep.subr.bf16.mxu0 0
  %6255 = vmatpush1.bf16.msra.mxu0 0
  %6256 = vmatprep.subr.bf16.mxu0 0
  %6257 = vmatpush1.bf16.msra.mxu0 0
  %6258 = vmatprep.subr.bf16.mxu0 0
  %6259 = vmatpush1.bf16.msra.mxu0 0
  %6260 = vmatprep.subr.bf16.mxu0 0
  %6261 = vmatpush1.bf16.msra.mxu0 0
  %6262 = vmatprep.subr.bf16.mxu0 0
  %6263 = vmatpush1.bf16.msra.mxu0 0
  %6264 = vmatprep.mubr.bf16.mxu0 0
  %6265 = vmatmul.mubr.bf16.gmra.mrb[0].mxu0 %v6107
  %v6266 = vpop.f32.mrb[0].mxu0
  %v6267 = vadd.f32 0.0, %v6266
  %v6268 = vpop.f32.mrb[0].mxu0
  %v6269 = vpop.f32.mrb[0].mxu0
  %v6270 = vadd.f32 0.0, %v6269
  %v6271 = vpop.f32.mrb[0].mxu0
  %6272 = vmatprep.mubr.bf16.mxu0 0
  %6273 = vmatmul.mubr.bf16.gmra.mrb[0].mxu0 %v6110
  %v6274 = vpop.f32.mrb[0].mxu0
  %v6275 = vadd.f32 0.0, %v6274
  %v6276 = vpop.f32.mrb[0].mxu0
  %v6277 = vpop.f32.mrb[0].mxu0
  %v6278 = vadd.f32 0.0, %v6277
  %v6279 = vpop.f32.mrb[0].mxu0
  %6280 = vmatprep.mubr.bf16.mxu0 0
  %6281 = vmatmul.mubr.bf16.gmra.mrb[0].mxu0 %v6113
  %v6282 = vpop.f32.mrb[0].mxu0
  %v6283 = vadd.f32 0.0, %v6282
  %v6284 = vpop.f32.mrb[0].mxu0
  %v6285 = vpop.f32.mrb[0].mxu0
  %v6286 = vadd.f32 0.0, %v6285
  %v6287 = vpop.f32.mrb[0].mxu0
  %6288 = vmatprep.mubr.bf16.mxu0 0
  %6289 = vmatmul.mubr.bf16.gmra.mrb[0].mxu0 %v6116
  %v6290 = vpop.f32.mrb[0].mxu0
  %v6291 = vadd.f32 0.0, %v6290
  %v6292 = vpop.f32.mrb[0].mxu0
  %v6293 = vpop.f32.mrb[0].mxu0
  %v6294 = vadd.f32 0.0, %v6293
  %v6295 = vpop.f32.mrb[0].mxu0
  %6296 = vmatprep.mubr.bf16.mxu0 0
  %6297 = vmatmul.mubr.bf16.gmra.mrb[0].mxu0 %v6119
  %v6298 = vpop.f32.mrb[0].mxu0
  %v6299 = vadd.f32 0.0, %v6298
  %v6300 = vpop.f32.mrb[0].mxu0
  %v6301 = vpop.f32.mrb[0].mxu0
  %v6302 = vadd.f32 0.0, %v6301
  %v6303 = vpop.f32.mrb[0].mxu0
  %6304 = vmatprep.mubr.bf16.mxu0 0
  %6305 = vmatmul.mubr.bf16.gmra.mrb[0].mxu0 %v6122
  %v6306 = vpop.f32.mrb[0].mxu0
  %v6307 = vadd.f32 0.0, %v6306
  %v6308 = vpop.f32.mrb[0].mxu0
  %v6309 = vpop.f32.mrb[0].mxu0
  %v6310 = vadd.f32 0.0, %v6309
  %v6311 = vpop.f32.mrb[0].mxu0
  %6312 = vmatprep.mubr.bf16.mxu0 0
  %6313 = vmatmul.mubr.bf16.gmra.mrb[0].mxu0 %v6125
  %v6314 = vpop.f32.mrb[0].mxu0
  %v6315 = vadd.f32 0.0, %v6314
  %v6316 = vpop.f32.mrb[0].mxu0
  %v6317 = vpop.f32.mrb[0].mxu0
  %v6318 = vadd.f32 0.0, %v6317
  %v6319 = vpop.f32.mrb[0].mxu0
  %6320 = vmatprep.mubr.bf16.mxu0 0
  %6321 = vmatmul.mubr.bf16.gmra.mrb[0].mxu0 %v6128
  %v6322 = vpop.f32.mrb[0].mxu0
  %v6323 = vadd.f32 0.0, %v6322
  %v6324 = vpop.f32.mrb[0].mxu0
  %v6325 = vpop.f32.mrb[0].mxu0
  %v6326 = vadd.f32 0.0, %v6325
  %v6327 = vpop.f32.mrb[0].mxu0
  %6328 = vmatprep.mubr.bf16.mxu0 0
  %6329 = vmatmul.mubr.bf16.gmra.mrb[0].mxu0 %v6131
  %v6330 = vpop.f32.mrb[0].mxu0
  %v6331 = vadd.f32 0.0, %v6330
  %v6332 = vpop.f32.mrb[0].mxu0
  %v6333 = vpop.f32.mrb[0].mxu0
  %v6334 = vadd.f32 0.0, %v6333
  %v6335 = vpop.f32.mrb[0].mxu0
  %6336 = vmatprep.mubr.bf16.mxu0 0
  %6337 = vmatmul.mubr.bf16.gmra.mrb[0].mxu0 %v6134
  %v6338 = vpop.f32.mrb[0].mxu0
  %v6339 = vadd.f32 0.0, %v6338
  %v6340 = vpop.f32.mrb[0].mxu0
  %v6341 = vpop.f32.mrb[0].mxu0
  %v6342 = vadd.f32 0.0, %v6341
  %v6343 = vpop.f32.mrb[0].mxu0
  %6344 = vmatprep.mubr.bf16.mxu0 0
  %6345 = vmatmul.mubr.bf16.gmra.mrb[0].mxu0 %v6137
  %v6346 = vpop.f32.mrb[0].mxu0
  %v6347 = vadd.f32 0.0, %v6346
  %v6348 = vpop.f32.mrb[0].mxu0
  %v6349 = vpop.f32.mrb[0].mxu0
  %v6350 = vadd.f32 0.0, %v6349
  %v6351 = vpop.f32.mrb[0].mxu0
  %6352 = vmatprep.mubr.bf16.mxu0 0
  %6353 = vmatmul.mubr.bf16.gmra.mrb[0].mxu0 %v6140
  %v6354 = vpop.f32.mrb[0].mxu0
  %v6355 = vadd.f32 0.0, %v6354
  %v6356 = vpop.f32.mrb[0].mxu0
  %v6357 = vpop.f32.mrb[0].mxu0
  %v6358 = vadd.f32 0.0, %v6357
  %v6359 = vpop.f32.mrb[0].mxu0
  %6360 = vmatprep.mubr.bf16.mxu0 0
  %6361 = vmatmul.mubr.bf16.gmra.mrb[0].mxu0 %v6143
  %v6362 = vpop.f32.mrb[0].mxu0
  %v6363 = vadd.f32 0.0, %v6362
  %v6364 = vpop.f32.mrb[0].mxu0
  %v6365 = vpop.f32.mrb[0].mxu0
  %v6366 = vadd.f32 0.0, %v6365
  %v6367 = vpop.f32.mrb[0].mxu0
  %6368 = vmatprep.mubr.bf16.mxu0 0
  %6369 = vmatmul.mubr.bf16.gmra.mrb[0].mxu0 %v6146
  %v6370 = vpop.f32.mrb[0].mxu0
  %v6371 = vadd.f32 0.0, %v6370
  %v6372 = vpop.f32.mrb[0].mxu0
  %v6373 = vpop.f32.mrb[0].mxu0
  %v6374 = vadd.f32 0.0, %v6373
  %v6375 = vpop.f32.mrb[0].mxu0
  %6376 = vmatprep.mubr.bf16.mxu0 0
  %6377 = vmatmul.mubr.bf16.gmra.mrb[0].mxu0 %v6149
  %v6378 = vpop.f32.mrb[0].mxu0
  %v6379 = vadd.f32 0.0, %v6378
  %v6380 = vpop.f32.mrb[0].mxu0
  %v6381 = vpop.f32.mrb[0].mxu0
  %v6382 = vadd.f32 0.0, %v6381
  %v6383 = vpop.f32.mrb[0].mxu0
  %6384 = vmatprep.mubr.bf16.mxu0 0
  %6385 = vmatmul.mubr.bf16.gmra.mrb[0].mxu0 %v6152
  %v6386 = vpop.f32.mrb[0].mxu0
  %v6387 = vadd.f32 0.0, %v6386
  %v6388 = vpop.f32.mrb[0].mxu0
  %v6389 = vpop.f32.mrb[0].mxu0
  %v6390 = vadd.f32 0.0, %v6389
  %v6391 = vpop.f32.mrb[0].mxu0
  %6392 = vmatprep.mubr.bf16.mxu0 0
  %6393 = vmatmul.mubr.bf16.gmra.mrb[0].mxu0 %v6155
  %v6394 = vpop.f32.mrb[0].mxu0
  %v6395 = vadd.f32 0.0, %v6394
  %v6396 = vpop.f32.mrb[0].mxu0
  %v6397 = vpop.f32.mrb[0].mxu0
  %v6398 = vadd.f32 0.0, %v6397
  %v6399 = vpop.f32.mrb[0].mxu0
  %6400 = vmatprep.mubr.bf16.mxu0 0
  %6401 = vmatmul.mubr.bf16.gmra.mrb[0].mxu0 %v6158
  %v6402 = vpop.f32.mrb[0].mxu0
  %v6403 = vadd.f32 0.0, %v6402
  %v6404 = vpop.f32.mrb[0].mxu0
  %v6405 = vpop.f32.mrb[0].mxu0
  %v6406 = vadd.f32 0.0, %v6405
  %v6407 = vpop.f32.mrb[0].mxu0
  %6408 = vmatprep.mubr.bf16.mxu0 0
  %6409 = vmatmul.mubr.bf16.gmra.mrb[0].mxu0 %v6161
  %v6410 = vpop.f32.mrb[0].mxu0
  %v6411 = vadd.f32 0.0, %v6410
  %v6412 = vpop.f32.mrb[0].mxu0
  %v6413 = vpop.f32.mrb[0].mxu0
  %v6414 = vadd.f32 0.0, %v6413
  %v6415 = vpop.f32.mrb[0].mxu0
  %6416 = vmatprep.mubr.bf16.mxu0 0
  %6417 = vmatmul.mubr.bf16.gmra.mrb[0].mxu0 %v6164
  %v6418 = vpop.f32.mrb[0].mxu0
  %v6419 = vadd.f32 0.0, %v6418
  %v6420 = vpop.f32.mrb[0].mxu0
  %v6421 = vpop.f32.mrb[0].mxu0
  %v6422 = vadd.f32 0.0, %v6421
  %v6423 = vpop.f32.mrb[0].mxu0
  %6424 = vmatprep.mubr.bf16.mxu0 0
  %6425 = vmatmul.mubr.bf16.gmra.mrb[0].mxu0 %v6167
  %v6426 = vpop.f32.mrb[0].mxu0
  %v6427 = vadd.f32 0.0, %v6426
  %v6428 = vpop.f32.mrb[0].mxu0
  %v6429 = vpop.f32.mrb[0].mxu0
  %v6430 = vadd.f32 0.0, %v6429
  %v6431 = vpop.f32.mrb[0].mxu0
  %6432 = vmatprep.mubr.bf16.mxu0 0
  %6433 = vmatmul.mubr.bf16.gmra.mrb[0].mxu0 %v6170
  %v6434 = vpop.f32.mrb[0].mxu0
  %v6435 = vadd.f32 0.0, %v6434
  %v6436 = vpop.f32.mrb[0].mxu0
  %v6437 = vpop.f32.mrb[0].mxu0
  %v6438 = vadd.f32 0.0, %v6437
  %v6439 = vpop.f32.mrb[0].mxu0
  %6440 = vmatprep.mubr.bf16.mxu0 0
  %6441 = vmatmul.mubr.bf16.gmra.mrb[0].mxu0 %v6173
  %v6442 = vpop.f32.mrb[0].mxu0
  %v6443 = vadd.f32 0.0, %v6442
  %v6444 = vpop.f32.mrb[0].mxu0
  %v6445 = vpop.f32.mrb[0].mxu0
  %v6446 = vadd.f32 0.0, %v6445
  %v6447 = vpop.f32.mrb[0].mxu0
  %6448 = vmatprep.mubr.bf16.mxu0 0
  %6449 = vmatmul.mubr.bf16.gmra.mrb[0].mxu0 %v6176
  %v6450 = vpop.f32.mrb[0].mxu0
  %v6451 = vadd.f32 0.0, %v6450
  %v6452 = vpop.f32.mrb[0].mxu0
  %v6453 = vpop.f32.mrb[0].mxu0
  %v6454 = vadd.f32 0.0, %v6453
  %v6455 = vpop.f32.mrb[0].mxu0
  %6456 = vmatprep.mubr.bf16.mxu0 0
  %6457 = vmatmul.mubr.bf16.gmra.mrb[0].mxu0 %v6179
  %v6458 = vpop.f32.mrb[0].mxu0
  %v6459 = vadd.f32 0.0, %v6458
  %v6460 = vpop.f32.mrb[0].mxu0
  %v6461 = vpop.f32.mrb[0].mxu0
  %v6462 = vadd.f32 0.0, %v6461
  %v6463 = vpop.f32.mrb[0].mxu0
  %6464 = vmatprep.mubr.bf16.mxu0 0
  %6465 = vmatmul.mubr.bf16.gmra.mrb[0].mxu0 %v6182
  %v6466 = vpop.f32.mrb[0].mxu0
  %v6467 = vadd.f32 0.0, %v6466
  %v6468 = vpop.f32.mrb[0].mxu0
  %v6469 = vpop.f32.mrb[0].mxu0
  %v6470 = vadd.f32 0.0, %v6469
  %v6471 = vpop.f32.mrb[0].mxu0
  %6472 = vmatprep.mubr.bf16.mxu0 0
  %6473 = vmatmul.mubr.bf16.gmra.mrb[0].mxu0 %v6185
  %v6474 = vpop.f32.mrb[0].mxu0
  %v6475 = vadd.f32 0.0, %v6474
  %v6476 = vpop.f32.mrb[0].mxu0
  %v6477 = vpop.f32.mrb[0].mxu0
  %v6478 = vadd.f32 0.0, %v6477
  %v6479 = vpop.f32.mrb[0].mxu0
  %6480 = vmatprep.mubr.bf16.mxu0 0
  %6481 = vmatmul.mubr.bf16.gmra.mrb[0].mxu0 %v6188
  %v6482 = vpop.f32.mrb[0].mxu0
  %v6483 = vadd.f32 0.0, %v6482
  %v6484 = vpop.f32.mrb[0].mxu0
  %v6485 = vpop.f32.mrb[0].mxu0
  %v6486 = vadd.f32 0.0, %v6485
  %v6487 = vpop.f32.mrb[0].mxu0
  %6488 = vmatprep.mubr.bf16.mxu0 0
  %6489 = vmatmul.mubr.bf16.gmra.mrb[0].mxu0 %v6191
  %v6490 = vpop.f32.mrb[0].mxu0
  %v6491 = vadd.f32 0.0, %v6490
  %v6492 = vpop.f32.mrb[0].mxu0
  %v6493 = vpop.f32.mrb[0].mxu0
  %v6494 = vadd.f32 0.0, %v6493
  %v6495 = vpop.f32.mrb[0].mxu0
  %6496 = vmatprep.mubr.bf16.mxu0 0
  %6497 = vmatmul.mubr.bf16.gmra.mrb[0].mxu0 %v6194
  %v6498 = vpop.f32.mrb[0].mxu0
  %v6499 = vadd.f32 0.0, %v6498
  %v6500 = vpop.f32.mrb[0].mxu0
  %v6501 = vpop.f32.mrb[0].mxu0
  %v6502 = vadd.f32 0.0, %v6501
  %v6503 = vpop.f32.mrb[0].mxu0
  %6504 = vmatprep.mubr.bf16.mxu0 0
  %6505 = vmatmul.mubr.bf16.gmra.mrb[0].mxu0 %v6197
  %v6506 = vpop.f32.mrb[0].mxu0
  %v6507 = vadd.f32 0.0, %v6506
  %v6508 = vpop.f32.mrb[0].mxu0
  %v6509 = vpop.f32.mrb[0].mxu0
  %v6510 = vadd.f32 0.0, %v6509
  %v6511 = vpop.f32.mrb[0].mxu0
  %6512 = vmatprep.mubr.bf16.mxu0 0
  %6513 = vmatmul.mubr.bf16.gmra.mrb[0].mxu0 %v6200
  %v6514 = vpop.f32.mrb[0].mxu0
  %v6515 = vadd.f32 0.0, %v6514
  %v6516 = vpop.f32.mrb[0].mxu0
  %v6517 = vpop.f32.mrb[0].mxu0
  %v6518 = vadd.f32 0.0, %v6517
  %v6519 = vpop.f32.mrb[0].mxu0
  %6520 = vmatprep.mubr.bf16.mxu0 0
  %6521 = vmatmul.mubr.bf16.gmra.mrb[0].mxu0 %v6203
  %v6522 = vpop.f32.mrb[0].mxu0
  %v6523 = vadd.f32 0.0, %v6522
  %v6524 = vpop.f32.mrb[0].mxu0
  %v6525 = vpop.f32.mrb[0].mxu0
  %v6526 = vadd.f32 0.0, %v6525
  %v6527 = vpop.f32.mrb[0].mxu0
  %6528 = vmatprep.mubr.bf16.mxu0 0
  %6529 = vmatmul.mubr.bf16.gmra.mrb[0].mxu0 %v6206
  %v6530 = vpop.f32.mrb[0].mxu0
  %v6531 = vadd.f32 0.0, %v6530
  %v6532 = vpop.f32.mrb[0].mxu0
  %v6533 = vpop.f32.mrb[0].mxu0
  %v6534 = vadd.f32 0.0, %v6533
  %v6535 = vpop.f32.mrb[0].mxu0
  %6536 = vmatprep.mubr.bf16.mxu0 0
  %6537 = vmatmul.mubr.bf16.gmra.mrb[0].mxu0 %v6209
  %v6538 = vpop.f32.mrb[0].mxu0
  %v6539 = vadd.f32 0.0, %v6538
  %v6540 = vpop.f32.mrb[0].mxu0
  %v6541 = vpop.f32.mrb[0].mxu0
  %v6542 = vadd.f32 0.0, %v6541
  %v6543 = vpop.f32.mrb[0].mxu0
  %6544 = vmatprep.mubr.bf16.mxu0 0
  %6545 = vmatmul.mubr.bf16.gmra.mrb[0].mxu0 %v6212
  %v6546 = vpop.f32.mrb[0].mxu0
  %v6547 = vadd.f32 0.0, %v6546
  %v6548 = vpop.f32.mrb[0].mxu0
  %v6549 = vpop.f32.mrb[0].mxu0
  %v6550 = vadd.f32 0.0, %v6549
  %v6551 = vpop.f32.mrb[0].mxu0
  %6552 = vmatprep.mubr.bf16.mxu0 0
  %6553 = vmatmul.mubr.bf16.gmra.mrb[0].mxu0 %v6215
  %v6554 = vpop.f32.mrb[0].mxu0
  %v6555 = vadd.f32 0.0, %v6554
  %v6556 = vpop.f32.mrb[0].mxu0
  %v6557 = vpop.f32.mrb[0].mxu0
  %v6558 = vadd.f32 0.0, %v6557
  %v6559 = vpop.f32.mrb[0].mxu0
  %6560 = vmatprep.mubr.bf16.mxu0 0
  %6561 = vmatmul.mubr.bf16.gmra.mrb[0].mxu0 %v6218
  %v6562 = vpop.f32.mrb[0].mxu0
  %v6563 = vadd.f32 0.0, %v6562
  %v6564 = vpop.f32.mrb[0].mxu0
  %v6565 = vpop.f32.mrb[0].mxu0
  %v6566 = vadd.f32 0.0, %v6565
  %v6567 = vpop.f32.mrb[0].mxu0
  %6568 = vmatprep.mubr.bf16.mxu0 0
  %6569 = vmatmul.mubr.bf16.gmra.mrb[0].mxu0 %v6221
  %v6570 = vpop.f32.mrb[0].mxu0
  %v6571 = vadd.f32 0.0, %v6570
  %v6572 = vpop.f32.mrb[0].mxu0
  %v6573 = vpop.f32.mrb[0].mxu0
  %v6574 = vadd.f32 0.0, %v6573
  %v6575 = vpop.f32.mrb[0].mxu0
  %6576 = vmatprep.mubr.bf16.mxu0 0
  %6577 = vmatmul.mubr.bf16.gmra.mrb[0].mxu0 %v6224
  %v6578 = vpop.f32.mrb[0].mxu0
  %v6579 = vadd.f32 0.0, %v6578
  %v6580 = vpop.f32.mrb[0].mxu0
  %v6581 = vpop.f32.mrb[0].mxu0
  %v6582 = vadd.f32 0.0, %v6581
  %v6583 = vpop.f32.mrb[0].mxu0
  %6584 = vmatprep.mubr.bf16.mxu0 0
  %6585 = vmatmul.mubr.bf16.gmra.mrb[0].mxu0 %v6227
  %v6586 = vpop.f32.mrb[0].mxu0
  %v6587 = vadd.f32 0.0, %v6586
  %v6588 = vpop.f32.mrb[0].mxu0
  %v6589 = vpop.f32.mrb[0].mxu0
  %v6590 = vpop.f32.mrb[0].mxu0
  %6591 = vdwg.mxu0
  %v6592 = vadd.f32 %v5644, %v6267
  %v6593 = vadd.f32 %v5645, %v6270
  %v6594 = vadd.f32 %v5646, %v6275
  %v6595 = vadd.f32 %v5647, %v6278
  %v6596 = vadd.f32 %v5648, %v6283
  %v6597 = vadd.f32 %v5649, %v6286
  %v6598 = vadd.f32 %v5650, %v6291
  %v6599 = vadd.f32 %v5651, %v6294
  %v6600 = vadd.f32 %v5652, %v6299
  %v6601 = vadd.f32 %v5653, %v6302
  %v6602 = vadd.f32 %v5654, %v6307
  %v6603 = vadd.f32 %v5655, %v6310
  %v6604 = vadd.f32 %v5656, %v6315
  %v6605 = vadd.f32 %v5657, %v6318
  %v6606 = vadd.f32 %v5658, %v6323
  %v6607 = vadd.f32 %v5659, %v6326
  %v6608 = vadd.f32 %v5660, %v6331
  %v6609 = vadd.f32 %v5661, %v6334
  %v6610 = vadd.f32 %v5662, %v6339
  %v6611 = vadd.f32 %v5663, %v6342
  %v6612 = vadd.f32 %v5664, %v6347
  %v6613 = vadd.f32 %v5665, %v6350
  %v6614 = vadd.f32 %v5666, %v6355
  %v6615 = vadd.f32 %v5667, %v6358
  %v6616 = vadd.f32 %v5668, %v6363
  %v6617 = vadd.f32 %v5669, %v6366
  %v6618 = vadd.f32 %v5670, %v6371
  %v6619 = vadd.f32 %v5671, %v6374
  %v6620 = vadd.f32 %v5672, %v6379
  %v6621 = vadd.f32 %v5673, %v6382
  %v6622 = vadd.f32 %v5674, %v6387
  %v6623 = vadd.f32 %v5675, %v6390
  %v6624 = vadd.f32 %v5676, %v6395
  %v6625 = vadd.f32 %v5677, %v6398
  %v6626 = vadd.f32 %v5678, %v6403
  %v6627 = vadd.f32 %v5679, %v6406
  %v6628 = vadd.f32 %v5680, %v6411
  %v6629 = vadd.f32 %v5681, %v6414
  %v6630 = vadd.f32 %v5682, %v6419
  %v6631 = vadd.f32 %v5683, %v6422
  %v6632 = vadd.f32 %v5684, %v6427
  %v6633 = vadd.f32 %v5685, %v6430
  %v6634 = vadd.f32 %v5686, %v6435
  %v6635 = vadd.f32 %v5687, %v6438
  %v6636 = vadd.f32 %v5688, %v6443
  %v6637 = vadd.f32 %v5689, %v6446
  %v6638 = vadd.f32 %v5690, %v6451
  %v6639 = vadd.f32 %v5691, %v6454
  %v6640 = vadd.f32 %v5692, %v6459
  %v6641 = vadd.f32 %v5693, %v6462
  %v6642 = vadd.f32 %v5694, %v6467
  %v6643 = vadd.f32 %v5695, %v6470
  %v6644 = vadd.f32 %v5696, %v6475
  %v6645 = vadd.f32 %v5697, %v6478
  %v6646 = vadd.f32 %v5698, %v6483
  %v6647 = vadd.f32 %v5699, %v6486
  %v6648 = vadd.f32 %v5700, %v6491
  %v6649 = vadd.f32 %v5701, %v6494
  %v6650 = vadd.f32 %v5702, %v6499
  %v6651 = vadd.f32 %v5703, %v6502
  %v6652 = vadd.f32 %v5704, %v6507
  %v6653 = vadd.f32 %v5705, %v6510
  %v6654 = vadd.f32 %v5706, %v6515
  %v6655 = vadd.f32 %v5707, %v6518
  %v6656 = vadd.f32 %v5708, %v6523
  %v6657 = vadd.f32 %v5709, %v6526
  %v6658 = vadd.f32 %v5710, %v6531
  %v6659 = vadd.f32 %v5711, %v6534
  %v6660 = vadd.f32 %v5712, %v6539
  %v6661 = vadd.f32 %v5713, %v6542
  %v6662 = vadd.f32 %v5714, %v6547
  %v6663 = vadd.f32 %v5715, %v6550
  %v6664 = vadd.f32 %v5716, %v6555
  %v6665 = vadd.f32 %v5717, %v6558
  %v6666 = vadd.f32 %v5718, %v6563
  %v6667 = vadd.f32 %v5719, %v6566
  %v6668 = vadd.f32 %v5720, %v6571
  %v6669 = vadd.f32 %v5721, %v6574
  %v6670 = vadd.f32 %v5722, %v6579
  %v6671 = vadd.f32 %v5723, %v6582
  %v6672 = vadd.f32 %v5724, %v6587
  %v6673 = vld [vmem:[%s0 + $0x10] sm:$0x8]
  %v6674 = vld [vmem:[%s2 + $0x50] sm:$0x6]
  %v6676 = vunpack.c.l.b16 %v6673
  %v6677 = vpack.c.b16 %v4951, %v6676
  %vm6678 = vcmask 1044480
  %v6679 = vrot.slane %v6677, 3
  %v6680 = vrot.slane %v5033, 3
  %v6681 = vsel %vm6678, %v6679, %v6680
  %v6682 = vrot.slane %v5034, 3
  %v6683 = vsel %vm6678, %v6680, %v6682
  %v6684 = vrot.slane %v5035, 3
  %v6685 = vsel %vm6678, %v6682, %v6684
  %v6686 = vrot.slane %v5036, 3
  %v6687 = vsel %vm6678, %v6684, %v6686
  %v6688 = vrot.slane %v5037, 3
  %v6689 = vsel %vm6678, %v6686, %v6688
  %v6690 = vrot.slane %v5038, 3
  %v6691 = vsel %vm6678, %v6688, %v6690
  %v6692 = vrot.slane %v5039, 3
  %v6693 = vsel %vm6678, %v6690, %v6692
  %v6694 = vrot.slane %v5040, 3
  %v6695 = vsel %vm6678, %v6692, %v6694
  %v6696 = vrot.slane %v5041, 3
  %v6697 = vsel %vm6678, %v6694, %v6696
  %v6698 = vrot.slane %v5042, 3
  %v6699 = vsel %vm6678, %v6696, %v6698
  %v6700 = vrot.slane %v5043, 3
  %v6701 = vsel %vm6678, %v6698, %v6700
  %v6702 = vrot.slane %v5044, 3
  %v6703 = vsel %vm6678, %v6700, %v6702
  %v6704 = vrot.slane %v5045, 3
  %v6705 = vsel %vm6678, %v6702, %v6704
  %v6706 = vrot.slane %v5046, 3
  %v6707 = vsel %vm6678, %v6704, %v6706
  %v6708 = vrot.slane %v5047, 3
  %v6709 = vsel %vm6678, %v6706, %v6708
  %v6710 = vrot.slane %v5048, 3
  %v6711 = vsel %vm6678, %v6708, %v6710
  %v6712 = vrot.slane %v5049, 3
  %v6713 = vsel %vm6678, %v6710, %v6712
  %v6714 = vrot.slane %v5050, 3
  %v6715 = vsel %vm6678, %v6712, %v6714
  %v6716 = vrot.slane %v5051, 3
  %v6717 = vsel %vm6678, %v6714, %v6716
  %v6718 = vrot.slane %v5052, 3
  %v6719 = vsel %vm6678, %v6716, %v6718
  %v6720 = vrot.slane %v5053, 3
  %v6721 = vsel %vm6678, %v6718, %v6720
  %v6722 = vrot.slane %v5054, 3
  %v6723 = vsel %vm6678, %v6720, %v6722
  %v6724 = vrot.slane %v5055, 3
  %v6725 = vsel %vm6678, %v6722, %v6724
  %v6726 = vrot.slane %v5056, 3
  %v6727 = vsel %vm6678, %v6724, %v6726
  %v6728 = vrot.slane %v5057, 3
  %v6729 = vsel %vm6678, %v6726, %v6728
  %v6730 = vrot.slane %v5058, 3
  %v6731 = vsel %vm6678, %v6728, %v6730
  %v6732 = vrot.slane %v5059, 3
  %v6733 = vsel %vm6678, %v6730, %v6732
  %v6734 = vrot.slane %v5060, 3
  %v6735 = vsel %vm6678, %v6732, %v6734
  %v6736 = vrot.slane %v5061, 3
  %v6737 = vsel %vm6678, %v6734, %v6736
  %v6738 = vrot.slane %v5062, 3
  %v6739 = vsel %vm6678, %v6736, %v6738
  %v6740 = vrot.slane %v5063, 3
  %v6741 = vsel %vm6678, %v6738, %v6740
  %v6742 = vrot.slane %v5064, 3
  %v6743 = vsel %vm6678, %v6740, %v6742
  %v6744 = vrot.slane %v5065, 3
  %v6745 = vsel %vm6678, %v6742, %v6744
  %v6746 = vrot.slane %v5066, 3
  %v6747 = vsel %vm6678, %v6744, %v6746
  %v6748 = vrot.slane %v5067, 3
  %v6749 = vsel %vm6678, %v6746, %v6748
  %v6750 = vrot.slane %v5068, 3
  %v6751 = vsel %vm6678, %v6748, %v6750
  %v6752 = vrot.slane %v5069, 3
  %v6753 = vsel %vm6678, %v6750, %v6752
  %v6754 = vrot.slane %v5070, 3
  %v6755 = vsel %vm6678, %v6752, %v6754
  %v6756 = vrot.slane %v5071, 3
  %v6757 = vsel %vm6678, %v6754, %v6756
  %v6758 = vrot.slane %v5730, 3
  %v6759 = vsel %vm6678, %v6756, %v6758
  %v6761 = vunpack.c.l.b16 %v6674
  %v6762 = vpack.c.b16 %v6761, %v6761
  %v6763 = vrot.slane %v6762, 1
  %v6765 = vsel %vm639, %v6681, 0
  %v6768 = vsel %vm639, %v6683, 0
  %v6771 = vsel %vm639, %v6685, 0
  %v6774 = vsel %vm639, %v6687, 0
  %v6777 = vsel %vm639, %v6689, 0
  %v6780 = vsel %vm639, %v6691, 0
  %v6783 = vsel %vm639, %v6693, 0
  %v6786 = vsel %vm639, %v6695, 0
  %v6789 = vsel %vm639, %v6697, 0
  %v6792 = vsel %vm639, %v6699, 0
  %v6795 = vsel %vm639, %v6701, 0
  %v6798 = vsel %vm639, %v6703, 0
  %v6801 = vsel %vm639, %v6705, 0
  %v6804 = vsel %vm639, %v6707, 0
  %v6807 = vsel %vm639, %v6709, 0
  %v6810 = vsel %vm639, %v6711, 0
  %v6813 = vsel %vm639, %v6713, 0
  %v6816 = vsel %vm639, %v6715, 0
  %v6819 = vsel %vm639, %v6717, 0
  %v6822 = vsel %vm639, %v6719, 0
  %v6825 = vsel %vm639, %v6721, 0
  %v6828 = vsel %vm639, %v6723, 0
  %v6831 = vsel %vm639, %v6725, 0
  %v6834 = vsel %vm639, %v6727, 0
  %v6837 = vsel %vm639, %v6729, 0
  %v6840 = vsel %vm639, %v6731, 0
  %v6843 = vsel %vm639, %v6733, 0
  %v6846 = vsel %vm639, %v6735, 0
  %v6849 = vsel %vm639, %v6737, 0
  %v6852 = vsel %vm639, %v6739, 0
  %v6855 = vsel %vm639, %v6741, 0
  %v6858 = vsel %vm639, %v6743, 0
  %v6861 = vsel %vm639, %v6745, 0
  %v6864 = vsel %vm639, %v6747, 0
  %v6867 = vsel %vm639, %v6749, 0
  %v6870 = vsel %vm639, %v6751, 0
  %v6873 = vsel %vm639, %v6753, 0
  %v6876 = vsel %vm639, %v6755, 0
  %v6879 = vsel %vm639, %v6757, 0
  %v6882 = vsel %vm639, %v6759, 0
  %v6885 = vsel %vm639, %v6758, 0
  %v6888 = vsel %vm763, %v6763, 0
  %6890 = vmatprep.subr.bf16.mxu0 0
  %6891 = vmatpush1.bf16.msra.mxu0 %v6888
  %6892 = vmatprep.subr.bf16.mxu0 0
  %6893 = vmatpush1.bf16.msra.mxu0 0
  %6894 = vmatprep.subr.bf16.mxu0 0
  %6895 = vmatpush1.bf16.msra.mxu0 0
  %6896 = vmatprep.subr.bf16.mxu0 0
  %6897 = vmatpush1.bf16.msra.mxu0 0
  %6898 = vmatprep.subr.bf16.mxu0 0
  %6899 = vmatpush1.bf16.msra.mxu0 0
  %6900 = vmatprep.subr.bf16.mxu0 0
  %6901 = vmatpush1.bf16.msra.mxu0 0
  %6902 = vmatprep.subr.bf16.mxu0 0
  %6903 = vmatpush1.bf16.msra.mxu0 0
  %6904 = vmatprep.subr.bf16.mxu0 0
  %6905 = vmatpush1.bf16.msra.mxu0 0
  %6906 = vmatprep.subr.bf16.mxu0 0
  %6907 = vmatpush1.bf16.msra.mxu0 0
  %6908 = vmatprep.subr.bf16.mxu0 0
  %6909 = vmatpush1.bf16.msra.mxu0 0
  %6910 = vmatprep.subr.bf16.mxu0 0
  %6911 = vmatpush1.bf16.msra.mxu0 0
  %6912 = vmatprep.subr.bf16.mxu0 0
  %6913 = vmatpush1.bf16.msra.mxu0 0
  %6914 = vmatprep.subr.bf16.mxu0 0
  %6915 = vmatpush1.bf16.msra.mxu0 0
  %6916 = vmatprep.subr.bf16.mxu0 0
  %6917 = vmatpush1.bf16.msra.mxu0 0
  %6918 = vmatprep.subr.bf16.mxu0 0
  %6919 = vmatpush1.bf16.msra.mxu0 0
  %6920 = vmatprep.subr.bf16.mxu0 0
  %6921 = vmatpush1.bf16.msra.mxu0 0
  %6922 = vmatprep.mubr.bf16.mxu0 0
  %6923 = vmatmul.mubr.bf16.gmra.mrb[0].mxu0 %v6765
  %v6924 = vpop.f32.mrb[0].mxu0
  %v6925 = vadd.f32 0.0, %v6924
  %v6926 = vpop.f32.mrb[0].mxu0
  %v6927 = vpop.f32.mrb[0].mxu0
  %v6928 = vadd.f32 0.0, %v6927
  %v6929 = vpop.f32.mrb[0].mxu0
  %6930 = vmatprep.mubr.bf16.mxu0 0
  %6931 = vmatmul.mubr.bf16.gmra.mrb[0].mxu0 %v6768
  %v6932 = vpop.f32.mrb[0].mxu0
  %v6933 = vadd.f32 0.0, %v6932
  %v6934 = vpop.f32.mrb[0].mxu0
  %v6935 = vpop.f32.mrb[0].mxu0
  %v6936 = vadd.f32 0.0, %v6935
  %v6937 = vpop.f32.mrb[0].mxu0
  %6938 = vmatprep.mubr.bf16.mxu0 0
  %6939 = vmatmul.mubr.bf16.gmra.mrb[0].mxu0 %v6771
  %v6940 = vpop.f32.mrb[0].mxu0
  %v6941 = vadd.f32 0.0, %v6940
  %v6942 = vpop.f32.mrb[0].mxu0
  %v6943 = vpop.f32.mrb[0].mxu0
  %v6944 = vadd.f32 0.0, %v6943
  %v6945 = vpop.f32.mrb[0].mxu0
  %6946 = vmatprep.mubr.bf16.mxu0 0
  %6947 = vmatmul.mubr.bf16.gmra.mrb[0].mxu0 %v6774
  %v6948 = vpop.f32.mrb[0].mxu0
  %v6949 = vadd.f32 0.0, %v6948
  %v6950 = vpop.f32.mrb[0].mxu0
  %v6951 = vpop.f32.mrb[0].mxu0
  %v6952 = vadd.f32 0.0, %v6951
  %v6953 = vpop.f32.mrb[0].mxu0
  %6954 = vmatprep.mubr.bf16.mxu0 0
  %6955 = vmatmul.mubr.bf16.gmra.mrb[0].mxu0 %v6777
  %v6956 = vpop.f32.mrb[0].mxu0
  %v6957 = vadd.f32 0.0, %v6956
  %v6958 = vpop.f32.mrb[0].mxu0
  %v6959 = vpop.f32.mrb[0].mxu0
  %v6960 = vadd.f32 0.0, %v6959
  %v6961 = vpop.f32.mrb[0].mxu0
  %6962 = vmatprep.mubr.bf16.mxu0 0
  %6963 = vmatmul.mubr.bf16.gmra.mrb[0].mxu0 %v6780
  %v6964 = vpop.f32.mrb[0].mxu0
  %v6965 = vadd.f32 0.0, %v6964
  %v6966 = vpop.f32.mrb[0].mxu0
  %v6967 = vpop.f32.mrb[0].mxu0
  %v6968 = vadd.f32 0.0, %v6967
  %v6969 = vpop.f32.mrb[0].mxu0
  %6970 = vmatprep.mubr.bf16.mxu0 0
  %6971 = vmatmul.mubr.bf16.gmra.mrb[0].mxu0 %v6783
  %v6972 = vpop.f32.mrb[0].mxu0
  %v6973 = vadd.f32 0.0, %v6972
  %v6974 = vpop.f32.mrb[0].mxu0
  %v6975 = vpop.f32.mrb[0].mxu0
  %v6976 = vadd.f32 0.0, %v6975
  %v6977 = vpop.f32.mrb[0].mxu0
  %6978 = vmatprep.mubr.bf16.mxu0 0
  %6979 = vmatmul.mubr.bf16.gmra.mrb[0].mxu0 %v6786
  %v6980 = vpop.f32.mrb[0].mxu0
  %v6981 = vadd.f32 0.0, %v6980
  %v6982 = vpop.f32.mrb[0].mxu0
  %v6983 = vpop.f32.mrb[0].mxu0
  %v6984 = vadd.f32 0.0, %v6983
  %v6985 = vpop.f32.mrb[0].mxu0
  %6986 = vmatprep.mubr.bf16.mxu0 0
  %6987 = vmatmul.mubr.bf16.gmra.mrb[0].mxu0 %v6789
  %v6988 = vpop.f32.mrb[0].mxu0
  %v6989 = vadd.f32 0.0, %v6988
  %v6990 = vpop.f32.mrb[0].mxu0
  %v6991 = vpop.f32.mrb[0].mxu0
  %v6992 = vadd.f32 0.0, %v6991
  %v6993 = vpop.f32.mrb[0].mxu0
  %6994 = vmatprep.mubr.bf16.mxu0 0
  %6995 = vmatmul.mubr.bf16.gmra.mrb[0].mxu0 %v6792
  %v6996 = vpop.f32.mrb[0].mxu0
  %v6997 = vadd.f32 0.0, %v6996
  %v6998 = vpop.f32.mrb[0].mxu0
  %v6999 = vpop.f32.mrb[0].mxu0
  %v7000 = vadd.f32 0.0, %v6999
  %v7001 = vpop.f32.mrb[0].mxu0
  %7002 = vmatprep.mubr.bf16.mxu0 0
  %7003 = vmatmul.mubr.bf16.gmra.mrb[0].mxu0 %v6795
  %v7004 = vpop.f32.mrb[0].mxu0
  %v7005 = vadd.f32 0.0, %v7004
  %v7006 = vpop.f32.mrb[0].mxu0
  %v7007 = vpop.f32.mrb[0].mxu0
  %v7008 = vadd.f32 0.0, %v7007
  %v7009 = vpop.f32.mrb[0].mxu0
  %7010 = vmatprep.mubr.bf16.mxu0 0
  %7011 = vmatmul.mubr.bf16.gmra.mrb[0].mxu0 %v6798
  %v7012 = vpop.f32.mrb[0].mxu0
  %v7013 = vadd.f32 0.0, %v7012
  %v7014 = vpop.f32.mrb[0].mxu0
  %v7015 = vpop.f32.mrb[0].mxu0
  %v7016 = vadd.f32 0.0, %v7015
  %v7017 = vpop.f32.mrb[0].mxu0
  %7018 = vmatprep.mubr.bf16.mxu0 0
  %7019 = vmatmul.mubr.bf16.gmra.mrb[0].mxu0 %v6801
  %v7020 = vpop.f32.mrb[0].mxu0
  %v7021 = vadd.f32 0.0, %v7020
  %v7022 = vpop.f32.mrb[0].mxu0
  %v7023 = vpop.f32.mrb[0].mxu0
  %v7024 = vadd.f32 0.0, %v7023
  %v7025 = vpop.f32.mrb[0].mxu0
  %7026 = vmatprep.mubr.bf16.mxu0 0
  %7027 = vmatmul.mubr.bf16.gmra.mrb[0].mxu0 %v6804
  %v7028 = vpop.f32.mrb[0].mxu0
  %v7029 = vadd.f32 0.0, %v7028
  %v7030 = vpop.f32.mrb[0].mxu0
  %v7031 = vpop.f32.mrb[0].mxu0
  %v7032 = vadd.f32 0.0, %v7031
  %v7033 = vpop.f32.mrb[0].mxu0
  %7034 = vmatprep.mubr.bf16.mxu0 0
  %7035 = vmatmul.mubr.bf16.gmra.mrb[0].mxu0 %v6807
  %v7036 = vpop.f32.mrb[0].mxu0
  %v7037 = vadd.f32 0.0, %v7036
  %v7038 = vpop.f32.mrb[0].mxu0
  %v7039 = vpop.f32.mrb[0].mxu0
  %v7040 = vadd.f32 0.0, %v7039
  %v7041 = vpop.f32.mrb[0].mxu0
  %7042 = vmatprep.mubr.bf16.mxu0 0
  %7043 = vmatmul.mubr.bf16.gmra.mrb[0].mxu0 %v6810
  %v7044 = vpop.f32.mrb[0].mxu0
  %v7045 = vadd.f32 0.0, %v7044
  %v7046 = vpop.f32.mrb[0].mxu0
  %v7047 = vpop.f32.mrb[0].mxu0
  %v7048 = vadd.f32 0.0, %v7047
  %v7049 = vpop.f32.mrb[0].mxu0
  %7050 = vmatprep.mubr.bf16.mxu0 0
  %7051 = vmatmul.mubr.bf16.gmra.mrb[0].mxu0 %v6813
  %v7052 = vpop.f32.mrb[0].mxu0
  %v7053 = vadd.f32 0.0, %v7052
  %v7054 = vpop.f32.mrb[0].mxu0
  %v7055 = vpop.f32.mrb[0].mxu0
  %v7056 = vadd.f32 0.0, %v7055
  %v7057 = vpop.f32.mrb[0].mxu0
  %7058 = vmatprep.mubr.bf16.mxu0 0
  %7059 = vmatmul.mubr.bf16.gmra.mrb[0].mxu0 %v6816
  %v7060 = vpop.f32.mrb[0].mxu0
  %v7061 = vadd.f32 0.0, %v7060
  %v7062 = vpop.f32.mrb[0].mxu0
  %v7063 = vpop.f32.mrb[0].mxu0
  %v7064 = vadd.f32 0.0, %v7063
  %v7065 = vpop.f32.mrb[0].mxu0
  %7066 = vmatprep.mubr.bf16.mxu0 0
  %7067 = vmatmul.mubr.bf16.gmra.mrb[0].mxu0 %v6819
  %v7068 = vpop.f32.mrb[0].mxu0
  %v7069 = vadd.f32 0.0, %v7068
  %v7070 = vpop.f32.mrb[0].mxu0
  %v7071 = vpop.f32.mrb[0].mxu0
  %v7072 = vadd.f32 0.0, %v7071
  %v7073 = vpop.f32.mrb[0].mxu0
  %7074 = vmatprep.mubr.bf16.mxu0 0
  %7075 = vmatmul.mubr.bf16.gmra.mrb[0].mxu0 %v6822
  %v7076 = vpop.f32.mrb[0].mxu0
  %v7077 = vadd.f32 0.0, %v7076
  %v7078 = vpop.f32.mrb[0].mxu0
  %v7079 = vpop.f32.mrb[0].mxu0
  %v7080 = vadd.f32 0.0, %v7079
  %v7081 = vpop.f32.mrb[0].mxu0
  %7082 = vmatprep.mubr.bf16.mxu0 0
  %7083 = vmatmul.mubr.bf16.gmra.mrb[0].mxu0 %v6825
  %v7084 = vpop.f32.mrb[0].mxu0
  %v7085 = vadd.f32 0.0, %v7084
  %v7086 = vpop.f32.mrb[0].mxu0
  %v7087 = vpop.f32.mrb[0].mxu0
  %v7088 = vadd.f32 0.0, %v7087
  %v7089 = vpop.f32.mrb[0].mxu0
  %7090 = vmatprep.mubr.bf16.mxu0 0
  %7091 = vmatmul.mubr.bf16.gmra.mrb[0].mxu0 %v6828
  %v7092 = vpop.f32.mrb[0].mxu0
  %v7093 = vadd.f32 0.0, %v7092
  %v7094 = vpop.f32.mrb[0].mxu0
  %v7095 = vpop.f32.mrb[0].mxu0
  %v7096 = vadd.f32 0.0, %v7095
  %v7097 = vpop.f32.mrb[0].mxu0
  %7098 = vmatprep.mubr.bf16.mxu0 0
  %7099 = vmatmul.mubr.bf16.gmra.mrb[0].mxu0 %v6831
  %v7100 = vpop.f32.mrb[0].mxu0
  %v7101 = vadd.f32 0.0, %v7100
  %v7102 = vpop.f32.mrb[0].mxu0
  %v7103 = vpop.f32.mrb[0].mxu0
  %v7104 = vadd.f32 0.0, %v7103
  %v7105 = vpop.f32.mrb[0].mxu0
  %7106 = vmatprep.mubr.bf16.mxu0 0
  %7107 = vmatmul.mubr.bf16.gmra.mrb[0].mxu0 %v6834
  %v7108 = vpop.f32.mrb[0].mxu0
  %v7109 = vadd.f32 0.0, %v7108
  %v7110 = vpop.f32.mrb[0].mxu0
  %v7111 = vpop.f32.mrb[0].mxu0
  %v7112 = vadd.f32 0.0, %v7111
  %v7113 = vpop.f32.mrb[0].mxu0
  %7114 = vmatprep.mubr.bf16.mxu0 0
  %7115 = vmatmul.mubr.bf16.gmra.mrb[0].mxu0 %v6837
  %v7116 = vpop.f32.mrb[0].mxu0
  %v7117 = vadd.f32 0.0, %v7116
  %v7118 = vpop.f32.mrb[0].mxu0
  %v7119 = vpop.f32.mrb[0].mxu0
  %v7120 = vadd.f32 0.0, %v7119
  %v7121 = vpop.f32.mrb[0].mxu0
  %7122 = vmatprep.mubr.bf16.mxu0 0
  %7123 = vmatmul.mubr.bf16.gmra.mrb[0].mxu0 %v6840
  %v7124 = vpop.f32.mrb[0].mxu0
  %v7125 = vadd.f32 0.0, %v7124
  %v7126 = vpop.f32.mrb[0].mxu0
  %v7127 = vpop.f32.mrb[0].mxu0
  %v7128 = vadd.f32 0.0, %v7127
  %v7129 = vpop.f32.mrb[0].mxu0
  %7130 = vmatprep.mubr.bf16.mxu0 0
  %7131 = vmatmul.mubr.bf16.gmra.mrb[0].mxu0 %v6843
  %v7132 = vpop.f32.mrb[0].mxu0
  %v7133 = vadd.f32 0.0, %v7132
  %v7134 = vpop.f32.mrb[0].mxu0
  %v7135 = vpop.f32.mrb[0].mxu0
  %v7136 = vadd.f32 0.0, %v7135
  %v7137 = vpop.f32.mrb[0].mxu0
  %7138 = vmatprep.mubr.bf16.mxu0 0
  %7139 = vmatmul.mubr.bf16.gmra.mrb[0].mxu0 %v6846
  %v7140 = vpop.f32.mrb[0].mxu0
  %v7141 = vadd.f32 0.0, %v7140
  %v7142 = vpop.f32.mrb[0].mxu0
  %v7143 = vpop.f32.mrb[0].mxu0
  %v7144 = vadd.f32 0.0, %v7143
  %v7145 = vpop.f32.mrb[0].mxu0
  %7146 = vmatprep.mubr.bf16.mxu0 0
  %7147 = vmatmul.mubr.bf16.gmra.mrb[0].mxu0 %v6849
  %v7148 = vpop.f32.mrb[0].mxu0
  %v7149 = vadd.f32 0.0, %v7148
  %v7150 = vpop.f32.mrb[0].mxu0
  %v7151 = vpop.f32.mrb[0].mxu0
  %v7152 = vadd.f32 0.0, %v7151
  %v7153 = vpop.f32.mrb[0].mxu0
  %7154 = vmatprep.mubr.bf16.mxu0 0
  %7155 = vmatmul.mubr.bf16.gmra.mrb[0].mxu0 %v6852
  %v7156 = vpop.f32.mrb[0].mxu0
  %v7157 = vadd.f32 0.0, %v7156
  %v7158 = vpop.f32.mrb[0].mxu0
  %v7159 = vpop.f32.mrb[0].mxu0
  %v7160 = vadd.f32 0.0, %v7159
  %v7161 = vpop.f32.mrb[0].mxu0
  %7162 = vmatprep.mubr.bf16.mxu0 0
  %7163 = vmatmul.mubr.bf16.gmra.mrb[0].mxu0 %v6855
  %v7164 = vpop.f32.mrb[0].mxu0
  %v7165 = vadd.f32 0.0, %v7164
  %v7166 = vpop.f32.mrb[0].mxu0
  %v7167 = vpop.f32.mrb[0].mxu0
  %v7168 = vadd.f32 0.0, %v7167
  %v7169 = vpop.f32.mrb[0].mxu0
  %7170 = vmatprep.mubr.bf16.mxu0 0
  %7171 = vmatmul.mubr.bf16.gmra.mrb[0].mxu0 %v6858
  %v7172 = vpop.f32.mrb[0].mxu0
  %v7173 = vadd.f32 0.0, %v7172
  %v7174 = vpop.f32.mrb[0].mxu0
  %v7175 = vpop.f32.mrb[0].mxu0
  %v7176 = vadd.f32 0.0, %v7175
  %v7177 = vpop.f32.mrb[0].mxu0
  %7178 = vmatprep.mubr.bf16.mxu0 0
  %7179 = vmatmul.mubr.bf16.gmra.mrb[0].mxu0 %v6861
  %v7180 = vpop.f32.mrb[0].mxu0
  %v7181 = vadd.f32 0.0, %v7180
  %v7182 = vpop.f32.mrb[0].mxu0
  %v7183 = vpop.f32.mrb[0].mxu0
  %v7184 = vadd.f32 0.0, %v7183
  %v7185 = vpop.f32.mrb[0].mxu0
  %7186 = vmatprep.mubr.bf16.mxu0 0
  %7187 = vmatmul.mubr.bf16.gmra.mrb[0].mxu0 %v6864
  %v7188 = vpop.f32.mrb[0].mxu0
  %v7189 = vadd.f32 0.0, %v7188
  %v7190 = vpop.f32.mrb[0].mxu0
  %v7191 = vpop.f32.mrb[0].mxu0
  %v7192 = vadd.f32 0.0, %v7191
  %v7193 = vpop.f32.mrb[0].mxu0
  %7194 = vmatprep.mubr.bf16.mxu0 0
  %7195 = vmatmul.mubr.bf16.gmra.mrb[0].mxu0 %v6867
  %v7196 = vpop.f32.mrb[0].mxu0
  %v7197 = vadd.f32 0.0, %v7196
  %v7198 = vpop.f32.mrb[0].mxu0
  %v7199 = vpop.f32.mrb[0].mxu0
  %v7200 = vadd.f32 0.0, %v7199
  %v7201 = vpop.f32.mrb[0].mxu0
  %7202 = vmatprep.mubr.bf16.mxu0 0
  %7203 = vmatmul.mubr.bf16.gmra.mrb[0].mxu0 %v6870
  %v7204 = vpop.f32.mrb[0].mxu0
  %v7205 = vadd.f32 0.0, %v7204
  %v7206 = vpop.f32.mrb[0].mxu0
  %v7207 = vpop.f32.mrb[0].mxu0
  %v7208 = vadd.f32 0.0, %v7207
  %v7209 = vpop.f32.mrb[0].mxu0
  %7210 = vmatprep.mubr.bf16.mxu0 0
  %7211 = vmatmul.mubr.bf16.gmra.mrb[0].mxu0 %v6873
  %v7212 = vpop.f32.mrb[0].mxu0
  %v7213 = vadd.f32 0.0, %v7212
  %v7214 = vpop.f32.mrb[0].mxu0
  %v7215 = vpop.f32.mrb[0].mxu0
  %v7216 = vadd.f32 0.0, %v7215
  %v7217 = vpop.f32.mrb[0].mxu0
  %7218 = vmatprep.mubr.bf16.mxu0 0
  %7219 = vmatmul.mubr.bf16.gmra.mrb[0].mxu0 %v6876
  %v7220 = vpop.f32.mrb[0].mxu0
  %v7221 = vadd.f32 0.0, %v7220
  %v7222 = vpop.f32.mrb[0].mxu0
  %v7223 = vpop.f32.mrb[0].mxu0
  %v7224 = vadd.f32 0.0, %v7223
  %v7225 = vpop.f32.mrb[0].mxu0
  %7226 = vmatprep.mubr.bf16.mxu0 0
  %7227 = vmatmul.mubr.bf16.gmra.mrb[0].mxu0 %v6879
  %v7228 = vpop.f32.mrb[0].mxu0
  %v7229 = vadd.f32 0.0, %v7228
  %v7230 = vpop.f32.mrb[0].mxu0
  %v7231 = vpop.f32.mrb[0].mxu0
  %v7232 = vadd.f32 0.0, %v7231
  %v7233 = vpop.f32.mrb[0].mxu0
  %7234 = vmatprep.mubr.bf16.mxu0 0
  %7235 = vmatmul.mubr.bf16.gmra.mrb[0].mxu0 %v6882
  %v7236 = vpop.f32.mrb[0].mxu0
  %v7237 = vadd.f32 0.0, %v7236
  %v7238 = vpop.f32.mrb[0].mxu0
  %v7239 = vpop.f32.mrb[0].mxu0
  %v7240 = vadd.f32 0.0, %v7239
  %v7241 = vpop.f32.mrb[0].mxu0
  %7242 = vmatprep.mubr.bf16.mxu0 0
  %7243 = vmatmul.mubr.bf16.gmra.mrb[0].mxu0 %v6885
  %v7244 = vpop.f32.mrb[0].mxu0
  %v7245 = vadd.f32 0.0, %v7244
  %v7246 = vpop.f32.mrb[0].mxu0
  %v7247 = vpop.f32.mrb[0].mxu0
  %v7248 = vpop.f32.mrb[0].mxu0
  %7249 = vdwg.mxu0
  %v7250 = vadd.f32 %v6592, %v6925
  %v7251 = vadd.f32 %v6593, %v6928
  %v7252 = vadd.f32 %v6594, %v6933
  %v7253 = vadd.f32 %v6595, %v6936
  %v7254 = vadd.f32 %v6596, %v6941
  %v7255 = vadd.f32 %v6597, %v6944
  %v7256 = vadd.f32 %v6598, %v6949
  %v7257 = vadd.f32 %v6599, %v6952
  %v7258 = vadd.f32 %v6600, %v6957
  %v7259 = vadd.f32 %v6601, %v6960
  %v7260 = vadd.f32 %v6602, %v6965
  %v7261 = vadd.f32 %v6603, %v6968
  %v7262 = vadd.f32 %v6604, %v6973
  %v7263 = vadd.f32 %v6605, %v6976
  %v7264 = vadd.f32 %v6606, %v6981
  %v7265 = vadd.f32 %v6607, %v6984
  %v7266 = vadd.f32 %v6608, %v6989
  %v7267 = vadd.f32 %v6609, %v6992
  %v7268 = vadd.f32 %v6610, %v6997
  %v7269 = vadd.f32 %v6611, %v7000
  %v7270 = vadd.f32 %v6612, %v7005
  %v7271 = vadd.f32 %v6613, %v7008
  %v7272 = vadd.f32 %v6614, %v7013
  %v7273 = vadd.f32 %v6615, %v7016
  %v7274 = vadd.f32 %v6616, %v7021
  %v7275 = vadd.f32 %v6617, %v7024
  %v7276 = vadd.f32 %v6618, %v7029
  %v7277 = vadd.f32 %v6619, %v7032
  %v7278 = vadd.f32 %v6620, %v7037
  %v7279 = vadd.f32 %v6621, %v7040
  %v7280 = vadd.f32 %v6622, %v7045
  %v7281 = vadd.f32 %v6623, %v7048
  %v7282 = vadd.f32 %v6624, %v7053
  %v7283 = vadd.f32 %v6625, %v7056
  %v7284 = vadd.f32 %v6626, %v7061
  %v7285 = vadd.f32 %v6627, %v7064
  %v7286 = vadd.f32 %v6628, %v7069
  %v7287 = vadd.f32 %v6629, %v7072
  %v7288 = vadd.f32 %v6630, %v7077
  %v7289 = vadd.f32 %v6631, %v7080
  %v7290 = vadd.f32 %v6632, %v7085
  %v7291 = vadd.f32 %v6633, %v7088
  %v7292 = vadd.f32 %v6634, %v7093
  %v7293 = vadd.f32 %v6635, %v7096
  %v7294 = vadd.f32 %v6636, %v7101
  %v7295 = vadd.f32 %v6637, %v7104
  %v7296 = vadd.f32 %v6638, %v7109
  %v7297 = vadd.f32 %v6639, %v7112
  %v7298 = vadd.f32 %v6640, %v7117
  %v7299 = vadd.f32 %v6641, %v7120
  %v7300 = vadd.f32 %v6642, %v7125
  %v7301 = vadd.f32 %v6643, %v7128
  %v7302 = vadd.f32 %v6644, %v7133
  %v7303 = vadd.f32 %v6645, %v7136
  %v7304 = vadd.f32 %v6646, %v7141
  %v7305 = vadd.f32 %v6647, %v7144
  %v7306 = vadd.f32 %v6648, %v7149
  %v7307 = vadd.f32 %v6649, %v7152
  %v7308 = vadd.f32 %v6650, %v7157
  %v7309 = vadd.f32 %v6651, %v7160
  %v7310 = vadd.f32 %v6652, %v7165
  %v7311 = vadd.f32 %v6653, %v7168
  %v7312 = vadd.f32 %v6654, %v7173
  %v7313 = vadd.f32 %v6655, %v7176
  %v7314 = vadd.f32 %v6656, %v7181
  %v7315 = vadd.f32 %v6657, %v7184
  %v7316 = vadd.f32 %v6658, %v7189
  %v7317 = vadd.f32 %v6659, %v7192
  %v7318 = vadd.f32 %v6660, %v7197
  %v7319 = vadd.f32 %v6661, %v7200
  %v7320 = vadd.f32 %v6662, %v7205
  %v7321 = vadd.f32 %v6663, %v7208
  %v7322 = vadd.f32 %v6664, %v7213
  %v7323 = vadd.f32 %v6665, %v7216
  %v7324 = vadd.f32 %v6666, %v7221
  %v7325 = vadd.f32 %v6667, %v7224
  %v7326 = vadd.f32 %v6668, %v7229
  %v7327 = vadd.f32 %v6669, %v7232
  %v7328 = vadd.f32 %v6670, %v7237
  %v7329 = vadd.f32 %v6671, %v7240
  %v7330 = vadd.f32 %v6672, %v7245
  %v7331 = vld [vmem:[%s2 + $0x50] sm:$0x8]
  %v7332 = vunpack.c.l.bf16 %v7331
  %v7333 = vlaneseq
  %v7334 = vshrl.u32 %v7333, 7
  %v7335 = vsub.s32 6, %v7334
  %v7336 = vrot.slane %v7332, %v7335
  %v7337 = vadd.f32 %v7250, %v7336
  %v7338 = vadd.f32 %v7251, %v7336
  %v7339 = vadd.f32 %v7252, %v7336
  %v7340 = vadd.f32 %v7253, %v7336
  %v7341 = vadd.f32 %v7254, %v7336
  %v7342 = vadd.f32 %v7255, %v7336
  %v7343 = vadd.f32 %v7256, %v7336
  %v7344 = vadd.f32 %v7257, %v7336
  %v7345 = vadd.f32 %v7258, %v7336
  %v7346 = vadd.f32 %v7259, %v7336
  %v7347 = vadd.f32 %v7260, %v7336
  %v7348 = vadd.f32 %v7261, %v7336
  %v7349 = vadd.f32 %v7262, %v7336
  %v7350 = vadd.f32 %v7263, %v7336
  %v7351 = vadd.f32 %v7264, %v7336
  %v7352 = vadd.f32 %v7265, %v7336
  %v7353 = vadd.f32 %v7266, %v7336
  %v7354 = vadd.f32 %v7267, %v7336
  %v7355 = vadd.f32 %v7268, %v7336
  %v7356 = vadd.f32 %v7269, %v7336
  %v7357 = vadd.f32 %v7270, %v7336
  %v7358 = vadd.f32 %v7271, %v7336
  %v7359 = vadd.f32 %v7272, %v7336
  %v7360 = vadd.f32 %v7273, %v7336
  %v7361 = vadd.f32 %v7274, %v7336
  %v7362 = vadd.f32 %v7275, %v7336
  %v7363 = vadd.f32 %v7276, %v7336
  %v7364 = vadd.f32 %v7277, %v7336
  %v7365 = vadd.f32 %v7278, %v7336
  %v7366 = vadd.f32 %v7279, %v7336
  %v7367 = vadd.f32 %v7280, %v7336
  %v7368 = vadd.f32 %v7281, %v7336
  %v7369 = vadd.f32 %v7282, %v7336
  %v7370 = vadd.f32 %v7283, %v7336
  %v7371 = vadd.f32 %v7284, %v7336
  %v7372 = vadd.f32 %v7285, %v7336
  %v7373 = vadd.f32 %v7286, %v7336
  %v7374 = vadd.f32 %v7287, %v7336
  %v7375 = vadd.f32 %v7288, %v7336
  %v7376 = vadd.f32 %v7289, %v7336
  %v7377 = vadd.f32 %v7290, %v7336
  %v7378 = vadd.f32 %v7291, %v7336
  %v7379 = vadd.f32 %v7292, %v7336
  %v7380 = vadd.f32 %v7293, %v7336
  %v7381 = vadd.f32 %v7294, %v7336
  %v7382 = vadd.f32 %v7295, %v7336
  %v7383 = vadd.f32 %v7296, %v7336
  %v7384 = vadd.f32 %v7297, %v7336
  %v7385 = vadd.f32 %v7298, %v7336
  %v7386 = vadd.f32 %v7299, %v7336
  %v7387 = vadd.f32 %v7300, %v7336
  %v7388 = vadd.f32 %v7301, %v7336
  %v7389 = vadd.f32 %v7302, %v7336
  %v7390 = vadd.f32 %v7303, %v7336
  %v7391 = vadd.f32 %v7304, %v7336
  %v7392 = vadd.f32 %v7305, %v7336
  %v7393 = vadd.f32 %v7306, %v7336
  %v7394 = vadd.f32 %v7307, %v7336
  %v7395 = vadd.f32 %v7308, %v7336
  %v7396 = vadd.f32 %v7309, %v7336
  %v7397 = vadd.f32 %v7310, %v7336
  %v7398 = vadd.f32 %v7311, %v7336
  %v7399 = vadd.f32 %v7312, %v7336
  %v7400 = vadd.f32 %v7313, %v7336
  %v7401 = vadd.f32 %v7314, %v7336
  %v7402 = vadd.f32 %v7315, %v7336
  %v7403 = vadd.f32 %v7316, %v7336
  %v7404 = vadd.f32 %v7317, %v7336
  %v7405 = vadd.f32 %v7318, %v7336
  %v7406 = vadd.f32 %v7319, %v7336
  %v7407 = vadd.f32 %v7320, %v7336
  %v7408 = vadd.f32 %v7321, %v7336
  %v7409 = vadd.f32 %v7322, %v7336
  %v7410 = vadd.f32 %v7323, %v7336
  %v7411 = vadd.f32 %v7324, %v7336
  %v7412 = vadd.f32 %v7325, %v7336
  %v7413 = vadd.f32 %v7326, %v7336
  %v7414 = vadd.f32 %v7327, %v7336
  %v7415 = vadd.f32 %v7328, %v7336
  %v7416 = vadd.f32 %v7329, %v7336
  %v7417 = vadd.f32 %v7330, %v7336
  %v7418 = vmax.f32 %v7337, 0.0
  %v7419 = vmax.f32 %v7338, 0.0
  %v7420 = vmax.f32 %v7339, 0.0
  %v7421 = vmax.f32 %v7340, 0.0
  %v7422 = vmax.f32 %v7341, 0.0
  %v7423 = vmax.f32 %v7342, 0.0
  %v7424 = vmax.f32 %v7343, 0.0
  %v7425 = vmax.f32 %v7344, 0.0
  %v7426 = vmax.f32 %v7345, 0.0
  %v7427 = vmax.f32 %v7346, 0.0
  %v7428 = vmax.f32 %v7347, 0.0
  %v7429 = vmax.f32 %v7348, 0.0
  %v7430 = vmax.f32 %v7349, 0.0
  %v7431 = vmax.f32 %v7350, 0.0
  %v7432 = vmax.f32 %v7351, 0.0
  %v7433 = vmax.f32 %v7352, 0.0
  %v7434 = vmax.f32 %v7353, 0.0
  %v7435 = vmax.f32 %v7354, 0.0
  %v7436 = vmax.f32 %v7355, 0.0
  %v7437 = vmax.f32 %v7356, 0.0
  %v7438 = vmax.f32 %v7357, 0.0
  %v7439 = vmax.f32 %v7358, 0.0
  %v7440 = vmax.f32 %v7359, 0.0
  %v7441 = vmax.f32 %v7360, 0.0
  %v7442 = vmax.f32 %v7361, 0.0
  %v7443 = vmax.f32 %v7362, 0.0
  %v7444 = vmax.f32 %v7363, 0.0
  %v7445 = vmax.f32 %v7364, 0.0
  %v7446 = vmax.f32 %v7365, 0.0
  %v7447 = vmax.f32 %v7366, 0.0
  %v7448 = vmax.f32 %v7367, 0.0
  %v7449 = vmax.f32 %v7368, 0.0
  %v7450 = vmax.f32 %v7369, 0.0
  %v7451 = vmax.f32 %v7370, 0.0
  %v7452 = vmax.f32 %v7371, 0.0
  %v7453 = vmax.f32 %v7372, 0.0
  %v7454 = vmax.f32 %v7373, 0.0
  %v7455 = vmax.f32 %v7374, 0.0
  %v7456 = vmax.f32 %v7375, 0.0
  %v7457 = vmax.f32 %v7376, 0.0
  %v7458 = vmax.f32 %v7377, 0.0
  %v7459 = vmax.f32 %v7378, 0.0
  %v7460 = vmax.f32 %v7379, 0.0
  %v7461 = vmax.f32 %v7380, 0.0
  %v7462 = vmax.f32 %v7381, 0.0
  %v7463 = vmax.f32 %v7382, 0.0
  %v7464 = vmax.f32 %v7383, 0.0
  %v7465 = vmax.f32 %v7384, 0.0
  %v7466 = vmax.f32 %v7385, 0.0
  %v7467 = vmax.f32 %v7386, 0.0
  %v7468 = vmax.f32 %v7387, 0.0
  %v7469 = vmax.f32 %v7388, 0.0
  %v7470 = vmax.f32 %v7389, 0.0
  %v7471 = vmax.f32 %v7390, 0.0
  %v7472 = vmax.f32 %v7391, 0.0
  %v7473 = vmax.f32 %v7392, 0.0
  %v7474 = vmax.f32 %v7393, 0.0
  %v7475 = vmax.f32 %v7394, 0.0
  %v7476 = vmax.f32 %v7395, 0.0
  %v7477 = vmax.f32 %v7396, 0.0
  %v7478 = vmax.f32 %v7397, 0.0
  %v7479 = vmax.f32 %v7398, 0.0
  %v7480 = vmax.f32 %v7399, 0.0
  %v7481 = vmax.f32 %v7400, 0.0
  %v7482 = vmax.f32 %v7401, 0.0
  %v7483 = vmax.f32 %v7402, 0.0
  %v7484 = vmax.f32 %v7403, 0.0
  %v7485 = vmax.f32 %v7404, 0.0
  %v7486 = vmax.f32 %v7405, 0.0
  %v7487 = vmax.f32 %v7406, 0.0
  %v7488 = vmax.f32 %v7407, 0.0
  %v7489 = vmax.f32 %v7408, 0.0
  %v7490 = vmax.f32 %v7409, 0.0
  %v7491 = vmax.f32 %v7410, 0.0
  %v7492 = vmax.f32 %v7411, 0.0
  %v7493 = vmax.f32 %v7412, 0.0
  %v7494 = vmax.f32 %v7413, 0.0
  %v7495 = vmax.f32 %v7414, 0.0
  %v7496 = vmax.f32 %v7415, 0.0
  %v7497 = vmax.f32 %v7416, 0.0
  %v7498 = vmax.f32 %v7417, 0.0
  %v7499 = vld [vmem:[%s1] sm:$0x3f]
  %v7500 = vpack.c.bf16 %v7419, %v7418
  %v7501 = vpack.c.bf16 %v7421, %v7420
  %v7502 = vpack.c.bf16 %v7423, %v7422
  %v7503 = vpack.c.bf16 %v7425, %v7424
  %v7504 = vpack.c.bf16 %v7427, %v7426
  %v7505 = vpack.c.bf16 %v7429, %v7428
  %v7506 = vpack.c.bf16 %v7431, %v7430
  %v7507 = vpack.c.bf16 %v7433, %v7432
  %v7508 = vpack.c.bf16 %v7435, %v7434
  %v7509 = vpack.c.bf16 %v7437, %v7436
  %v7510 = vpack.c.bf16 %v7439, %v7438
  %v7511 = vpack.c.bf16 %v7441, %v7440
  %v7512 = vpack.c.bf16 %v7443, %v7442
  %v7513 = vpack.c.bf16 %v7445, %v7444
  %v7514 = vpack.c.bf16 %v7447, %v7446
  %v7515 = vpack.c.bf16 %v7449, %v7448
  %v7516 = vpack.c.bf16 %v7451, %v7450
  %v7517 = vpack.c.bf16 %v7453, %v7452
  %v7518 = vpack.c.bf16 %v7455, %v7454
  %v7519 = vpack.c.bf16 %v7457, %v7456
  %v7520 = vpack.c.bf16 %v7459, %v7458
  %v7521 = vpack.c.bf16 %v7461, %v7460
  %v7522 = vpack.c.bf16 %v7463, %v7462
  %v7523 = vpack.c.bf16 %v7465, %v7464
  %v7524 = vpack.c.bf16 %v7467, %v7466
  %v7525 = vpack.c.bf16 %v7469, %v7468
  %v7526 = vpack.c.bf16 %v7471, %v7470
  %v7527 = vpack.c.bf16 %v7473, %v7472
  %v7528 = vpack.c.bf16 %v7475, %v7474
  %v7529 = vpack.c.bf16 %v7477, %v7476
  %v7530 = vpack.c.bf16 %v7479, %v7478
  %v7531 = vpack.c.bf16 %v7481, %v7480
  %v7532 = vpack.c.bf16 %v7483, %v7482
  %v7533 = vpack.c.bf16 %v7485, %v7484
  %v7534 = vpack.c.bf16 %v7487, %v7486
  %v7535 = vpack.c.bf16 %v7489, %v7488
  %v7536 = vpack.c.bf16 %v7491, %v7490
  %v7537 = vpack.c.bf16 %v7493, %v7492
  %v7538 = vpack.c.bf16 %v7495, %v7494
  %v7539 = vpack.c.bf16 %v7497, %v7496
  %v7540 = vpack.c.bf16 %v7498, %v7498
  %v7542 = vcombine.high %v7499, %v7499
  %v7544 = vunpack.c.l.s4 1966171168
  %v7545 = vunpack.c.0.s8 %v7544
  %v7546 = vlaneseq
  %v7547 = vshrl.u32 %v7546, 7
  %v7548 = vsub.s32 %v7545, %v7547
  %v7549 = vrot.slane %v7499, %v7548
  %v7551 = vunpack.c.l.s4 1966171168
  %v7552 = vunpack.c.0.s8 %v7551
  %v7553 = vlaneseq
  %v7554 = vshrl.u32 %v7553, 7
  %v7555 = vsub.s32 %v7552, %v7554
  %v7556 = vrot.slane %v7542, %v7555
  %v7557 = vcombine.high %v7549, %v7549
  %v7558 = vcombine.high %v7556, %v7556
  %v7560 = vunpack.c.l.s4 1966171168
  %v7561 = vunpack.c.0.s8 %v7560
  %v7562 = vlaneseq
  %v7563 = vshrl.u32 %v7562, 7
  %v7564 = vsub.s32 %v7561, %v7563
  %v7565 = vrot.slane %v7549, %v7564
  %v7567 = vunpack.c.l.s4 1966171168
  %v7568 = vunpack.c.0.s8 %v7567
  %v7569 = vlaneseq
  %v7570 = vshrl.u32 %v7569, 7
  %v7571 = vsub.s32 %v7568, %v7570
  %v7572 = vrot.slane %v7556, %v7571
  %v7574 = vunpack.c.l.s4 1966171168
  %v7575 = vunpack.c.0.s8 %v7574
  %v7576 = vlaneseq
  %v7577 = vshrl.u32 %v7576, 7
  %v7578 = vsub.s32 %v7575, %v7577
  %v7579 = vrot.slane %v7557, %v7578
  %v7581 = vunpack.c.l.s4 1966171168
  %v7582 = vunpack.c.0.s8 %v7581
  %v7583 = vlaneseq
  %v7584 = vshrl.u32 %v7583, 7
  %v7585 = vsub.s32 %v7582, %v7584
  %v7586 = vrot.slane %v7558, %v7585
  %v7587 = vcombine.high %v7565, %v7565
  %v7588 = vcombine.high %v7579, %v7579
  %vm7594 = vcmask 64512
  %v7596 = vsel %vm7594, %v7586, 0
  %vm7598 = vcmask 1043456
  %v7600 = vsel %vm7598, %v7540, 0
  %7602 = vmatprep.subr.bf16.mxu0 0
  %7603 = vmatpush1.bf16.msra.mxu0 %v7500
  %7604 = vmatprep.subr.bf16.mxu0 0
  %7605 = vmatpush1.bf16.msra.mxu0 %v7501
  %7606 = vmatprep.subr.bf16.mxu0 0
  %7607 = vmatpush1.bf16.msra.mxu0 %v7502
  %7608 = vmatprep.subr.bf16.mxu0 0
  %7609 = vmatpush1.bf16.msra.mxu0 %v7503
  %7610 = vmatprep.subr.bf16.mxu0 0
  %7611 = vmatpush1.bf16.msra.mxu0 %v7504
  %7612 = vmatprep.subr.bf16.mxu0 0
  %7613 = vmatpush1.bf16.msra.mxu0 %v7505
  %7614 = vmatprep.subr.bf16.mxu0 0
  %7615 = vmatpush1.bf16.msra.mxu0 %v7506
  %7616 = vmatprep.subr.bf16.mxu0 0
  %7617 = vmatpush1.bf16.msra.mxu0 %v7507
  %7618 = vmatprep.subr.bf16.mxu0 0
  %7619 = vmatpush1.bf16.msra.mxu0 %v7508
  %7620 = vmatprep.subr.bf16.mxu0 0
  %7621 = vmatpush1.bf16.msra.mxu0 %v7509
  %7622 = vmatprep.subr.bf16.mxu0 0
  %7623 = vmatpush1.bf16.msra.mxu0 %v7510
  %7624 = vmatprep.subr.bf16.mxu0 0
  %7625 = vmatpush1.bf16.msra.mxu0 %v7511
  %7626 = vmatprep.subr.bf16.mxu0 0
  %7627 = vmatpush1.bf16.msra.mxu0 %v7512
  %7628 = vmatprep.subr.bf16.mxu0 0
  %7629 = vmatpush1.bf16.msra.mxu0 %v7513
  %7630 = vmatprep.subr.bf16.mxu0 0
  %7631 = vmatpush1.bf16.msra.mxu0 %v7514
  %7632 = vmatprep.subr.bf16.mxu0 0
  %7633 = vmatpush1.bf16.msra.mxu0 %v7515
  %7634 = vmatprep.mubr.bf16.mxu0 %v7579
  %7635 = vmatmul.mubr.bf16.gmra.mrb[0].mxu0 %v7565
  %v7636 = vpop.f32.mrb[0].mxu0
  %v7637 = vadd.f32 0.0, %v7636
  %v7638 = vpop.f32.mrb[0].mxu0
  %v7639 = vpop.f32.mrb[0].mxu0
  %v7640 = vpop.f32.mrb[0].mxu0
  %7641 = vdwg.mxu0
  %7642 = vmatprep.subr.bf16.mxu0 0
  %7643 = vmatpush1.bf16.msra.mxu0 %v7516
  %7644 = vmatprep.subr.bf16.mxu0 0
  %7645 = vmatpush1.bf16.msra.mxu0 %v7517
  %7646 = vmatprep.subr.bf16.mxu0 0
  %7647 = vmatpush1.bf16.msra.mxu0 %v7518
  %7648 = vmatprep.subr.bf16.mxu0 0
  %7649 = vmatpush1.bf16.msra.mxu0 %v7519
  %7650 = vmatprep.subr.bf16.mxu0 0
  %7651 = vmatpush1.bf16.msra.mxu0 %v7520
  %7652 = vmatprep.subr.bf16.mxu0 0
  %7653 = vmatpush1.bf16.msra.mxu0 %v7521
  %7654 = vmatprep.subr.bf16.mxu0 0
  %7655 = vmatpush1.bf16.msra.mxu0 %v7522
  %7656 = vmatprep.subr.bf16.mxu0 0
  %7657 = vmatpush1.bf16.msra.mxu0 %v7523
  %7658 = vmatprep.subr.bf16.mxu0 0
  %7659 = vmatpush1.bf16.msra.mxu0 %v7524
  %7660 = vmatprep.subr.bf16.mxu0 0
  %7661 = vmatpush1.bf16.msra.mxu0 %v7525
  %7662 = vmatprep.subr.bf16.mxu0 0
  %7663 = vmatpush1.bf16.msra.mxu0 %v7526
  %7664 = vmatprep.subr.bf16.mxu0 0
  %7665 = vmatpush1.bf16.msra.mxu0 %v7527
  %7666 = vmatprep.subr.bf16.mxu0 0
  %7667 = vmatpush1.bf16.msra.mxu0 %v7528
  %7668 = vmatprep.subr.bf16.mxu0 0
  %7669 = vmatpush1.bf16.msra.mxu0 %v7529
  %7670 = vmatprep.subr.bf16.mxu0 0
  %7671 = vmatpush1.bf16.msra.mxu0 %v7530
  %7672 = vmatprep.subr.bf16.mxu0 0
  %7673 = vmatpush1.bf16.msra.mxu0 %v7531
  %7674 = vmatprep.mubr.bf16.mxu0 %v7588
  %7675 = vmatmul.mubr.bf16.gmra.mrb[0].mxu0 %v7587
  %v7676 = vpop.f32.mrb[0].mxu0
  %v7677 = vadd.f32 %v7637, %v7676
  %v7678 = vpop.f32.mrb[0].mxu0
  %v7679 = vpop.f32.mrb[0].mxu0
  %v7680 = vpop.f32.mrb[0].mxu0
  %7681 = vdwg.mxu0
  %7682 = vmatprep.subr.bf16.mxu0 0
  %7683 = vmatpush1.bf16.msra.mxu0 %v7532
  %7684 = vmatprep.subr.bf16.mxu0 0
  %7685 = vmatpush1.bf16.msra.mxu0 %v7533
  %7686 = vmatprep.subr.bf16.mxu0 0
  %7687 = vmatpush1.bf16.msra.mxu0 %v7534
  %7688 = vmatprep.subr.bf16.mxu0 0
  %7689 = vmatpush1.bf16.msra.mxu0 %v7535
  %7690 = vmatprep.subr.bf16.mxu0 0
  %7691 = vmatpush1.bf16.msra.mxu0 %v7536
  %7692 = vmatprep.subr.bf16.mxu0 0
  %7693 = vmatpush1.bf16.msra.mxu0 %v7537
  %7694 = vmatprep.subr.bf16.mxu0 0
  %7695 = vmatpush1.bf16.msra.mxu0 %v7538
  %7696 = vmatprep.subr.bf16.mxu0 0
  %7697 = vmatpush1.bf16.msra.mxu0 %v7539
  %7698 = vmatprep.subr.bf16.mxu0 0
  %7699 = vmatpush1.bf16.msra.mxu0 %v7600
  %7700 = vmatprep.subr.bf16.mxu0 0
  %7701 = vmatpush1.bf16.msra.mxu0 0
  %7702 = vmatprep.subr.bf16.mxu0 0
  %7703 = vmatpush1.bf16.msra.mxu0 0
  %7704 = vmatprep.subr.bf16.mxu0 0
  %7705 = vmatpush1.bf16.msra.mxu0 0
  %7706 = vmatprep.subr.bf16.mxu0 0
  %7707 = vmatpush1.bf16.msra.mxu0 0
  %7708 = vmatprep.subr.bf16.mxu0 0
  %7709 = vmatpush1.bf16.msra.mxu0 0
  %7710 = vmatprep.subr.bf16.mxu0 0
  %7711 = vmatpush1.bf16.msra.mxu0 0
  %7712 = vmatprep.subr.bf16.mxu0 0
  %7713 = vmatpush1.bf16.msra.mxu0 0
  %7714 = vmatprep.mubr.bf16.mxu0 %v7596
  %7715 = vmatmul.mubr.bf16.gmra.mrb[0].mxu0 %v7572
  %v7716 = vpop.f32.mrb[0].mxu0
  %v7717 = vadd.f32 %v7677, %v7716
  %v7718 = vpop.f32.mrb[0].mxu0
  %v7719 = vpop.f32.mrb[0].mxu0
  %v7720 = vpop.f32.mrb[0].mxu0
  %7721 = vdwg.mxu0
  %v7722 = vld [vmem:[%s2] sm:$0xff]
  %v7723 = vld [vmem:[%s2 + $0x8] sm:$0xff]
  %v7724 = vld [vmem:[%s2 + $0x10] sm:$0xff]
  %v7725 = vld [vmem:[%s2 + $0x18] sm:$0xff]
  %v7726 = vld [vmem:[%s2 + $0x20] sm:$0x11]
  %v7727 = vunpack.c.l.bf16 %v7726
  %v7728 = vunpack.c.h.bf16 %v7726
  %v7729 = vpack.c.bf16 %v7717, %v7717
  %v7730 = vlaneseq
  %v7731 = vshrl.u32 %v7730, 7
  %v7732 = vsub.s32 0, %v7731
  %v7733 = vrot.slane %v7727, %v7732
  %v7734 = vlaneseq
  %v7735 = vshrl.u32 %v7734, 7
  %v7736 = vsub.s32 0, %v7735
  %v7737 = vrot.slane %v7728, %v7736
  %v7742 = vunpack.c.l.b16 %v7722
  %v7743 = vunpack.c.h.b16 %v7722
  %v7744 = vunpack.c.l.b16 %v7723
  %v7745 = vunpack.c.h.b16 %v7723
  %v7746 = vunpack.c.l.b16 %v7724
  %v7747 = vunpack.c.h.b16 %v7724
  %v7748 = vunpack.c.l.b16 %v7725
  %v7749 = vunpack.c.h.b16 %v7725
  %v7750 = vpack.c.b16 %v7744, %v7742
  %v7751 = vpack.c.b16 %v7745, %v7743
  %v7752 = vpack.c.b16 %v7748, %v7746
  %v7753 = vpack.c.b16 %v7749, %v7747
  %vm7758 = vcmask 261120
  %v7760 = vsel %vm7758, %v7729, 0
  %7762 = vmatprep.subr.bf16.mxu0 %v7751
  %7763 = vmatpush1.bf16.msra.mxu0 %v7750
  %7764 = vmatprep.subr.bf16.mxu0 %v7753
  %7765 = vmatpush1.bf16.msra.mxu0 %v7752
  %7766 = vmatprep.subr.bf16.mxu0 0
  %7767 = vmatpush1.bf16.msra.mxu0 0
  %7768 = vmatprep.subr.bf16.mxu0 0
  %7769 = vmatpush1.bf16.msra.mxu0 0
  %7770 = vmatprep.subr.bf16.mxu0 0
  %7771 = vmatpush1.bf16.msra.mxu0 0
  %7772 = vmatprep.subr.bf16.mxu0 0
  %7773 = vmatpush1.bf16.msra.mxu0 0
  %7774 = vmatprep.subr.bf16.mxu0 0
  %7775 = vmatpush1.bf16.msra.mxu0 0
  %7776 = vmatprep.subr.bf16.mxu0 0
  %7777 = vmatpush1.bf16.msra.mxu0 0
  %7778 = vmatprep.subr.bf16.mxu0 0
  %7779 = vmatpush1.bf16.msra.mxu0 0
  %7780 = vmatprep.subr.bf16.mxu0 0
  %7781 = vmatpush1.bf16.msra.mxu0 0
  %7782 = vmatprep.subr.bf16.mxu0 0
  %7783 = vmatpush1.bf16.msra.mxu0 0
  %7784 = vmatprep.subr.bf16.mxu0 0
  %7785 = vmatpush1.bf16.msra.mxu0 0
  %7786 = vmatprep.subr.bf16.mxu0 0
  %7787 = vmatpush1.bf16.msra.mxu0 0
  %7788 = vmatprep.subr.bf16.mxu0 0
  %7789 = vmatpush1.bf16.msra.mxu0 0
  %7790 = vmatprep.subr.bf16.mxu0 0
  %7791 = vmatpush1.bf16.msra.mxu0 0
  %7792 = vmatprep.subr.bf16.mxu0 0
  %7793 = vmatpush1.bf16.msra.mxu0 0
  %7794 = vmatprep.mubr.bf16.mxu0 0
  %7795 = vmatmul.mubr.bf16.gmra.mrb[0].mxu0 %v7760
  %v7796 = vpop.f32.mrb[0].mxu0
  %v7797 = vadd.f32 %v7733, %v7796
  %v7798 = vpop.f32.mrb[0].mxu0
  %v7799 = vadd.f32 %v7737, %v7798
  %v7800 = vpop.f32.mrb[0].mxu0
  %v7801 = vpop.f32.mrb[0].mxu0
  %7802 = vdwg.mxu0
  %v7803 = vld [vmem:[%s2 + $0x20] sm:$0xff]
  %v7804 = vld [vmem:[%s2 + $0x28] sm:$0xff]
  %v7805 = vld [vmem:[%s2 + $0x30] sm:$0x11]
  %v7806 = vld [vmem:[%s2 + $0x30] sm:$0x1]
  %v7807 = vunpack.c.l.bf16 %v7806
  %v7808 = vpack.c.bf16 %v7797, %v7797
  %v7809 = vpack.c.bf16 %v7799, %v7799
  %v7810 = vlaneseq
  %v7811 = vshrl.u32 %v7810, 7
  %v7812 = vsub.s32 1, %v7811
  %v7813 = vrot.slane %v7807, %v7812
  %v7817 = vunpack.c.l.b16 %v7803
  %v7818 = vunpack.c.h.b16 %v7803
  %v7819 = vunpack.c.l.b16 %v7804
  %v7820 = vunpack.c.h.b16 %v7804
  %v7821 = vunpack.c.l.b16 %v7805
  %v7822 = vunpack.c.h.b16 %v7805
  %v7823 = vpack.c.b16 %v7819, %v7817
  %v7824 = vpack.c.b16 %v7820, %v7818
  %v7825 = vpack.c.b16 %v7821, %v7821
  %v7826 = vpack.c.b16 %v7822, %v7822
  %v7828 = vshrl.u32 %v7823, 16
  %v7830 = vshll.u32 %v7823, 16
  %v7832 = vrot.slane %v7830, 1
  %v7833 = vor.u32 %v7828, %v7832
  %v7835 = vshll.u32 %v7825, 16
  %v7837 = vrot.slane %v7835, 1
  %v7838 = vsel %vm305, %v7833, %v7837
  %v7840 = vshrl.u32 %v7824, 16
  %v7842 = vshll.u32 %v7824, 16
  %v7844 = vrot.slane %v7842, 1
  %v7845 = vor.u32 %v7840, %v7844
  %v7847 = vshll.u32 %v7826, 16
  %v7849 = vrot.slane %v7847, 1
  %v7850 = vsel %vm305, %v7845, %v7849
  %7853 = vmatprep.subr.bf16.mxu0 %v7850
  %7854 = vmatpush1.bf16.xpose.msra.mxu0 %v7838
  %7855 = vmatprep.subr.bf16.mxu0 0
  %7856 = vmatpush1.bf16.xpose.msra.mxu0 0
  %7857 = vmatprep.subr.bf16.mxu0 0
  %7858 = vmatpush1.bf16.xpose.msra.mxu0 0
  %7859 = vmatprep.subr.bf16.mxu0 0
  %7860 = vmatpush1.bf16.xpose.msra.mxu0 0
  %7861 = vmatprep.subr.bf16.mxu0 0
  %7862 = vmatpush1.bf16.xpose.msra.mxu0 0
  %7863 = vmatprep.subr.bf16.mxu0 0
  %7864 = vmatpush1.bf16.xpose.msra.mxu0 0
  %7865 = vmatprep.subr.bf16.mxu0 0
  %7866 = vmatpush1.bf16.xpose.msra.mxu0 0
  %7867 = vmatprep.subr.bf16.mxu0 0
  %7868 = vmatpush1.bf16.xpose.msra.mxu0 0
  %7869 = vmatprep.subr.bf16.mxu0 0
  %7870 = vmatpush1.bf16.xpose.msra.mxu0 0
  %7871 = vmatprep.subr.bf16.mxu0 0
  %7872 = vmatpush1.bf16.xpose.msra.mxu0 0
  %7873 = vmatprep.subr.bf16.mxu0 0
  %7874 = vmatpush1.bf16.xpose.msra.mxu0 0
  %7875 = vmatprep.subr.bf16.mxu0 0
  %7876 = vmatpush1.bf16.xpose.msra.mxu0 0
  %7877 = vmatprep.subr.bf16.mxu0 0
  %7878 = vmatpush1.bf16.xpose.msra.mxu0 0
  %7879 = vmatprep.subr.bf16.mxu0 0
  %7880 = vmatpush1.bf16.xpose.msra.mxu0 0
  %7881 = vmatprep.subr.bf16.mxu0 0
  %7882 = vmatpush1.bf16.xpose.msra.mxu0 0
  %7883 = vmatprep.subr.bf16.mxu0 0
  %7884 = vmatpush1.bf16.xpose.msra.mxu0 0
  %7885 = vmatprep.mubr.bf16.mxu0 %v7809
  %7886 = vmatmul.mubr.bf16.gmra.mrb[0].mxu0 %v7808
  %v7887 = vpop.f32.mrb[0].mxu0
  %v7888 = vadd.f32 %v7813, %v7887
  %v7889 = vpop.f32.mrb[0].mxu0
  %v7890 = vpop.f32.mrb[0].mxu0
  %v7891 = vpop.f32.mrb[0].mxu0
  %7892 = vdwg.mxu0
  %v7893 = vlaneseq
  %v7894 = vand.u32 %v7893, 127
  %vm7895 = vcmp.ge.s32.totalorder %v7894, 4
  %vm7896 = vcmp.lt.s32.totalorder %v7894, 8
  %vm7897 = vmand %vm7895, %vm7896
  %v7898 = vsel %vm7897, %v7888, -inf
  %vm7899 = vcmask 123904
  %v7900 = vsel %vm7899, %v7898, -inf
  %7901 = vmax.xlane.f32.xlu0 %v7900
  %v7902 = vpop.xlane.xlu0 %7901
  %v7903 = vsub.f32 %v7888, %v7902
  %v7904 = vmul.f32 %v7903, 1.442695
  %v7905 = vpow.pop %v7904
  %v7906 = vsel %vm7897, %v7905, 0.0
  %v7907 = vsel %vm7899, %v7906, 0.0
  %7908 = vadd.xlane.f32.xlu0 %v7907
  %v7909 = vpop.xlane.xlu0 %7908
  %v7910 = vrcp.pop %v7909
  %v7911 = vmul.f32 %v7906, %v7910
  %v7912 = vsel %vm7897, %v7911, %v7888
  %vm7913 = vcmask 130048
  %v7914 = vsel %vm7913, %v7912, 0.0
  %7915 = vst [vmem:[%s3] sm:$0x3] %v7914
  // Predicated region
  $region14: #{_forward_impl.1} parent=0 // pred_check
    _
  $region15: #{_forward_impl.1} parent=0 // pred_check_branch
    %7917 = sbr.rel (0) target = $region17
  $region16: #{_forward_impl.1} parent=0 // pred_region
    _
  $region17: #{_forward_impl.1} parent=0 // pred_fallthru
    _
  // Predicated region
  $region18: #{_forward_impl.1} parent=0 // pred_check
    _
  $region19: #{_forward_impl.1} parent=0 // pred_check_branch
    %7919 = sbr.rel (0) target = $region21
  $region20: #{_forward_impl.1} parent=0 // pred_region
    _
  $region21: #{_forward_impl.1} parent=0 // pred_fallthru
    _

</llo_original>
